<compile_context>
chip_gen: v6e
topology: v6e:2x2x1
jax: 0.10.0
libtpu: 0.0.40
codegen_flags: <defaults>
</compile_context>

<pallas_src>
import functools

import jax
import jax.numpy as jnp
import numpy as np
from jax.experimental import pallas as pl
from jax.experimental.pallas import tpu as pltpu

EPS = 1e-5     # nn.BatchNorm2d default eps
LANE = 128     # TPU lane width


def _round_up(x, m):
    return (x + m - 1) // m * m


def _bn_train(h, gamma, beta, inv_rows):
    """Train-mode BatchNorm (batch stats, biased variance), two-pass, f32.

    Two-pass (mean first, then centered second moment) avoids the catastrophic
    cancellation of the single-pass E[h^2]-E[h]^2 form on post-ReLU data.
    Returns the normalized (pre-activation) tensor.
    """
    mu = jnp.sum(h, axis=0, keepdims=True) * inv_rows
    d = h - mu
    var = jnp.sum(d * d, axis=0, keepdims=True) * inv_rows
    return d * (gamma * jax.lax.rsqrt(var + EPS)) + beta


def _bottleneck_kernel(x_ref, w1_ref, g1_ref, b1_ref,
                       w2_ref, g2_ref, b2_ref,
                       w3_ref, g3_ref, b3_ref,
                       o_ref, hp_ref, *, N, H, W):
    # x_ref : (rows, C) f32 lane-dense input (also the residual, re-read later)
    # w1_ref/w3_ref : (C, C) bf16      w2_ref : (3, 3, C, C) bf16 (HWIO)
    # g*/b* : (1, C) f32               hp_ref : (N, H+2, W, C) f32 VMEM scratch
    rows, C = x_ref.shape
    inv_rows = 1.0 / rows
    bf16 = jnp.bfloat16

    # ---- conv1 (1x1) + bn1 + relu -------------------------------------------
    # bf16 MXU operands, f32 accumulation; BN / ReLU in f32 (VPU/EUP).
    h1 = jnp.dot(x_ref[...].astype(bf16), w1_ref[...],
                 preferred_element_type=jnp.float32)
    h1 = jnp.maximum(_bn_train(h1, g1_ref[...], b1_ref[...], inv_rows), 0.0)

    # ---- stage conv1 output into the VMEM halo scratch ------------------------
    # Only the top/bottom halo rows are zeroed (the interior is fully
    # overwritten right after); the W-direction halo is handled by gating the
    # shifted taps, so there are no halo/dead columns to zero at all.
    zrow = jnp.zeros((N, 1, W, C), jnp.float32)
    hp_ref[:, 0:1, :, :] = zrow
    hp_ref[:, H + 1:H + 2, :, :] = zrow
    hp_ref[:, 1:H + 1, :, :] = h1.reshape(N, H, W, C)

    # ---- conv2 (3x3, stride 1, pad 1) -----------------------------------------
    # Per ky: ONE aligned slab load, reused by all three kx taps.  The +/-1
    # column shifts are sublane rotations (pltpu.roll, XLU slot); the column
    # that would read outside the image is gated to zero, which reproduces the
    # conv's zero padding exactly.
    w_pos = jax.lax.broadcasted_iota(jnp.int32, (rows, 1), 0) % W
    left_gate = (w_pos > 0).astype(jnp.float32)          # input col w-1 exists
    right_gate = (w_pos < (W - 1)).astype(jnp.float32)   # input col w+1 exists

    acc = None
    for ky in range(3):
        slab = hp_ref[:, ky:ky + H, :, :].reshape(rows, C)   # aligned f32 load
        for kx in range(3):
            if kx == 0:
                p = pltpu.roll(slab, 1, 0) * left_gate        # p[r] = slab[r-1]
            elif kx == 1:
                p = slab
            else:
                p = pltpu.roll(slab, rows - 1, 0) * right_gate  # p[r] = slab[r+1]
            t = jnp.dot(p.astype(bf16), w2_ref[ky, kx],
                        preferred_element_type=jnp.float32)
            acc = t if acc is None else acc + t   # first tap seeds the accumulator
    h2 = jnp.maximum(_bn_train(acc, g2_ref[...], b2_ref[...], inv_rows), 0.0)

    # ---- conv3 (1x1) + bn3 + residual add + relu ------------------------------
    h3 = jnp.dot(h2.astype(bf16), w3_ref[...], preferred_element_type=jnp.float32)
    h3 = _bn_train(h3, g3_ref[...], b3_ref[...], inv_rows)
    # Residual read at point of use (not hoisted across the three matmuls).
    o_ref[...] = jnp.maximum(h3 + x_ref[...], 0.0).astype(o_ref.dtype)


def bottleneck_forward_nhwc(x_nhwc, params):
    """Bottleneck forward on an NHWC activation; returns NHWC.

    Use this entry point when chaining blocks so activations stay lane-dense
    NHWC end-to-end (no per-block NCHW<->NHWC transposes / channel re-pads).
    """
    w1, g1, b1, w2, g2, b2, w3, g3, b3 = params
    N, H, W, Cin = x_nhwc.shape
    P = w1.shape[1]
    Cout = w3.shape[1]
    assert Cin == Cout, "identity shortcut requires inplanes == planes * expansion"
    assert W % 8 == 0, "TODO(synk): W not a multiple of 8 needs masked slab slices"

    # Channel width padded to the lane width.  Realistic bottleneck channel
    # counts (>=256) are already multiples of the v6e/v7x 256-wide MXU; only
    # toy shapes pay real padding waste here.
    C = _round_up(max(Cin, P, Cout), LANE)
    rows = N * H * W

    x2d = x_nhwc.reshape(rows, Cin).astype(jnp.float32)
    if C != Cin:
        x2d = jnp.pad(x2d, ((0, 0), (0, C - Cin)))

    bf16 = jnp.bfloat16
    # Weights go to the kernel as bf16 MXU operands (halves their DMA / VMEM).
    # NOTE: gamma/beta MUST be zero-padded: padded channels then get
    # scale = 0 * rsqrt(eps) = 0 and shift = 0, so they stay exactly zero.
    w1p = jnp.pad(w1, ((0, C - Cin), (0, C - P))).astype(bf16)
    w2p = jnp.pad(w2, ((0, 0), (0, 0), (0, C - P), (0, C - P))).astype(bf16)
    w3p = jnp.pad(w3, ((0, C - P), (0, C - Cout))).astype(bf16)
    g1p = jnp.pad(g1, ((0, 0), (0, C - P)))
    b1p = jnp.pad(b1, ((0, 0), (0, C - P)))
    g2p = jnp.pad(g2, ((0, 0), (0, C - P)))
    b2p = jnp.pad(b2, ((0, 0), (0, C - P)))
    g3p = jnp.pad(g3, ((0, 0), (0, C - Cout)))
    b3p = jnp.pad(b3, ((0, 0), (0, C - Cout)))

    kernel = functools.partial(_bottleneck_kernel, N=N, H=H, W=W)
    # No grid: a single invocation on whole-array VMEM refs => nothing is
    # double-buffered (a grid=(1,) pipeline would allocate 2 buffers per
    # operand for zero overlap benefit).
    vmem_spec = pl.BlockSpec(memory_space=pltpu.MemorySpace.VMEM)

    out2d = pl.pallas_call(
        kernel,
        out_shape=jax.ShapeDtypeStruct((rows, C), jnp.float32),
        in_specs=[vmem_spec] * 10,
        out_specs=vmem_spec,
        scratch_shapes=[pltpu.VMEM((N, H + 2, W, C), jnp.float32)],
        compiler_params=pltpu.CompilerParams(
            vmem_limit_bytes=64 * 1024 * 1024),
    )(x2d, w1p, g1p, b1p, w2p, g2p, b2p, w3p, g3p, b3p)

    return out2d[:, :Cout].reshape(N, H, W, Cout)


def bottleneck_forward(x_nchw, params):
    """PyTorch-layout entry point: (N, Cin, H, W) -> (N, 4*planes, H, W)."""
    x_nhwc = jnp.transpose(x_nchw, (0, 2, 3, 1))
    out = bottleneck_forward_nhwc(x_nhwc, params)
    return jnp.transpose(out, (0, 3, 1, 2))


# ----------------------------- plain-JAX reference ---------------------------
def _bn_ref(h, gamma, beta):
    mu = jnp.mean(h, axis=(0, 1, 2), keepdims=True)
    var = jnp.mean((h - mu) ** 2, axis=(0, 1, 2), keepdims=True)
    return (h - mu) * jax.lax.rsqrt(var + EPS) * gamma + beta


def bottleneck_reference(x_nchw, params):
    """Reference with the kernel's precision policy: bf16 matmul/conv operands,
    f32 accumulation, f32 BatchNorm / ReLU / residual."""
    w1, g1, b1, w2, g2, b2, w3, g3, b3 = params
    bf16 = jnp.bfloat16
    x = jnp.transpose(x_nchw, (0, 2, 3, 1)).astype(jnp.float32)   # NHWC
    N, H, W, Cin = x.shape

    h = jnp.dot(x.reshape(-1, Cin).astype(bf16), w1.astype(bf16),
                preferred_element_type=jnp.float32).reshape(N, H, W, -1)
    h = jnp.maximum(_bn_ref(h, g1, b1), 0.0)
    h = jax.lax.conv_general_dilated(
        h.astype(bf16), w2.astype(bf16), window_strides=(1, 1),
        padding=((1, 1), (1, 1)),
        dimension_numbers=('NHWC', 'HWIO', 'NHWC'),
        preferred_element_type=jnp.float32)
    h = jnp.maximum(_bn_ref(h, g2, b2), 0.0)
    P = h.shape[-1]
    h = jnp.dot(h.reshape(-1, P).astype(bf16), w3.astype(bf16),
                preferred_element_type=jnp.float32).reshape(N, H, W, -1)
    h = _bn_ref(h, g3, b3)
    out = jnp.maximum(h + x, 0.0)
    return jnp.transpose(out, (0, 3, 1, 2))


if __name__ == "__main__":
    key = jax.random.PRNGKey(0)
    N, H, W = 2, 16, 16
    planes = 4
    inplanes = planes * 4   # identity shortcut requires inplanes == 4*planes
    Cout = planes * 4

    ks = jax.random.split(key, 10)
    x_nchw = jax.random.normal(ks[0], (N, inplanes, H, W), jnp.float32)

    # PyTorch-layout conv weights (OIHW), deterministic synthetic init.
    w1_oihw = 0.1 * jax.random.normal(ks[1], (planes, inplanes, 1, 1), jnp.float32)
    w2_oihw = 0.1 * jax.random.normal(ks[2], (planes, planes, 3, 3), jnp.float32)
    w3_oihw = 0.1 * jax.random.normal(ks[3], (Cout, planes, 1, 1), jnp.float32)

    g1 = 1.0 + 0.1 * jax.random.normal(ks[4], (1, planes), jnp.float32)
    b1 = 0.1 * jax.random.normal(ks[5], (1, planes), jnp.float32)
    g2 = 1.0 + 0.1 * jax.random.normal(ks[6], (1, planes), jnp.float32)
    b2 = 0.1 * jax.random.normal(ks[7], (1, planes), jnp.float32)
    g3 = 1.0 + 0.1 * jax.random.normal(ks[8], (1, Cout), jnp.float32)
    b3 = 0.1 * jax.random.normal(ks[9], (1, Cout), jnp.float32)

    # Kernel / reference weight layouts: 1x1 convs as (in, out) matmuls, 3x3 HWIO.
    w1 = jnp.transpose(w1_oihw.reshape(planes, inplanes), (1, 0))   # (Cin, P)
    w2 = jnp.transpose(w2_oihw, (2, 3, 1, 0))                       # (3, 3, P, P)
    w3 = jnp.transpose(w3_oihw.reshape(Cout, planes), (1, 0))       # (P, Cout)
    params = (w1, g1, b1, w2, g2, b2, w3, g3, b3)

    out = jax.jit(bottleneck_forward)(x_nchw, params)
    jax.block_until_ready(out)

    ref = bottleneck_reference(x_nchw, params)
    assert out.shape == (N, Cout, H, W), out.shape
    np.testing.assert_allclose(np.asarray(out), np.asarray(ref),
                               rtol=2e-3, atol=2e-3)

    print("KERNEL_OK")
</pallas_src>

<mosaic_0001>
module attributes {stable_mosaic.version = 11 : i64} {
  func.func @_bottleneck_kernel(%arg0: memref<512x128xf32, #tpu.memory_space<vmem>>, %arg1: memref<128x128xbf16, #tpu.memory_space<vmem>>, %arg2: memref<1x128xf32, #tpu.memory_space<vmem>>, %arg3: memref<1x128xf32, #tpu.memory_space<vmem>>, %arg4: memref<3x3x128x128xbf16, #tpu.memory_space<vmem>>, %arg5: memref<1x128xf32, #tpu.memory_space<vmem>>, %arg6: memref<1x128xf32, #tpu.memory_space<vmem>>, %arg7: memref<128x128xbf16, #tpu.memory_space<vmem>>, %arg8: memref<1x128xf32, #tpu.memory_space<vmem>>, %arg9: memref<1x128xf32, #tpu.memory_space<vmem>>, %arg10: memref<512x128xf32, #tpu.memory_space<vmem>>, %arg11: memref<2x18x16x128xf32, #tpu.memory_space<vmem>>) attributes {dimension_semantics = [], scalar_prefetch = 0 : i64, scratch_operands = 1 : i64, tpu.core_type = #tpu.core_type<tc>} {
    %c0 = arith.constant 0 : index
    %c0_0 = arith.constant 0 : index
    %0 = vector.load %arg0[%c0, %c0_0] : memref<512x128xf32, #tpu.memory_space<vmem>>, vector<512x128xf32>
    %1 = arith.truncf %0 : vector<512x128xf32> to vector<512x128xbf16>
    %c0_1 = arith.constant 0 : index
    %c0_2 = arith.constant 0 : index
    %2 = vector.load %arg1[%c0_1, %c0_2] : memref<128x128xbf16, #tpu.memory_space<vmem>>, vector<128x128xbf16>
    %cst = arith.constant dense<0.000000e+00> : vector<512x128xf32>
    %3 = tpu.matmul %1, %2, %cst {dimension_numbers = #tpu.dot_dimension_numbers<[1], [0], [0], [1], [0, 0, 1, 1], [], []>} : vector<512x128xbf16>, vector<128x128xbf16>, vector<512x128xf32> -> vector<512x128xf32>
    %c0_3 = arith.constant 0 : index
    %c0_4 = arith.constant 0 : index
    %4 = vector.load %arg2[%c0_3, %c0_4] : memref<1x128xf32, #tpu.memory_space<vmem>>, vector<1x128xf32>
    %c0_5 = arith.constant 0 : index
    %c0_6 = arith.constant 0 : index
    %5 = vector.load %arg3[%c0_5, %c0_6] : memref<1x128xf32, #tpu.memory_space<vmem>>, vector<1x128xf32>
    %cst_7 = arith.constant dense<0.000000e+00> : vector<128xf32>
    %6 = vector.multi_reduction <add>, %3, %cst_7 [0] : vector<512x128xf32> to vector<128xf32>
    %7 = vector.shape_cast %6 : vector<128xf32> to vector<1x128xf32>
    %cst_8 = arith.constant 0.001953125 : f32
    %8 = vector.broadcast %cst_8 : f32 to vector<1x128xf32>
    %9 = arith.mulf %7, %8 : vector<1x128xf32>
    %10 = vector.broadcast %9 : vector<1x128xf32> to vector<512x128xf32>
    %11 = arith.subf %3, %10 : vector<512x128xf32>
    %12 = arith.mulf %11, %11 : vector<512x128xf32>
    %cst_9 = arith.constant dense<0.000000e+00> : vector<128xf32>
    %13 = vector.multi_reduction <add>, %12, %cst_9 [0] : vector<512x128xf32> to vector<128xf32>
    %14 = vector.shape_cast %13 : vector<128xf32> to vector<1x128xf32>
    %cst_10 = arith.constant 0.001953125 : f32
    %15 = vector.broadcast %cst_10 : f32 to vector<1x128xf32>
    %16 = arith.mulf %14, %15 : vector<1x128xf32>
    %cst_11 = arith.constant 9.99999974E-6 : f32
    %17 = vector.broadcast %cst_11 : f32 to vector<1x128xf32>
    %18 = arith.addf %16, %17 : vector<1x128xf32>
    %19 = math.rsqrt %18 : vector<1x128xf32>
    %20 = arith.mulf %4, %19 : vector<1x128xf32>
    %21 = vector.broadcast %20 : vector<1x128xf32> to vector<512x128xf32>
    %22 = arith.mulf %11, %21 : vector<512x128xf32>
    %23 = vector.broadcast %5 : vector<1x128xf32> to vector<512x128xf32>
    %24 = arith.addf %22, %23 : vector<512x128xf32>
    %cst_12 = arith.constant 0.000000e+00 : f32
    %25 = vector.broadcast %cst_12 : f32 to vector<512x128xf32>
    %26 = arith.maximumf %24, %25 : vector<512x128xf32>
    %cst_13 = arith.constant 0.000000e+00 : f32
    %27 = vector.broadcast %cst_13 : f32 to vector<2x1x16x128xf32>
    %c0_14 = arith.constant 0 : index
    %c0_15 = arith.constant 0 : index
    %c0_16 = arith.constant 0 : index
    %c0_17 = arith.constant 0 : index
    %28 = vector.load %arg11[%c0_14, %c0_15, %c0_16, %c0_17] : memref<2x18x16x128xf32, #tpu.memory_space<vmem>>, vector<2x1x16x128xf32>
    tpu.vector_store %arg11[%c0_14, %c0_15, %c0_16, %c0_17], %27 {strides = array<i32>} : memref<2x18x16x128xf32, #tpu.memory_space<vmem>>, vector<2x1x16x128xf32>,
    %c0_18 = arith.constant 0 : index
    %c17 = arith.constant 17 : index
    %c0_19 = arith.constant 0 : index
    %c0_20 = arith.constant 0 : index
    %29 = vector.load %arg11[%c0_18, %c17, %c0_19, %c0_20] : memref<2x18x16x128xf32, #tpu.memory_space<vmem>>, vector<2x1x16x128xf32>
    tpu.vector_store %arg11[%c0_18, %c17, %c0_19, %c0_20], %27 {strides = array<i32>} : memref<2x18x16x128xf32, #tpu.memory_space<vmem>>, vector<2x1x16x128xf32>,
    %30 = vector.shape_cast %26 : vector<512x128xf32> to vector<2x16x16x128xf32>
    %c0_21 = arith.constant 0 : index
    %c1 = arith.constant 1 : index
    %c0_22 = arith.constant 0 : index
    %c0_23 = arith.constant 0 : index
    %31 = vector.load %arg11[%c0_21, %c1, %c0_22, %c0_23] : memref<2x18x16x128xf32, #tpu.memory_space<vmem>>, vector<2x16x16x128xf32>
    tpu.vector_store %arg11[%c0_21, %c1, %c0_22, %c0_23], %30 {strides = array<i32>} : memref<2x18x16x128xf32, #tpu.memory_space<vmem>>, vector<2x16x16x128xf32>,
    %32 = tpu.iota {dimensions = array<i32: 0>} : vector<512x1xi32>
    %c16_i32 = arith.constant 16 : i32
    %c0_i32 = arith.constant 0 : i32
    %33 = arith.cmpi eq, %c16_i32, %c0_i32 : i32
    %c1_i32 = arith.constant 1 : i32
    %34 = arith.select %33, %c1_i32, %c16_i32 : i32
    %35 = vector.broadcast %34 : i32 to vector<512x1xi32>
    %36 = arith.remsi %32, %35 : vector<512x1xi32>
    %c0_i32_24 = arith.constant 0 : i32
    %37 = vector.broadcast %c0_i32_24 : i32 to vector<512x1xi32>
    %38 = arith.cmpi ne, %36, %37 : vector<512x1xi32>
    %c0_i32_25 = arith.constant 0 : i32
    %39 = vector.broadcast %c0_i32_25 : i32 to vector<512x1xi32>
    %40 = arith.cmpi slt, %36, %39 : vector<512x1xi32>
    %c0_i32_26 = arith.constant 0 : i32
    %41 = arith.cmpi slt, %34, %c0_i32_26 : i32
    %42 = vector.broadcast %41 : i1 to vector<512x1xi1>
    %43 = vector.broadcast %42 : vector<512x1xi1> to vector<512x1xi1>
    %44 = arith.xori %40, %43 : vector<512x1xi1>
    %45 = arith.andi %44, %38 : vector<512x1xi1>
    %46 = vector.broadcast %34 : i32 to vector<512x1xi32>
    %47 = arith.addi %36, %46 : vector<512x1xi32>
    %48 = arith.select %45, %47, %36 : vector<512x1xi1>, vector<512x1xi32>
    %c0_i32_27 = arith.constant 0 : i32
    %49 = vector.broadcast %c0_i32_27 : i32 to vector<512x1xi32>
    %50 = arith.cmpi sgt, %48, %49 : vector<512x1xi32>
    %51 = arith.extui %50 : vector<512x1xi1> to vector<512x1xi32>
    %52 = arith.sitofp %51 : vector<512x1xi32> to vector<512x1xf32>
    %c15_i32 = arith.constant 15 : i32
    %53 = vector.broadcast %c15_i32 : i32 to vector<512x1xi32>
    %54 = arith.cmpi slt, %48, %53 : vector<512x1xi32>
    %55 = arith.extui %54 : vector<512x1xi1> to vector<512x1xi32>
    %56 = arith.sitofp %55 : vector<512x1xi32> to vector<512x1xf32>
    %c0_28 = arith.constant 0 : index
    %c0_29 = arith.constant 0 : index
    %c0_30 = arith.constant 0 : index
    %c0_31 = arith.constant 0 : index
    %57 = vector.load %arg11[%c0_28, %c0_29, %c0_30, %c0_31] : memref<2x18x16x128xf32, #tpu.memory_space<vmem>>, vector<2x16x16x128xf32>
    %58 = vector.shape_cast %57 : vector<2x16x16x128xf32> to vector<512x128xf32>
    %c1_i32_32 = arith.constant 1 : i32
    %59 = tpu.dynamic_rotate %58 by %c1_i32_32 dim 0 : vector<512x128xf32>, i32 -> vector<512x128xf32>
    %60 = vector.broadcast %52 : vector<512x1xf32> to vector<512x128xf32>
    %61 = arith.mulf %59, %60 : vector<512x128xf32>
    %62 = arith.truncf %61 : vector<512x128xf32> to vector<512x128xbf16>
    %c0_33 = arith.constant 0 : index
    %c0_34 = arith.constant 0 : index
    %c0_35 = arith.constant 0 : index
    %c0_36 = arith.constant 0 : index
    %63 = vector.load %arg4[%c0_33, %c0_34, %c0_35, %c0_36] : memref<3x3x128x128xbf16, #tpu.memory_space<vmem>>, vector<1x1x128x128xbf16>
    %64 = vector.shape_cast %63 : vector<1x1x128x128xbf16> to vector<128x128xbf16>
    %cst_37 = arith.constant dense<0.000000e+00> : vector<512x128xf32>
    %65 = tpu.matmul %62, %64, %cst_37 {dimension_numbers = #tpu.dot_dimension_numbers<[1], [0], [0], [1], [0, 0, 1, 1], [], []>} : vector<512x128xbf16>, vector<128x128xbf16>, vector<512x128xf32> -> vector<512x128xf32>
    %66 = arith.truncf %58 : vector<512x128xf32> to vector<512x128xbf16>
    %c0_38 = arith.constant 0 : index
    %c1_39 = arith.constant 1 : index
    %c0_40 = arith.constant 0 : index
    %c0_41 = arith.constant 0 : index
    %67 = vector.load %arg4[%c0_38, %c1_39, %c0_40, %c0_41] : memref<3x3x128x128xbf16, #tpu.memory_space<vmem>>, vector<1x1x128x128xbf16>
    %68 = vector.shape_cast %67 : vector<1x1x128x128xbf16> to vector<128x128xbf16>
    %cst_42 = arith.constant dense<0.000000e+00> : vector<512x128xf32>
    %69 = tpu.matmul %66, %68, %cst_42 {dimension_numbers = #tpu.dot_dimension_numbers<[1], [0], [0], [1], [0, 0, 1, 1], [], []>} : vector<512x128xbf16>, vector<128x128xbf16>, vector<512x128xf32> -> vector<512x128xf32>
    %70 = arith.addf %65, %69 : vector<512x128xf32>
    %c511_i32 = arith.constant 511 : i32
    %71 = tpu.dynamic_rotate %58 by %c511_i32 dim 0 : vector<512x128xf32>, i32 -> vector<512x128xf32>
    %72 = vector.broadcast %56 : vector<512x1xf32> to vector<512x128xf32>
    %73 = arith.mulf %71, %72 : vector<512x128xf32>
    %74 = arith.truncf %73 : vector<512x128xf32> to vector<512x128xbf16>
    %c0_43 = arith.constant 0 : index
    %c2 = arith.constant 2 : index
    %c0_44 = arith.constant 0 : index
    %c0_45 = arith.constant 0 : index
    %75 = vector.load %arg4[%c0_43, %c2, %c0_44, %c0_45] : memref<3x3x128x128xbf16, #tpu.memory_space<vmem>>, vector<1x1x128x128xbf16>
    %76 = vector.shape_cast %75 : vector<1x1x128x128xbf16> to vector<128x128xbf16>
    %cst_46 = arith.constant dense<0.000000e+00> : vector<512x128xf32>
    %77 = tpu.matmul %74, %76, %cst_46 {dimension_numbers = #tpu.dot_dimension_numbers<[1], [0], [0], [1], [0, 0, 1, 1], [], []>} : vector<512x128xbf16>, vector<128x128xbf16>, vector<512x128xf32> -> vector<512x128xf32>
    %78 = arith.addf %70, %77 : vector<512x128xf32>
    %c0_47 = arith.constant 0 : index
    %c1_48 = arith.constant 1 : index
    %c0_49 = arith.constant 0 : index
    %c0_50 = arith.constant 0 : index
    %79 = vector.load %arg11[%c0_47, %c1_48, %c0_49, %c0_50] : memref<2x18x16x128xf32, #tpu.memory_space<vmem>>, vector<2x16x16x128xf32>
    %80 = vector.shape_cast %79 : vector<2x16x16x128xf32> to vector<512x128xf32>
    %c1_i32_51 = arith.constant 1 : i32
    %81 = tpu.dynamic_rotate %80 by %c1_i32_51 dim 0 : vector<512x128xf32>, i32 -> vector<512x128xf32>
    %82 = vector.broadcast %52 : vector<512x1xf32> to vector<512x128xf32>
    %83 = arith.mulf %81, %82 : vector<512x128xf32>
    %84 = arith.truncf %83 : vector<512x128xf32> to vector<512x128xbf16>
    %c1_52 = arith.constant 1 : index
    %c0_53 = arith.constant 0 : index
    %c0_54 = arith.constant 0 : index
    %c0_55 = arith.constant 0 : index
    %85 = vector.load %arg4[%c1_52, %c0_53, %c0_54, %c0_55] : memref<3x3x128x128xbf16, #tpu.memory_space<vmem>>, vector<1x1x128x128xbf16>
    %86 = vector.shape_cast %85 : vector<1x1x128x128xbf16> to vector<128x128xbf16>
    %cst_56 = arith.constant dense<0.000000e+00> : vector<512x128xf32>
    %87 = tpu.matmul %84, %86, %cst_56 {dimension_numbers = #tpu.dot_dimension_numbers<[1], [0], [0], [1], [0, 0, 1, 1], [], []>} : vector<512x128xbf16>, vector<128x128xbf16>, vector<512x128xf32> -> vector<512x128xf32>
    %88 = arith.addf %78, %87 : vector<512x128xf32>
    %89 = arith.truncf %80 : vector<512x128xf32> to vector<512x128xbf16>
    %c1_57 = arith.constant 1 : index
    %c1_58 = arith.constant 1 : index
    %c0_59 = arith.constant 0 : index
    %c0_60 = arith.constant 0 : index
    %90 = vector.load %arg4[%c1_57, %c1_58, %c0_59, %c0_60] : memref<3x3x128x128xbf16, #tpu.memory_space<vmem>>, vector<1x1x128x128xbf16>
    %91 = vector.shape_cast %90 : vector<1x1x128x128xbf16> to vector<128x128xbf16>
    %cst_61 = arith.constant dense<0.000000e+00> : vector<512x128xf32>
    %92 = tpu.matmul %89, %91, %cst_61 {dimension_numbers = #tpu.dot_dimension_numbers<[1], [0], [0], [1], [0, 0, 1, 1], [], []>} : vector<512x128xbf16>, vector<128x128xbf16>, vector<512x128xf32> -> vector<512x128xf32>
    %93 = arith.addf %88, %92 : vector<512x128xf32>
    %c511_i32_62 = arith.constant 511 : i32
    %94 = tpu.dynamic_rotate %80 by %c511_i32_62 dim 0 : vector<512x128xf32>, i32 -> vector<512x128xf32>
    %95 = vector.broadcast %56 : vector<512x1xf32> to vector<512x128xf32>
    %96 = arith.mulf %94, %95 : vector<512x128xf32>
    %97 = arith.truncf %96 : vector<512x128xf32> to vector<512x128xbf16>
    %c1_63 = arith.constant 1 : index
    %c2_64 = arith.constant 2 : index
    %c0_65 = arith.constant 0 : index
    %c0_66 = arith.constant 0 : index
    %98 = vector.load %arg4[%c1_63, %c2_64, %c0_65, %c0_66] : memref<3x3x128x128xbf16, #tpu.memory_space<vmem>>, vector<1x1x128x128xbf16>
    %99 = vector.shape_cast %98 : vector<1x1x128x128xbf16> to vector<128x128xbf16>
    %cst_67 = arith.constant dense<0.000000e+00> : vector<512x128xf32>
    %100 = tpu.matmul %97, %99, %cst_67 {dimension_numbers = #tpu.dot_dimension_numbers<[1], [0], [0], [1], [0, 0, 1, 1], [], []>} : vector<512x128xbf16>, vector<128x128xbf16>, vector<512x128xf32> -> vector<512x128xf32>
    %101 = arith.addf %93, %100 : vector<512x128xf32>
    %c0_68 = arith.constant 0 : index
    %c2_69 = arith.constant 2 : index
    %c0_70 = arith.constant 0 : index
    %c0_71 = arith.constant 0 : index
    %102 = vector.load %arg11[%c0_68, %c2_69, %c0_70, %c0_71] : memref<2x18x16x128xf32, #tpu.memory_space<vmem>>, vector<2x16x16x128xf32>
    %103 = vector.shape_cast %102 : vector<2x16x16x128xf32> to vector<512x128xf32>
    %c1_i32_72 = arith.constant 1 : i32
    %104 = tpu.dynamic_rotate %103 by %c1_i32_72 dim 0 : vector<512x128xf32>, i32 -> vector<512x128xf32>
    %105 = vector.broadcast %52 : vector<512x1xf32> to vector<512x128xf32>
    %106 = arith.mulf %104, %105 : vector<512x128xf32>
    %107 = arith.truncf %106 : vector<512x128xf32> to vector<512x128xbf16>
    %c2_73 = arith.constant 2 : index
    %c0_74 = arith.constant 0 : index
    %c0_75 = arith.constant 0 : index
    %c0_76 = arith.constant 0 : index
    %108 = vector.load %arg4[%c2_73, %c0_74, %c0_75, %c0_76] : memref<3x3x128x128xbf16, #tpu.memory_space<vmem>>, vector<1x1x128x128xbf16>
    %109 = vector.shape_cast %108 : vector<1x1x128x128xbf16> to vector<128x128xbf16>
    %cst_77 = arith.constant dense<0.000000e+00> : vector<512x128xf32>
    %110 = tpu.matmul %107, %109, %cst_77 {dimension_numbers = #tpu.dot_dimension_numbers<[1], [0], [0], [1], [0, 0, 1, 1], [], []>} : vector<512x128xbf16>, vector<128x128xbf16>, vector<512x128xf32> -> vector<512x128xf32>
    %111 = arith.addf %101, %110 : vector<512x128xf32>
    %112 = arith.truncf %103 : vector<512x128xf32> to vector<512x128xbf16>
    %c2_78 = arith.constant 2 : index
    %c1_79 = arith.constant 1 : index
    %c0_80 = arith.constant 0 : index
    %c0_81 = arith.constant 0 : index
    %113 = vector.load %arg4[%c2_78, %c1_79, %c0_80, %c0_81] : memref<3x3x128x128xbf16, #tpu.memory_space<vmem>>, vector<1x1x128x128xbf16>
    %114 = vector.shape_cast %113 : vector<1x1x128x128xbf16> to vector<128x128xbf16>
    %cst_82 = arith.constant dense<0.000000e+00> : vector<512x128xf32>
    %115 = tpu.matmul %112, %114, %cst_82 {dimension_numbers = #tpu.dot_dimension_numbers<[1], [0], [0], [1], [0, 0, 1, 1], [], []>} : vector<512x128xbf16>, vector<128x128xbf16>, vector<512x128xf32> -> vector<512x128xf32>
    %116 = arith.addf %111, %115 : vector<512x128xf32>
    %c511_i32_83 = arith.constant 511 : i32
    %117 = tpu.dynamic_rotate %103 by %c511_i32_83 dim 0 : vector<512x128xf32>, i32 -> vector<512x128xf32>
    %118 = vector.broadcast %56 : vector<512x1xf32> to vector<512x128xf32>
    %119 = arith.mulf %117, %118 : vector<512x128xf32>
    %120 = arith.truncf %119 : vector<512x128xf32> to vector<512x128xbf16>
    %c2_84 = arith.constant 2 : index
    %c2_85 = arith.constant 2 : index
    %c0_86 = arith.constant 0 : index
    %c0_87 = arith.constant 0 : index
    %121 = vector.load %arg4[%c2_84, %c2_85, %c0_86, %c0_87] : memref<3x3x128x128xbf16, #tpu.memory_space<vmem>>, vector<1x1x128x128xbf16>
    %122 = vector.shape_cast %121 : vector<1x1x128x128xbf16> to vector<128x128xbf16>
    %cst_88 = arith.constant dense<0.000000e+00> : vector<512x128xf32>
    %123 = tpu.matmul %120, %122, %cst_88 {dimension_numbers = #tpu.dot_dimension_numbers<[1], [0], [0], [1], [0, 0, 1, 1], [], []>} : vector<512x128xbf16>, vector<128x128xbf16>, vector<512x128xf32> -> vector<512x128xf32>
    %124 = arith.addf %116, %123 : vector<512x128xf32>
    %c0_89 = arith.constant 0 : index
    %c0_90 = arith.constant 0 : index
    %125 = vector.load %arg5[%c0_89, %c0_90] : memref<1x128xf32, #tpu.memory_space<vmem>>, vector<1x128xf32>
    %c0_91 = arith.constant 0 : index
    %c0_92 = arith.constant 0 : index
    %126 = vector.load %arg6[%c0_91, %c0_92] : memref<1x128xf32, #tpu.memory_space<vmem>>, vector<1x128xf32>
    %cst_93 = arith.constant dense<0.000000e+00> : vector<128xf32>
    %127 = vector.multi_reduction <add>, %124, %cst_93 [0] : vector<512x128xf32> to vector<128xf32>
    %128 = vector.shape_cast %127 : vector<128xf32> to vector<1x128xf32>
    %cst_94 = arith.constant 0.001953125 : f32
    %129 = vector.broadcast %cst_94 : f32 to vector<1x128xf32>
    %130 = arith.mulf %128, %129 : vector<1x128xf32>
    %131 = vector.broadcast %130 : vector<1x128xf32> to vector<512x128xf32>
    %132 = arith.subf %124, %131 : vector<512x128xf32>
    %133 = arith.mulf %132, %132 : vector<512x128xf32>
    %cst_95 = arith.constant dense<0.000000e+00> : vector<128xf32>
    %134 = vector.multi_reduction <add>, %133, %cst_95 [0] : vector<512x128xf32> to vector<128xf32>
    %135 = vector.shape_cast %134 : vector<128xf32> to vector<1x128xf32>
    %cst_96 = arith.constant 0.001953125 : f32
    %136 = vector.broadcast %cst_96 : f32 to vector<1x128xf32>
    %137 = arith.mulf %135, %136 : vector<1x128xf32>
    %cst_97 = arith.constant 9.99999974E-6 : f32
    %138 = vector.broadcast %cst_97 : f32 to vector<1x128xf32>
    %139 = arith.addf %137, %138 : vector<1x128xf32>
    %140 = math.rsqrt %139 : vector<1x128xf32>
    %141 = arith.mulf %125, %140 : vector<1x128xf32>
    %142 = vector.broadcast %141 : vector<1x128xf32> to vector<512x128xf32>
    %143 = arith.mulf %132, %142 : vector<512x128xf32>
    %144 = vector.broadcast %126 : vector<1x128xf32> to vector<512x128xf32>
    %145 = arith.addf %143, %144 : vector<512x128xf32>
    %cst_98 = arith.constant 0.000000e+00 : f32
    %146 = vector.broadcast %cst_98 : f32 to vector<512x128xf32>
    %147 = arith.maximumf %145, %146 : vector<512x128xf32>
    %148 = arith.truncf %147 : vector<512x128xf32> to vector<512x128xbf16>
    %c0_99 = arith.constant 0 : index
    %c0_100 = arith.constant 0 : index
    %149 = vector.load %arg7[%c0_99, %c0_100] : memref<128x128xbf16, #tpu.memory_space<vmem>>, vector<128x128xbf16>
    %cst_101 = arith.constant dense<0.000000e+00> : vector<512x128xf32>
    %150 = tpu.matmul %148, %149, %cst_101 {dimension_numbers = #tpu.dot_dimension_numbers<[1], [0], [0], [1], [0, 0, 1, 1], [], []>} : vector<512x128xbf16>, vector<128x128xbf16>, vector<512x128xf32> -> vector<512x128xf32>
    %c0_102 = arith.constant 0 : index
    %c0_103 = arith.constant 0 : index
    %151 = vector.load %arg8[%c0_102, %c0_103] : memref<1x128xf32, #tpu.memory_space<vmem>>, vector<1x128xf32>
    %c0_104 = arith.constant 0 : index
    %c0_105 = arith.constant 0 : index
    %152 = vector.load %arg9[%c0_104, %c0_105] : memref<1x128xf32, #tpu.memory_space<vmem>>, vector<1x128xf32>
    %cst_106 = arith.constant dense<0.000000e+00> : vector<128xf32>
    %153 = vector.multi_reduction <add>, %150, %cst_106 [0] : vector<512x128xf32> to vector<128xf32>
    %154 = vector.shape_cast %153 : vector<128xf32> to vector<1x128xf32>
    %cst_107 = arith.constant 0.001953125 : f32
    %155 = vector.broadcast %cst_107 : f32 to vector<1x128xf32>
    %156 = arith.mulf %154, %155 : vector<1x128xf32>
    %157 = vector.broadcast %156 : vector<1x128xf32> to vector<512x128xf32>
    %158 = arith.subf %150, %157 : vector<512x128xf32>
    %159 = arith.mulf %158, %158 : vector<512x128xf32>
    %cst_108 = arith.constant dense<0.000000e+00> : vector<128xf32>
    %160 = vector.multi_reduction <add>, %159, %cst_108 [0] : vector<512x128xf32> to vector<128xf32>
    %161 = vector.shape_cast %160 : vector<128xf32> to vector<1x128xf32>
    %cst_109 = arith.constant 0.001953125 : f32
    %162 = vector.broadcast %cst_109 : f32 to vector<1x128xf32>
    %163 = arith.mulf %161, %162 : vector<1x128xf32>
    %cst_110 = arith.constant 9.99999974E-6 : f32
    %164 = vector.broadcast %cst_110 : f32 to vector<1x128xf32>
    %165 = arith.addf %163, %164 : vector<1x128xf32>
    %166 = math.rsqrt %165 : vector<1x128xf32>
    %167 = arith.mulf %151, %166 : vector<1x128xf32>
    %168 = vector.broadcast %167 : vector<1x128xf32> to vector<512x128xf32>
    %169 = arith.mulf %158, %168 : vector<512x128xf32>
    %170 = vector.broadcast %152 : vector<1x128xf32> to vector<512x128xf32>
    %171 = arith.addf %169, %170 : vector<512x128xf32>
    %c0_111 = arith.constant 0 : index
    %c0_112 = arith.constant 0 : index
    %172 = vector.load %arg0[%c0_111, %c0_112] : memref<512x128xf32, #tpu.memory_space<vmem>>, vector<512x128xf32>
    %173 = arith.addf %171, %172 : vector<512x128xf32>
    %cst_113 = arith.constant 0.000000e+00 : f32
    %174 = vector.broadcast %cst_113 : f32 to vector<512x128xf32>
    %175 = arith.maximumf %173, %174 : vector<512x128xf32>
    %c0_114 = arith.constant 0 : index
    %c0_115 = arith.constant 0 : index
    %176 = vector.load %arg10[%c0_114, %c0_115] : memref<512x128xf32, #tpu.memory_space<vmem>>, vector<512x128xf32>
    tpu.vector_store %arg10[%c0_114, %c0_115], %175 {strides = array<i32>} : memref<512x128xf32, #tpu.memory_space<vmem>>, vector<512x128xf32>,
    return
  }
}

</mosaic_0001>

<llo_original>
// kernel: bottleneck_forward.1
$region0: #{bottleneck_forward.1}
  #allocation0 [shape = 'u32[]', space=smem, size = 0x4, offset = 0x4, fixed_abs, tag = 'smem constant byte address 0x4 - core index']
  #allocation1 [shape = 'u32[144,128]{1,0:T(1,128)}', space=vmem, size = 0x12000, scoped, tag = 'internal scratch']
  #allocation2 [shape = 'f32[2,18,16,128]{3,2,1,0:T(8,128)}', space=vmem, size = 0x48000, scoped, tag = 'scratch operand']
  %s0 = inlined_call_operand.vmem [shape: f32[512,128], index: 0, kind: input, shape index: {}]
  %s1 = inlined_call_operand.vmem [shape: bf16[128,128], index: 1, kind: input, shape index: {}]
  %s2 = inlined_call_operand.vmem [shape: f32[1,128], index: 2, kind: input, shape index: {}]
  %s3 = inlined_call_operand.vmem [shape: f32[1,128], index: 3, kind: input, shape index: {}]
  %s4 = inlined_call_operand.vmem [shape: bf16[3,3,128,128], index: 4, kind: input, shape index: {}]
  %s5 = inlined_call_operand.vmem [shape: f32[1,128], index: 5, kind: input, shape index: {}]
  %s6 = inlined_call_operand.vmem [shape: f32[1,128], index: 6, kind: input, shape index: {}]
  %s7 = inlined_call_operand.vmem [shape: bf16[128,128], index: 7, kind: input, shape index: {}]
  %s8 = inlined_call_operand.vmem [shape: f32[1,128], index: 8, kind: input, shape index: {}]
  %s9 = inlined_call_operand.vmem [shape: f32[1,128], index: 9, kind: input, shape index: {}]
  %s10 = inlined_call_operand.vmem [shape: f32[512,128], index: 10, kind: output, shape index: {}]
  %s11 = sld [smem:[#allocation0]]
  $region50: #{bottleneck_forward.1} parent=0
    _
  %s13 = ssub.s32 1, %s11
  %s14 = scalar_select 0, %s13, %s11
  // Predicated region
  $region2: #{bottleneck_forward.1} parent=0 // pred_check
    _
  $region3: #{bottleneck_forward.1} parent=0 // pred_check_branch
    %16 = sbr.rel (0) target = $region5
  $region4: #{bottleneck_forward.1} parent=0 // pred_region
    _
  $region5: #{bottleneck_forward.1} parent=0 // pred_fallthru
    _
  // Predicated region
  $region6: #{bottleneck_forward.1} parent=0 // pred_check
    _
  $region7: #{bottleneck_forward.1} parent=0 // pred_check_branch
    %18 = sbr.rel (0) target = $region9
  $region8: #{bottleneck_forward.1} parent=0 // pred_region
    _
  $region9: #{bottleneck_forward.1} parent=0 // pred_fallthru
    _
  // Predicated region
  $region10: #{bottleneck_forward.1} parent=0 // pred_check
    _
  $region11: #{bottleneck_forward.1} parent=0 // pred_check_branch
    %20 = sbr.rel (0) target = $region13
  $region12: #{bottleneck_forward.1} parent=0 // pred_region
    _
  $region13: #{bottleneck_forward.1} parent=0 // pred_fallthru
    _
  // Predicated region
  $region14: #{bottleneck_forward.1} parent=0 // pred_check
    _
  $region15: #{bottleneck_forward.1} parent=0 // pred_check_branch
    %22 = sbr.rel (0) target = $region17
  $region16: #{bottleneck_forward.1} parent=0 // pred_region
    _
  $region17: #{bottleneck_forward.1} parent=0 // pred_fallthru
    _
  // Predicated region
  $region18: #{bottleneck_forward.1} parent=0 // pred_check
    _
  $region19: #{bottleneck_forward.1} parent=0 // pred_check_branch
    %24 = sbr.rel (0) target = $region21
  $region20: #{bottleneck_forward.1} parent=0 // pred_region
    _
  $region21: #{bottleneck_forward.1} parent=0 // pred_fallthru
    _
  // Predicated region
  $region22: #{bottleneck_forward.1} parent=0 // pred_check
    _
  $region23: #{bottleneck_forward.1} parent=0 // pred_check_branch
    %26 = sbr.rel (0) target = $region25
  $region24: #{bottleneck_forward.1} parent=0 // pred_region
    _
  $region25: #{bottleneck_forward.1} parent=0 // pred_fallthru
    _
  // Predicated region
  $region26: #{bottleneck_forward.1} parent=0 // pred_check
    _
  $region27: #{bottleneck_forward.1} parent=0 // pred_check_branch
    %28 = sbr.rel (0) target = $region29
  $region28: #{bottleneck_forward.1} parent=0 // pred_region
    _
  $region29: #{bottleneck_forward.1} parent=0 // pred_fallthru
    _
  // Predicated region
  $region30: #{bottleneck_forward.1} parent=0 // pred_check
    _
  $region31: #{bottleneck_forward.1} parent=0 // pred_check_branch
    %30 = sbr.rel (0) target = $region33
  $region32: #{bottleneck_forward.1} parent=0 // pred_region
    _
  $region33: #{bottleneck_forward.1} parent=0 // pred_fallthru
    _
  // Predicated region
  $region34: #{bottleneck_forward.1} parent=0 // pred_check
    _
  $region35: #{bottleneck_forward.1} parent=0 // pred_check_branch
    %32 = sbr.rel (0) target = $region37
  $region36: #{bottleneck_forward.1} parent=0 // pred_region
    _
  $region37: #{bottleneck_forward.1} parent=0 // pred_fallthru
    _
  // Predicated region
  $region38: #{bottleneck_forward.1} parent=0 // pred_check
    _
  $region39: #{bottleneck_forward.1} parent=0 // pred_check_branch
    %34 = sbr.rel (0) target = $region41
  $region40: #{bottleneck_forward.1} parent=0 // pred_region
    _
  $region41: #{bottleneck_forward.1} parent=0 // pred_fallthru
    _
  %v36 = vld [vmem:[%s0] sm:$0xff]
  %v37 = vld [vmem:[%s0 + $0x8] sm:$0xff]
  %v38 = vld [vmem:[%s0 + $0x10] sm:$0xff]
  %v39 = vld [vmem:[%s0 + $0x18] sm:$0xff]
  %v40 = vld [vmem:[%s0 + $0x20] sm:$0xff]
  %v41 = vld [vmem:[%s0 + $0x28] sm:$0xff]
  %v42 = vld [vmem:[%s0 + $0x30] sm:$0xff]
  %v43 = vld [vmem:[%s0 + $0x38] sm:$0xff]
  %v44 = vld [vmem:[%s0 + $0x40] sm:$0xff]
  %v45 = vld [vmem:[%s0 + $0x48] sm:$0xff]
  %v46 = vld [vmem:[%s0 + $0x50] sm:$0xff]
  %v47 = vld [vmem:[%s0 + $0x58] sm:$0xff]
  %v48 = vld [vmem:[%s0 + $0x60] sm:$0xff]
  %v49 = vld [vmem:[%s0 + $0x68] sm:$0xff]
  %v50 = vld [vmem:[%s0 + $0x70] sm:$0xff]
  %v51 = vld [vmem:[%s0 + $0x78] sm:$0xff]
  %v52 = vld [vmem:[%s0 + $0x80] sm:$0xff]
  %v53 = vld [vmem:[%s0 + $0x88] sm:$0xff]
  %v54 = vld [vmem:[%s0 + $0x90] sm:$0xff]
  %v55 = vld [vmem:[%s0 + $0x98] sm:$0xff]
  %v56 = vld [vmem:[%s0 + $0xa0] sm:$0xff]
  %v57 = vld [vmem:[%s0 + $0xa8] sm:$0xff]
  %v58 = vld [vmem:[%s0 + $0xb0] sm:$0xff]
  %v59 = vld [vmem:[%s0 + $0xb8] sm:$0xff]
  %v60 = vld [vmem:[%s0 + $0xc0] sm:$0xff]
  %v61 = vld [vmem:[%s0 + $0xc8] sm:$0xff]
  %v62 = vld [vmem:[%s0 + $0xd0] sm:$0xff]
  %v63 = vld [vmem:[%s0 + $0xd8] sm:$0xff]
  %v64 = vld [vmem:[%s0 + $0xe0] sm:$0xff]
  %v65 = vld [vmem:[%s0 + $0xe8] sm:$0xff]
  %v66 = vld [vmem:[%s0 + $0xf0] sm:$0xff]
  %v67 = vld [vmem:[%s0 + $0xf8] sm:$0xff]
  %v68 = vld [vmem:[%s0 + $0x100] sm:$0xff]
  %v69 = vld [vmem:[%s0 + $0x108] sm:$0xff]
  %v70 = vld [vmem:[%s0 + $0x110] sm:$0xff]
  %v71 = vld [vmem:[%s0 + $0x118] sm:$0xff]
  %v72 = vld [vmem:[%s0 + $0x120] sm:$0xff]
  %v73 = vld [vmem:[%s0 + $0x128] sm:$0xff]
  %v74 = vld [vmem:[%s0 + $0x130] sm:$0xff]
  %v75 = vld [vmem:[%s0 + $0x138] sm:$0xff]
  %v76 = vld [vmem:[%s0 + $0x140] sm:$0xff]
  %v77 = vld [vmem:[%s0 + $0x148] sm:$0xff]
  %v78 = vld [vmem:[%s0 + $0x150] sm:$0xff]
  %v79 = vld [vmem:[%s0 + $0x158] sm:$0xff]
  %v80 = vld [vmem:[%s0 + $0x160] sm:$0xff]
  %v81 = vld [vmem:[%s0 + $0x168] sm:$0xff]
  %v82 = vld [vmem:[%s0 + $0x170] sm:$0xff]
  %v83 = vld [vmem:[%s0 + $0x178] sm:$0xff]
  %v84 = vld [vmem:[%s0 + $0x180] sm:$0xff]
  %v85 = vld [vmem:[%s0 + $0x188] sm:$0xff]
  %v86 = vld [vmem:[%s0 + $0x190] sm:$0xff]
  %v87 = vld [vmem:[%s0 + $0x198] sm:$0xff]
  %v88 = vld [vmem:[%s0 + $0x1a0] sm:$0xff]
  %v89 = vld [vmem:[%s0 + $0x1a8] sm:$0xff]
  %v90 = vld [vmem:[%s0 + $0x1b0] sm:$0xff]
  %v91 = vld [vmem:[%s0 + $0x1b8] sm:$0xff]
  %v92 = vld [vmem:[%s0 + $0x1c0] sm:$0xff]
  %v93 = vld [vmem:[%s0 + $0x1c8] sm:$0xff]
  %v94 = vld [vmem:[%s0 + $0x1d0] sm:$0xff]
  %v95 = vld [vmem:[%s0 + $0x1d8] sm:$0xff]
  %v96 = vld [vmem:[%s0 + $0x1e0] sm:$0xff]
  %v97 = vld [vmem:[%s0 + $0x1e8] sm:$0xff]
  %v98 = vld [vmem:[%s0 + $0x1f0] sm:$0xff]
  %v99 = vld [vmem:[%s0 + $0x1f8] sm:$0xff]
  %v100 = vpack.c.bf16 %v37, %v36
  %v101 = vpack.c.bf16 %v39, %v38
  %v102 = vpack.c.bf16 %v41, %v40
  %v103 = vpack.c.bf16 %v43, %v42
  %v104 = vpack.c.bf16 %v45, %v44
  %v105 = vpack.c.bf16 %v47, %v46
  %v106 = vpack.c.bf16 %v49, %v48
  %v107 = vpack.c.bf16 %v51, %v50
  %v108 = vpack.c.bf16 %v53, %v52
  %v109 = vpack.c.bf16 %v55, %v54
  %v110 = vpack.c.bf16 %v57, %v56
  %v111 = vpack.c.bf16 %v59, %v58
  %v112 = vpack.c.bf16 %v61, %v60
  %v113 = vpack.c.bf16 %v63, %v62
  %v114 = vpack.c.bf16 %v65, %v64
  %v115 = vpack.c.bf16 %v67, %v66
  %v116 = vpack.c.bf16 %v69, %v68
  %v117 = vpack.c.bf16 %v71, %v70
  %v118 = vpack.c.bf16 %v73, %v72
  %v119 = vpack.c.bf16 %v75, %v74
  %v120 = vpack.c.bf16 %v77, %v76
  %v121 = vpack.c.bf16 %v79, %v78
  %v122 = vpack.c.bf16 %v81, %v80
  %v123 = vpack.c.bf16 %v83, %v82
  %v124 = vpack.c.bf16 %v85, %v84
  %v125 = vpack.c.bf16 %v87, %v86
  %v126 = vpack.c.bf16 %v89, %v88
  %v127 = vpack.c.bf16 %v91, %v90
  %v128 = vpack.c.bf16 %v93, %v92
  %v129 = vpack.c.bf16 %v95, %v94
  %v130 = vpack.c.bf16 %v97, %v96
  %v131 = vpack.c.bf16 %v99, %v98
  %v132 = vld [vmem:[%s1] sm:$0xf]
  %v133 = vld [vmem:[%s1 + $0x4] sm:$0xf]
  %v134 = vld [vmem:[%s1 + $0x8] sm:$0xf]
  %v135 = vld [vmem:[%s1 + $0xc] sm:$0xf]
  %v136 = vld [vmem:[%s1 + $0x10] sm:$0xf]
  %v137 = vld [vmem:[%s1 + $0x14] sm:$0xf]
  %v138 = vld [vmem:[%s1 + $0x18] sm:$0xf]
  %v139 = vld [vmem:[%s1 + $0x1c] sm:$0xf]
  %v140 = vld [vmem:[%s1 + $0x20] sm:$0xf]
  %v141 = vld [vmem:[%s1 + $0x24] sm:$0xf]
  %v142 = vld [vmem:[%s1 + $0x28] sm:$0xf]
  %v143 = vld [vmem:[%s1 + $0x2c] sm:$0xf]
  %v144 = vld [vmem:[%s1 + $0x30] sm:$0xf]
  %v145 = vld [vmem:[%s1 + $0x34] sm:$0xf]
  %v146 = vld [vmem:[%s1 + $0x38] sm:$0xf]
  %v147 = vld [vmem:[%s1 + $0x3c] sm:$0xf]
  %v164 = vunpack.c.l.b16 %v132
  %v165 = vunpack.c.l.b16 %v133
  %v166 = vunpack.c.l.b16 %v134
  %v167 = vunpack.c.l.b16 %v135
  %v168 = vunpack.c.l.b16 %v136
  %v169 = vunpack.c.l.b16 %v137
  %v170 = vunpack.c.l.b16 %v138
  %v171 = vunpack.c.l.b16 %v139
  %v172 = vunpack.c.l.b16 %v140
  %v173 = vunpack.c.l.b16 %v141
  %v174 = vunpack.c.l.b16 %v142
  %v175 = vunpack.c.l.b16 %v143
  %v176 = vunpack.c.l.b16 %v144
  %v177 = vunpack.c.l.b16 %v145
  %v178 = vunpack.c.l.b16 %v146
  %v179 = vunpack.c.l.b16 %v147
  %v180 = vpack.c.b16 %v165, %v164
  %v181 = vpack.c.b16 %v167, %v166
  %v182 = vpack.c.b16 %v169, %v168
  %v183 = vpack.c.b16 %v171, %v170
  %v184 = vpack.c.b16 %v173, %v172
  %v185 = vpack.c.b16 %v175, %v174
  %v186 = vpack.c.b16 %v177, %v176
  %v187 = vpack.c.b16 %v179, %v178
  %196 = vmatprep.subr.bf16.mxu0 0
  %197 = vmatpush1.bf16.msra.mxu0 %v187
  %198 = vmatprep.subr.bf16.mxu0 0
  %199 = vmatpush1.bf16.msra.mxu0 %v186
  %200 = vmatprep.subr.bf16.mxu0 0
  %201 = vmatpush1.bf16.msra.mxu0 %v185
  %202 = vmatprep.subr.bf16.mxu0 0
  %203 = vmatpush1.bf16.msra.mxu0 %v184
  %204 = vmatprep.subr.bf16.mxu0 0
  %205 = vmatpush1.bf16.msra.mxu0 %v183
  %206 = vmatprep.subr.bf16.mxu0 0
  %207 = vmatpush1.bf16.msra.mxu0 %v182
  %208 = vmatprep.subr.bf16.mxu0 0
  %209 = vmatpush1.bf16.msra.mxu0 %v181
  %210 = vmatprep.subr.bf16.mxu0 0
  %211 = vmatpush1.bf16.msra.mxu0 %v180
  %212 = vmatprep.subr.bf16.mxu0 0
  %213 = vmatpush2.bf16.msra.mxu0 0
  %214 = vmatprep.subr.bf16.mxu0 0
  %215 = vmatpush2.bf16.msra.mxu0 0
  %216 = vmatprep.subr.bf16.mxu0 0
  %217 = vmatpush2.bf16.msra.mxu0 0
  %218 = vmatprep.subr.bf16.mxu0 0
  %219 = vmatpush2.bf16.msra.mxu0 0
  %220 = vmatprep.subr.bf16.mxu0 0
  %221 = vmatpush2.bf16.msra.mxu0 0
  %222 = vmatprep.subr.bf16.mxu0 0
  %223 = vmatpush2.bf16.msra.mxu0 0
  %224 = vmatprep.subr.bf16.mxu0 0
  %225 = vmatpush2.bf16.msra.mxu0 0
  %226 = vmatprep.subr.bf16.mxu0 0
  %227 = vmatpush2.bf16.msra.mxu0 0
  %228 = vmatprep.mubr.bf16.mxu0 0
  %229 = vmatmul.mubr.bf16.gmra.mxu0 %v100
  %v230 = vpop.f32.mrf.mxu0
  %v231 = vadd.f32 0.0, %v230
  %v232 = vpop.f32.mrf.mxu0
  %v233 = vpop.f32.mrf.mxu0
  %v234 = vadd.f32 0.0, %v233
  %v235 = vpop.f32.mrf.mxu0
  %236 = vmatprep.mubr.bf16.mxu0 0
  %237 = vmatmul.mubr.bf16.gmra.mxu0 %v101
  %v238 = vpop.f32.mrf.mxu0
  %v239 = vadd.f32 0.0, %v238
  %v240 = vpop.f32.mrf.mxu0
  %v241 = vpop.f32.mrf.mxu0
  %v242 = vadd.f32 0.0, %v241
  %v243 = vpop.f32.mrf.mxu0
  %244 = vmatprep.mubr.bf16.mxu0 0
  %245 = vmatmul.mubr.bf16.gmra.mxu0 %v102
  %v246 = vpop.f32.mrf.mxu0
  %v247 = vadd.f32 0.0, %v246
  %v248 = vpop.f32.mrf.mxu0
  %v249 = vpop.f32.mrf.mxu0
  %v250 = vadd.f32 0.0, %v249
  %v251 = vpop.f32.mrf.mxu0
  %252 = vmatprep.mubr.bf16.mxu0 0
  %253 = vmatmul.mubr.bf16.gmra.mxu0 %v103
  %v254 = vpop.f32.mrf.mxu0
  %v255 = vadd.f32 0.0, %v254
  %v256 = vpop.f32.mrf.mxu0
  %v257 = vpop.f32.mrf.mxu0
  %v258 = vadd.f32 0.0, %v257
  %v259 = vpop.f32.mrf.mxu0
  %260 = vmatprep.mubr.bf16.mxu0 0
  %261 = vmatmul.mubr.bf16.gmra.mxu0 %v104
  %v262 = vpop.f32.mrf.mxu0
  %v263 = vadd.f32 0.0, %v262
  %v264 = vpop.f32.mrf.mxu0
  %v265 = vpop.f32.mrf.mxu0
  %v266 = vadd.f32 0.0, %v265
  %v267 = vpop.f32.mrf.mxu0
  %268 = vmatprep.mubr.bf16.mxu0 0
  %269 = vmatmul.mubr.bf16.gmra.mxu0 %v105
  %v270 = vpop.f32.mrf.mxu0
  %v271 = vadd.f32 0.0, %v270
  %v272 = vpop.f32.mrf.mxu0
  %v273 = vpop.f32.mrf.mxu0
  %v274 = vadd.f32 0.0, %v273
  %v275 = vpop.f32.mrf.mxu0
  %276 = vmatprep.mubr.bf16.mxu0 0
  %277 = vmatmul.mubr.bf16.gmra.mxu0 %v106
  %v278 = vpop.f32.mrf.mxu0
  %v279 = vadd.f32 0.0, %v278
  %v280 = vpop.f32.mrf.mxu0
  %v281 = vpop.f32.mrf.mxu0
  %v282 = vadd.f32 0.0, %v281
  %v283 = vpop.f32.mrf.mxu0
  %284 = vmatprep.mubr.bf16.mxu0 0
  %285 = vmatmul.mubr.bf16.gmra.mxu0 %v107
  %v286 = vpop.f32.mrf.mxu0
  %v287 = vadd.f32 0.0, %v286
  %v288 = vpop.f32.mrf.mxu0
  %v289 = vpop.f32.mrf.mxu0
  %v290 = vadd.f32 0.0, %v289
  %v291 = vpop.f32.mrf.mxu0
  %292 = vmatprep.mubr.bf16.mxu0 0
  %293 = vmatmul.mubr.bf16.gmra.mxu0 %v108
  %v294 = vpop.f32.mrf.mxu0
  %v295 = vadd.f32 0.0, %v294
  %v296 = vpop.f32.mrf.mxu0
  %v297 = vpop.f32.mrf.mxu0
  %v298 = vadd.f32 0.0, %v297
  %v299 = vpop.f32.mrf.mxu0
  %300 = vmatprep.mubr.bf16.mxu0 0
  %301 = vmatmul.mubr.bf16.gmra.mxu0 %v109
  %v302 = vpop.f32.mrf.mxu0
  %v303 = vadd.f32 0.0, %v302
  %v304 = vpop.f32.mrf.mxu0
  %v305 = vpop.f32.mrf.mxu0
  %v306 = vadd.f32 0.0, %v305
  %v307 = vpop.f32.mrf.mxu0
  %308 = vmatprep.mubr.bf16.mxu0 0
  %309 = vmatmul.mubr.bf16.gmra.mxu0 %v110
  %v310 = vpop.f32.mrf.mxu0
  %v311 = vadd.f32 0.0, %v310
  %v312 = vpop.f32.mrf.mxu0
  %v313 = vpop.f32.mrf.mxu0
  %v314 = vadd.f32 0.0, %v313
  %v315 = vpop.f32.mrf.mxu0
  %316 = vmatprep.mubr.bf16.mxu0 0
  %317 = vmatmul.mubr.bf16.gmra.mxu0 %v111
  %v318 = vpop.f32.mrf.mxu0
  %v319 = vadd.f32 0.0, %v318
  %v320 = vpop.f32.mrf.mxu0
  %v321 = vpop.f32.mrf.mxu0
  %v322 = vadd.f32 0.0, %v321
  %v323 = vpop.f32.mrf.mxu0
  %324 = vmatprep.mubr.bf16.mxu0 0
  %325 = vmatmul.mubr.bf16.gmra.mxu0 %v112
  %v326 = vpop.f32.mrf.mxu0
  %v327 = vadd.f32 0.0, %v326
  %v328 = vpop.f32.mrf.mxu0
  %v329 = vpop.f32.mrf.mxu0
  %v330 = vadd.f32 0.0, %v329
  %v331 = vpop.f32.mrf.mxu0
  %332 = vmatprep.mubr.bf16.mxu0 0
  %333 = vmatmul.mubr.bf16.gmra.mxu0 %v113
  %v334 = vpop.f32.mrf.mxu0
  %v335 = vadd.f32 0.0, %v334
  %v336 = vpop.f32.mrf.mxu0
  %v337 = vpop.f32.mrf.mxu0
  %v338 = vadd.f32 0.0, %v337
  %v339 = vpop.f32.mrf.mxu0
  %340 = vmatprep.mubr.bf16.mxu0 0
  %341 = vmatmul.mubr.bf16.gmra.mxu0 %v114
  %v342 = vpop.f32.mrf.mxu0
  %v343 = vadd.f32 0.0, %v342
  %v344 = vpop.f32.mrf.mxu0
  %v345 = vpop.f32.mrf.mxu0
  %v346 = vadd.f32 0.0, %v345
  %v347 = vpop.f32.mrf.mxu0
  %348 = vmatprep.mubr.bf16.mxu0 0
  %349 = vmatmul.mubr.bf16.gmra.mxu0 %v115
  %v350 = vpop.f32.mrf.mxu0
  %v351 = vadd.f32 0.0, %v350
  %v352 = vpop.f32.mrf.mxu0
  %v353 = vpop.f32.mrf.mxu0
  %v354 = vadd.f32 0.0, %v353
  %v355 = vpop.f32.mrf.mxu0
  %356 = vmatprep.mubr.bf16.mxu0 0
  %357 = vmatmul.mubr.bf16.gmra.mxu0 %v116
  %v358 = vpop.f32.mrf.mxu0
  %v359 = vadd.f32 0.0, %v358
  %v360 = vpop.f32.mrf.mxu0
  %v361 = vpop.f32.mrf.mxu0
  %v362 = vadd.f32 0.0, %v361
  %v363 = vpop.f32.mrf.mxu0
  %364 = vmatprep.mubr.bf16.mxu0 0
  %365 = vmatmul.mubr.bf16.gmra.mxu0 %v117
  %v366 = vpop.f32.mrf.mxu0
  %v367 = vadd.f32 0.0, %v366
  %v368 = vpop.f32.mrf.mxu0
  %v369 = vpop.f32.mrf.mxu0
  %v370 = vadd.f32 0.0, %v369
  %v371 = vpop.f32.mrf.mxu0
  %372 = vmatprep.mubr.bf16.mxu0 0
  %373 = vmatmul.mubr.bf16.gmra.mxu0 %v118
  %v374 = vpop.f32.mrf.mxu0
  %v375 = vadd.f32 0.0, %v374
  %v376 = vpop.f32.mrf.mxu0
  %v377 = vpop.f32.mrf.mxu0
  %v378 = vadd.f32 0.0, %v377
  %v379 = vpop.f32.mrf.mxu0
  %380 = vmatprep.mubr.bf16.mxu0 0
  %381 = vmatmul.mubr.bf16.gmra.mxu0 %v119
  %v382 = vpop.f32.mrf.mxu0
  %v383 = vadd.f32 0.0, %v382
  %v384 = vpop.f32.mrf.mxu0
  %v385 = vpop.f32.mrf.mxu0
  %v386 = vadd.f32 0.0, %v385
  %v387 = vpop.f32.mrf.mxu0
  %388 = vmatprep.mubr.bf16.mxu0 0
  %389 = vmatmul.mubr.bf16.gmra.mxu0 %v120
  %v390 = vpop.f32.mrf.mxu0
  %v391 = vadd.f32 0.0, %v390
  %v392 = vpop.f32.mrf.mxu0
  %v393 = vpop.f32.mrf.mxu0
  %v394 = vadd.f32 0.0, %v393
  %v395 = vpop.f32.mrf.mxu0
  %396 = vmatprep.mubr.bf16.mxu0 0
  %397 = vmatmul.mubr.bf16.gmra.mxu0 %v121
  %v398 = vpop.f32.mrf.mxu0
  %v399 = vadd.f32 0.0, %v398
  %v400 = vpop.f32.mrf.mxu0
  %v401 = vpop.f32.mrf.mxu0
  %v402 = vadd.f32 0.0, %v401
  %v403 = vpop.f32.mrf.mxu0
  %404 = vmatprep.mubr.bf16.mxu0 0
  %405 = vmatmul.mubr.bf16.gmra.mxu0 %v122
  %v406 = vpop.f32.mrf.mxu0
  %v407 = vadd.f32 0.0, %v406
  %v408 = vpop.f32.mrf.mxu0
  %v409 = vpop.f32.mrf.mxu0
  %v410 = vadd.f32 0.0, %v409
  %v411 = vpop.f32.mrf.mxu0
  %412 = vmatprep.mubr.bf16.mxu0 0
  %413 = vmatmul.mubr.bf16.gmra.mxu0 %v123
  %v414 = vpop.f32.mrf.mxu0
  %v415 = vadd.f32 0.0, %v414
  %v416 = vpop.f32.mrf.mxu0
  %v417 = vpop.f32.mrf.mxu0
  %v418 = vadd.f32 0.0, %v417
  %v419 = vpop.f32.mrf.mxu0
  %420 = vmatprep.mubr.bf16.mxu0 0
  %421 = vmatmul.mubr.bf16.gmra.mxu0 %v124
  %v422 = vpop.f32.mrf.mxu0
  %v423 = vadd.f32 0.0, %v422
  %v424 = vpop.f32.mrf.mxu0
  %v425 = vpop.f32.mrf.mxu0
  %v426 = vadd.f32 0.0, %v425
  %v427 = vpop.f32.mrf.mxu0
  %428 = vmatprep.mubr.bf16.mxu0 0
  %429 = vmatmul.mubr.bf16.gmra.mxu0 %v125
  %v430 = vpop.f32.mrf.mxu0
  %v431 = vadd.f32 0.0, %v430
  %v432 = vpop.f32.mrf.mxu0
  %v433 = vpop.f32.mrf.mxu0
  %v434 = vadd.f32 0.0, %v433
  %v435 = vpop.f32.mrf.mxu0
  %436 = vmatprep.mubr.bf16.mxu0 0
  %437 = vmatmul.mubr.bf16.gmra.mxu0 %v126
  %v438 = vpop.f32.mrf.mxu0
  %v439 = vadd.f32 0.0, %v438
  %v440 = vpop.f32.mrf.mxu0
  %v441 = vpop.f32.mrf.mxu0
  %v442 = vadd.f32 0.0, %v441
  %v443 = vpop.f32.mrf.mxu0
  %444 = vmatprep.mubr.bf16.mxu0 0
  %445 = vmatmul.mubr.bf16.gmra.mxu0 %v127
  %v446 = vpop.f32.mrf.mxu0
  %v447 = vadd.f32 0.0, %v446
  %v448 = vpop.f32.mrf.mxu0
  %v449 = vpop.f32.mrf.mxu0
  %v450 = vadd.f32 0.0, %v449
  %v451 = vpop.f32.mrf.mxu0
  %452 = vmatprep.mubr.bf16.mxu0 0
  %453 = vmatmul.mubr.bf16.gmra.mxu0 %v128
  %v454 = vpop.f32.mrf.mxu0
  %v455 = vadd.f32 0.0, %v454
  %v456 = vpop.f32.mrf.mxu0
  %v457 = vpop.f32.mrf.mxu0
  %v458 = vadd.f32 0.0, %v457
  %v459 = vpop.f32.mrf.mxu0
  %460 = vmatprep.mubr.bf16.mxu0 0
  %461 = vmatmul.mubr.bf16.gmra.mxu0 %v129
  %v462 = vpop.f32.mrf.mxu0
  %v463 = vadd.f32 0.0, %v462
  %v464 = vpop.f32.mrf.mxu0
  %v465 = vpop.f32.mrf.mxu0
  %v466 = vadd.f32 0.0, %v465
  %v467 = vpop.f32.mrf.mxu0
  %468 = vmatprep.mubr.bf16.mxu0 0
  %469 = vmatmul.mubr.bf16.gmra.mxu0 %v130
  %v470 = vpop.f32.mrf.mxu0
  %v471 = vadd.f32 0.0, %v470
  %v472 = vpop.f32.mrf.mxu0
  %v473 = vpop.f32.mrf.mxu0
  %v474 = vadd.f32 0.0, %v473
  %v475 = vpop.f32.mrf.mxu0
  %476 = vmatprep.mubr.bf16.mxu0 0
  %477 = vmatmul.mubr.bf16.gmra.mxu0 %v131
  %v478 = vpop.f32.mrf.mxu0
  %v479 = vadd.f32 0.0, %v478
  %v480 = vpop.f32.mrf.mxu0
  %v481 = vpop.f32.mrf.mxu0
  %v482 = vadd.f32 0.0, %v481
  %v483 = vpop.f32.mrf.mxu0
  %484 = vdwg.mxu0
  %v485 = vld [vmem:[%s2] sm:$0x1]
  %v486 = vld [vmem:[%s3] sm:$0x1]
  %v487 = vadd.f32 %v231, %v234
  %v488 = vadd.f32 %v487, %v239
  %v489 = vadd.f32 %v488, %v242
  %v490 = vadd.f32 %v489, %v247
  %v491 = vadd.f32 %v490, %v250
  %v492 = vadd.f32 %v491, %v255
  %v493 = vadd.f32 %v492, %v258
  %v494 = vadd.f32 %v493, %v263
  %v495 = vadd.f32 %v494, %v266
  %v496 = vadd.f32 %v495, %v271
  %v497 = vadd.f32 %v496, %v274
  %v498 = vadd.f32 %v497, %v279
  %v499 = vadd.f32 %v498, %v282
  %v500 = vadd.f32 %v499, %v287
  %v501 = vadd.f32 %v500, %v290
  %v502 = vadd.f32 %v501, %v295
  %v503 = vadd.f32 %v502, %v298
  %v504 = vadd.f32 %v503, %v303
  %v505 = vadd.f32 %v504, %v306
  %v506 = vadd.f32 %v505, %v311
  %v507 = vadd.f32 %v506, %v314
  %v508 = vadd.f32 %v507, %v319
  %v509 = vadd.f32 %v508, %v322
  %v510 = vadd.f32 %v509, %v327
  %v511 = vadd.f32 %v510, %v330
  %v512 = vadd.f32 %v511, %v335
  %v513 = vadd.f32 %v512, %v338
  %v514 = vadd.f32 %v513, %v343
  %v515 = vadd.f32 %v514, %v346
  %v516 = vadd.f32 %v515, %v351
  %v517 = vadd.f32 %v516, %v354
  %v518 = vadd.f32 %v517, %v359
  %v519 = vadd.f32 %v518, %v362
  %v520 = vadd.f32 %v519, %v367
  %v521 = vadd.f32 %v520, %v370
  %v522 = vadd.f32 %v521, %v375
  %v523 = vadd.f32 %v522, %v378
  %v524 = vadd.f32 %v523, %v383
  %v525 = vadd.f32 %v524, %v386
  %v526 = vadd.f32 %v525, %v391
  %v527 = vadd.f32 %v526, %v394
  %v528 = vadd.f32 %v527, %v399
  %v529 = vadd.f32 %v528, %v402
  %v530 = vadd.f32 %v529, %v407
  %v531 = vadd.f32 %v530, %v410
  %v532 = vadd.f32 %v531, %v415
  %v533 = vadd.f32 %v532, %v418
  %v534 = vadd.f32 %v533, %v423
  %v535 = vadd.f32 %v534, %v426
  %v536 = vadd.f32 %v535, %v431
  %v537 = vadd.f32 %v536, %v434
  %v538 = vadd.f32 %v537, %v439
  %v539 = vadd.f32 %v538, %v442
  %v540 = vadd.f32 %v539, %v447
  %v541 = vadd.f32 %v540, %v450
  %v542 = vadd.f32 %v541, %v455
  %v543 = vadd.f32 %v542, %v458
  %v544 = vadd.f32 %v543, %v463
  %v545 = vadd.f32 %v544, %v466
  %v546 = vadd.f32 %v545, %v471
  %v547 = vadd.f32 %v546, %v474
  %v548 = vadd.f32 %v547, %v479
  %v549 = vadd.f32 %v548, %v482
  %v550 = vrot.slane %v549, 4
  %v551 = vadd.f32 %v549, %v550
  %v552 = vrot.slane %v551, 2
  %v553 = vadd.f32 %v551, %v552
  %v554 = vrot.slane %v553, 1
  %v555 = vadd.f32 %v553, %v554
  %v556 = vmul.f32 %v555, 0.001953125
  %v557 = vsub.f32 %v231, %v556
  %v558 = vsub.f32 %v234, %v556
  %v559 = vsub.f32 %v239, %v556
  %v560 = vsub.f32 %v242, %v556
  %v561 = vsub.f32 %v247, %v556
  %v562 = vsub.f32 %v250, %v556
  %v563 = vsub.f32 %v255, %v556
  %v564 = vsub.f32 %v258, %v556
  %v565 = vsub.f32 %v263, %v556
  %v566 = vsub.f32 %v266, %v556
  %v567 = vsub.f32 %v271, %v556
  %v568 = vsub.f32 %v274, %v556
  %v569 = vsub.f32 %v279, %v556
  %v570 = vsub.f32 %v282, %v556
  %v571 = vsub.f32 %v287, %v556
  %v572 = vsub.f32 %v290, %v556
  %v573 = vsub.f32 %v295, %v556
  %v574 = vsub.f32 %v298, %v556
  %v575 = vsub.f32 %v303, %v556
  %v576 = vsub.f32 %v306, %v556
  %v577 = vsub.f32 %v311, %v556
  %v578 = vsub.f32 %v314, %v556
  %v579 = vsub.f32 %v319, %v556
  %v580 = vsub.f32 %v322, %v556
  %v581 = vsub.f32 %v327, %v556
  %v582 = vsub.f32 %v330, %v556
  %v583 = vsub.f32 %v335, %v556
  %v584 = vsub.f32 %v338, %v556
  %v585 = vsub.f32 %v343, %v556
  %v586 = vsub.f32 %v346, %v556
  %v587 = vsub.f32 %v351, %v556
  %v588 = vsub.f32 %v354, %v556
  %v589 = vsub.f32 %v359, %v556
  %v590 = vsub.f32 %v362, %v556
  %v591 = vsub.f32 %v367, %v556
  %v592 = vsub.f32 %v370, %v556
  %v593 = vsub.f32 %v375, %v556
  %v594 = vsub.f32 %v378, %v556
  %v595 = vsub.f32 %v383, %v556
  %v596 = vsub.f32 %v386, %v556
  %v597 = vsub.f32 %v391, %v556
  %v598 = vsub.f32 %v394, %v556
  %v599 = vsub.f32 %v399, %v556
  %v600 = vsub.f32 %v402, %v556
  %v601 = vsub.f32 %v407, %v556
  %v602 = vsub.f32 %v410, %v556
  %v603 = vsub.f32 %v415, %v556
  %v604 = vsub.f32 %v418, %v556
  %v605 = vsub.f32 %v423, %v556
  %v606 = vsub.f32 %v426, %v556
  %v607 = vsub.f32 %v431, %v556
  %v608 = vsub.f32 %v434, %v556
  %v609 = vsub.f32 %v439, %v556
  %v610 = vsub.f32 %v442, %v556
  %v611 = vsub.f32 %v447, %v556
  %v612 = vsub.f32 %v450, %v556
  %v613 = vsub.f32 %v455, %v556
  %v614 = vsub.f32 %v458, %v556
  %v615 = vsub.f32 %v463, %v556
  %v616 = vsub.f32 %v466, %v556
  %v617 = vsub.f32 %v471, %v556
  %v618 = vsub.f32 %v474, %v556
  %v619 = vsub.f32 %v479, %v556
  %v620 = vsub.f32 %v482, %v556
  %v621 = vmul.f32 %v557, %v557
  %v622 = vmul.f32 %v558, %v558
  %v623 = vmul.f32 %v559, %v559
  %v624 = vmul.f32 %v560, %v560
  %v625 = vmul.f32 %v561, %v561
  %v626 = vmul.f32 %v562, %v562
  %v627 = vmul.f32 %v563, %v563
  %v628 = vmul.f32 %v564, %v564
  %v629 = vmul.f32 %v565, %v565
  %v630 = vmul.f32 %v566, %v566
  %v631 = vmul.f32 %v567, %v567
  %v632 = vmul.f32 %v568, %v568
  %v633 = vmul.f32 %v569, %v569
  %v634 = vmul.f32 %v570, %v570
  %v635 = vmul.f32 %v571, %v571
  %v636 = vmul.f32 %v572, %v572
  %v637 = vmul.f32 %v573, %v573
  %v638 = vmul.f32 %v574, %v574
  %v639 = vmul.f32 %v575, %v575
  %v640 = vmul.f32 %v576, %v576
  %v641 = vmul.f32 %v577, %v577
  %v642 = vmul.f32 %v578, %v578
  %v643 = vmul.f32 %v579, %v579
  %v644 = vmul.f32 %v580, %v580
  %v645 = vmul.f32 %v581, %v581
  %v646 = vmul.f32 %v582, %v582
  %v647 = vmul.f32 %v583, %v583
  %v648 = vmul.f32 %v584, %v584
  %v649 = vmul.f32 %v585, %v585
  %v650 = vmul.f32 %v586, %v586
  %v651 = vmul.f32 %v587, %v587
  %v652 = vmul.f32 %v588, %v588
  %v653 = vmul.f32 %v589, %v589
  %v654 = vmul.f32 %v590, %v590
  %v655 = vmul.f32 %v591, %v591
  %v656 = vmul.f32 %v592, %v592
  %v657 = vmul.f32 %v593, %v593
  %v658 = vmul.f32 %v594, %v594
  %v659 = vmul.f32 %v595, %v595
  %v660 = vmul.f32 %v596, %v596
  %v661 = vmul.f32 %v597, %v597
  %v662 = vmul.f32 %v598, %v598
  %v663 = vmul.f32 %v599, %v599
  %v664 = vmul.f32 %v600, %v600
  %v665 = vmul.f32 %v601, %v601
  %v666 = vmul.f32 %v602, %v602
  %v667 = vmul.f32 %v603, %v603
  %v668 = vmul.f32 %v604, %v604
  %v669 = vmul.f32 %v605, %v605
  %v670 = vmul.f32 %v606, %v606
  %v671 = vmul.f32 %v607, %v607
  %v672 = vmul.f32 %v608, %v608
  %v673 = vmul.f32 %v609, %v609
  %v674 = vmul.f32 %v610, %v610
  %v675 = vmul.f32 %v611, %v611
  %v676 = vmul.f32 %v612, %v612
  %v677 = vmul.f32 %v613, %v613
  %v678 = vmul.f32 %v614, %v614
  %v679 = vmul.f32 %v615, %v615
  %v680 = vmul.f32 %v616, %v616
  %v681 = vmul.f32 %v617, %v617
  %v682 = vmul.f32 %v618, %v618
  %v683 = vmul.f32 %v619, %v619
  %v684 = vmul.f32 %v620, %v620
  %v685 = vadd.f32 %v621, %v622
  %v686 = vadd.f32 %v685, %v623
  %v687 = vadd.f32 %v686, %v624
  %v688 = vadd.f32 %v687, %v625
  %v689 = vadd.f32 %v688, %v626
  %v690 = vadd.f32 %v689, %v627
  %v691 = vadd.f32 %v690, %v628
  %v692 = vadd.f32 %v691, %v629
  %v693 = vadd.f32 %v692, %v630
  %v694 = vadd.f32 %v693, %v631
  %v695 = vadd.f32 %v694, %v632
  %v696 = vadd.f32 %v695, %v633
  %v697 = vadd.f32 %v696, %v634
  %v698 = vadd.f32 %v697, %v635
  %v699 = vadd.f32 %v698, %v636
  %v700 = vadd.f32 %v699, %v637
  %v701 = vadd.f32 %v700, %v638
  %v702 = vadd.f32 %v701, %v639
  %v703 = vadd.f32 %v702, %v640
  %v704 = vadd.f32 %v703, %v641
  %v705 = vadd.f32 %v704, %v642
  %v706 = vadd.f32 %v705, %v643
  %v707 = vadd.f32 %v706, %v644
  %v708 = vadd.f32 %v707, %v645
  %v709 = vadd.f32 %v708, %v646
  %v710 = vadd.f32 %v709, %v647
  %v711 = vadd.f32 %v710, %v648
  %v712 = vadd.f32 %v711, %v649
  %v713 = vadd.f32 %v712, %v650
  %v714 = vadd.f32 %v713, %v651
  %v715 = vadd.f32 %v714, %v652
  %v716 = vadd.f32 %v715, %v653
  %v717 = vadd.f32 %v716, %v654
  %v718 = vadd.f32 %v717, %v655
  %v719 = vadd.f32 %v718, %v656
  %v720 = vadd.f32 %v719, %v657
  %v721 = vadd.f32 %v720, %v658
  %v722 = vadd.f32 %v721, %v659
  %v723 = vadd.f32 %v722, %v660
  %v724 = vadd.f32 %v723, %v661
  %v725 = vadd.f32 %v724, %v662
  %v726 = vadd.f32 %v725, %v663
  %v727 = vadd.f32 %v726, %v664
  %v728 = vadd.f32 %v727, %v665
  %v729 = vadd.f32 %v728, %v666
  %v730 = vadd.f32 %v729, %v667
  %v731 = vadd.f32 %v730, %v668
  %v732 = vadd.f32 %v731, %v669
  %v733 = vadd.f32 %v732, %v670
  %v734 = vadd.f32 %v733, %v671
  %v735 = vadd.f32 %v734, %v672
  %v736 = vadd.f32 %v735, %v673
  %v737 = vadd.f32 %v736, %v674
  %v738 = vadd.f32 %v737, %v675
  %v739 = vadd.f32 %v738, %v676
  %v740 = vadd.f32 %v739, %v677
  %v741 = vadd.f32 %v740, %v678
  %v742 = vadd.f32 %v741, %v679
  %v743 = vadd.f32 %v742, %v680
  %v744 = vadd.f32 %v743, %v681
  %v745 = vadd.f32 %v744, %v682
  %v746 = vadd.f32 %v745, %v683
  %v747 = vadd.f32 %v746, %v684
  %v748 = vrot.slane %v747, 4
  %v749 = vadd.f32 %v747, %v748
  %v750 = vrot.slane %v749, 2
  %v751 = vadd.f32 %v749, %v750
  %v752 = vrot.slane %v751, 1
  %v753 = vadd.f32 %v751, %v752
  %v754 = vmul.f32 %v753, 0.001953125
  %v755 = vadd.f32 %v754, 1e-05
  %v756 = vrsqrt.pop %v755
  %v757 = vmul.f32 %v485, %v756
  %v759 = vlaneseq
  %v760 = vshrl.u32 %v759, 7
  %v761 = vsub.s32 0, %v760
  %v762 = vrot.slane %v757, %v761
  %v764 = vmul.f32 %v557, %v762
  %v765 = vmul.f32 %v558, %v762
  %v766 = vmul.f32 %v559, %v762
  %v767 = vmul.f32 %v560, %v762
  %v768 = vmul.f32 %v561, %v762
  %v769 = vmul.f32 %v562, %v762
  %v770 = vmul.f32 %v563, %v762
  %v771 = vmul.f32 %v564, %v762
  %v772 = vmul.f32 %v565, %v762
  %v773 = vmul.f32 %v566, %v762
  %v774 = vmul.f32 %v567, %v762
  %v775 = vmul.f32 %v568, %v762
  %v776 = vmul.f32 %v569, %v762
  %v777 = vmul.f32 %v570, %v762
  %v778 = vmul.f32 %v571, %v762
  %v779 = vmul.f32 %v572, %v762
  %v780 = vmul.f32 %v573, %v762
  %v781 = vmul.f32 %v574, %v762
  %v782 = vmul.f32 %v575, %v762
  %v783 = vmul.f32 %v576, %v762
  %v784 = vmul.f32 %v577, %v762
  %v785 = vmul.f32 %v578, %v762
  %v786 = vmul.f32 %v579, %v762
  %v787 = vmul.f32 %v580, %v762
  %v788 = vmul.f32 %v581, %v762
  %v789 = vmul.f32 %v582, %v762
  %v790 = vmul.f32 %v583, %v762
  %v791 = vmul.f32 %v584, %v762
  %v792 = vmul.f32 %v585, %v762
  %v793 = vmul.f32 %v586, %v762
  %v794 = vmul.f32 %v587, %v762
  %v795 = vmul.f32 %v588, %v762
  %v796 = vmul.f32 %v589, %v762
  %v797 = vmul.f32 %v590, %v762
  %v798 = vmul.f32 %v591, %v762
  %v799 = vmul.f32 %v592, %v762
  %v800 = vmul.f32 %v593, %v762
  %v801 = vmul.f32 %v594, %v762
  %v802 = vmul.f32 %v595, %v762
  %v803 = vmul.f32 %v596, %v762
  %v804 = vmul.f32 %v597, %v762
  %v805 = vmul.f32 %v598, %v762
  %v806 = vmul.f32 %v599, %v762
  %v807 = vmul.f32 %v600, %v762
  %v808 = vmul.f32 %v601, %v762
  %v809 = vmul.f32 %v602, %v762
  %v810 = vmul.f32 %v603, %v762
  %v811 = vmul.f32 %v604, %v762
  %v812 = vmul.f32 %v605, %v762
  %v813 = vmul.f32 %v606, %v762
  %v814 = vmul.f32 %v607, %v762
  %v815 = vmul.f32 %v608, %v762
  %v816 = vmul.f32 %v609, %v762
  %v817 = vmul.f32 %v610, %v762
  %v818 = vmul.f32 %v611, %v762
  %v819 = vmul.f32 %v612, %v762
  %v820 = vmul.f32 %v613, %v762
  %v821 = vmul.f32 %v614, %v762
  %v822 = vmul.f32 %v615, %v762
  %v823 = vmul.f32 %v616, %v762
  %v824 = vmul.f32 %v617, %v762
  %v825 = vmul.f32 %v618, %v762
  %v826 = vmul.f32 %v619, %v762
  %v827 = vmul.f32 %v620, %v762
  %v829 = vlaneseq
  %v830 = vshrl.u32 %v829, 7
  %v831 = vsub.s32 0, %v830
  %v832 = vrot.slane %v486, %v831
  %v834 = vadd.f32 %v764, %v832
  %v835 = vadd.f32 %v765, %v832
  %v836 = vadd.f32 %v766, %v832
  %v837 = vadd.f32 %v767, %v832
  %v838 = vadd.f32 %v768, %v832
  %v839 = vadd.f32 %v769, %v832
  %v840 = vadd.f32 %v770, %v832
  %v841 = vadd.f32 %v771, %v832
  %v842 = vadd.f32 %v772, %v832
  %v843 = vadd.f32 %v773, %v832
  %v844 = vadd.f32 %v774, %v832
  %v845 = vadd.f32 %v775, %v832
  %v846 = vadd.f32 %v776, %v832
  %v847 = vadd.f32 %v777, %v832
  %v848 = vadd.f32 %v778, %v832
  %v849 = vadd.f32 %v779, %v832
  %v850 = vadd.f32 %v780, %v832
  %v851 = vadd.f32 %v781, %v832
  %v852 = vadd.f32 %v782, %v832
  %v853 = vadd.f32 %v783, %v832
  %v854 = vadd.f32 %v784, %v832
  %v855 = vadd.f32 %v785, %v832
  %v856 = vadd.f32 %v786, %v832
  %v857 = vadd.f32 %v787, %v832
  %v858 = vadd.f32 %v788, %v832
  %v859 = vadd.f32 %v789, %v832
  %v860 = vadd.f32 %v790, %v832
  %v861 = vadd.f32 %v791, %v832
  %v862 = vadd.f32 %v792, %v832
  %v863 = vadd.f32 %v793, %v832
  %v864 = vadd.f32 %v794, %v832
  %v865 = vadd.f32 %v795, %v832
  %v866 = vadd.f32 %v796, %v832
  %v867 = vadd.f32 %v797, %v832
  %v868 = vadd.f32 %v798, %v832
  %v869 = vadd.f32 %v799, %v832
  %v870 = vadd.f32 %v800, %v832
  %v871 = vadd.f32 %v801, %v832
  %v872 = vadd.f32 %v802, %v832
  %v873 = vadd.f32 %v803, %v832
  %v874 = vadd.f32 %v804, %v832
  %v875 = vadd.f32 %v805, %v832
  %v876 = vadd.f32 %v806, %v832
  %v877 = vadd.f32 %v807, %v832
  %v878 = vadd.f32 %v808, %v832
  %v879 = vadd.f32 %v809, %v832
  %v880 = vadd.f32 %v810, %v832
  %v881 = vadd.f32 %v811, %v832
  %v882 = vadd.f32 %v812, %v832
  %v883 = vadd.f32 %v813, %v832
  %v884 = vadd.f32 %v814, %v832
  %v885 = vadd.f32 %v815, %v832
  %v886 = vadd.f32 %v816, %v832
  %v887 = vadd.f32 %v817, %v832
  %v888 = vadd.f32 %v818, %v832
  %v889 = vadd.f32 %v819, %v832
  %v890 = vadd.f32 %v820, %v832
  %v891 = vadd.f32 %v821, %v832
  %v892 = vadd.f32 %v822, %v832
  %v893 = vadd.f32 %v823, %v832
  %v894 = vadd.f32 %v824, %v832
  %v895 = vadd.f32 %v825, %v832
  %v896 = vadd.f32 %v826, %v832
  %v897 = vadd.f32 %v827, %v832
  %v898 = vmax.f32 %v834, 0.0
  %v899 = vmax.f32 %v835, 0.0
  %v900 = vmax.f32 %v836, 0.0
  %v901 = vmax.f32 %v837, 0.0
  %v902 = vmax.f32 %v838, 0.0
  %v903 = vmax.f32 %v839, 0.0
  %v904 = vmax.f32 %v840, 0.0
  %v905 = vmax.f32 %v841, 0.0
  %v906 = vmax.f32 %v842, 0.0
  %v907 = vmax.f32 %v843, 0.0
  %v908 = vmax.f32 %v844, 0.0
  %v909 = vmax.f32 %v845, 0.0
  %v910 = vmax.f32 %v846, 0.0
  %v911 = vmax.f32 %v847, 0.0
  %v912 = vmax.f32 %v848, 0.0
  %v913 = vmax.f32 %v849, 0.0
  %v914 = vmax.f32 %v850, 0.0
  %v915 = vmax.f32 %v851, 0.0
  %v916 = vmax.f32 %v852, 0.0
  %v917 = vmax.f32 %v853, 0.0
  %v918 = vmax.f32 %v854, 0.0
  %v919 = vmax.f32 %v855, 0.0
  %v920 = vmax.f32 %v856, 0.0
  %v921 = vmax.f32 %v857, 0.0
  %v922 = vmax.f32 %v858, 0.0
  %v923 = vmax.f32 %v859, 0.0
  %v924 = vmax.f32 %v860, 0.0
  %v925 = vmax.f32 %v861, 0.0
  %v926 = vmax.f32 %v862, 0.0
  %v927 = vmax.f32 %v863, 0.0
  %v928 = vmax.f32 %v864, 0.0
  %v929 = vmax.f32 %v865, 0.0
  %v930 = vmax.f32 %v866, 0.0
  %v931 = vmax.f32 %v867, 0.0
  %v932 = vmax.f32 %v868, 0.0
  %v933 = vmax.f32 %v869, 0.0
  %v934 = vmax.f32 %v870, 0.0
  %v935 = vmax.f32 %v871, 0.0
  %v936 = vmax.f32 %v872, 0.0
  %v937 = vmax.f32 %v873, 0.0
  %v938 = vmax.f32 %v874, 0.0
  %v939 = vmax.f32 %v875, 0.0
  %v940 = vmax.f32 %v876, 0.0
  %v941 = vmax.f32 %v877, 0.0
  %v942 = vmax.f32 %v878, 0.0
  %v943 = vmax.f32 %v879, 0.0
  %v944 = vmax.f32 %v880, 0.0
  %v945 = vmax.f32 %v881, 0.0
  %v946 = vmax.f32 %v882, 0.0
  %v947 = vmax.f32 %v883, 0.0
  %v948 = vmax.f32 %v884, 0.0
  %v949 = vmax.f32 %v885, 0.0
  %v950 = vmax.f32 %v886, 0.0
  %v951 = vmax.f32 %v887, 0.0
  %v952 = vmax.f32 %v888, 0.0
  %v953 = vmax.f32 %v889, 0.0
  %v954 = vmax.f32 %v890, 0.0
  %v955 = vmax.f32 %v891, 0.0
  %v956 = vmax.f32 %v892, 0.0
  %v957 = vmax.f32 %v893, 0.0
  %v958 = vmax.f32 %v894, 0.0
  %v959 = vmax.f32 %v895, 0.0
  %v960 = vmax.f32 %v896, 0.0
  %v961 = vmax.f32 %v897, 0.0
  %962 = vst [vmem:[#allocation2] sm:$0xff] 0.0
  %963 = vst [vmem:[#allocation2 + $0x8] sm:$0xff] 0.0
  %964 = vst [vmem:[#allocation2 + $0x120] sm:$0xff] 0.0
  %965 = vst [vmem:[#allocation2 + $0x128] sm:$0xff] 0.0
  %s966 = scalar_lea.vmem [#allocation2], 272
  %967 = vst [vmem:[%s966] sm:$0xff] 0.0
  %968 = vst [vmem:[%s966 + $0x8] sm:$0xff] 0.0
  %969 = vst [vmem:[%s966 + $0x120] sm:$0xff] 0.0
  %970 = vst [vmem:[%s966 + $0x128] sm:$0xff] 0.0
  %s971 = scalar_lea.vmem [#allocation2], 16
  %972 = vst [vmem:[%s971] sm:$0xff] %v898
  %973 = vst [vmem:[%s971 + $0x8] sm:$0xff] %v899
  %974 = vst [vmem:[%s971 + $0x10] sm:$0xff] %v900
  %975 = vst [vmem:[%s971 + $0x18] sm:$0xff] %v901
  %976 = vst [vmem:[%s971 + $0x20] sm:$0xff] %v902
  %977 = vst [vmem:[%s971 + $0x28] sm:$0xff] %v903
  %978 = vst [vmem:[%s971 + $0x30] sm:$0xff] %v904
  %979 = vst [vmem:[%s971 + $0x38] sm:$0xff] %v905
  %980 = vst [vmem:[%s971 + $0x40] sm:$0xff] %v906
  %981 = vst [vmem:[%s971 + $0x48] sm:$0xff] %v907
  %982 = vst [vmem:[%s971 + $0x50] sm:$0xff] %v908
  %983 = vst [vmem:[%s971 + $0x58] sm:$0xff] %v909
  %984 = vst [vmem:[%s971 + $0x60] sm:$0xff] %v910
  %985 = vst [vmem:[%s971 + $0x68] sm:$0xff] %v911
  %986 = vst [vmem:[%s971 + $0x70] sm:$0xff] %v912
  %987 = vst [vmem:[%s971 + $0x78] sm:$0xff] %v913
  %988 = vst [vmem:[%s971 + $0x80] sm:$0xff] %v914
  %989 = vst [vmem:[%s971 + $0x88] sm:$0xff] %v915
  %990 = vst [vmem:[%s971 + $0x90] sm:$0xff] %v916
  %991 = vst [vmem:[%s971 + $0x98] sm:$0xff] %v917
  %992 = vst [vmem:[%s971 + $0xa0] sm:$0xff] %v918
  %993 = vst [vmem:[%s971 + $0xa8] sm:$0xff] %v919
  %994 = vst [vmem:[%s971 + $0xb0] sm:$0xff] %v920
  %995 = vst [vmem:[%s971 + $0xb8] sm:$0xff] %v921
  %996 = vst [vmem:[%s971 + $0xc0] sm:$0xff] %v922
  %997 = vst [vmem:[%s971 + $0xc8] sm:$0xff] %v923
  %998 = vst [vmem:[%s971 + $0xd0] sm:$0xff] %v924
  %999 = vst [vmem:[%s971 + $0xd8] sm:$0xff] %v925
  %1000 = vst [vmem:[%s971 + $0xe0] sm:$0xff] %v926
  %1001 = vst [vmem:[%s971 + $0xe8] sm:$0xff] %v927
  %1002 = vst [vmem:[%s971 + $0xf0] sm:$0xff] %v928
  %1003 = vst [vmem:[%s971 + $0xf8] sm:$0xff] %v929
  %1004 = vst [vmem:[%s971 + $0x120] sm:$0xff] %v930
  %1005 = vst [vmem:[%s971 + $0x128] sm:$0xff] %v931
  %1006 = vst [vmem:[%s971 + $0x130] sm:$0xff] %v932
  %1007 = vst [vmem:[%s971 + $0x138] sm:$0xff] %v933
  %1008 = vst [vmem:[%s971 + $0x140] sm:$0xff] %v934
  %1009 = vst [vmem:[%s971 + $0x148] sm:$0xff] %v935
  %1010 = vst [vmem:[%s971 + $0x150] sm:$0xff] %v936
  %1011 = vst [vmem:[%s971 + $0x158] sm:$0xff] %v937
  %1012 = vst [vmem:[%s971 + $0x160] sm:$0xff] %v938
  %1013 = vst [vmem:[%s971 + $0x168] sm:$0xff] %v939
  %1014 = vst [vmem:[%s971 + $0x170] sm:$0xff] %v940
  %1015 = vst [vmem:[%s971 + $0x178] sm:$0xff] %v941
  %1016 = vst [vmem:[%s971 + $0x180] sm:$0xff] %v942
  %1017 = vst [vmem:[%s971 + $0x188] sm:$0xff] %v943
  %1018 = vst [vmem:[%s971 + $0x190] sm:$0xff] %v944
  %1019 = vst [vmem:[%s971 + $0x198] sm:$0xff] %v945
  %1020 = vst [vmem:[%s971 + $0x1a0] sm:$0xff] %v946
  %1021 = vst [vmem:[%s971 + $0x1a8] sm:$0xff] %v947
  %1022 = vst [vmem:[%s971 + $0x1b0] sm:$0xff] %v948
  %1023 = vst [vmem:[%s971 + $0x1b8] sm:$0xff] %v949
  %1024 = vst [vmem:[%s971 + $0x1c0] sm:$0xff] %v950
  %1025 = vst [vmem:[%s971 + $0x1c8] sm:$0xff] %v951
  %1026 = vst [vmem:[%s971 + $0x1d0] sm:$0xff] %v952
  %1027 = vst [vmem:[%s971 + $0x1d8] sm:$0xff] %v953
  %1028 = vst [vmem:[%s971 + $0x1e0] sm:$0xff] %v954
  %1029 = vst [vmem:[%s971 + $0x1e8] sm:$0xff] %v955
  %1030 = vst [vmem:[%s971 + $0x1f0] sm:$0xff] %v956
  %1031 = vst [vmem:[%s971 + $0x1f8] sm:$0xff] %v957
  %1032 = vst [vmem:[%s971 + $0x200] sm:$0xff] %v958
  %1033 = vst [vmem:[%s971 + $0x208] sm:$0xff] %v959
  %1034 = vst [vmem:[%s971 + $0x210] sm:$0xff] %v960
  %1035 = vst [vmem:[%s971 + $0x218] sm:$0xff] %v961
  %v1036 = vlaneseq
  %v1037 = vshrl.u32 %v1036, 7
  %v1038 = vadd.s32 %v1037, 8
  %v1039 = vadd.s32 %v1037, 16
  %v1040 = vadd.s32 %v1037, 24
  %v1041 = vadd.s32 %v1037, 32
  %v1042 = vadd.s32 %v1037, 40
  %v1043 = vadd.s32 %v1037, 48
  %v1044 = vadd.s32 %v1037, 56
  %v1045 = vadd.s32 %v1037, 64
  %v1046 = vadd.s32 %v1037, 72
  %v1047 = vadd.s32 %v1037, 80
  %v1048 = vadd.s32 %v1037, 88
  %v1049 = vadd.s32 %v1037, 96
  %v1050 = vadd.s32 %v1037, 104
  %v1051 = vadd.s32 %v1037, 112
  %v1052 = vadd.s32 %v1037, 120
  %v1053 = vadd.s32 %v1037, 128
  %v1054 = vadd.s32 %v1037, 136
  %v1055 = vadd.s32 %v1037, 144
  %v1056 = vadd.s32 %v1037, 152
  %v1057 = vadd.s32 %v1037, 160
  %v1058 = vadd.s32 %v1037, 168
  %v1059 = vadd.s32 %v1037, 176
  %v1060 = vadd.s32 %v1037, 184
  %v1061 = vadd.s32 %v1037, 192
  %v1062 = vadd.s32 %v1037, 200
  %v1063 = vadd.s32 %v1037, 208
  %v1064 = vadd.s32 %v1037, 216
  %v1065 = vadd.s32 %v1037, 224
  %v1066 = vadd.s32 %v1037, 232
  %v1067 = vadd.s32 %v1037, 240
  %v1068 = vadd.s32 %v1037, 248
  %v1069 = vadd.s32 %v1037, 256
  %v1070 = vadd.s32 %v1037, 264
  %v1071 = vadd.s32 %v1037, 272
  %v1072 = vadd.s32 %v1037, 280
  %v1073 = vadd.s32 %v1037, 288
  %v1074 = vadd.s32 %v1037, 296
  %v1075 = vadd.s32 %v1037, 304
  %v1076 = vadd.s32 %v1037, 312
  %v1077 = vadd.s32 %v1037, 320
  %v1078 = vadd.s32 %v1037, 328
  %v1079 = vadd.s32 %v1037, 336
  %v1080 = vadd.s32 %v1037, 344
  %v1081 = vadd.s32 %v1037, 352
  %v1082 = vadd.s32 %v1037, 360
  %v1083 = vadd.s32 %v1037, 368
  %v1084 = vadd.s32 %v1037, 376
  %v1085 = vadd.s32 %v1037, 384
  %v1086 = vadd.s32 %v1037, 392
  %v1087 = vadd.s32 %v1037, 400
  %v1088 = vadd.s32 %v1037, 408
  %v1089 = vadd.s32 %v1037, 416
  %v1090 = vadd.s32 %v1037, 424
  %v1091 = vadd.s32 %v1037, 432
  %v1092 = vadd.s32 %v1037, 440
  %v1093 = vadd.s32 %v1037, 448
  %v1094 = vadd.s32 %v1037, 456
  %v1095 = vadd.s32 %v1037, 464
  %v1096 = vadd.s32 %v1037, 472
  %v1097 = vadd.s32 %v1037, 480
  %v1098 = vadd.s32 %v1037, 488
  %v1099 = vadd.s32 %v1037, 496
  %v1100 = vadd.s32 %v1037, 504
  %vm1101 = vcmp.lt.s32.totalorder %v1037, 0
  %v1102 = vsub.s32 0, %v1037
  %v1103 = vsel %vm1101, %v1102, %v1037
  %v1104 = vshrl.u32 %v1103, 4
  %v1105 = vand.u32 %v1103, 15
  %v1106 = vsub.s32 0, %v1105
  %v1107 = vsel %vm1101, %v1106, %v1105
  %vm1108 = vcmp.lt.s32.totalorder %v1038, 0
  %v1109 = vsub.s32 0, %v1038
  %v1110 = vsel %vm1108, %v1109, %v1038
  %v1111 = vshrl.u32 %v1110, 4
  %v1112 = vand.u32 %v1110, 15
  %v1113 = vsub.s32 0, %v1112
  %v1114 = vsel %vm1108, %v1113, %v1112
  %vm1115 = vcmp.lt.s32.totalorder %v1039, 0
  %v1116 = vsub.s32 0, %v1039
  %v1117 = vsel %vm1115, %v1116, %v1039
  %v1118 = vshrl.u32 %v1117, 4
  %v1119 = vand.u32 %v1117, 15
  %v1120 = vsub.s32 0, %v1119
  %v1121 = vsel %vm1115, %v1120, %v1119
  %vm1122 = vcmp.lt.s32.totalorder %v1040, 0
  %v1123 = vsub.s32 0, %v1040
  %v1124 = vsel %vm1122, %v1123, %v1040
  %v1125 = vshrl.u32 %v1124, 4
  %v1126 = vand.u32 %v1124, 15
  %v1127 = vsub.s32 0, %v1126
  %v1128 = vsel %vm1122, %v1127, %v1126
  %vm1129 = vcmp.lt.s32.totalorder %v1041, 0
  %v1130 = vsub.s32 0, %v1041
  %v1131 = vsel %vm1129, %v1130, %v1041
  %v1132 = vshrl.u32 %v1131, 4
  %v1133 = vand.u32 %v1131, 15
  %v1134 = vsub.s32 0, %v1133
  %v1135 = vsel %vm1129, %v1134, %v1133
  %vm1136 = vcmp.lt.s32.totalorder %v1042, 0
  %v1137 = vsub.s32 0, %v1042
  %v1138 = vsel %vm1136, %v1137, %v1042
  %v1139 = vshrl.u32 %v1138, 4
  %v1140 = vand.u32 %v1138, 15
  %v1141 = vsub.s32 0, %v1140
  %v1142 = vsel %vm1136, %v1141, %v1140
  %vm1143 = vcmp.lt.s32.totalorder %v1043, 0
  %v1144 = vsub.s32 0, %v1043
  %v1145 = vsel %vm1143, %v1144, %v1043
  %v1146 = vshrl.u32 %v1145, 4
  %v1147 = vand.u32 %v1145, 15
  %v1148 = vsub.s32 0, %v1147
  %v1149 = vsel %vm1143, %v1148, %v1147
  %vm1150 = vcmp.lt.s32.totalorder %v1044, 0
  %v1151 = vsub.s32 0, %v1044
  %v1152 = vsel %vm1150, %v1151, %v1044
  %v1153 = vshrl.u32 %v1152, 4
  %v1154 = vand.u32 %v1152, 15
  %v1155 = vsub.s32 0, %v1154
  %v1156 = vsel %vm1150, %v1155, %v1154
  %vm1157 = vcmp.lt.s32.totalorder %v1045, 0
  %v1158 = vsub.s32 0, %v1045
  %v1159 = vsel %vm1157, %v1158, %v1045
  %v1160 = vshrl.u32 %v1159, 4
  %v1161 = vand.u32 %v1159, 15
  %v1162 = vsub.s32 0, %v1161
  %v1163 = vsel %vm1157, %v1162, %v1161
  %vm1164 = vcmp.lt.s32.totalorder %v1046, 0
  %v1165 = vsub.s32 0, %v1046
  %v1166 = vsel %vm1164, %v1165, %v1046
  %v1167 = vshrl.u32 %v1166, 4
  %v1168 = vand.u32 %v1166, 15
  %v1169 = vsub.s32 0, %v1168
  %v1170 = vsel %vm1164, %v1169, %v1168
  %vm1171 = vcmp.lt.s32.totalorder %v1047, 0
  %v1172 = vsub.s32 0, %v1047
  %v1173 = vsel %vm1171, %v1172, %v1047
  %v1174 = vshrl.u32 %v1173, 4
  %v1175 = vand.u32 %v1173, 15
  %v1176 = vsub.s32 0, %v1175
  %v1177 = vsel %vm1171, %v1176, %v1175
  %vm1178 = vcmp.lt.s32.totalorder %v1048, 0
  %v1179 = vsub.s32 0, %v1048
  %v1180 = vsel %vm1178, %v1179, %v1048
  %v1181 = vshrl.u32 %v1180, 4
  %v1182 = vand.u32 %v1180, 15
  %v1183 = vsub.s32 0, %v1182
  %v1184 = vsel %vm1178, %v1183, %v1182
  %vm1185 = vcmp.lt.s32.totalorder %v1049, 0
  %v1186 = vsub.s32 0, %v1049
  %v1187 = vsel %vm1185, %v1186, %v1049
  %v1188 = vshrl.u32 %v1187, 4
  %v1189 = vand.u32 %v1187, 15
  %v1190 = vsub.s32 0, %v1189
  %v1191 = vsel %vm1185, %v1190, %v1189
  %vm1192 = vcmp.lt.s32.totalorder %v1050, 0
  %v1193 = vsub.s32 0, %v1050
  %v1194 = vsel %vm1192, %v1193, %v1050
  %v1195 = vshrl.u32 %v1194, 4
  %v1196 = vand.u32 %v1194, 15
  %v1197 = vsub.s32 0, %v1196
  %v1198 = vsel %vm1192, %v1197, %v1196
  %vm1199 = vcmp.lt.s32.totalorder %v1051, 0
  %v1200 = vsub.s32 0, %v1051
  %v1201 = vsel %vm1199, %v1200, %v1051
  %v1202 = vshrl.u32 %v1201, 4
  %v1203 = vand.u32 %v1201, 15
  %v1204 = vsub.s32 0, %v1203
  %v1205 = vsel %vm1199, %v1204, %v1203
  %vm1206 = vcmp.lt.s32.totalorder %v1052, 0
  %v1207 = vsub.s32 0, %v1052
  %v1208 = vsel %vm1206, %v1207, %v1052
  %v1209 = vshrl.u32 %v1208, 4
  %v1210 = vand.u32 %v1208, 15
  %v1211 = vsub.s32 0, %v1210
  %v1212 = vsel %vm1206, %v1211, %v1210
  %vm1213 = vcmp.lt.s32.totalorder %v1053, 0
  %v1214 = vsub.s32 0, %v1053
  %v1215 = vsel %vm1213, %v1214, %v1053
  %v1216 = vshrl.u32 %v1215, 4
  %v1217 = vand.u32 %v1215, 15
  %v1218 = vsub.s32 0, %v1217
  %v1219 = vsel %vm1213, %v1218, %v1217
  %vm1220 = vcmp.lt.s32.totalorder %v1054, 0
  %v1221 = vsub.s32 0, %v1054
  %v1222 = vsel %vm1220, %v1221, %v1054
  %v1223 = vshrl.u32 %v1222, 4
  %v1224 = vand.u32 %v1222, 15
  %v1225 = vsub.s32 0, %v1224
  %v1226 = vsel %vm1220, %v1225, %v1224
  %vm1227 = vcmp.lt.s32.totalorder %v1055, 0
  %v1228 = vsub.s32 0, %v1055
  %v1229 = vsel %vm1227, %v1228, %v1055
  %v1230 = vshrl.u32 %v1229, 4
  %v1231 = vand.u32 %v1229, 15
  %v1232 = vsub.s32 0, %v1231
  %v1233 = vsel %vm1227, %v1232, %v1231
  %vm1234 = vcmp.lt.s32.totalorder %v1056, 0
  %v1235 = vsub.s32 0, %v1056
  %v1236 = vsel %vm1234, %v1235, %v1056
  %v1237 = vshrl.u32 %v1236, 4
  %v1238 = vand.u32 %v1236, 15
  %v1239 = vsub.s32 0, %v1238
  %v1240 = vsel %vm1234, %v1239, %v1238
  %vm1241 = vcmp.lt.s32.totalorder %v1057, 0
  %v1242 = vsub.s32 0, %v1057
  %v1243 = vsel %vm1241, %v1242, %v1057
  %v1244 = vshrl.u32 %v1243, 4
  %v1245 = vand.u32 %v1243, 15
  %v1246 = vsub.s32 0, %v1245
  %v1247 = vsel %vm1241, %v1246, %v1245
  %vm1248 = vcmp.lt.s32.totalorder %v1058, 0
  %v1249 = vsub.s32 0, %v1058
  %v1250 = vsel %vm1248, %v1249, %v1058
  %v1251 = vshrl.u32 %v1250, 4
  %v1252 = vand.u32 %v1250, 15
  %v1253 = vsub.s32 0, %v1252
  %v1254 = vsel %vm1248, %v1253, %v1252
  %vm1255 = vcmp.lt.s32.totalorder %v1059, 0
  %v1256 = vsub.s32 0, %v1059
  %v1257 = vsel %vm1255, %v1256, %v1059
  %v1258 = vshrl.u32 %v1257, 4
  %v1259 = vand.u32 %v1257, 15
  %v1260 = vsub.s32 0, %v1259
  %v1261 = vsel %vm1255, %v1260, %v1259
  %vm1262 = vcmp.lt.s32.totalorder %v1060, 0
  %v1263 = vsub.s32 0, %v1060
  %v1264 = vsel %vm1262, %v1263, %v1060
  %v1265 = vshrl.u32 %v1264, 4
  %v1266 = vand.u32 %v1264, 15
  %v1267 = vsub.s32 0, %v1266
  %v1268 = vsel %vm1262, %v1267, %v1266
  %vm1269 = vcmp.lt.s32.totalorder %v1061, 0
  %v1270 = vsub.s32 0, %v1061
  %v1271 = vsel %vm1269, %v1270, %v1061
  %v1272 = vshrl.u32 %v1271, 4
  %v1273 = vand.u32 %v1271, 15
  %v1274 = vsub.s32 0, %v1273
  %v1275 = vsel %vm1269, %v1274, %v1273
  %vm1276 = vcmp.lt.s32.totalorder %v1062, 0
  %v1277 = vsub.s32 0, %v1062
  %v1278 = vsel %vm1276, %v1277, %v1062
  %v1279 = vshrl.u32 %v1278, 4
  %v1280 = vand.u32 %v1278, 15
  %v1281 = vsub.s32 0, %v1280
  %v1282 = vsel %vm1276, %v1281, %v1280
  %vm1283 = vcmp.lt.s32.totalorder %v1063, 0
  %v1284 = vsub.s32 0, %v1063
  %v1285 = vsel %vm1283, %v1284, %v1063
  %v1286 = vshrl.u32 %v1285, 4
  %v1287 = vand.u32 %v1285, 15
  %v1288 = vsub.s32 0, %v1287
  %v1289 = vsel %vm1283, %v1288, %v1287
  %vm1290 = vcmp.lt.s32.totalorder %v1064, 0
  %v1291 = vsub.s32 0, %v1064
  %v1292 = vsel %vm1290, %v1291, %v1064
  %v1293 = vshrl.u32 %v1292, 4
  %v1294 = vand.u32 %v1292, 15
  %v1295 = vsub.s32 0, %v1294
  %v1296 = vsel %vm1290, %v1295, %v1294
  %vm1297 = vcmp.lt.s32.totalorder %v1065, 0
  %v1298 = vsub.s32 0, %v1065
  %v1299 = vsel %vm1297, %v1298, %v1065
  %v1300 = vshrl.u32 %v1299, 4
  %v1301 = vand.u32 %v1299, 15
  %v1302 = vsub.s32 0, %v1301
  %v1303 = vsel %vm1297, %v1302, %v1301
  %vm1304 = vcmp.lt.s32.totalorder %v1066, 0
  %v1305 = vsub.s32 0, %v1066
  %v1306 = vsel %vm1304, %v1305, %v1066
  %v1307 = vshrl.u32 %v1306, 4
  %v1308 = vand.u32 %v1306, 15
  %v1309 = vsub.s32 0, %v1308
  %v1310 = vsel %vm1304, %v1309, %v1308
  %vm1311 = vcmp.lt.s32.totalorder %v1067, 0
  %v1312 = vsub.s32 0, %v1067
  %v1313 = vsel %vm1311, %v1312, %v1067
  %v1314 = vshrl.u32 %v1313, 4
  %v1315 = vand.u32 %v1313, 15
  %v1316 = vsub.s32 0, %v1315
  %v1317 = vsel %vm1311, %v1316, %v1315
  %vm1318 = vcmp.lt.s32.totalorder %v1068, 0
  %v1319 = vsub.s32 0, %v1068
  %v1320 = vsel %vm1318, %v1319, %v1068
  %v1321 = vshrl.u32 %v1320, 4
  %v1322 = vand.u32 %v1320, 15
  %v1323 = vsub.s32 0, %v1322
  %v1324 = vsel %vm1318, %v1323, %v1322
  %vm1325 = vcmp.lt.s32.totalorder %v1069, 0
  %v1326 = vsub.s32 0, %v1069
  %v1327 = vsel %vm1325, %v1326, %v1069
  %v1328 = vshrl.u32 %v1327, 4
  %v1329 = vand.u32 %v1327, 15
  %v1330 = vsub.s32 0, %v1329
  %v1331 = vsel %vm1325, %v1330, %v1329
  %vm1332 = vcmp.lt.s32.totalorder %v1070, 0
  %v1333 = vsub.s32 0, %v1070
  %v1334 = vsel %vm1332, %v1333, %v1070
  %v1335 = vshrl.u32 %v1334, 4
  %v1336 = vand.u32 %v1334, 15
  %v1337 = vsub.s32 0, %v1336
  %v1338 = vsel %vm1332, %v1337, %v1336
  %vm1339 = vcmp.lt.s32.totalorder %v1071, 0
  %v1340 = vsub.s32 0, %v1071
  %v1341 = vsel %vm1339, %v1340, %v1071
  %v1342 = vshrl.u32 %v1341, 4
  %v1343 = vand.u32 %v1341, 15
  %v1344 = vsub.s32 0, %v1343
  %v1345 = vsel %vm1339, %v1344, %v1343
  %vm1346 = vcmp.lt.s32.totalorder %v1072, 0
  %v1347 = vsub.s32 0, %v1072
  %v1348 = vsel %vm1346, %v1347, %v1072
  %v1349 = vshrl.u32 %v1348, 4
  %v1350 = vand.u32 %v1348, 15
  %v1351 = vsub.s32 0, %v1350
  %v1352 = vsel %vm1346, %v1351, %v1350
  %vm1353 = vcmp.lt.s32.totalorder %v1073, 0
  %v1354 = vsub.s32 0, %v1073
  %v1355 = vsel %vm1353, %v1354, %v1073
  %v1356 = vshrl.u32 %v1355, 4
  %v1357 = vand.u32 %v1355, 15
  %v1358 = vsub.s32 0, %v1357
  %v1359 = vsel %vm1353, %v1358, %v1357
  %vm1360 = vcmp.lt.s32.totalorder %v1074, 0
  %v1361 = vsub.s32 0, %v1074
  %v1362 = vsel %vm1360, %v1361, %v1074
  %v1363 = vshrl.u32 %v1362, 4
  %v1364 = vand.u32 %v1362, 15
  %v1365 = vsub.s32 0, %v1364
  %v1366 = vsel %vm1360, %v1365, %v1364
  %vm1367 = vcmp.lt.s32.totalorder %v1075, 0
  %v1368 = vsub.s32 0, %v1075
  %v1369 = vsel %vm1367, %v1368, %v1075
  %v1370 = vshrl.u32 %v1369, 4
  %v1371 = vand.u32 %v1369, 15
  %v1372 = vsub.s32 0, %v1371
  %v1373 = vsel %vm1367, %v1372, %v1371
  %vm1374 = vcmp.lt.s32.totalorder %v1076, 0
  %v1375 = vsub.s32 0, %v1076
  %v1376 = vsel %vm1374, %v1375, %v1076
  %v1377 = vshrl.u32 %v1376, 4
  %v1378 = vand.u32 %v1376, 15
  %v1379 = vsub.s32 0, %v1378
  %v1380 = vsel %vm1374, %v1379, %v1378
  %vm1381 = vcmp.lt.s32.totalorder %v1077, 0
  %v1382 = vsub.s32 0, %v1077
  %v1383 = vsel %vm1381, %v1382, %v1077
  %v1384 = vshrl.u32 %v1383, 4
  %v1385 = vand.u32 %v1383, 15
  %v1386 = vsub.s32 0, %v1385
  %v1387 = vsel %vm1381, %v1386, %v1385
  %vm1388 = vcmp.lt.s32.totalorder %v1078, 0
  %v1389 = vsub.s32 0, %v1078
  %v1390 = vsel %vm1388, %v1389, %v1078
  %v1391 = vshrl.u32 %v1390, 4
  %v1392 = vand.u32 %v1390, 15
  %v1393 = vsub.s32 0, %v1392
  %v1394 = vsel %vm1388, %v1393, %v1392
  %vm1395 = vcmp.lt.s32.totalorder %v1079, 0
  %v1396 = vsub.s32 0, %v1079
  %v1397 = vsel %vm1395, %v1396, %v1079
  %v1398 = vshrl.u32 %v1397, 4
  %v1399 = vand.u32 %v1397, 15
  %v1400 = vsub.s32 0, %v1399
  %v1401 = vsel %vm1395, %v1400, %v1399
  %vm1402 = vcmp.lt.s32.totalorder %v1080, 0
  %v1403 = vsub.s32 0, %v1080
  %v1404 = vsel %vm1402, %v1403, %v1080
  %v1405 = vshrl.u32 %v1404, 4
  %v1406 = vand.u32 %v1404, 15
  %v1407 = vsub.s32 0, %v1406
  %v1408 = vsel %vm1402, %v1407, %v1406
  %vm1409 = vcmp.lt.s32.totalorder %v1081, 0
  %v1410 = vsub.s32 0, %v1081
  %v1411 = vsel %vm1409, %v1410, %v1081
  %v1412 = vshrl.u32 %v1411, 4
  %v1413 = vand.u32 %v1411, 15
  %v1414 = vsub.s32 0, %v1413
  %v1415 = vsel %vm1409, %v1414, %v1413
  %vm1416 = vcmp.lt.s32.totalorder %v1082, 0
  %v1417 = vsub.s32 0, %v1082
  %v1418 = vsel %vm1416, %v1417, %v1082
  %v1419 = vshrl.u32 %v1418, 4
  %v1420 = vand.u32 %v1418, 15
  %v1421 = vsub.s32 0, %v1420
  %v1422 = vsel %vm1416, %v1421, %v1420
  %vm1423 = vcmp.lt.s32.totalorder %v1083, 0
  %v1424 = vsub.s32 0, %v1083
  %v1425 = vsel %vm1423, %v1424, %v1083
  %v1426 = vshrl.u32 %v1425, 4
  %v1427 = vand.u32 %v1425, 15
  %v1428 = vsub.s32 0, %v1427
  %v1429 = vsel %vm1423, %v1428, %v1427
  %vm1430 = vcmp.lt.s32.totalorder %v1084, 0
  %v1431 = vsub.s32 0, %v1084
  %v1432 = vsel %vm1430, %v1431, %v1084
  %v1433 = vshrl.u32 %v1432, 4
  %v1434 = vand.u32 %v1432, 15
  %v1435 = vsub.s32 0, %v1434
  %v1436 = vsel %vm1430, %v1435, %v1434
  %vm1437 = vcmp.lt.s32.totalorder %v1085, 0
  %v1438 = vsub.s32 0, %v1085
  %v1439 = vsel %vm1437, %v1438, %v1085
  %v1440 = vshrl.u32 %v1439, 4
  %v1441 = vand.u32 %v1439, 15
  %v1442 = vsub.s32 0, %v1441
  %v1443 = vsel %vm1437, %v1442, %v1441
  %vm1444 = vcmp.lt.s32.totalorder %v1086, 0
  %v1445 = vsub.s32 0, %v1086
  %v1446 = vsel %vm1444, %v1445, %v1086
  %v1447 = vshrl.u32 %v1446, 4
  %v1448 = vand.u32 %v1446, 15
  %v1449 = vsub.s32 0, %v1448
  %v1450 = vsel %vm1444, %v1449, %v1448
  %vm1451 = vcmp.lt.s32.totalorder %v1087, 0
  %v1452 = vsub.s32 0, %v1087
  %v1453 = vsel %vm1451, %v1452, %v1087
  %v1454 = vshrl.u32 %v1453, 4
  %v1455 = vand.u32 %v1453, 15
  %v1456 = vsub.s32 0, %v1455
  %v1457 = vsel %vm1451, %v1456, %v1455
  %vm1458 = vcmp.lt.s32.totalorder %v1088, 0
  %v1459 = vsub.s32 0, %v1088
  %v1460 = vsel %vm1458, %v1459, %v1088
  %v1461 = vshrl.u32 %v1460, 4
  %v1462 = vand.u32 %v1460, 15
  %v1463 = vsub.s32 0, %v1462
  %v1464 = vsel %vm1458, %v1463, %v1462
  %vm1465 = vcmp.lt.s32.totalorder %v1089, 0
  %v1466 = vsub.s32 0, %v1089
  %v1467 = vsel %vm1465, %v1466, %v1089
  %v1468 = vshrl.u32 %v1467, 4
  %v1469 = vand.u32 %v1467, 15
  %v1470 = vsub.s32 0, %v1469
  %v1471 = vsel %vm1465, %v1470, %v1469
  %vm1472 = vcmp.lt.s32.totalorder %v1090, 0
  %v1473 = vsub.s32 0, %v1090
  %v1474 = vsel %vm1472, %v1473, %v1090
  %v1475 = vshrl.u32 %v1474, 4
  %v1476 = vand.u32 %v1474, 15
  %v1477 = vsub.s32 0, %v1476
  %v1478 = vsel %vm1472, %v1477, %v1476
  %vm1479 = vcmp.lt.s32.totalorder %v1091, 0
  %v1480 = vsub.s32 0, %v1091
  %v1481 = vsel %vm1479, %v1480, %v1091
  %v1482 = vshrl.u32 %v1481, 4
  %v1483 = vand.u32 %v1481, 15
  %v1484 = vsub.s32 0, %v1483
  %v1485 = vsel %vm1479, %v1484, %v1483
  %vm1486 = vcmp.lt.s32.totalorder %v1092, 0
  %v1487 = vsub.s32 0, %v1092
  %v1488 = vsel %vm1486, %v1487, %v1092
  %v1489 = vshrl.u32 %v1488, 4
  %v1490 = vand.u32 %v1488, 15
  %v1491 = vsub.s32 0, %v1490
  %v1492 = vsel %vm1486, %v1491, %v1490
  %vm1493 = vcmp.lt.s32.totalorder %v1093, 0
  %v1494 = vsub.s32 0, %v1093
  %v1495 = vsel %vm1493, %v1494, %v1093
  %v1496 = vshrl.u32 %v1495, 4
  %v1497 = vand.u32 %v1495, 15
  %v1498 = vsub.s32 0, %v1497
  %v1499 = vsel %vm1493, %v1498, %v1497
  %vm1500 = vcmp.lt.s32.totalorder %v1094, 0
  %v1501 = vsub.s32 0, %v1094
  %v1502 = vsel %vm1500, %v1501, %v1094
  %v1503 = vshrl.u32 %v1502, 4
  %v1504 = vand.u32 %v1502, 15
  %v1505 = vsub.s32 0, %v1504
  %v1506 = vsel %vm1500, %v1505, %v1504
  %vm1507 = vcmp.lt.s32.totalorder %v1095, 0
  %v1508 = vsub.s32 0, %v1095
  %v1509 = vsel %vm1507, %v1508, %v1095
  %v1510 = vshrl.u32 %v1509, 4
  %v1511 = vand.u32 %v1509, 15
  %v1512 = vsub.s32 0, %v1511
  %v1513 = vsel %vm1507, %v1512, %v1511
  %vm1514 = vcmp.lt.s32.totalorder %v1096, 0
  %v1515 = vsub.s32 0, %v1096
  %v1516 = vsel %vm1514, %v1515, %v1096
  %v1517 = vshrl.u32 %v1516, 4
  %v1518 = vand.u32 %v1516, 15
  %v1519 = vsub.s32 0, %v1518
  %v1520 = vsel %vm1514, %v1519, %v1518
  %vm1521 = vcmp.lt.s32.totalorder %v1097, 0
  %v1522 = vsub.s32 0, %v1097
  %v1523 = vsel %vm1521, %v1522, %v1097
  %v1524 = vshrl.u32 %v1523, 4
  %v1525 = vand.u32 %v1523, 15
  %v1526 = vsub.s32 0, %v1525
  %v1527 = vsel %vm1521, %v1526, %v1525
  %vm1528 = vcmp.lt.s32.totalorder %v1098, 0
  %v1529 = vsub.s32 0, %v1098
  %v1530 = vsel %vm1528, %v1529, %v1098
  %v1531 = vshrl.u32 %v1530, 4
  %v1532 = vand.u32 %v1530, 15
  %v1533 = vsub.s32 0, %v1532
  %v1534 = vsel %vm1528, %v1533, %v1532
  %vm1535 = vcmp.lt.s32.totalorder %v1099, 0
  %v1536 = vsub.s32 0, %v1099
  %v1537 = vsel %vm1535, %v1536, %v1099
  %v1538 = vshrl.u32 %v1537, 4
  %v1539 = vand.u32 %v1537, 15
  %v1540 = vsub.s32 0, %v1539
  %v1541 = vsel %vm1535, %v1540, %v1539
  %vm1542 = vcmp.lt.s32.totalorder %v1100, 0
  %v1543 = vsub.s32 0, %v1100
  %v1544 = vsel %vm1542, %v1543, %v1100
  %v1545 = vshrl.u32 %v1544, 4
  %v1546 = vand.u32 %v1544, 15
  %v1547 = vsub.s32 0, %v1546
  %v1548 = vsel %vm1542, %v1547, %v1546
  %vm1549 = vcmp.ne.s32.totalorder %v1107, 0
  %vm1550 = vcmp.ne.s32.totalorder %v1114, 0
  %vm1551 = vcmp.ne.s32.totalorder %v1121, 0
  %vm1552 = vcmp.ne.s32.totalorder %v1128, 0
  %vm1553 = vcmp.ne.s32.totalorder %v1135, 0
  %vm1554 = vcmp.ne.s32.totalorder %v1142, 0
  %vm1555 = vcmp.ne.s32.totalorder %v1149, 0
  %vm1556 = vcmp.ne.s32.totalorder %v1156, 0
  %vm1557 = vcmp.ne.s32.totalorder %v1163, 0
  %vm1558 = vcmp.ne.s32.totalorder %v1170, 0
  %vm1559 = vcmp.ne.s32.totalorder %v1177, 0
  %vm1560 = vcmp.ne.s32.totalorder %v1184, 0
  %vm1561 = vcmp.ne.s32.totalorder %v1191, 0
  %vm1562 = vcmp.ne.s32.totalorder %v1198, 0
  %vm1563 = vcmp.ne.s32.totalorder %v1205, 0
  %vm1564 = vcmp.ne.s32.totalorder %v1212, 0
  %vm1565 = vcmp.ne.s32.totalorder %v1219, 0
  %vm1566 = vcmp.ne.s32.totalorder %v1226, 0
  %vm1567 = vcmp.ne.s32.totalorder %v1233, 0
  %vm1568 = vcmp.ne.s32.totalorder %v1240, 0
  %vm1569 = vcmp.ne.s32.totalorder %v1247, 0
  %vm1570 = vcmp.ne.s32.totalorder %v1254, 0
  %vm1571 = vcmp.ne.s32.totalorder %v1261, 0
  %vm1572 = vcmp.ne.s32.totalorder %v1268, 0
  %vm1573 = vcmp.ne.s32.totalorder %v1275, 0
  %vm1574 = vcmp.ne.s32.totalorder %v1282, 0
  %vm1575 = vcmp.ne.s32.totalorder %v1289, 0
  %vm1576 = vcmp.ne.s32.totalorder %v1296, 0
  %vm1577 = vcmp.ne.s32.totalorder %v1303, 0
  %vm1578 = vcmp.ne.s32.totalorder %v1310, 0
  %vm1579 = vcmp.ne.s32.totalorder %v1317, 0
  %vm1580 = vcmp.ne.s32.totalorder %v1324, 0
  %vm1581 = vcmp.ne.s32.totalorder %v1331, 0
  %vm1582 = vcmp.ne.s32.totalorder %v1338, 0
  %vm1583 = vcmp.ne.s32.totalorder %v1345, 0
  %vm1584 = vcmp.ne.s32.totalorder %v1352, 0
  %vm1585 = vcmp.ne.s32.totalorder %v1359, 0
  %vm1586 = vcmp.ne.s32.totalorder %v1366, 0
  %vm1587 = vcmp.ne.s32.totalorder %v1373, 0
  %vm1588 = vcmp.ne.s32.totalorder %v1380, 0
  %vm1589 = vcmp.ne.s32.totalorder %v1387, 0
  %vm1590 = vcmp.ne.s32.totalorder %v1394, 0
  %vm1591 = vcmp.ne.s32.totalorder %v1401, 0
  %vm1592 = vcmp.ne.s32.totalorder %v1408, 0
  %vm1593 = vcmp.ne.s32.totalorder %v1415, 0
  %vm1594 = vcmp.ne.s32.totalorder %v1422, 0
  %vm1595 = vcmp.ne.s32.totalorder %v1429, 0
  %vm1596 = vcmp.ne.s32.totalorder %v1436, 0
  %vm1597 = vcmp.ne.s32.totalorder %v1443, 0
  %vm1598 = vcmp.ne.s32.totalorder %v1450, 0
  %vm1599 = vcmp.ne.s32.totalorder %v1457, 0
  %vm1600 = vcmp.ne.s32.totalorder %v1464, 0
  %vm1601 = vcmp.ne.s32.totalorder %v1471, 0
  %vm1602 = vcmp.ne.s32.totalorder %v1478, 0
  %vm1603 = vcmp.ne.s32.totalorder %v1485, 0
  %vm1604 = vcmp.ne.s32.totalorder %v1492, 0
  %vm1605 = vcmp.ne.s32.totalorder %v1499, 0
  %vm1606 = vcmp.ne.s32.totalorder %v1506, 0
  %vm1607 = vcmp.ne.s32.totalorder %v1513, 0
  %vm1608 = vcmp.ne.s32.totalorder %v1520, 0
  %vm1609 = vcmp.ne.s32.totalorder %v1527, 0
  %vm1610 = vcmp.ne.s32.totalorder %v1534, 0
  %vm1611 = vcmp.ne.s32.totalorder %v1541, 0
  %vm1612 = vcmp.ne.s32.totalorder %v1548, 0
  %vm1613 = vcmp.lt.s32.totalorder %v1107, 0
  %vm1614 = vcmp.lt.s32.totalorder %v1114, 0
  %vm1615 = vcmp.lt.s32.totalorder %v1121, 0
  %vm1616 = vcmp.lt.s32.totalorder %v1128, 0
  %vm1617 = vcmp.lt.s32.totalorder %v1135, 0
  %vm1618 = vcmp.lt.s32.totalorder %v1142, 0
  %vm1619 = vcmp.lt.s32.totalorder %v1149, 0
  %vm1620 = vcmp.lt.s32.totalorder %v1156, 0
  %vm1621 = vcmp.lt.s32.totalorder %v1163, 0
  %vm1622 = vcmp.lt.s32.totalorder %v1170, 0
  %vm1623 = vcmp.lt.s32.totalorder %v1177, 0
  %vm1624 = vcmp.lt.s32.totalorder %v1184, 0
  %vm1625 = vcmp.lt.s32.totalorder %v1191, 0
  %vm1626 = vcmp.lt.s32.totalorder %v1198, 0
  %vm1627 = vcmp.lt.s32.totalorder %v1205, 0
  %vm1628 = vcmp.lt.s32.totalorder %v1212, 0
  %vm1629 = vcmp.lt.s32.totalorder %v1219, 0
  %vm1630 = vcmp.lt.s32.totalorder %v1226, 0
  %vm1631 = vcmp.lt.s32.totalorder %v1233, 0
  %vm1632 = vcmp.lt.s32.totalorder %v1240, 0
  %vm1633 = vcmp.lt.s32.totalorder %v1247, 0
  %vm1634 = vcmp.lt.s32.totalorder %v1254, 0
  %vm1635 = vcmp.lt.s32.totalorder %v1261, 0
  %vm1636 = vcmp.lt.s32.totalorder %v1268, 0
  %vm1637 = vcmp.lt.s32.totalorder %v1275, 0
  %vm1638 = vcmp.lt.s32.totalorder %v1282, 0
  %vm1639 = vcmp.lt.s32.totalorder %v1289, 0
  %vm1640 = vcmp.lt.s32.totalorder %v1296, 0
  %vm1641 = vcmp.lt.s32.totalorder %v1303, 0
  %vm1642 = vcmp.lt.s32.totalorder %v1310, 0
  %vm1643 = vcmp.lt.s32.totalorder %v1317, 0
  %vm1644 = vcmp.lt.s32.totalorder %v1324, 0
  %vm1645 = vcmp.lt.s32.totalorder %v1331, 0
  %vm1646 = vcmp.lt.s32.totalorder %v1338, 0
  %vm1647 = vcmp.lt.s32.totalorder %v1345, 0
  %vm1648 = vcmp.lt.s32.totalorder %v1352, 0
  %vm1649 = vcmp.lt.s32.totalorder %v1359, 0
  %vm1650 = vcmp.lt.s32.totalorder %v1366, 0
  %vm1651 = vcmp.lt.s32.totalorder %v1373, 0
  %vm1652 = vcmp.lt.s32.totalorder %v1380, 0
  %vm1653 = vcmp.lt.s32.totalorder %v1387, 0
  %vm1654 = vcmp.lt.s32.totalorder %v1394, 0
  %vm1655 = vcmp.lt.s32.totalorder %v1401, 0
  %vm1656 = vcmp.lt.s32.totalorder %v1408, 0
  %vm1657 = vcmp.lt.s32.totalorder %v1415, 0
  %vm1658 = vcmp.lt.s32.totalorder %v1422, 0
  %vm1659 = vcmp.lt.s32.totalorder %v1429, 0
  %vm1660 = vcmp.lt.s32.totalorder %v1436, 0
  %vm1661 = vcmp.lt.s32.totalorder %v1443, 0
  %vm1662 = vcmp.lt.s32.totalorder %v1450, 0
  %vm1663 = vcmp.lt.s32.totalorder %v1457, 0
  %vm1664 = vcmp.lt.s32.totalorder %v1464, 0
  %vm1665 = vcmp.lt.s32.totalorder %v1471, 0
  %vm1666 = vcmp.lt.s32.totalorder %v1478, 0
  %vm1667 = vcmp.lt.s32.totalorder %v1485, 0
  %vm1668 = vcmp.lt.s32.totalorder %v1492, 0
  %vm1669 = vcmp.lt.s32.totalorder %v1499, 0
  %vm1670 = vcmp.lt.s32.totalorder %v1506, 0
  %vm1671 = vcmp.lt.s32.totalorder %v1513, 0
  %vm1672 = vcmp.lt.s32.totalorder %v1520, 0
  %vm1673 = vcmp.lt.s32.totalorder %v1527, 0
  %vm1674 = vcmp.lt.s32.totalorder %v1534, 0
  %vm1675 = vcmp.lt.s32.totalorder %v1541, 0
  %vm1676 = vcmp.lt.s32.totalorder %v1548, 0
  %vm1677 = vmand %vm1613, %vm1549
  %vm1678 = vmand %vm1614, %vm1550
  %vm1679 = vmand %vm1615, %vm1551
  %vm1680 = vmand %vm1616, %vm1552
  %vm1681 = vmand %vm1617, %vm1553
  %vm1682 = vmand %vm1618, %vm1554
  %vm1683 = vmand %vm1619, %vm1555
  %vm1684 = vmand %vm1620, %vm1556
  %vm1685 = vmand %vm1621, %vm1557
  %vm1686 = vmand %vm1622, %vm1558
  %vm1687 = vmand %vm1623, %vm1559
  %vm1688 = vmand %vm1624, %vm1560
  %vm1689 = vmand %vm1625, %vm1561
  %vm1690 = vmand %vm1626, %vm1562
  %vm1691 = vmand %vm1627, %vm1563
  %vm1692 = vmand %vm1628, %vm1564
  %vm1693 = vmand %vm1629, %vm1565
  %vm1694 = vmand %vm1630, %vm1566
  %vm1695 = vmand %vm1631, %vm1567
  %vm1696 = vmand %vm1632, %vm1568
  %vm1697 = vmand %vm1633, %vm1569
  %vm1698 = vmand %vm1634, %vm1570
  %vm1699 = vmand %vm1635, %vm1571
  %vm1700 = vmand %vm1636, %vm1572
  %vm1701 = vmand %vm1637, %vm1573
  %vm1702 = vmand %vm1638, %vm1574
  %vm1703 = vmand %vm1639, %vm1575
  %vm1704 = vmand %vm1640, %vm1576
  %vm1705 = vmand %vm1641, %vm1577
  %vm1706 = vmand %vm1642, %vm1578
  %vm1707 = vmand %vm1643, %vm1579
  %vm1708 = vmand %vm1644, %vm1580
  %vm1709 = vmand %vm1645, %vm1581
  %vm1710 = vmand %vm1646, %vm1582
  %vm1711 = vmand %vm1647, %vm1583
  %vm1712 = vmand %vm1648, %vm1584
  %vm1713 = vmand %vm1649, %vm1585
  %vm1714 = vmand %vm1650, %vm1586
  %vm1715 = vmand %vm1651, %vm1587
  %vm1716 = vmand %vm1652, %vm1588
  %vm1717 = vmand %vm1653, %vm1589
  %vm1718 = vmand %vm1654, %vm1590
  %vm1719 = vmand %vm1655, %vm1591
  %vm1720 = vmand %vm1656, %vm1592
  %vm1721 = vmand %vm1657, %vm1593
  %vm1722 = vmand %vm1658, %vm1594
  %vm1723 = vmand %vm1659, %vm1595
  %vm1724 = vmand %vm1660, %vm1596
  %vm1725 = vmand %vm1661, %vm1597
  %vm1726 = vmand %vm1662, %vm1598
  %vm1727 = vmand %vm1663, %vm1599
  %vm1728 = vmand %vm1664, %vm1600
  %vm1729 = vmand %vm1665, %vm1601
  %vm1730 = vmand %vm1666, %vm1602
  %vm1731 = vmand %vm1667, %vm1603
  %vm1732 = vmand %vm1668, %vm1604
  %vm1733 = vmand %vm1669, %vm1605
  %vm1734 = vmand %vm1670, %vm1606
  %vm1735 = vmand %vm1671, %vm1607
  %vm1736 = vmand %vm1672, %vm1608
  %vm1737 = vmand %vm1673, %vm1609
  %vm1738 = vmand %vm1674, %vm1610
  %vm1739 = vmand %vm1675, %vm1611
  %vm1740 = vmand %vm1676, %vm1612
  %v1741 = vadd.s32 %v1107, 16
  %v1742 = vadd.s32 %v1114, 16
  %v1743 = vadd.s32 %v1121, 16
  %v1744 = vadd.s32 %v1128, 16
  %v1745 = vadd.s32 %v1135, 16
  %v1746 = vadd.s32 %v1142, 16
  %v1747 = vadd.s32 %v1149, 16
  %v1748 = vadd.s32 %v1156, 16
  %v1749 = vadd.s32 %v1163, 16
  %v1750 = vadd.s32 %v1170, 16
  %v1751 = vadd.s32 %v1177, 16
  %v1752 = vadd.s32 %v1184, 16
  %v1753 = vadd.s32 %v1191, 16
  %v1754 = vadd.s32 %v1198, 16
  %v1755 = vadd.s32 %v1205, 16
  %v1756 = vadd.s32 %v1212, 16
  %v1757 = vadd.s32 %v1219, 16
  %v1758 = vadd.s32 %v1226, 16
  %v1759 = vadd.s32 %v1233, 16
  %v1760 = vadd.s32 %v1240, 16
  %v1761 = vadd.s32 %v1247, 16
  %v1762 = vadd.s32 %v1254, 16
  %v1763 = vadd.s32 %v1261, 16
  %v1764 = vadd.s32 %v1268, 16
  %v1765 = vadd.s32 %v1275, 16
  %v1766 = vadd.s32 %v1282, 16
  %v1767 = vadd.s32 %v1289, 16
  %v1768 = vadd.s32 %v1296, 16
  %v1769 = vadd.s32 %v1303, 16
  %v1770 = vadd.s32 %v1310, 16
  %v1771 = vadd.s32 %v1317, 16
  %v1772 = vadd.s32 %v1324, 16
  %v1773 = vadd.s32 %v1331, 16
  %v1774 = vadd.s32 %v1338, 16
  %v1775 = vadd.s32 %v1345, 16
  %v1776 = vadd.s32 %v1352, 16
  %v1777 = vadd.s32 %v1359, 16
  %v1778 = vadd.s32 %v1366, 16
  %v1779 = vadd.s32 %v1373, 16
  %v1780 = vadd.s32 %v1380, 16
  %v1781 = vadd.s32 %v1387, 16
  %v1782 = vadd.s32 %v1394, 16
  %v1783 = vadd.s32 %v1401, 16
  %v1784 = vadd.s32 %v1408, 16
  %v1785 = vadd.s32 %v1415, 16
  %v1786 = vadd.s32 %v1422, 16
  %v1787 = vadd.s32 %v1429, 16
  %v1788 = vadd.s32 %v1436, 16
  %v1789 = vadd.s32 %v1443, 16
  %v1790 = vadd.s32 %v1450, 16
  %v1791 = vadd.s32 %v1457, 16
  %v1792 = vadd.s32 %v1464, 16
  %v1793 = vadd.s32 %v1471, 16
  %v1794 = vadd.s32 %v1478, 16
  %v1795 = vadd.s32 %v1485, 16
  %v1796 = vadd.s32 %v1492, 16
  %v1797 = vadd.s32 %v1499, 16
  %v1798 = vadd.s32 %v1506, 16
  %v1799 = vadd.s32 %v1513, 16
  %v1800 = vadd.s32 %v1520, 16
  %v1801 = vadd.s32 %v1527, 16
  %v1802 = vadd.s32 %v1534, 16
  %v1803 = vadd.s32 %v1541, 16
  %v1804 = vadd.s32 %v1548, 16
  %v1805 = vsel %vm1677, %v1741, %v1107
  %v1806 = vsel %vm1678, %v1742, %v1114
  %v1807 = vsel %vm1679, %v1743, %v1121
  %v1808 = vsel %vm1680, %v1744, %v1128
  %v1809 = vsel %vm1681, %v1745, %v1135
  %v1810 = vsel %vm1682, %v1746, %v1142
  %v1811 = vsel %vm1683, %v1747, %v1149
  %v1812 = vsel %vm1684, %v1748, %v1156
  %v1813 = vsel %vm1685, %v1749, %v1163
  %v1814 = vsel %vm1686, %v1750, %v1170
  %v1815 = vsel %vm1687, %v1751, %v1177
  %v1816 = vsel %vm1688, %v1752, %v1184
  %v1817 = vsel %vm1689, %v1753, %v1191
  %v1818 = vsel %vm1690, %v1754, %v1198
  %v1819 = vsel %vm1691, %v1755, %v1205
  %v1820 = vsel %vm1692, %v1756, %v1212
  %v1821 = vsel %vm1693, %v1757, %v1219
  %v1822 = vsel %vm1694, %v1758, %v1226
  %v1823 = vsel %vm1695, %v1759, %v1233
  %v1824 = vsel %vm1696, %v1760, %v1240
  %v1825 = vsel %vm1697, %v1761, %v1247
  %v1826 = vsel %vm1698, %v1762, %v1254
  %v1827 = vsel %vm1699, %v1763, %v1261
  %v1828 = vsel %vm1700, %v1764, %v1268
  %v1829 = vsel %vm1701, %v1765, %v1275
  %v1830 = vsel %vm1702, %v1766, %v1282
  %v1831 = vsel %vm1703, %v1767, %v1289
  %v1832 = vsel %vm1704, %v1768, %v1296
  %v1833 = vsel %vm1705, %v1769, %v1303
  %v1834 = vsel %vm1706, %v1770, %v1310
  %v1835 = vsel %vm1707, %v1771, %v1317
  %v1836 = vsel %vm1708, %v1772, %v1324
  %v1837 = vsel %vm1709, %v1773, %v1331
  %v1838 = vsel %vm1710, %v1774, %v1338
  %v1839 = vsel %vm1711, %v1775, %v1345
  %v1840 = vsel %vm1712, %v1776, %v1352
  %v1841 = vsel %vm1713, %v1777, %v1359
  %v1842 = vsel %vm1714, %v1778, %v1366
  %v1843 = vsel %vm1715, %v1779, %v1373
  %v1844 = vsel %vm1716, %v1780, %v1380
  %v1845 = vsel %vm1717, %v1781, %v1387
  %v1846 = vsel %vm1718, %v1782, %v1394
  %v1847 = vsel %vm1719, %v1783, %v1401
  %v1848 = vsel %vm1720, %v1784, %v1408
  %v1849 = vsel %vm1721, %v1785, %v1415
  %v1850 = vsel %vm1722, %v1786, %v1422
  %v1851 = vsel %vm1723, %v1787, %v1429
  %v1852 = vsel %vm1724, %v1788, %v1436
  %v1853 = vsel %vm1725, %v1789, %v1443
  %v1854 = vsel %vm1726, %v1790, %v1450
  %v1855 = vsel %vm1727, %v1791, %v1457
  %v1856 = vsel %vm1728, %v1792, %v1464
  %v1857 = vsel %vm1729, %v1793, %v1471
  %v1858 = vsel %vm1730, %v1794, %v1478
  %v1859 = vsel %vm1731, %v1795, %v1485
  %v1860 = vsel %vm1732, %v1796, %v1492
  %v1861 = vsel %vm1733, %v1797, %v1499
  %v1862 = vsel %vm1734, %v1798, %v1506
  %v1863 = vsel %vm1735, %v1799, %v1513
  %v1864 = vsel %vm1736, %v1800, %v1520
  %v1865 = vsel %vm1737, %v1801, %v1527
  %v1866 = vsel %vm1738, %v1802, %v1534
  %v1867 = vsel %vm1739, %v1803, %v1541
  %v1868 = vsel %vm1740, %v1804, %v1548
  %vm1869 = vcmp.gt.s32.totalorder %v1805, 0
  %vm1870 = vcmp.gt.s32.totalorder %v1806, 0
  %vm1871 = vcmp.gt.s32.totalorder %v1807, 0
  %vm1872 = vcmp.gt.s32.totalorder %v1808, 0
  %vm1873 = vcmp.gt.s32.totalorder %v1809, 0
  %vm1874 = vcmp.gt.s32.totalorder %v1810, 0
  %vm1875 = vcmp.gt.s32.totalorder %v1811, 0
  %vm1876 = vcmp.gt.s32.totalorder %v1812, 0
  %vm1877 = vcmp.gt.s32.totalorder %v1813, 0
  %vm1878 = vcmp.gt.s32.totalorder %v1814, 0
  %vm1879 = vcmp.gt.s32.totalorder %v1815, 0
  %vm1880 = vcmp.gt.s32.totalorder %v1816, 0
  %vm1881 = vcmp.gt.s32.totalorder %v1817, 0
  %vm1882 = vcmp.gt.s32.totalorder %v1818, 0
  %vm1883 = vcmp.gt.s32.totalorder %v1819, 0
  %vm1884 = vcmp.gt.s32.totalorder %v1820, 0
  %vm1885 = vcmp.gt.s32.totalorder %v1821, 0
  %vm1886 = vcmp.gt.s32.totalorder %v1822, 0
  %vm1887 = vcmp.gt.s32.totalorder %v1823, 0
  %vm1888 = vcmp.gt.s32.totalorder %v1824, 0
  %vm1889 = vcmp.gt.s32.totalorder %v1825, 0
  %vm1890 = vcmp.gt.s32.totalorder %v1826, 0
  %vm1891 = vcmp.gt.s32.totalorder %v1827, 0
  %vm1892 = vcmp.gt.s32.totalorder %v1828, 0
  %vm1893 = vcmp.gt.s32.totalorder %v1829, 0
  %vm1894 = vcmp.gt.s32.totalorder %v1830, 0
  %vm1895 = vcmp.gt.s32.totalorder %v1831, 0
  %vm1896 = vcmp.gt.s32.totalorder %v1832, 0
  %vm1897 = vcmp.gt.s32.totalorder %v1833, 0
  %vm1898 = vcmp.gt.s32.totalorder %v1834, 0
  %vm1899 = vcmp.gt.s32.totalorder %v1835, 0
  %vm1900 = vcmp.gt.s32.totalorder %v1836, 0
  %vm1901 = vcmp.gt.s32.totalorder %v1837, 0
  %vm1902 = vcmp.gt.s32.totalorder %v1838, 0
  %vm1903 = vcmp.gt.s32.totalorder %v1839, 0
  %vm1904 = vcmp.gt.s32.totalorder %v1840, 0
  %vm1905 = vcmp.gt.s32.totalorder %v1841, 0
  %vm1906 = vcmp.gt.s32.totalorder %v1842, 0
  %vm1907 = vcmp.gt.s32.totalorder %v1843, 0
  %vm1908 = vcmp.gt.s32.totalorder %v1844, 0
  %vm1909 = vcmp.gt.s32.totalorder %v1845, 0
  %vm1910 = vcmp.gt.s32.totalorder %v1846, 0
  %vm1911 = vcmp.gt.s32.totalorder %v1847, 0
  %vm1912 = vcmp.gt.s32.totalorder %v1848, 0
  %vm1913 = vcmp.gt.s32.totalorder %v1849, 0
  %vm1914 = vcmp.gt.s32.totalorder %v1850, 0
  %vm1915 = vcmp.gt.s32.totalorder %v1851, 0
  %vm1916 = vcmp.gt.s32.totalorder %v1852, 0
  %vm1917 = vcmp.gt.s32.totalorder %v1853, 0
  %vm1918 = vcmp.gt.s32.totalorder %v1854, 0
  %vm1919 = vcmp.gt.s32.totalorder %v1855, 0
  %vm1920 = vcmp.gt.s32.totalorder %v1856, 0
  %vm1921 = vcmp.gt.s32.totalorder %v1857, 0
  %vm1922 = vcmp.gt.s32.totalorder %v1858, 0
  %vm1923 = vcmp.gt.s32.totalorder %v1859, 0
  %vm1924 = vcmp.gt.s32.totalorder %v1860, 0
  %vm1925 = vcmp.gt.s32.totalorder %v1861, 0
  %vm1926 = vcmp.gt.s32.totalorder %v1862, 0
  %vm1927 = vcmp.gt.s32.totalorder %v1863, 0
  %vm1928 = vcmp.gt.s32.totalorder %v1864, 0
  %vm1929 = vcmp.gt.s32.totalorder %v1865, 0
  %vm1930 = vcmp.gt.s32.totalorder %v1866, 0
  %vm1931 = vcmp.gt.s32.totalorder %v1867, 0
  %vm1932 = vcmp.gt.s32.totalorder %v1868, 0
  %v1933 = vsel %vm1869, 1, 0
  %v1934 = vsel %vm1870, 1, 0
  %v1935 = vsel %vm1871, 1, 0
  %v1936 = vsel %vm1872, 1, 0
  %v1937 = vsel %vm1873, 1, 0
  %v1938 = vsel %vm1874, 1, 0
  %v1939 = vsel %vm1875, 1, 0
  %v1940 = vsel %vm1876, 1, 0
  %v1941 = vsel %vm1877, 1, 0
  %v1942 = vsel %vm1878, 1, 0
  %v1943 = vsel %vm1879, 1, 0
  %v1944 = vsel %vm1880, 1, 0
  %v1945 = vsel %vm1881, 1, 0
  %v1946 = vsel %vm1882, 1, 0
  %v1947 = vsel %vm1883, 1, 0
  %v1948 = vsel %vm1884, 1, 0
  %v1949 = vsel %vm1885, 1, 0
  %v1950 = vsel %vm1886, 1, 0
  %v1951 = vsel %vm1887, 1, 0
  %v1952 = vsel %vm1888, 1, 0
  %v1953 = vsel %vm1889, 1, 0
  %v1954 = vsel %vm1890, 1, 0
  %v1955 = vsel %vm1891, 1, 0
  %v1956 = vsel %vm1892, 1, 0
  %v1957 = vsel %vm1893, 1, 0
  %v1958 = vsel %vm1894, 1, 0
  %v1959 = vsel %vm1895, 1, 0
  %v1960 = vsel %vm1896, 1, 0
  %v1961 = vsel %vm1897, 1, 0
  %v1962 = vsel %vm1898, 1, 0
  %v1963 = vsel %vm1899, 1, 0
  %v1964 = vsel %vm1900, 1, 0
  %v1965 = vsel %vm1901, 1, 0
  %v1966 = vsel %vm1902, 1, 0
  %v1967 = vsel %vm1903, 1, 0
  %v1968 = vsel %vm1904, 1, 0
  %v1969 = vsel %vm1905, 1, 0
  %v1970 = vsel %vm1906, 1, 0
  %v1971 = vsel %vm1907, 1, 0
  %v1972 = vsel %vm1908, 1, 0
  %v1973 = vsel %vm1909, 1, 0
  %v1974 = vsel %vm1910, 1, 0
  %v1975 = vsel %vm1911, 1, 0
  %v1976 = vsel %vm1912, 1, 0
  %v1977 = vsel %vm1913, 1, 0
  %v1978 = vsel %vm1914, 1, 0
  %v1979 = vsel %vm1915, 1, 0
  %v1980 = vsel %vm1916, 1, 0
  %v1981 = vsel %vm1917, 1, 0
  %v1982 = vsel %vm1918, 1, 0
  %v1983 = vsel %vm1919, 1, 0
  %v1984 = vsel %vm1920, 1, 0
  %v1985 = vsel %vm1921, 1, 0
  %v1986 = vsel %vm1922, 1, 0
  %v1987 = vsel %vm1923, 1, 0
  %v1988 = vsel %vm1924, 1, 0
  %v1989 = vsel %vm1925, 1, 0
  %v1990 = vsel %vm1926, 1, 0
  %v1991 = vsel %vm1927, 1, 0
  %v1992 = vsel %vm1928, 1, 0
  %v1993 = vsel %vm1929, 1, 0
  %v1994 = vsel %vm1930, 1, 0
  %v1995 = vsel %vm1931, 1, 0
  %v1996 = vsel %vm1932, 1, 0
  %v1997 = vcvt.s32.f32 %v1933
  %v1998 = vcvt.s32.f32 %v1934
  %v1999 = vcvt.s32.f32 %v1935
  %v2000 = vcvt.s32.f32 %v1936
  %v2001 = vcvt.s32.f32 %v1937
  %v2002 = vcvt.s32.f32 %v1938
  %v2003 = vcvt.s32.f32 %v1939
  %v2004 = vcvt.s32.f32 %v1940
  %v2005 = vcvt.s32.f32 %v1941
  %v2006 = vcvt.s32.f32 %v1942
  %v2007 = vcvt.s32.f32 %v1943
  %v2008 = vcvt.s32.f32 %v1944
  %v2009 = vcvt.s32.f32 %v1945
  %v2010 = vcvt.s32.f32 %v1946
  %v2011 = vcvt.s32.f32 %v1947
  %v2012 = vcvt.s32.f32 %v1948
  %v2013 = vcvt.s32.f32 %v1949
  %v2014 = vcvt.s32.f32 %v1950
  %v2015 = vcvt.s32.f32 %v1951
  %v2016 = vcvt.s32.f32 %v1952
  %v2017 = vcvt.s32.f32 %v1953
  %v2018 = vcvt.s32.f32 %v1954
  %v2019 = vcvt.s32.f32 %v1955
  %v2020 = vcvt.s32.f32 %v1956
  %v2021 = vcvt.s32.f32 %v1957
  %v2022 = vcvt.s32.f32 %v1958
  %v2023 = vcvt.s32.f32 %v1959
  %v2024 = vcvt.s32.f32 %v1960
  %v2025 = vcvt.s32.f32 %v1961
  %v2026 = vcvt.s32.f32 %v1962
  %v2027 = vcvt.s32.f32 %v1963
  %v2028 = vcvt.s32.f32 %v1964
  %v2029 = vcvt.s32.f32 %v1965
  %v2030 = vcvt.s32.f32 %v1966
  %v2031 = vcvt.s32.f32 %v1967
  %v2032 = vcvt.s32.f32 %v1968
  %v2033 = vcvt.s32.f32 %v1969
  %v2034 = vcvt.s32.f32 %v1970
  %v2035 = vcvt.s32.f32 %v1971
  %v2036 = vcvt.s32.f32 %v1972
  %v2037 = vcvt.s32.f32 %v1973
  %v2038 = vcvt.s32.f32 %v1974
  %v2039 = vcvt.s32.f32 %v1975
  %v2040 = vcvt.s32.f32 %v1976
  %v2041 = vcvt.s32.f32 %v1977
  %v2042 = vcvt.s32.f32 %v1978
  %v2043 = vcvt.s32.f32 %v1979
  %v2044 = vcvt.s32.f32 %v1980
  %v2045 = vcvt.s32.f32 %v1981
  %v2046 = vcvt.s32.f32 %v1982
  %v2047 = vcvt.s32.f32 %v1983
  %v2048 = vcvt.s32.f32 %v1984
  %v2049 = vcvt.s32.f32 %v1985
  %v2050 = vcvt.s32.f32 %v1986
  %v2051 = vcvt.s32.f32 %v1987
  %v2052 = vcvt.s32.f32 %v1988
  %v2053 = vcvt.s32.f32 %v1989
  %v2054 = vcvt.s32.f32 %v1990
  %v2055 = vcvt.s32.f32 %v1991
  %v2056 = vcvt.s32.f32 %v1992
  %v2057 = vcvt.s32.f32 %v1993
  %v2058 = vcvt.s32.f32 %v1994
  %v2059 = vcvt.s32.f32 %v1995
  %v2060 = vcvt.s32.f32 %v1996
  %vm2061 = vcmp.lt.s32.totalorder %v1805, 15
  %vm2062 = vcmp.lt.s32.totalorder %v1806, 15
  %vm2063 = vcmp.lt.s32.totalorder %v1807, 15
  %vm2064 = vcmp.lt.s32.totalorder %v1808, 15
  %vm2065 = vcmp.lt.s32.totalorder %v1809, 15
  %vm2066 = vcmp.lt.s32.totalorder %v1810, 15
  %vm2067 = vcmp.lt.s32.totalorder %v1811, 15
  %vm2068 = vcmp.lt.s32.totalorder %v1812, 15
  %vm2069 = vcmp.lt.s32.totalorder %v1813, 15
  %vm2070 = vcmp.lt.s32.totalorder %v1814, 15
  %vm2071 = vcmp.lt.s32.totalorder %v1815, 15
  %vm2072 = vcmp.lt.s32.totalorder %v1816, 15
  %vm2073 = vcmp.lt.s32.totalorder %v1817, 15
  %vm2074 = vcmp.lt.s32.totalorder %v1818, 15
  %vm2075 = vcmp.lt.s32.totalorder %v1819, 15
  %vm2076 = vcmp.lt.s32.totalorder %v1820, 15
  %vm2077 = vcmp.lt.s32.totalorder %v1821, 15
  %vm2078 = vcmp.lt.s32.totalorder %v1822, 15
  %vm2079 = vcmp.lt.s32.totalorder %v1823, 15
  %vm2080 = vcmp.lt.s32.totalorder %v1824, 15
  %vm2081 = vcmp.lt.s32.totalorder %v1825, 15
  %vm2082 = vcmp.lt.s32.totalorder %v1826, 15
  %vm2083 = vcmp.lt.s32.totalorder %v1827, 15
  %vm2084 = vcmp.lt.s32.totalorder %v1828, 15
  %vm2085 = vcmp.lt.s32.totalorder %v1829, 15
  %vm2086 = vcmp.lt.s32.totalorder %v1830, 15
  %vm2087 = vcmp.lt.s32.totalorder %v1831, 15
  %vm2088 = vcmp.lt.s32.totalorder %v1832, 15
  %vm2089 = vcmp.lt.s32.totalorder %v1833, 15
  %vm2090 = vcmp.lt.s32.totalorder %v1834, 15
  %vm2091 = vcmp.lt.s32.totalorder %v1835, 15
  %vm2092 = vcmp.lt.s32.totalorder %v1836, 15
  %vm2093 = vcmp.lt.s32.totalorder %v1837, 15
  %vm2094 = vcmp.lt.s32.totalorder %v1838, 15
  %vm2095 = vcmp.lt.s32.totalorder %v1839, 15
  %vm2096 = vcmp.lt.s32.totalorder %v1840, 15
  %vm2097 = vcmp.lt.s32.totalorder %v1841, 15
  %vm2098 = vcmp.lt.s32.totalorder %v1842, 15
  %vm2099 = vcmp.lt.s32.totalorder %v1843, 15
  %vm2100 = vcmp.lt.s32.totalorder %v1844, 15
  %vm2101 = vcmp.lt.s32.totalorder %v1845, 15
  %vm2102 = vcmp.lt.s32.totalorder %v1846, 15
  %vm2103 = vcmp.lt.s32.totalorder %v1847, 15
  %vm2104 = vcmp.lt.s32.totalorder %v1848, 15
  %vm2105 = vcmp.lt.s32.totalorder %v1849, 15
  %vm2106 = vcmp.lt.s32.totalorder %v1850, 15
  %vm2107 = vcmp.lt.s32.totalorder %v1851, 15
  %vm2108 = vcmp.lt.s32.totalorder %v1852, 15
  %vm2109 = vcmp.lt.s32.totalorder %v1853, 15
  %vm2110 = vcmp.lt.s32.totalorder %v1854, 15
  %vm2111 = vcmp.lt.s32.totalorder %v1855, 15
  %vm2112 = vcmp.lt.s32.totalorder %v1856, 15
  %vm2113 = vcmp.lt.s32.totalorder %v1857, 15
  %vm2114 = vcmp.lt.s32.totalorder %v1858, 15
  %vm2115 = vcmp.lt.s32.totalorder %v1859, 15
  %vm2116 = vcmp.lt.s32.totalorder %v1860, 15
  %vm2117 = vcmp.lt.s32.totalorder %v1861, 15
  %vm2118 = vcmp.lt.s32.totalorder %v1862, 15
  %vm2119 = vcmp.lt.s32.totalorder %v1863, 15
  %vm2120 = vcmp.lt.s32.totalorder %v1864, 15
  %vm2121 = vcmp.lt.s32.totalorder %v1865, 15
  %vm2122 = vcmp.lt.s32.totalorder %v1866, 15
  %vm2123 = vcmp.lt.s32.totalorder %v1867, 15
  %vm2124 = vcmp.lt.s32.totalorder %v1868, 15
  %v2125 = vsel %vm2061, 1, 0
  %v2126 = vsel %vm2062, 1, 0
  %v2127 = vsel %vm2063, 1, 0
  %v2128 = vsel %vm2064, 1, 0
  %v2129 = vsel %vm2065, 1, 0
  %v2130 = vsel %vm2066, 1, 0
  %v2131 = vsel %vm2067, 1, 0
  %v2132 = vsel %vm2068, 1, 0
  %v2133 = vsel %vm2069, 1, 0
  %v2134 = vsel %vm2070, 1, 0
  %v2135 = vsel %vm2071, 1, 0
  %v2136 = vsel %vm2072, 1, 0
  %v2137 = vsel %vm2073, 1, 0
  %v2138 = vsel %vm2074, 1, 0
  %v2139 = vsel %vm2075, 1, 0
  %v2140 = vsel %vm2076, 1, 0
  %v2141 = vsel %vm2077, 1, 0
  %v2142 = vsel %vm2078, 1, 0
  %v2143 = vsel %vm2079, 1, 0
  %v2144 = vsel %vm2080, 1, 0
  %v2145 = vsel %vm2081, 1, 0
  %v2146 = vsel %vm2082, 1, 0
  %v2147 = vsel %vm2083, 1, 0
  %v2148 = vsel %vm2084, 1, 0
  %v2149 = vsel %vm2085, 1, 0
  %v2150 = vsel %vm2086, 1, 0
  %v2151 = vsel %vm2087, 1, 0
  %v2152 = vsel %vm2088, 1, 0
  %v2153 = vsel %vm2089, 1, 0
  %v2154 = vsel %vm2090, 1, 0
  %v2155 = vsel %vm2091, 1, 0
  %v2156 = vsel %vm2092, 1, 0
  %v2157 = vsel %vm2093, 1, 0
  %v2158 = vsel %vm2094, 1, 0
  %v2159 = vsel %vm2095, 1, 0
  %v2160 = vsel %vm2096, 1, 0
  %v2161 = vsel %vm2097, 1, 0
  %v2162 = vsel %vm2098, 1, 0
  %v2163 = vsel %vm2099, 1, 0
  %v2164 = vsel %vm2100, 1, 0
  %v2165 = vsel %vm2101, 1, 0
  %v2166 = vsel %vm2102, 1, 0
  %v2167 = vsel %vm2103, 1, 0
  %v2168 = vsel %vm2104, 1, 0
  %v2169 = vsel %vm2105, 1, 0
  %v2170 = vsel %vm2106, 1, 0
  %v2171 = vsel %vm2107, 1, 0
  %v2172 = vsel %vm2108, 1, 0
  %v2173 = vsel %vm2109, 1, 0
  %v2174 = vsel %vm2110, 1, 0
  %v2175 = vsel %vm2111, 1, 0
  %v2176 = vsel %vm2112, 1, 0
  %v2177 = vsel %vm2113, 1, 0
  %v2178 = vsel %vm2114, 1, 0
  %v2179 = vsel %vm2115, 1, 0
  %v2180 = vsel %vm2116, 1, 0
  %v2181 = vsel %vm2117, 1, 0
  %v2182 = vsel %vm2118, 1, 0
  %v2183 = vsel %vm2119, 1, 0
  %v2184 = vsel %vm2120, 1, 0
  %v2185 = vsel %vm2121, 1, 0
  %v2186 = vsel %vm2122, 1, 0
  %v2187 = vsel %vm2123, 1, 0
  %v2188 = vsel %vm2124, 1, 0
  %v2189 = vcvt.s32.f32 %v2125
  %v2190 = vcvt.s32.f32 %v2126
  %v2191 = vcvt.s32.f32 %v2127
  %v2192 = vcvt.s32.f32 %v2128
  %v2193 = vcvt.s32.f32 %v2129
  %v2194 = vcvt.s32.f32 %v2130
  %v2195 = vcvt.s32.f32 %v2131
  %v2196 = vcvt.s32.f32 %v2132
  %v2197 = vcvt.s32.f32 %v2133
  %v2198 = vcvt.s32.f32 %v2134
  %v2199 = vcvt.s32.f32 %v2135
  %v2200 = vcvt.s32.f32 %v2136
  %v2201 = vcvt.s32.f32 %v2137
  %v2202 = vcvt.s32.f32 %v2138
  %v2203 = vcvt.s32.f32 %v2139
  %v2204 = vcvt.s32.f32 %v2140
  %v2205 = vcvt.s32.f32 %v2141
  %v2206 = vcvt.s32.f32 %v2142
  %v2207 = vcvt.s32.f32 %v2143
  %v2208 = vcvt.s32.f32 %v2144
  %v2209 = vcvt.s32.f32 %v2145
  %v2210 = vcvt.s32.f32 %v2146
  %v2211 = vcvt.s32.f32 %v2147
  %v2212 = vcvt.s32.f32 %v2148
  %v2213 = vcvt.s32.f32 %v2149
  %v2214 = vcvt.s32.f32 %v2150
  %v2215 = vcvt.s32.f32 %v2151
  %v2216 = vcvt.s32.f32 %v2152
  %v2217 = vcvt.s32.f32 %v2153
  %v2218 = vcvt.s32.f32 %v2154
  %v2219 = vcvt.s32.f32 %v2155
  %v2220 = vcvt.s32.f32 %v2156
  %v2221 = vcvt.s32.f32 %v2157
  %v2222 = vcvt.s32.f32 %v2158
  %v2223 = vcvt.s32.f32 %v2159
  %v2224 = vcvt.s32.f32 %v2160
  %v2225 = vcvt.s32.f32 %v2161
  %v2226 = vcvt.s32.f32 %v2162
  %v2227 = vcvt.s32.f32 %v2163
  %v2228 = vcvt.s32.f32 %v2164
  %v2229 = vcvt.s32.f32 %v2165
  %v2230 = vcvt.s32.f32 %v2166
  %v2231 = vcvt.s32.f32 %v2167
  %v2232 = vcvt.s32.f32 %v2168
  %v2233 = vcvt.s32.f32 %v2169
  %v2234 = vcvt.s32.f32 %v2170
  %v2235 = vcvt.s32.f32 %v2171
  %v2236 = vcvt.s32.f32 %v2172
  %v2237 = vcvt.s32.f32 %v2173
  %v2238 = vcvt.s32.f32 %v2174
  %v2239 = vcvt.s32.f32 %v2175
  %v2240 = vcvt.s32.f32 %v2176
  %v2241 = vcvt.s32.f32 %v2177
  %v2242 = vcvt.s32.f32 %v2178
  %v2243 = vcvt.s32.f32 %v2179
  %v2244 = vcvt.s32.f32 %v2180
  %v2245 = vcvt.s32.f32 %v2181
  %v2246 = vcvt.s32.f32 %v2182
  %v2247 = vcvt.s32.f32 %v2183
  %v2248 = vcvt.s32.f32 %v2184
  %v2249 = vcvt.s32.f32 %v2185
  %v2250 = vcvt.s32.f32 %v2186
  %v2251 = vcvt.s32.f32 %v2187
  %v2252 = vcvt.s32.f32 %v2188
  %v2253 = vld [vmem:[#allocation2] sm:$0xff]
  %v2254 = vld [vmem:[#allocation2 + $0x8] sm:$0xff]
  %v2255 = vld [vmem:[#allocation2 + $0x10] sm:$0xff]
  %v2256 = vld [vmem:[#allocation2 + $0x18] sm:$0xff]
  %v2257 = vld [vmem:[#allocation2 + $0x20] sm:$0xff]
  %v2258 = vld [vmem:[#allocation2 + $0x28] sm:$0xff]
  %v2259 = vld [vmem:[#allocation2 + $0x30] sm:$0xff]
  %v2260 = vld [vmem:[#allocation2 + $0x38] sm:$0xff]
  %v2261 = vld [vmem:[#allocation2 + $0x40] sm:$0xff]
  %v2262 = vld [vmem:[#allocation2 + $0x48] sm:$0xff]
  %v2263 = vld [vmem:[#allocation2 + $0x50] sm:$0xff]
  %v2264 = vld [vmem:[#allocation2 + $0x58] sm:$0xff]
  %v2265 = vld [vmem:[#allocation2 + $0x60] sm:$0xff]
  %v2266 = vld [vmem:[#allocation2 + $0x68] sm:$0xff]
  %v2267 = vld [vmem:[#allocation2 + $0x70] sm:$0xff]
  %v2268 = vld [vmem:[#allocation2 + $0x78] sm:$0xff]
  %v2269 = vld [vmem:[#allocation2 + $0x80] sm:$0xff]
  %v2270 = vld [vmem:[#allocation2 + $0x88] sm:$0xff]
  %v2271 = vld [vmem:[#allocation2 + $0x90] sm:$0xff]
  %v2272 = vld [vmem:[#allocation2 + $0x98] sm:$0xff]
  %v2273 = vld [vmem:[#allocation2 + $0xa0] sm:$0xff]
  %v2274 = vld [vmem:[#allocation2 + $0xa8] sm:$0xff]
  %v2275 = vld [vmem:[#allocation2 + $0xb0] sm:$0xff]
  %v2276 = vld [vmem:[#allocation2 + $0xb8] sm:$0xff]
  %v2277 = vld [vmem:[#allocation2 + $0xc0] sm:$0xff]
  %v2278 = vld [vmem:[#allocation2 + $0xc8] sm:$0xff]
  %v2279 = vld [vmem:[#allocation2 + $0xd0] sm:$0xff]
  %v2280 = vld [vmem:[#allocation2 + $0xd8] sm:$0xff]
  %v2281 = vld [vmem:[#allocation2 + $0xe0] sm:$0xff]
  %v2282 = vld [vmem:[#allocation2 + $0xe8] sm:$0xff]
  %v2283 = vld [vmem:[#allocation2 + $0xf0] sm:$0xff]
  %v2284 = vld [vmem:[#allocation2 + $0xf8] sm:$0xff]
  %v2285 = vld [vmem:[#allocation2 + $0x120] sm:$0xff]
  %v2286 = vld [vmem:[#allocation2 + $0x128] sm:$0xff]
  %v2287 = vld [vmem:[#allocation2 + $0x130] sm:$0xff]
  %v2288 = vld [vmem:[#allocation2 + $0x138] sm:$0xff]
  %v2289 = vld [vmem:[#allocation2 + $0x140] sm:$0xff]
  %v2290 = vld [vmem:[#allocation2 + $0x148] sm:$0xff]
  %v2291 = vld [vmem:[#allocation2 + $0x150] sm:$0xff]
  %v2292 = vld [vmem:[#allocation2 + $0x158] sm:$0xff]
  %v2293 = vld [vmem:[#allocation2 + $0x160] sm:$0xff]
  %v2294 = vld [vmem:[#allocation2 + $0x168] sm:$0xff]
  %v2295 = vld [vmem:[#allocation2 + $0x170] sm:$0xff]
  %v2296 = vld [vmem:[#allocation2 + $0x178] sm:$0xff]
  %v2297 = vld [vmem:[#allocation2 + $0x180] sm:$0xff]
  %v2298 = vld [vmem:[#allocation2 + $0x188] sm:$0xff]
  %v2299 = vld [vmem:[#allocation2 + $0x190] sm:$0xff]
  %v2300 = vld [vmem:[#allocation2 + $0x198] sm:$0xff]
  %v2301 = vld [vmem:[#allocation2 + $0x1a0] sm:$0xff]
  %v2302 = vld [vmem:[#allocation2 + $0x1a8] sm:$0xff]
  %v2303 = vld [vmem:[#allocation2 + $0x1b0] sm:$0xff]
  %v2304 = vld [vmem:[#allocation2 + $0x1b8] sm:$0xff]
  %v2305 = vld [vmem:[#allocation2 + $0x1c0] sm:$0xff]
  %v2306 = vld [vmem:[#allocation2 + $0x1c8] sm:$0xff]
  %v2307 = vld [vmem:[#allocation2 + $0x1d0] sm:$0xff]
  %v2308 = vld [vmem:[#allocation2 + $0x1d8] sm:$0xff]
  %v2309 = vld [vmem:[#allocation2 + $0x1e0] sm:$0xff]
  %v2310 = vld [vmem:[#allocation2 + $0x1e8] sm:$0xff]
  %v2311 = vld [vmem:[#allocation2 + $0x1f0] sm:$0xff]
  %v2312 = vld [vmem:[#allocation2 + $0x1f8] sm:$0xff]
  %v2313 = vld [vmem:[#allocation2 + $0x200] sm:$0xff]
  %v2314 = vld [vmem:[#allocation2 + $0x208] sm:$0xff]
  %v2315 = vld [vmem:[#allocation2 + $0x210] sm:$0xff]
  %v2316 = vld [vmem:[#allocation2 + $0x218] sm:$0xff]
  %v2317 = vrot.slane %v2253, 7
  %v2318 = vrot.slane %v2254, 7
  %v2319 = vrot.slane %v2255, 7
  %v2320 = vrot.slane %v2256, 7
  %v2321 = vrot.slane %v2257, 7
  %v2322 = vrot.slane %v2258, 7
  %v2323 = vrot.slane %v2259, 7
  %v2324 = vrot.slane %v2260, 7
  %v2325 = vrot.slane %v2261, 7
  %v2326 = vrot.slane %v2262, 7
  %v2327 = vrot.slane %v2263, 7
  %v2328 = vrot.slane %v2264, 7
  %v2329 = vrot.slane %v2265, 7
  %v2330 = vrot.slane %v2266, 7
  %v2331 = vrot.slane %v2267, 7
  %v2332 = vrot.slane %v2268, 7
  %v2333 = vrot.slane %v2269, 7
  %v2334 = vrot.slane %v2270, 7
  %v2335 = vrot.slane %v2271, 7
  %v2336 = vrot.slane %v2272, 7
  %v2337 = vrot.slane %v2273, 7
  %v2338 = vrot.slane %v2274, 7
  %v2339 = vrot.slane %v2275, 7
  %v2340 = vrot.slane %v2276, 7
  %v2341 = vrot.slane %v2277, 7
  %v2342 = vrot.slane %v2278, 7
  %v2343 = vrot.slane %v2279, 7
  %v2344 = vrot.slane %v2280, 7
  %v2345 = vrot.slane %v2281, 7
  %v2346 = vrot.slane %v2282, 7
  %v2347 = vrot.slane %v2283, 7
  %v2348 = vrot.slane %v2284, 7
  %v2349 = vrot.slane %v2285, 7
  %v2350 = vrot.slane %v2286, 7
  %v2351 = vrot.slane %v2287, 7
  %v2352 = vrot.slane %v2288, 7
  %v2353 = vrot.slane %v2289, 7
  %v2354 = vrot.slane %v2290, 7
  %v2355 = vrot.slane %v2291, 7
  %v2356 = vrot.slane %v2292, 7
  %v2357 = vrot.slane %v2293, 7
  %v2358 = vrot.slane %v2294, 7
  %v2359 = vrot.slane %v2295, 7
  %v2360 = vrot.slane %v2296, 7
  %v2361 = vrot.slane %v2297, 7
  %v2362 = vrot.slane %v2298, 7
  %v2363 = vrot.slane %v2299, 7
  %v2364 = vrot.slane %v2300, 7
  %v2365 = vrot.slane %v2301, 7
  %v2366 = vrot.slane %v2302, 7
  %v2367 = vrot.slane %v2303, 7
  %v2368 = vrot.slane %v2304, 7
  %v2369 = vrot.slane %v2305, 7
  %v2370 = vrot.slane %v2306, 7
  %v2371 = vrot.slane %v2307, 7
  %v2372 = vrot.slane %v2308, 7
  %v2373 = vrot.slane %v2309, 7
  %v2374 = vrot.slane %v2310, 7
  %v2375 = vrot.slane %v2311, 7
  %v2376 = vrot.slane %v2312, 7
  %v2377 = vrot.slane %v2313, 7
  %v2378 = vrot.slane %v2314, 7
  %v2379 = vrot.slane %v2315, 7
  %v2380 = vrot.slane %v2316, 7
  %vm2381 = vcmp.lt.s32.totalorder %v1037, 1
  %v2382 = vsel %vm2381, %v2379, %v2380
  %v2383 = vsel %vm2381, %v2378, %v2379
  %v2384 = vsel %vm2381, %v2377, %v2378
  %v2385 = vsel %vm2381, %v2376, %v2377
  %v2386 = vsel %vm2381, %v2375, %v2376
  %v2387 = vsel %vm2381, %v2374, %v2375
  %v2388 = vsel %vm2381, %v2373, %v2374
  %v2389 = vsel %vm2381, %v2372, %v2373
  %v2390 = vsel %vm2381, %v2371, %v2372
  %v2391 = vsel %vm2381, %v2370, %v2371
  %v2392 = vsel %vm2381, %v2369, %v2370
  %v2393 = vsel %vm2381, %v2368, %v2369
  %v2394 = vsel %vm2381, %v2367, %v2368
  %v2395 = vsel %vm2381, %v2366, %v2367
  %v2396 = vsel %vm2381, %v2365, %v2366
  %v2397 = vsel %vm2381, %v2364, %v2365
  %v2398 = vsel %vm2381, %v2363, %v2364
  %v2399 = vsel %vm2381, %v2362, %v2363
  %v2400 = vsel %vm2381, %v2361, %v2362
  %v2401 = vsel %vm2381, %v2360, %v2361
  %v2402 = vsel %vm2381, %v2359, %v2360
  %v2403 = vsel %vm2381, %v2358, %v2359
  %v2404 = vsel %vm2381, %v2357, %v2358
  %v2405 = vsel %vm2381, %v2356, %v2357
  %v2406 = vsel %vm2381, %v2355, %v2356
  %v2407 = vsel %vm2381, %v2354, %v2355
  %v2408 = vsel %vm2381, %v2353, %v2354
  %v2409 = vsel %vm2381, %v2352, %v2353
  %v2410 = vsel %vm2381, %v2351, %v2352
  %v2411 = vsel %vm2381, %v2350, %v2351
  %v2412 = vsel %vm2381, %v2349, %v2350
  %v2413 = vsel %vm2381, %v2348, %v2349
  %v2414 = vsel %vm2381, %v2347, %v2348
  %v2415 = vsel %vm2381, %v2346, %v2347
  %v2416 = vsel %vm2381, %v2345, %v2346
  %v2417 = vsel %vm2381, %v2344, %v2345
  %v2418 = vsel %vm2381, %v2343, %v2344
  %v2419 = vsel %vm2381, %v2342, %v2343
  %v2420 = vsel %vm2381, %v2341, %v2342
  %v2421 = vsel %vm2381, %v2340, %v2341
  %v2422 = vsel %vm2381, %v2339, %v2340
  %v2423 = vsel %vm2381, %v2338, %v2339
  %v2424 = vsel %vm2381, %v2337, %v2338
  %v2425 = vsel %vm2381, %v2336, %v2337
  %v2426 = vsel %vm2381, %v2335, %v2336
  %v2427 = vsel %vm2381, %v2334, %v2335
  %v2428 = vsel %vm2381, %v2333, %v2334
  %v2429 = vsel %vm2381, %v2332, %v2333
  %v2430 = vsel %vm2381, %v2331, %v2332
  %v2431 = vsel %vm2381, %v2330, %v2331
  %v2432 = vsel %vm2381, %v2329, %v2330
  %v2433 = vsel %vm2381, %v2328, %v2329
  %v2434 = vsel %vm2381, %v2327, %v2328
  %v2435 = vsel %vm2381, %v2326, %v2327
  %v2436 = vsel %vm2381, %v2325, %v2326
  %v2437 = vsel %vm2381, %v2324, %v2325
  %v2438 = vsel %vm2381, %v2323, %v2324
  %v2439 = vsel %vm2381, %v2322, %v2323
  %v2440 = vsel %vm2381, %v2321, %v2322
  %v2441 = vsel %vm2381, %v2320, %v2321
  %v2442 = vsel %vm2381, %v2319, %v2320
  %v2443 = vsel %vm2381, %v2318, %v2319
  %v2444 = vsel %vm2381, %v2317, %v2318
  %v2445 = vsel %vm2381, %v2380, %v2317
  %v2446 = vmul.f32 %v2445, %v1997
  %v2447 = vmul.f32 %v2444, %v1998
  %v2448 = vmul.f32 %v2443, %v1999
  %v2449 = vmul.f32 %v2442, %v2000
  %v2450 = vmul.f32 %v2441, %v2001
  %v2451 = vmul.f32 %v2440, %v2002
  %v2452 = vmul.f32 %v2439, %v2003
  %v2453 = vmul.f32 %v2438, %v2004
  %v2454 = vmul.f32 %v2437, %v2005
  %v2455 = vmul.f32 %v2436, %v2006
  %v2456 = vmul.f32 %v2435, %v2007
  %v2457 = vmul.f32 %v2434, %v2008
  %v2458 = vmul.f32 %v2433, %v2009
  %v2459 = vmul.f32 %v2432, %v2010
  %v2460 = vmul.f32 %v2431, %v2011
  %v2461 = vmul.f32 %v2430, %v2012
  %v2462 = vmul.f32 %v2429, %v2013
  %v2463 = vmul.f32 %v2428, %v2014
  %v2464 = vmul.f32 %v2427, %v2015
  %v2465 = vmul.f32 %v2426, %v2016
  %v2466 = vmul.f32 %v2425, %v2017
  %v2467 = vmul.f32 %v2424, %v2018
  %v2468 = vmul.f32 %v2423, %v2019
  %v2469 = vmul.f32 %v2422, %v2020
  %v2470 = vmul.f32 %v2421, %v2021
  %v2471 = vmul.f32 %v2420, %v2022
  %v2472 = vmul.f32 %v2419, %v2023
  %v2473 = vmul.f32 %v2418, %v2024
  %v2474 = vmul.f32 %v2417, %v2025
  %v2475 = vmul.f32 %v2416, %v2026
  %v2476 = vmul.f32 %v2415, %v2027
  %v2477 = vmul.f32 %v2414, %v2028
  %v2478 = vmul.f32 %v2413, %v2029
  %v2479 = vmul.f32 %v2412, %v2030
  %v2480 = vmul.f32 %v2411, %v2031
  %v2481 = vmul.f32 %v2410, %v2032
  %v2482 = vmul.f32 %v2409, %v2033
  %v2483 = vmul.f32 %v2408, %v2034
  %v2484 = vmul.f32 %v2407, %v2035
  %v2485 = vmul.f32 %v2406, %v2036
  %v2486 = vmul.f32 %v2405, %v2037
  %v2487 = vmul.f32 %v2404, %v2038
  %v2488 = vmul.f32 %v2403, %v2039
  %v2489 = vmul.f32 %v2402, %v2040
  %v2490 = vmul.f32 %v2401, %v2041
  %v2491 = vmul.f32 %v2400, %v2042
  %v2492 = vmul.f32 %v2399, %v2043
  %v2493 = vmul.f32 %v2398, %v2044
  %v2494 = vmul.f32 %v2397, %v2045
  %v2495 = vmul.f32 %v2396, %v2046
  %v2496 = vmul.f32 %v2395, %v2047
  %v2497 = vmul.f32 %v2394, %v2048
  %v2498 = vmul.f32 %v2393, %v2049
  %v2499 = vmul.f32 %v2392, %v2050
  %v2500 = vmul.f32 %v2391, %v2051
  %v2501 = vmul.f32 %v2390, %v2052
  %v2502 = vmul.f32 %v2389, %v2053
  %v2503 = vmul.f32 %v2388, %v2054
  %v2504 = vmul.f32 %v2387, %v2055
  %v2505 = vmul.f32 %v2386, %v2056
  %v2506 = vmul.f32 %v2385, %v2057
  %v2507 = vmul.f32 %v2384, %v2058
  %v2508 = vmul.f32 %v2383, %v2059
  %v2509 = vmul.f32 %v2382, %v2060
  %v2510 = vpack.c.bf16 %v2447, %v2446
  %v2511 = vpack.c.bf16 %v2449, %v2448
  %v2512 = vpack.c.bf16 %v2451, %v2450
  %v2513 = vpack.c.bf16 %v2453, %v2452
  %v2514 = vpack.c.bf16 %v2455, %v2454
  %v2515 = vpack.c.bf16 %v2457, %v2456
  %v2516 = vpack.c.bf16 %v2459, %v2458
  %v2517 = vpack.c.bf16 %v2461, %v2460
  %v2518 = vpack.c.bf16 %v2463, %v2462
  %v2519 = vpack.c.bf16 %v2465, %v2464
  %v2520 = vpack.c.bf16 %v2467, %v2466
  %v2521 = vpack.c.bf16 %v2469, %v2468
  %v2522 = vpack.c.bf16 %v2471, %v2470
  %v2523 = vpack.c.bf16 %v2473, %v2472
  %v2524 = vpack.c.bf16 %v2475, %v2474
  %v2525 = vpack.c.bf16 %v2477, %v2476
  %v2526 = vpack.c.bf16 %v2479, %v2478
  %v2527 = vpack.c.bf16 %v2481, %v2480
  %v2528 = vpack.c.bf16 %v2483, %v2482
  %v2529 = vpack.c.bf16 %v2485, %v2484
  %v2530 = vpack.c.bf16 %v2487, %v2486
  %v2531 = vpack.c.bf16 %v2489, %v2488
  %v2532 = vpack.c.bf16 %v2491, %v2490
  %v2533 = vpack.c.bf16 %v2493, %v2492
  %v2534 = vpack.c.bf16 %v2495, %v2494
  %v2535 = vpack.c.bf16 %v2497, %v2496
  %v2536 = vpack.c.bf16 %v2499, %v2498
  %v2537 = vpack.c.bf16 %v2501, %v2500
  %v2538 = vpack.c.bf16 %v2503, %v2502
  %v2539 = vpack.c.bf16 %v2505, %v2504
  %v2540 = vpack.c.bf16 %v2507, %v2506
  %v2541 = vpack.c.bf16 %v2509, %v2508
  %v2542 = vld [vmem:[%s4] sm:$0xf]
  %v2543 = vld [vmem:[%s4 + $0x4] sm:$0xf]
  %v2544 = vld [vmem:[%s4 + $0x8] sm:$0xf]
  %v2545 = vld [vmem:[%s4 + $0xc] sm:$0xf]
  %v2546 = vld [vmem:[%s4 + $0x10] sm:$0xf]
  %v2547 = vld [vmem:[%s4 + $0x14] sm:$0xf]
  %v2548 = vld [vmem:[%s4 + $0x18] sm:$0xf]
  %v2549 = vld [vmem:[%s4 + $0x1c] sm:$0xf]
  %v2550 = vld [vmem:[%s4 + $0x20] sm:$0xf]
  %v2551 = vld [vmem:[%s4 + $0x24] sm:$0xf]
  %v2552 = vld [vmem:[%s4 + $0x28] sm:$0xf]
  %v2553 = vld [vmem:[%s4 + $0x2c] sm:$0xf]
  %v2554 = vld [vmem:[%s4 + $0x30] sm:$0xf]
  %v2555 = vld [vmem:[%s4 + $0x34] sm:$0xf]
  %v2556 = vld [vmem:[%s4 + $0x38] sm:$0xf]
  %v2557 = vld [vmem:[%s4 + $0x3c] sm:$0xf]
  %v2558 = vpack.c.bf16 %v2254, %v2253
  %v2559 = vpack.c.bf16 %v2256, %v2255
  %v2560 = vpack.c.bf16 %v2258, %v2257
  %v2561 = vpack.c.bf16 %v2260, %v2259
  %v2562 = vpack.c.bf16 %v2262, %v2261
  %v2563 = vpack.c.bf16 %v2264, %v2263
  %v2564 = vpack.c.bf16 %v2266, %v2265
  %v2565 = vpack.c.bf16 %v2268, %v2267
  %v2566 = vpack.c.bf16 %v2270, %v2269
  %v2567 = vpack.c.bf16 %v2272, %v2271
  %v2568 = vpack.c.bf16 %v2274, %v2273
  %v2569 = vpack.c.bf16 %v2276, %v2275
  %v2570 = vpack.c.bf16 %v2278, %v2277
  %v2571 = vpack.c.bf16 %v2280, %v2279
  %v2572 = vpack.c.bf16 %v2282, %v2281
  %v2573 = vpack.c.bf16 %v2284, %v2283
  %v2574 = vpack.c.bf16 %v2286, %v2285
  %v2575 = vpack.c.bf16 %v2288, %v2287
  %v2576 = vpack.c.bf16 %v2290, %v2289
  %v2577 = vpack.c.bf16 %v2292, %v2291
  %v2578 = vpack.c.bf16 %v2294, %v2293
  %v2579 = vpack.c.bf16 %v2296, %v2295
  %v2580 = vpack.c.bf16 %v2298, %v2297
  %v2581 = vpack.c.bf16 %v2300, %v2299
  %v2582 = vpack.c.bf16 %v2302, %v2301
  %v2583 = vpack.c.bf16 %v2304, %v2303
  %v2584 = vpack.c.bf16 %v2306, %v2305
  %v2585 = vpack.c.bf16 %v2308, %v2307
  %v2586 = vpack.c.bf16 %v2310, %v2309
  %v2587 = vpack.c.bf16 %v2312, %v2311
  %v2588 = vpack.c.bf16 %v2314, %v2313
  %v2589 = vpack.c.bf16 %v2316, %v2315
  %s2590 = scalar_lea.vmem %s4, 64
  %v2591 = vld [vmem:[%s2590] sm:$0xf]
  %v2592 = vld [vmem:[%s2590 + $0x4] sm:$0xf]
  %v2593 = vld [vmem:[%s2590 + $0x8] sm:$0xf]
  %v2594 = vld [vmem:[%s2590 + $0xc] sm:$0xf]
  %v2595 = vld [vmem:[%s2590 + $0x10] sm:$0xf]
  %v2596 = vld [vmem:[%s2590 + $0x14] sm:$0xf]
  %v2597 = vld [vmem:[%s2590 + $0x18] sm:$0xf]
  %v2598 = vld [vmem:[%s2590 + $0x1c] sm:$0xf]
  %v2599 = vld [vmem:[%s2590 + $0x20] sm:$0xf]
  %v2600 = vld [vmem:[%s2590 + $0x24] sm:$0xf]
  %v2601 = vld [vmem:[%s2590 + $0x28] sm:$0xf]
  %v2602 = vld [vmem:[%s2590 + $0x2c] sm:$0xf]
  %v2603 = vld [vmem:[%s2590 + $0x30] sm:$0xf]
  %v2604 = vld [vmem:[%s2590 + $0x34] sm:$0xf]
  %v2605 = vld [vmem:[%s2590 + $0x38] sm:$0xf]
  %v2606 = vld [vmem:[%s2590 + $0x3c] sm:$0xf]
  %v2623 = vunpack.c.l.b16 %v2591
  %v2624 = vunpack.c.l.b16 %v2592
  %v2625 = vunpack.c.l.b16 %v2593
  %v2626 = vunpack.c.l.b16 %v2594
  %v2627 = vunpack.c.l.b16 %v2595
  %v2628 = vunpack.c.l.b16 %v2596
  %v2629 = vunpack.c.l.b16 %v2597
  %v2630 = vunpack.c.l.b16 %v2598
  %v2631 = vunpack.c.l.b16 %v2599
  %v2632 = vunpack.c.l.b16 %v2600
  %v2633 = vunpack.c.l.b16 %v2601
  %v2634 = vunpack.c.l.b16 %v2602
  %v2635 = vunpack.c.l.b16 %v2603
  %v2636 = vunpack.c.l.b16 %v2604
  %v2637 = vunpack.c.l.b16 %v2605
  %v2638 = vunpack.c.l.b16 %v2606
  %v2639 = vpack.c.b16 %v2624, %v2623
  %v2640 = vpack.c.b16 %v2626, %v2625
  %v2641 = vpack.c.b16 %v2628, %v2627
  %v2642 = vpack.c.b16 %v2630, %v2629
  %v2643 = vpack.c.b16 %v2632, %v2631
  %v2644 = vpack.c.b16 %v2634, %v2633
  %v2645 = vpack.c.b16 %v2636, %v2635
  %v2646 = vpack.c.b16 %v2638, %v2637
  %2655 = vmatprep.subr.bf16.mxu0 0
  %2656 = vmatpush1.bf16.msra.mxu0 %v2646
  %2657 = vmatprep.subr.bf16.mxu0 0
  %2658 = vmatpush1.bf16.msra.mxu0 %v2645
  %2659 = vmatprep.subr.bf16.mxu0 0
  %2660 = vmatpush1.bf16.msra.mxu0 %v2644
  %2661 = vmatprep.subr.bf16.mxu0 0
  %2662 = vmatpush1.bf16.msra.mxu0 %v2643
  %2663 = vmatprep.subr.bf16.mxu0 0
  %2664 = vmatpush1.bf16.msra.mxu0 %v2642
  %2665 = vmatprep.subr.bf16.mxu0 0
  %2666 = vmatpush1.bf16.msra.mxu0 %v2641
  %2667 = vmatprep.subr.bf16.mxu0 0
  %2668 = vmatpush1.bf16.msra.mxu0 %v2640
  %2669 = vmatprep.subr.bf16.mxu0 0
  %2670 = vmatpush1.bf16.msra.mxu0 %v2639
  %2671 = vmatprep.subr.bf16.mxu0 0
  %2672 = vmatpush2.bf16.msra.mxu0 0
  %2673 = vmatprep.subr.bf16.mxu0 0
  %2674 = vmatpush2.bf16.msra.mxu0 0
  %2675 = vmatprep.subr.bf16.mxu0 0
  %2676 = vmatpush2.bf16.msra.mxu0 0
  %2677 = vmatprep.subr.bf16.mxu0 0
  %2678 = vmatpush2.bf16.msra.mxu0 0
  %2679 = vmatprep.subr.bf16.mxu0 0
  %2680 = vmatpush2.bf16.msra.mxu0 0
  %2681 = vmatprep.subr.bf16.mxu0 0
  %2682 = vmatpush2.bf16.msra.mxu0 0
  %2683 = vmatprep.subr.bf16.mxu0 0
  %2684 = vmatpush2.bf16.msra.mxu0 0
  %2685 = vmatprep.subr.bf16.mxu0 0
  %2686 = vmatpush2.bf16.msra.mxu0 0
  %2687 = vmatprep.mubr.bf16.mxu0 0
  %2688 = vmatmul.mubr.bf16.gmra.mxu0 %v2558
  %v2689 = vpop.f32.mrf.mxu0
  %v2690 = vadd.f32 0.0, %v2689
  %v2691 = vpop.f32.mrf.mxu0
  %v2692 = vpop.f32.mrf.mxu0
  %v2693 = vadd.f32 0.0, %v2692
  %v2694 = vpop.f32.mrf.mxu0
  %2695 = vmatprep.mubr.bf16.mxu0 0
  %2696 = vmatmul.mubr.bf16.gmra.mxu0 %v2559
  %v2697 = vpop.f32.mrf.mxu0
  %v2698 = vadd.f32 0.0, %v2697
  %v2699 = vpop.f32.mrf.mxu0
  %v2700 = vpop.f32.mrf.mxu0
  %v2701 = vadd.f32 0.0, %v2700
  %v2702 = vpop.f32.mrf.mxu0
  %2703 = vmatprep.mubr.bf16.mxu0 0
  %2704 = vmatmul.mubr.bf16.gmra.mxu0 %v2560
  %v2705 = vpop.f32.mrf.mxu0
  %v2706 = vadd.f32 0.0, %v2705
  %v2707 = vpop.f32.mrf.mxu0
  %v2708 = vpop.f32.mrf.mxu0
  %v2709 = vadd.f32 0.0, %v2708
  %v2710 = vpop.f32.mrf.mxu0
  %2711 = vmatprep.mubr.bf16.mxu0 0
  %2712 = vmatmul.mubr.bf16.gmra.mxu0 %v2561
  %v2713 = vpop.f32.mrf.mxu0
  %v2714 = vadd.f32 0.0, %v2713
  %v2715 = vpop.f32.mrf.mxu0
  %v2716 = vpop.f32.mrf.mxu0
  %v2717 = vadd.f32 0.0, %v2716
  %v2718 = vpop.f32.mrf.mxu0
  %2719 = vmatprep.mubr.bf16.mxu0 0
  %2720 = vmatmul.mubr.bf16.gmra.mxu0 %v2562
  %v2721 = vpop.f32.mrf.mxu0
  %v2722 = vadd.f32 0.0, %v2721
  %v2723 = vpop.f32.mrf.mxu0
  %v2724 = vpop.f32.mrf.mxu0
  %v2725 = vadd.f32 0.0, %v2724
  %v2726 = vpop.f32.mrf.mxu0
  %2727 = vmatprep.mubr.bf16.mxu0 0
  %2728 = vmatmul.mubr.bf16.gmra.mxu0 %v2563
  %v2729 = vpop.f32.mrf.mxu0
  %v2730 = vadd.f32 0.0, %v2729
  %v2731 = vpop.f32.mrf.mxu0
  %v2732 = vpop.f32.mrf.mxu0
  %v2733 = vadd.f32 0.0, %v2732
  %v2734 = vpop.f32.mrf.mxu0
  %2735 = vmatprep.mubr.bf16.mxu0 0
  %2736 = vmatmul.mubr.bf16.gmra.mxu0 %v2564
  %v2737 = vpop.f32.mrf.mxu0
  %v2738 = vadd.f32 0.0, %v2737
  %v2739 = vpop.f32.mrf.mxu0
  %v2740 = vpop.f32.mrf.mxu0
  %v2741 = vadd.f32 0.0, %v2740
  %v2742 = vpop.f32.mrf.mxu0
  %2743 = vmatprep.mubr.bf16.mxu0 0
  %2744 = vmatmul.mubr.bf16.gmra.mxu0 %v2565
  %v2745 = vpop.f32.mrf.mxu0
  %v2746 = vadd.f32 0.0, %v2745
  %v2747 = vpop.f32.mrf.mxu0
  %v2748 = vpop.f32.mrf.mxu0
  %v2749 = vadd.f32 0.0, %v2748
  %v2750 = vpop.f32.mrf.mxu0
  %2751 = vmatprep.mubr.bf16.mxu0 0
  %2752 = vmatmul.mubr.bf16.gmra.mxu0 %v2566
  %v2753 = vpop.f32.mrf.mxu0
  %v2754 = vadd.f32 0.0, %v2753
  %v2755 = vpop.f32.mrf.mxu0
  %v2756 = vpop.f32.mrf.mxu0
  %v2757 = vadd.f32 0.0, %v2756
  %v2758 = vpop.f32.mrf.mxu0
  %2759 = vmatprep.mubr.bf16.mxu0 0
  %2760 = vmatmul.mubr.bf16.gmra.mxu0 %v2567
  %v2761 = vpop.f32.mrf.mxu0
  %v2762 = vadd.f32 0.0, %v2761
  %v2763 = vpop.f32.mrf.mxu0
  %v2764 = vpop.f32.mrf.mxu0
  %v2765 = vadd.f32 0.0, %v2764
  %v2766 = vpop.f32.mrf.mxu0
  %2767 = vmatprep.mubr.bf16.mxu0 0
  %2768 = vmatmul.mubr.bf16.gmra.mxu0 %v2568
  %v2769 = vpop.f32.mrf.mxu0
  %v2770 = vadd.f32 0.0, %v2769
  %v2771 = vpop.f32.mrf.mxu0
  %v2772 = vpop.f32.mrf.mxu0
  %v2773 = vadd.f32 0.0, %v2772
  %v2774 = vpop.f32.mrf.mxu0
  %2775 = vmatprep.mubr.bf16.mxu0 0
  %2776 = vmatmul.mubr.bf16.gmra.mxu0 %v2569
  %v2777 = vpop.f32.mrf.mxu0
  %v2778 = vadd.f32 0.0, %v2777
  %v2779 = vpop.f32.mrf.mxu0
  %v2780 = vpop.f32.mrf.mxu0
  %v2781 = vadd.f32 0.0, %v2780
  %v2782 = vpop.f32.mrf.mxu0
  %2783 = vmatprep.mubr.bf16.mxu0 0
  %2784 = vmatmul.mubr.bf16.gmra.mxu0 %v2570
  %v2785 = vpop.f32.mrf.mxu0
  %v2786 = vadd.f32 0.0, %v2785
  %v2787 = vpop.f32.mrf.mxu0
  %v2788 = vpop.f32.mrf.mxu0
  %v2789 = vadd.f32 0.0, %v2788
  %v2790 = vpop.f32.mrf.mxu0
  %2791 = vmatprep.mubr.bf16.mxu0 0
  %2792 = vmatmul.mubr.bf16.gmra.mxu0 %v2571
  %v2793 = vpop.f32.mrf.mxu0
  %v2794 = vadd.f32 0.0, %v2793
  %v2795 = vpop.f32.mrf.mxu0
  %v2796 = vpop.f32.mrf.mxu0
  %v2797 = vadd.f32 0.0, %v2796
  %v2798 = vpop.f32.mrf.mxu0
  %2799 = vmatprep.mubr.bf16.mxu0 0
  %2800 = vmatmul.mubr.bf16.gmra.mxu0 %v2572
  %v2801 = vpop.f32.mrf.mxu0
  %v2802 = vadd.f32 0.0, %v2801
  %v2803 = vpop.f32.mrf.mxu0
  %v2804 = vpop.f32.mrf.mxu0
  %v2805 = vadd.f32 0.0, %v2804
  %v2806 = vpop.f32.mrf.mxu0
  %2807 = vmatprep.mubr.bf16.mxu0 0
  %2808 = vmatmul.mubr.bf16.gmra.mxu0 %v2573
  %v2809 = vpop.f32.mrf.mxu0
  %v2810 = vadd.f32 0.0, %v2809
  %v2811 = vpop.f32.mrf.mxu0
  %v2812 = vpop.f32.mrf.mxu0
  %v2813 = vadd.f32 0.0, %v2812
  %v2814 = vpop.f32.mrf.mxu0
  %2815 = vmatprep.mubr.bf16.mxu0 0
  %2816 = vmatmul.mubr.bf16.gmra.mxu0 %v2574
  %v2817 = vpop.f32.mrf.mxu0
  %v2818 = vadd.f32 0.0, %v2817
  %v2819 = vpop.f32.mrf.mxu0
  %v2820 = vpop.f32.mrf.mxu0
  %v2821 = vadd.f32 0.0, %v2820
  %v2822 = vpop.f32.mrf.mxu0
  %2823 = vmatprep.mubr.bf16.mxu0 0
  %2824 = vmatmul.mubr.bf16.gmra.mxu0 %v2575
  %v2825 = vpop.f32.mrf.mxu0
  %v2826 = vadd.f32 0.0, %v2825
  %v2827 = vpop.f32.mrf.mxu0
  %v2828 = vpop.f32.mrf.mxu0
  %v2829 = vadd.f32 0.0, %v2828
  %v2830 = vpop.f32.mrf.mxu0
  %2831 = vmatprep.mubr.bf16.mxu0 0
  %2832 = vmatmul.mubr.bf16.gmra.mxu0 %v2576
  %v2833 = vpop.f32.mrf.mxu0
  %v2834 = vadd.f32 0.0, %v2833
  %v2835 = vpop.f32.mrf.mxu0
  %v2836 = vpop.f32.mrf.mxu0
  %v2837 = vadd.f32 0.0, %v2836
  %v2838 = vpop.f32.mrf.mxu0
  %2839 = vmatprep.mubr.bf16.mxu0 0
  %2840 = vmatmul.mubr.bf16.gmra.mxu0 %v2577
  %v2841 = vpop.f32.mrf.mxu0
  %v2842 = vadd.f32 0.0, %v2841
  %v2843 = vpop.f32.mrf.mxu0
  %v2844 = vpop.f32.mrf.mxu0
  %v2845 = vadd.f32 0.0, %v2844
  %v2846 = vpop.f32.mrf.mxu0
  %2847 = vmatprep.mubr.bf16.mxu0 0
  %2848 = vmatmul.mubr.bf16.gmra.mxu0 %v2578
  %v2849 = vpop.f32.mrf.mxu0
  %v2850 = vadd.f32 0.0, %v2849
  %v2851 = vpop.f32.mrf.mxu0
  %v2852 = vpop.f32.mrf.mxu0
  %v2853 = vadd.f32 0.0, %v2852
  %v2854 = vpop.f32.mrf.mxu0
  %2855 = vmatprep.mubr.bf16.mxu0 0
  %2856 = vmatmul.mubr.bf16.gmra.mxu0 %v2579
  %v2857 = vpop.f32.mrf.mxu0
  %v2858 = vadd.f32 0.0, %v2857
  %v2859 = vpop.f32.mrf.mxu0
  %v2860 = vpop.f32.mrf.mxu0
  %v2861 = vadd.f32 0.0, %v2860
  %v2862 = vpop.f32.mrf.mxu0
  %2863 = vmatprep.mubr.bf16.mxu0 0
  %2864 = vmatmul.mubr.bf16.gmra.mxu0 %v2580
  %v2865 = vpop.f32.mrf.mxu0
  %v2866 = vadd.f32 0.0, %v2865
  %v2867 = vpop.f32.mrf.mxu0
  %v2868 = vpop.f32.mrf.mxu0
  %v2869 = vadd.f32 0.0, %v2868
  %v2870 = vpop.f32.mrf.mxu0
  %2871 = vmatprep.mubr.bf16.mxu0 0
  %2872 = vmatmul.mubr.bf16.gmra.mxu0 %v2581
  %v2873 = vpop.f32.mrf.mxu0
  %v2874 = vadd.f32 0.0, %v2873
  %v2875 = vpop.f32.mrf.mxu0
  %v2876 = vpop.f32.mrf.mxu0
  %v2877 = vadd.f32 0.0, %v2876
  %v2878 = vpop.f32.mrf.mxu0
  %2879 = vmatprep.mubr.bf16.mxu0 0
  %2880 = vmatmul.mubr.bf16.gmra.mxu0 %v2582
  %v2881 = vpop.f32.mrf.mxu0
  %v2882 = vadd.f32 0.0, %v2881
  %v2883 = vpop.f32.mrf.mxu0
  %v2884 = vpop.f32.mrf.mxu0
  %v2885 = vadd.f32 0.0, %v2884
  %v2886 = vpop.f32.mrf.mxu0
  %2887 = vmatprep.mubr.bf16.mxu0 0
  %2888 = vmatmul.mubr.bf16.gmra.mxu0 %v2583
  %v2889 = vpop.f32.mrf.mxu0
  %v2890 = vadd.f32 0.0, %v2889
  %v2891 = vpop.f32.mrf.mxu0
  %v2892 = vpop.f32.mrf.mxu0
  %v2893 = vadd.f32 0.0, %v2892
  %v2894 = vpop.f32.mrf.mxu0
  %2895 = vmatprep.mubr.bf16.mxu0 0
  %2896 = vmatmul.mubr.bf16.gmra.mxu0 %v2584
  %v2897 = vpop.f32.mrf.mxu0
  %v2898 = vadd.f32 0.0, %v2897
  %v2899 = vpop.f32.mrf.mxu0
  %v2900 = vpop.f32.mrf.mxu0
  %v2901 = vadd.f32 0.0, %v2900
  %v2902 = vpop.f32.mrf.mxu0
  %2903 = vmatprep.mubr.bf16.mxu0 0
  %2904 = vmatmul.mubr.bf16.gmra.mxu0 %v2585
  %v2905 = vpop.f32.mrf.mxu0
  %v2906 = vadd.f32 0.0, %v2905
  %v2907 = vpop.f32.mrf.mxu0
  %v2908 = vpop.f32.mrf.mxu0
  %v2909 = vadd.f32 0.0, %v2908
  %v2910 = vpop.f32.mrf.mxu0
  %2911 = vmatprep.mubr.bf16.mxu0 0
  %2912 = vmatmul.mubr.bf16.gmra.mxu0 %v2586
  %v2913 = vpop.f32.mrf.mxu0
  %v2914 = vadd.f32 0.0, %v2913
  %v2915 = vpop.f32.mrf.mxu0
  %v2916 = vpop.f32.mrf.mxu0
  %v2917 = vadd.f32 0.0, %v2916
  %v2918 = vpop.f32.mrf.mxu0
  %2919 = vmatprep.mubr.bf16.mxu0 0
  %2920 = vmatmul.mubr.bf16.gmra.mxu0 %v2587
  %v2921 = vpop.f32.mrf.mxu0
  %v2922 = vadd.f32 0.0, %v2921
  %v2923 = vpop.f32.mrf.mxu0
  %v2924 = vpop.f32.mrf.mxu0
  %v2925 = vadd.f32 0.0, %v2924
  %v2926 = vpop.f32.mrf.mxu0
  %2927 = vmatprep.mubr.bf16.mxu0 0
  %2928 = vmatmul.mubr.bf16.gmra.mxu0 %v2588
  %v2929 = vpop.f32.mrf.mxu0
  %v2930 = vadd.f32 0.0, %v2929
  %v2931 = vpop.f32.mrf.mxu0
  %v2932 = vpop.f32.mrf.mxu0
  %v2933 = vadd.f32 0.0, %v2932
  %v2934 = vpop.f32.mrf.mxu0
  %2935 = vmatprep.mubr.bf16.mxu0 0
  %2936 = vmatmul.mubr.bf16.gmra.mxu0 %v2589
  %v2937 = vpop.f32.mrf.mxu0
  %v2938 = vadd.f32 0.0, %v2937
  %v2939 = vpop.f32.mrf.mxu0
  %v2940 = vpop.f32.mrf.mxu0
  %v2941 = vadd.f32 0.0, %v2940
  %v2942 = vpop.f32.mrf.mxu0
  %2943 = vdwg.mxu0
  %v2960 = vunpack.c.l.b16 %v2542
  %v2961 = vunpack.c.l.b16 %v2543
  %v2962 = vunpack.c.l.b16 %v2544
  %v2963 = vunpack.c.l.b16 %v2545
  %v2964 = vunpack.c.l.b16 %v2546
  %v2965 = vunpack.c.l.b16 %v2547
  %v2966 = vunpack.c.l.b16 %v2548
  %v2967 = vunpack.c.l.b16 %v2549
  %v2968 = vunpack.c.l.b16 %v2550
  %v2969 = vunpack.c.l.b16 %v2551
  %v2970 = vunpack.c.l.b16 %v2552
  %v2971 = vunpack.c.l.b16 %v2553
  %v2972 = vunpack.c.l.b16 %v2554
  %v2973 = vunpack.c.l.b16 %v2555
  %v2974 = vunpack.c.l.b16 %v2556
  %v2975 = vunpack.c.l.b16 %v2557
  %v2976 = vpack.c.b16 %v2961, %v2960
  %v2977 = vpack.c.b16 %v2963, %v2962
  %v2978 = vpack.c.b16 %v2965, %v2964
  %v2979 = vpack.c.b16 %v2967, %v2966
  %v2980 = vpack.c.b16 %v2969, %v2968
  %v2981 = vpack.c.b16 %v2971, %v2970
  %v2982 = vpack.c.b16 %v2973, %v2972
  %v2983 = vpack.c.b16 %v2975, %v2974
  %2992 = vmatprep.subr.bf16.mxu0 0
  %2993 = vmatpush1.bf16.msra.mxu0 %v2983
  %2994 = vmatprep.subr.bf16.mxu0 0
  %2995 = vmatpush1.bf16.msra.mxu0 %v2982
  %2996 = vmatprep.subr.bf16.mxu0 0
  %2997 = vmatpush1.bf16.msra.mxu0 %v2981
  %2998 = vmatprep.subr.bf16.mxu0 0
  %2999 = vmatpush1.bf16.msra.mxu0 %v2980
  %3000 = vmatprep.subr.bf16.mxu0 0
  %3001 = vmatpush1.bf16.msra.mxu0 %v2979
  %3002 = vmatprep.subr.bf16.mxu0 0
  %3003 = vmatpush1.bf16.msra.mxu0 %v2978
  %3004 = vmatprep.subr.bf16.mxu0 0
  %3005 = vmatpush1.bf16.msra.mxu0 %v2977
  %3006 = vmatprep.subr.bf16.mxu0 0
  %3007 = vmatpush1.bf16.msra.mxu0 %v2976
  %3008 = vmatprep.subr.bf16.mxu0 0
  %3009 = vmatpush2.bf16.msra.mxu0 0
  %3010 = vmatprep.subr.bf16.mxu0 0
  %3011 = vmatpush2.bf16.msra.mxu0 0
  %3012 = vmatprep.subr.bf16.mxu0 0
  %3013 = vmatpush2.bf16.msra.mxu0 0
  %3014 = vmatprep.subr.bf16.mxu0 0
  %3015 = vmatpush2.bf16.msra.mxu0 0
  %3016 = vmatprep.subr.bf16.mxu0 0
  %3017 = vmatpush2.bf16.msra.mxu0 0
  %3018 = vmatprep.subr.bf16.mxu0 0
  %3019 = vmatpush2.bf16.msra.mxu0 0
  %3020 = vmatprep.subr.bf16.mxu0 0
  %3021 = vmatpush2.bf16.msra.mxu0 0
  %3022 = vmatprep.subr.bf16.mxu0 0
  %3023 = vmatpush2.bf16.msra.mxu0 0
  %3024 = vmatprep.mubr.bf16.mxu0 0
  %3025 = vmatmul.mubr.bf16.gmra.mxu0 %v2510
  %v3026 = vpop.f32.mrf.mxu0
  %v3027 = vadd.f32 %v2690, %v3026
  %v3028 = vpop.f32.mrf.mxu0
  %v3029 = vpop.f32.mrf.mxu0
  %v3030 = vadd.f32 %v2693, %v3029
  %v3031 = vpop.f32.mrf.mxu0
  %3032 = vmatprep.mubr.bf16.mxu0 0
  %3033 = vmatmul.mubr.bf16.gmra.mxu0 %v2511
  %v3034 = vpop.f32.mrf.mxu0
  %v3035 = vadd.f32 %v2698, %v3034
  %v3036 = vpop.f32.mrf.mxu0
  %v3037 = vpop.f32.mrf.mxu0
  %v3038 = vadd.f32 %v2701, %v3037
  %v3039 = vpop.f32.mrf.mxu0
  %3040 = vmatprep.mubr.bf16.mxu0 0
  %3041 = vmatmul.mubr.bf16.gmra.mxu0 %v2512
  %v3042 = vpop.f32.mrf.mxu0
  %v3043 = vadd.f32 %v2706, %v3042
  %v3044 = vpop.f32.mrf.mxu0
  %v3045 = vpop.f32.mrf.mxu0
  %v3046 = vadd.f32 %v2709, %v3045
  %v3047 = vpop.f32.mrf.mxu0
  %3048 = vmatprep.mubr.bf16.mxu0 0
  %3049 = vmatmul.mubr.bf16.gmra.mxu0 %v2513
  %v3050 = vpop.f32.mrf.mxu0
  %v3051 = vadd.f32 %v2714, %v3050
  %v3052 = vpop.f32.mrf.mxu0
  %v3053 = vpop.f32.mrf.mxu0
  %v3054 = vadd.f32 %v2717, %v3053
  %v3055 = vpop.f32.mrf.mxu0
  %3056 = vmatprep.mubr.bf16.mxu0 0
  %3057 = vmatmul.mubr.bf16.gmra.mxu0 %v2514
  %v3058 = vpop.f32.mrf.mxu0
  %v3059 = vadd.f32 %v2722, %v3058
  %v3060 = vpop.f32.mrf.mxu0
  %v3061 = vpop.f32.mrf.mxu0
  %v3062 = vadd.f32 %v2725, %v3061
  %v3063 = vpop.f32.mrf.mxu0
  %3064 = vmatprep.mubr.bf16.mxu0 0
  %3065 = vmatmul.mubr.bf16.gmra.mxu0 %v2515
  %v3066 = vpop.f32.mrf.mxu0
  %v3067 = vadd.f32 %v2730, %v3066
  %v3068 = vpop.f32.mrf.mxu0
  %v3069 = vpop.f32.mrf.mxu0
  %v3070 = vadd.f32 %v2733, %v3069
  %v3071 = vpop.f32.mrf.mxu0
  %3072 = vmatprep.mubr.bf16.mxu0 0
  %3073 = vmatmul.mubr.bf16.gmra.mxu0 %v2516
  %v3074 = vpop.f32.mrf.mxu0
  %v3075 = vadd.f32 %v2738, %v3074
  %v3076 = vpop.f32.mrf.mxu0
  %v3077 = vpop.f32.mrf.mxu0
  %v3078 = vadd.f32 %v2741, %v3077
  %v3079 = vpop.f32.mrf.mxu0
  %3080 = vmatprep.mubr.bf16.mxu0 0
  %3081 = vmatmul.mubr.bf16.gmra.mxu0 %v2517
  %v3082 = vpop.f32.mrf.mxu0
  %v3083 = vadd.f32 %v2746, %v3082
  %v3084 = vpop.f32.mrf.mxu0
  %v3085 = vpop.f32.mrf.mxu0
  %v3086 = vadd.f32 %v2749, %v3085
  %v3087 = vpop.f32.mrf.mxu0
  %3088 = vmatprep.mubr.bf16.mxu0 0
  %3089 = vmatmul.mubr.bf16.gmra.mxu0 %v2518
  %v3090 = vpop.f32.mrf.mxu0
  %v3091 = vadd.f32 %v2754, %v3090
  %v3092 = vpop.f32.mrf.mxu0
  %v3093 = vpop.f32.mrf.mxu0
  %v3094 = vadd.f32 %v2757, %v3093
  %v3095 = vpop.f32.mrf.mxu0
  %3096 = vmatprep.mubr.bf16.mxu0 0
  %3097 = vmatmul.mubr.bf16.gmra.mxu0 %v2519
  %v3098 = vpop.f32.mrf.mxu0
  %v3099 = vadd.f32 %v2762, %v3098
  %v3100 = vpop.f32.mrf.mxu0
  %v3101 = vpop.f32.mrf.mxu0
  %v3102 = vadd.f32 %v2765, %v3101
  %v3103 = vpop.f32.mrf.mxu0
  %3104 = vmatprep.mubr.bf16.mxu0 0
  %3105 = vmatmul.mubr.bf16.gmra.mxu0 %v2520
  %v3106 = vpop.f32.mrf.mxu0
  %v3107 = vadd.f32 %v2770, %v3106
  %v3108 = vpop.f32.mrf.mxu0
  %v3109 = vpop.f32.mrf.mxu0
  %v3110 = vadd.f32 %v2773, %v3109
  %v3111 = vpop.f32.mrf.mxu0
  %3112 = vmatprep.mubr.bf16.mxu0 0
  %3113 = vmatmul.mubr.bf16.gmra.mxu0 %v2521
  %v3114 = vpop.f32.mrf.mxu0
  %v3115 = vadd.f32 %v2778, %v3114
  %v3116 = vpop.f32.mrf.mxu0
  %v3117 = vpop.f32.mrf.mxu0
  %v3118 = vadd.f32 %v2781, %v3117
  %v3119 = vpop.f32.mrf.mxu0
  %3120 = vmatprep.mubr.bf16.mxu0 0
  %3121 = vmatmul.mubr.bf16.gmra.mxu0 %v2522
  %v3122 = vpop.f32.mrf.mxu0
  %v3123 = vadd.f32 %v2786, %v3122
  %v3124 = vpop.f32.mrf.mxu0
  %v3125 = vpop.f32.mrf.mxu0
  %v3126 = vadd.f32 %v2789, %v3125
  %v3127 = vpop.f32.mrf.mxu0
  %3128 = vmatprep.mubr.bf16.mxu0 0
  %3129 = vmatmul.mubr.bf16.gmra.mxu0 %v2523
  %v3130 = vpop.f32.mrf.mxu0
  %v3131 = vadd.f32 %v2794, %v3130
  %v3132 = vpop.f32.mrf.mxu0
  %v3133 = vpop.f32.mrf.mxu0
  %v3134 = vadd.f32 %v2797, %v3133
  %v3135 = vpop.f32.mrf.mxu0
  %3136 = vmatprep.mubr.bf16.mxu0 0
  %3137 = vmatmul.mubr.bf16.gmra.mxu0 %v2524
  %v3138 = vpop.f32.mrf.mxu0
  %v3139 = vadd.f32 %v2802, %v3138
  %v3140 = vpop.f32.mrf.mxu0
  %v3141 = vpop.f32.mrf.mxu0
  %v3142 = vadd.f32 %v2805, %v3141
  %v3143 = vpop.f32.mrf.mxu0
  %3144 = vmatprep.mubr.bf16.mxu0 0
  %3145 = vmatmul.mubr.bf16.gmra.mxu0 %v2525
  %v3146 = vpop.f32.mrf.mxu0
  %v3147 = vadd.f32 %v2810, %v3146
  %v3148 = vpop.f32.mrf.mxu0
  %v3149 = vpop.f32.mrf.mxu0
  %v3150 = vadd.f32 %v2813, %v3149
  %v3151 = vpop.f32.mrf.mxu0
  %3152 = vmatprep.mubr.bf16.mxu0 0
  %3153 = vmatmul.mubr.bf16.gmra.mxu0 %v2526
  %v3154 = vpop.f32.mrf.mxu0
  %v3155 = vadd.f32 %v2818, %v3154
  %v3156 = vpop.f32.mrf.mxu0
  %v3157 = vpop.f32.mrf.mxu0
  %v3158 = vadd.f32 %v2821, %v3157
  %v3159 = vpop.f32.mrf.mxu0
  %3160 = vmatprep.mubr.bf16.mxu0 0
  %3161 = vmatmul.mubr.bf16.gmra.mxu0 %v2527
  %v3162 = vpop.f32.mrf.mxu0
  %v3163 = vadd.f32 %v2826, %v3162
  %v3164 = vpop.f32.mrf.mxu0
  %v3165 = vpop.f32.mrf.mxu0
  %v3166 = vadd.f32 %v2829, %v3165
  %v3167 = vpop.f32.mrf.mxu0
  %3168 = vmatprep.mubr.bf16.mxu0 0
  %3169 = vmatmul.mubr.bf16.gmra.mxu0 %v2528
  %v3170 = vpop.f32.mrf.mxu0
  %v3171 = vadd.f32 %v2834, %v3170
  %v3172 = vpop.f32.mrf.mxu0
  %v3173 = vpop.f32.mrf.mxu0
  %v3174 = vadd.f32 %v2837, %v3173
  %v3175 = vpop.f32.mrf.mxu0
  %3176 = vmatprep.mubr.bf16.mxu0 0
  %3177 = vmatmul.mubr.bf16.gmra.mxu0 %v2529
  %v3178 = vpop.f32.mrf.mxu0
  %v3179 = vadd.f32 %v2842, %v3178
  %v3180 = vpop.f32.mrf.mxu0
  %v3181 = vpop.f32.mrf.mxu0
  %v3182 = vadd.f32 %v2845, %v3181
  %v3183 = vpop.f32.mrf.mxu0
  %3184 = vmatprep.mubr.bf16.mxu0 0
  %3185 = vmatmul.mubr.bf16.gmra.mxu0 %v2530
  %v3186 = vpop.f32.mrf.mxu0
  %v3187 = vadd.f32 %v2850, %v3186
  %v3188 = vpop.f32.mrf.mxu0
  %v3189 = vpop.f32.mrf.mxu0
  %v3190 = vadd.f32 %v2853, %v3189
  %v3191 = vpop.f32.mrf.mxu0
  %3192 = vmatprep.mubr.bf16.mxu0 0
  %3193 = vmatmul.mubr.bf16.gmra.mxu0 %v2531
  %v3194 = vpop.f32.mrf.mxu0
  %v3195 = vadd.f32 %v2858, %v3194
  %v3196 = vpop.f32.mrf.mxu0
  %v3197 = vpop.f32.mrf.mxu0
  %v3198 = vadd.f32 %v2861, %v3197
  %v3199 = vpop.f32.mrf.mxu0
  %3200 = vmatprep.mubr.bf16.mxu0 0
  %3201 = vmatmul.mubr.bf16.gmra.mxu0 %v2532
  %v3202 = vpop.f32.mrf.mxu0
  %v3203 = vadd.f32 %v2866, %v3202
  %v3204 = vpop.f32.mrf.mxu0
  %v3205 = vpop.f32.mrf.mxu0
  %v3206 = vadd.f32 %v2869, %v3205
  %v3207 = vpop.f32.mrf.mxu0
  %3208 = vmatprep.mubr.bf16.mxu0 0
  %3209 = vmatmul.mubr.bf16.gmra.mxu0 %v2533
  %v3210 = vpop.f32.mrf.mxu0
  %v3211 = vadd.f32 %v2874, %v3210
  %v3212 = vpop.f32.mrf.mxu0
  %v3213 = vpop.f32.mrf.mxu0
  %v3214 = vadd.f32 %v2877, %v3213
  %v3215 = vpop.f32.mrf.mxu0
  %3216 = vmatprep.mubr.bf16.mxu0 0
  %3217 = vmatmul.mubr.bf16.gmra.mxu0 %v2534
  %v3218 = vpop.f32.mrf.mxu0
  %v3219 = vadd.f32 %v2882, %v3218
  %v3220 = vpop.f32.mrf.mxu0
  %v3221 = vpop.f32.mrf.mxu0
  %v3222 = vadd.f32 %v2885, %v3221
  %v3223 = vpop.f32.mrf.mxu0
  %3224 = vmatprep.mubr.bf16.mxu0 0
  %3225 = vmatmul.mubr.bf16.gmra.mxu0 %v2535
  %v3226 = vpop.f32.mrf.mxu0
  %v3227 = vadd.f32 %v2890, %v3226
  %v3228 = vpop.f32.mrf.mxu0
  %v3229 = vpop.f32.mrf.mxu0
  %v3230 = vadd.f32 %v2893, %v3229
  %v3231 = vpop.f32.mrf.mxu0
  %3232 = vmatprep.mubr.bf16.mxu0 0
  %3233 = vmatmul.mubr.bf16.gmra.mxu0 %v2536
  %v3234 = vpop.f32.mrf.mxu0
  %v3235 = vadd.f32 %v2898, %v3234
  %v3236 = vpop.f32.mrf.mxu0
  %v3237 = vpop.f32.mrf.mxu0
  %v3238 = vadd.f32 %v2901, %v3237
  %v3239 = vpop.f32.mrf.mxu0
  %3240 = vmatprep.mubr.bf16.mxu0 0
  %3241 = vmatmul.mubr.bf16.gmra.mxu0 %v2537
  %v3242 = vpop.f32.mrf.mxu0
  %v3243 = vadd.f32 %v2906, %v3242
  %v3244 = vpop.f32.mrf.mxu0
  %v3245 = vpop.f32.mrf.mxu0
  %v3246 = vadd.f32 %v2909, %v3245
  %v3247 = vpop.f32.mrf.mxu0
  %3248 = vmatprep.mubr.bf16.mxu0 0
  %3249 = vmatmul.mubr.bf16.gmra.mxu0 %v2538
  %v3250 = vpop.f32.mrf.mxu0
  %v3251 = vadd.f32 %v2914, %v3250
  %v3252 = vpop.f32.mrf.mxu0
  %v3253 = vpop.f32.mrf.mxu0
  %v3254 = vadd.f32 %v2917, %v3253
  %v3255 = vpop.f32.mrf.mxu0
  %3256 = vmatprep.mubr.bf16.mxu0 0
  %3257 = vmatmul.mubr.bf16.gmra.mxu0 %v2539
  %v3258 = vpop.f32.mrf.mxu0
  %v3259 = vadd.f32 %v2922, %v3258
  %v3260 = vpop.f32.mrf.mxu0
  %v3261 = vpop.f32.mrf.mxu0
  %v3262 = vadd.f32 %v2925, %v3261
  %v3263 = vpop.f32.mrf.mxu0
  %3264 = vmatprep.mubr.bf16.mxu0 0
  %3265 = vmatmul.mubr.bf16.gmra.mxu0 %v2540
  %v3266 = vpop.f32.mrf.mxu0
  %v3267 = vadd.f32 %v2930, %v3266
  %v3268 = vpop.f32.mrf.mxu0
  %v3269 = vpop.f32.mrf.mxu0
  %v3270 = vadd.f32 %v2933, %v3269
  %v3271 = vpop.f32.mrf.mxu0
  %3272 = vmatprep.mubr.bf16.mxu0 0
  %3273 = vmatmul.mubr.bf16.gmra.mxu0 %v2541
  %v3274 = vpop.f32.mrf.mxu0
  %v3275 = vadd.f32 %v2938, %v3274
  %v3276 = vpop.f32.mrf.mxu0
  %v3277 = vpop.f32.mrf.mxu0
  %v3278 = vadd.f32 %v2941, %v3277
  %v3279 = vpop.f32.mrf.mxu0
  %3280 = vdwg.mxu0
  %v3281 = vrot.slane %v2253, 1
  %v3282 = vrot.slane %v2254, 1
  %v3283 = vrot.slane %v2255, 1
  %v3284 = vrot.slane %v2256, 1
  %v3285 = vrot.slane %v2257, 1
  %v3286 = vrot.slane %v2258, 1
  %v3287 = vrot.slane %v2259, 1
  %v3288 = vrot.slane %v2260, 1
  %v3289 = vrot.slane %v2261, 1
  %v3290 = vrot.slane %v2262, 1
  %v3291 = vrot.slane %v2263, 1
  %v3292 = vrot.slane %v2264, 1
  %v3293 = vrot.slane %v2265, 1
  %v3294 = vrot.slane %v2266, 1
  %v3295 = vrot.slane %v2267, 1
  %v3296 = vrot.slane %v2268, 1
  %v3297 = vrot.slane %v2269, 1
  %v3298 = vrot.slane %v2270, 1
  %v3299 = vrot.slane %v2271, 1
  %v3300 = vrot.slane %v2272, 1
  %v3301 = vrot.slane %v2273, 1
  %v3302 = vrot.slane %v2274, 1
  %v3303 = vrot.slane %v2275, 1
  %v3304 = vrot.slane %v2276, 1
  %v3305 = vrot.slane %v2277, 1
  %v3306 = vrot.slane %v2278, 1
  %v3307 = vrot.slane %v2279, 1
  %v3308 = vrot.slane %v2280, 1
  %v3309 = vrot.slane %v2281, 1
  %v3310 = vrot.slane %v2282, 1
  %v3311 = vrot.slane %v2283, 1
  %v3312 = vrot.slane %v2284, 1
  %v3313 = vrot.slane %v2285, 1
  %v3314 = vrot.slane %v2286, 1
  %v3315 = vrot.slane %v2287, 1
  %v3316 = vrot.slane %v2288, 1
  %v3317 = vrot.slane %v2289, 1
  %v3318 = vrot.slane %v2290, 1
  %v3319 = vrot.slane %v2291, 1
  %v3320 = vrot.slane %v2292, 1
  %v3321 = vrot.slane %v2293, 1
  %v3322 = vrot.slane %v2294, 1
  %v3323 = vrot.slane %v2295, 1
  %v3324 = vrot.slane %v2296, 1
  %v3325 = vrot.slane %v2297, 1
  %v3326 = vrot.slane %v2298, 1
  %v3327 = vrot.slane %v2299, 1
  %v3328 = vrot.slane %v2300, 1
  %v3329 = vrot.slane %v2301, 1
  %v3330 = vrot.slane %v2302, 1
  %v3331 = vrot.slane %v2303, 1
  %v3332 = vrot.slane %v2304, 1
  %v3333 = vrot.slane %v2305, 1
  %v3334 = vrot.slane %v2306, 1
  %v3335 = vrot.slane %v2307, 1
  %v3336 = vrot.slane %v2308, 1
  %v3337 = vrot.slane %v2309, 1
  %v3338 = vrot.slane %v2310, 1
  %v3339 = vrot.slane %v2311, 1
  %v3340 = vrot.slane %v2312, 1
  %v3341 = vrot.slane %v2313, 1
  %v3342 = vrot.slane %v2314, 1
  %v3343 = vrot.slane %v2315, 1
  %v3344 = vrot.slane %v2316, 1
  %vm3345 = vcmp.lt.s32.totalorder %v1037, 7
  %v3346 = vsel %vm3345, %v3343, %v3344
  %v3347 = vsel %vm3345, %v3342, %v3343
  %v3348 = vsel %vm3345, %v3341, %v3342
  %v3349 = vsel %vm3345, %v3340, %v3341
  %v3350 = vsel %vm3345, %v3339, %v3340
  %v3351 = vsel %vm3345, %v3338, %v3339
  %v3352 = vsel %vm3345, %v3337, %v3338
  %v3353 = vsel %vm3345, %v3336, %v3337
  %v3354 = vsel %vm3345, %v3335, %v3336
  %v3355 = vsel %vm3345, %v3334, %v3335
  %v3356 = vsel %vm3345, %v3333, %v3334
  %v3357 = vsel %vm3345, %v3332, %v3333
  %v3358 = vsel %vm3345, %v3331, %v3332
  %v3359 = vsel %vm3345, %v3330, %v3331
  %v3360 = vsel %vm3345, %v3329, %v3330
  %v3361 = vsel %vm3345, %v3328, %v3329
  %v3362 = vsel %vm3345, %v3327, %v3328
  %v3363 = vsel %vm3345, %v3326, %v3327
  %v3364 = vsel %vm3345, %v3325, %v3326
  %v3365 = vsel %vm3345, %v3324, %v3325
  %v3366 = vsel %vm3345, %v3323, %v3324
  %v3367 = vsel %vm3345, %v3322, %v3323
  %v3368 = vsel %vm3345, %v3321, %v3322
  %v3369 = vsel %vm3345, %v3320, %v3321
  %v3370 = vsel %vm3345, %v3319, %v3320
  %v3371 = vsel %vm3345, %v3318, %v3319
  %v3372 = vsel %vm3345, %v3317, %v3318
  %v3373 = vsel %vm3345, %v3316, %v3317
  %v3374 = vsel %vm3345, %v3315, %v3316
  %v3375 = vsel %vm3345, %v3314, %v3315
  %v3376 = vsel %vm3345, %v3313, %v3314
  %v3377 = vsel %vm3345, %v3312, %v3313
  %v3378 = vsel %vm3345, %v3311, %v3312
  %v3379 = vsel %vm3345, %v3310, %v3311
  %v3380 = vsel %vm3345, %v3309, %v3310
  %v3381 = vsel %vm3345, %v3308, %v3309
  %v3382 = vsel %vm3345, %v3307, %v3308
  %v3383 = vsel %vm3345, %v3306, %v3307
  %v3384 = vsel %vm3345, %v3305, %v3306
  %v3385 = vsel %vm3345, %v3304, %v3305
  %v3386 = vsel %vm3345, %v3303, %v3304
  %v3387 = vsel %vm3345, %v3302, %v3303
  %v3388 = vsel %vm3345, %v3301, %v3302
  %v3389 = vsel %vm3345, %v3300, %v3301
  %v3390 = vsel %vm3345, %v3299, %v3300
  %v3391 = vsel %vm3345, %v3298, %v3299
  %v3392 = vsel %vm3345, %v3297, %v3298
  %v3393 = vsel %vm3345, %v3296, %v3297
  %v3394 = vsel %vm3345, %v3295, %v3296
  %v3395 = vsel %vm3345, %v3294, %v3295
  %v3396 = vsel %vm3345, %v3293, %v3294
  %v3397 = vsel %vm3345, %v3292, %v3293
  %v3398 = vsel %vm3345, %v3291, %v3292
  %v3399 = vsel %vm3345, %v3290, %v3291
  %v3400 = vsel %vm3345, %v3289, %v3290
  %v3401 = vsel %vm3345, %v3288, %v3289
  %v3402 = vsel %vm3345, %v3287, %v3288
  %v3403 = vsel %vm3345, %v3286, %v3287
  %v3404 = vsel %vm3345, %v3285, %v3286
  %v3405 = vsel %vm3345, %v3284, %v3285
  %v3406 = vsel %vm3345, %v3283, %v3284
  %v3407 = vsel %vm3345, %v3282, %v3283
  %v3408 = vsel %vm3345, %v3281, %v3282
  %v3409 = vsel %vm3345, %v3344, %v3281
  %v3410 = vmul.f32 %v3408, %v2189
  %v3411 = vmul.f32 %v3407, %v2190
  %v3412 = vmul.f32 %v3406, %v2191
  %v3413 = vmul.f32 %v3405, %v2192
  %v3414 = vmul.f32 %v3404, %v2193
  %v3415 = vmul.f32 %v3403, %v2194
  %v3416 = vmul.f32 %v3402, %v2195
  %v3417 = vmul.f32 %v3401, %v2196
  %v3418 = vmul.f32 %v3400, %v2197
  %v3419 = vmul.f32 %v3399, %v2198
  %v3420 = vmul.f32 %v3398, %v2199
  %v3421 = vmul.f32 %v3397, %v2200
  %v3422 = vmul.f32 %v3396, %v2201
  %v3423 = vmul.f32 %v3395, %v2202
  %v3424 = vmul.f32 %v3394, %v2203
  %v3425 = vmul.f32 %v3393, %v2204
  %v3426 = vmul.f32 %v3392, %v2205
  %v3427 = vmul.f32 %v3391, %v2206
  %v3428 = vmul.f32 %v3390, %v2207
  %v3429 = vmul.f32 %v3389, %v2208
  %v3430 = vmul.f32 %v3388, %v2209
  %v3431 = vmul.f32 %v3387, %v2210
  %v3432 = vmul.f32 %v3386, %v2211
  %v3433 = vmul.f32 %v3385, %v2212
  %v3434 = vmul.f32 %v3384, %v2213
  %v3435 = vmul.f32 %v3383, %v2214
  %v3436 = vmul.f32 %v3382, %v2215
  %v3437 = vmul.f32 %v3381, %v2216
  %v3438 = vmul.f32 %v3380, %v2217
  %v3439 = vmul.f32 %v3379, %v2218
  %v3440 = vmul.f32 %v3378, %v2219
  %v3441 = vmul.f32 %v3377, %v2220
  %v3442 = vmul.f32 %v3376, %v2221
  %v3443 = vmul.f32 %v3375, %v2222
  %v3444 = vmul.f32 %v3374, %v2223
  %v3445 = vmul.f32 %v3373, %v2224
  %v3446 = vmul.f32 %v3372, %v2225
  %v3447 = vmul.f32 %v3371, %v2226
  %v3448 = vmul.f32 %v3370, %v2227
  %v3449 = vmul.f32 %v3369, %v2228
  %v3450 = vmul.f32 %v3368, %v2229
  %v3451 = vmul.f32 %v3367, %v2230
  %v3452 = vmul.f32 %v3366, %v2231
  %v3453 = vmul.f32 %v3365, %v2232
  %v3454 = vmul.f32 %v3364, %v2233
  %v3455 = vmul.f32 %v3363, %v2234
  %v3456 = vmul.f32 %v3362, %v2235
  %v3457 = vmul.f32 %v3361, %v2236
  %v3458 = vmul.f32 %v3360, %v2237
  %v3459 = vmul.f32 %v3359, %v2238
  %v3460 = vmul.f32 %v3358, %v2239
  %v3461 = vmul.f32 %v3357, %v2240
  %v3462 = vmul.f32 %v3356, %v2241
  %v3463 = vmul.f32 %v3355, %v2242
  %v3464 = vmul.f32 %v3354, %v2243
  %v3465 = vmul.f32 %v3353, %v2244
  %v3466 = vmul.f32 %v3352, %v2245
  %v3467 = vmul.f32 %v3351, %v2246
  %v3468 = vmul.f32 %v3350, %v2247
  %v3469 = vmul.f32 %v3349, %v2248
  %v3470 = vmul.f32 %v3348, %v2249
  %v3471 = vmul.f32 %v3347, %v2250
  %v3472 = vmul.f32 %v3346, %v2251
  %v3473 = vmul.f32 %v3409, %v2252
  %v3474 = vpack.c.bf16 %v3411, %v3410
  %v3475 = vpack.c.bf16 %v3413, %v3412
  %v3476 = vpack.c.bf16 %v3415, %v3414
  %v3477 = vpack.c.bf16 %v3417, %v3416
  %v3478 = vpack.c.bf16 %v3419, %v3418
  %v3479 = vpack.c.bf16 %v3421, %v3420
  %v3480 = vpack.c.bf16 %v3423, %v3422
  %v3481 = vpack.c.bf16 %v3425, %v3424
  %v3482 = vpack.c.bf16 %v3427, %v3426
  %v3483 = vpack.c.bf16 %v3429, %v3428
  %v3484 = vpack.c.bf16 %v3431, %v3430
  %v3485 = vpack.c.bf16 %v3433, %v3432
  %v3486 = vpack.c.bf16 %v3435, %v3434
  %v3487 = vpack.c.bf16 %v3437, %v3436
  %v3488 = vpack.c.bf16 %v3439, %v3438
  %v3489 = vpack.c.bf16 %v3441, %v3440
  %v3490 = vpack.c.bf16 %v3443, %v3442
  %v3491 = vpack.c.bf16 %v3445, %v3444
  %v3492 = vpack.c.bf16 %v3447, %v3446
  %v3493 = vpack.c.bf16 %v3449, %v3448
  %v3494 = vpack.c.bf16 %v3451, %v3450
  %v3495 = vpack.c.bf16 %v3453, %v3452
  %v3496 = vpack.c.bf16 %v3455, %v3454
  %v3497 = vpack.c.bf16 %v3457, %v3456
  %v3498 = vpack.c.bf16 %v3459, %v3458
  %v3499 = vpack.c.bf16 %v3461, %v3460
  %v3500 = vpack.c.bf16 %v3463, %v3462
  %v3501 = vpack.c.bf16 %v3465, %v3464
  %v3502 = vpack.c.bf16 %v3467, %v3466
  %v3503 = vpack.c.bf16 %v3469, %v3468
  %v3504 = vpack.c.bf16 %v3471, %v3470
  %v3505 = vpack.c.bf16 %v3473, %v3472
  %s3506 = scalar_lea.vmem %s4, 128
  %v3507 = vld [vmem:[%s3506] sm:$0xf]
  %v3508 = vld [vmem:[%s3506 + $0x4] sm:$0xf]
  %v3509 = vld [vmem:[%s3506 + $0x8] sm:$0xf]
  %v3510 = vld [vmem:[%s3506 + $0xc] sm:$0xf]
  %v3511 = vld [vmem:[%s3506 + $0x10] sm:$0xf]
  %v3512 = vld [vmem:[%s3506 + $0x14] sm:$0xf]
  %v3513 = vld [vmem:[%s3506 + $0x18] sm:$0xf]
  %v3514 = vld [vmem:[%s3506 + $0x1c] sm:$0xf]
  %v3515 = vld [vmem:[%s3506 + $0x20] sm:$0xf]
  %v3516 = vld [vmem:[%s3506 + $0x24] sm:$0xf]
  %v3517 = vld [vmem:[%s3506 + $0x28] sm:$0xf]
  %v3518 = vld [vmem:[%s3506 + $0x2c] sm:$0xf]
  %v3519 = vld [vmem:[%s3506 + $0x30] sm:$0xf]
  %v3520 = vld [vmem:[%s3506 + $0x34] sm:$0xf]
  %v3521 = vld [vmem:[%s3506 + $0x38] sm:$0xf]
  %v3522 = vld [vmem:[%s3506 + $0x3c] sm:$0xf]
  %v3539 = vunpack.c.l.b16 %v3507
  %v3540 = vunpack.c.l.b16 %v3508
  %v3541 = vunpack.c.l.b16 %v3509
  %v3542 = vunpack.c.l.b16 %v3510
  %v3543 = vunpack.c.l.b16 %v3511
  %v3544 = vunpack.c.l.b16 %v3512
  %v3545 = vunpack.c.l.b16 %v3513
  %v3546 = vunpack.c.l.b16 %v3514
  %v3547 = vunpack.c.l.b16 %v3515
  %v3548 = vunpack.c.l.b16 %v3516
  %v3549 = vunpack.c.l.b16 %v3517
  %v3550 = vunpack.c.l.b16 %v3518
  %v3551 = vunpack.c.l.b16 %v3519
  %v3552 = vunpack.c.l.b16 %v3520
  %v3553 = vunpack.c.l.b16 %v3521
  %v3554 = vunpack.c.l.b16 %v3522
  %v3555 = vpack.c.b16 %v3540, %v3539
  %v3556 = vpack.c.b16 %v3542, %v3541
  %v3557 = vpack.c.b16 %v3544, %v3543
  %v3558 = vpack.c.b16 %v3546, %v3545
  %v3559 = vpack.c.b16 %v3548, %v3547
  %v3560 = vpack.c.b16 %v3550, %v3549
  %v3561 = vpack.c.b16 %v3552, %v3551
  %v3562 = vpack.c.b16 %v3554, %v3553
  %3571 = vmatprep.subr.bf16.mxu0 0
  %3572 = vmatpush1.bf16.msra.mxu0 %v3562
  %3573 = vmatprep.subr.bf16.mxu0 0
  %3574 = vmatpush1.bf16.msra.mxu0 %v3561
  %3575 = vmatprep.subr.bf16.mxu0 0
  %3576 = vmatpush1.bf16.msra.mxu0 %v3560
  %3577 = vmatprep.subr.bf16.mxu0 0
  %3578 = vmatpush1.bf16.msra.mxu0 %v3559
  %3579 = vmatprep.subr.bf16.mxu0 0
  %3580 = vmatpush1.bf16.msra.mxu0 %v3558
  %3581 = vmatprep.subr.bf16.mxu0 0
  %3582 = vmatpush1.bf16.msra.mxu0 %v3557
  %3583 = vmatprep.subr.bf16.mxu0 0
  %3584 = vmatpush1.bf16.msra.mxu0 %v3556
  %3585 = vmatprep.subr.bf16.mxu0 0
  %3586 = vmatpush1.bf16.msra.mxu0 %v3555
  %3587 = vmatprep.subr.bf16.mxu0 0
  %3588 = vmatpush2.bf16.msra.mxu0 0
  %3589 = vmatprep.subr.bf16.mxu0 0
  %3590 = vmatpush2.bf16.msra.mxu0 0
  %3591 = vmatprep.subr.bf16.mxu0 0
  %3592 = vmatpush2.bf16.msra.mxu0 0
  %3593 = vmatprep.subr.bf16.mxu0 0
  %3594 = vmatpush2.bf16.msra.mxu0 0
  %3595 = vmatprep.subr.bf16.mxu0 0
  %3596 = vmatpush2.bf16.msra.mxu0 0
  %3597 = vmatprep.subr.bf16.mxu0 0
  %3598 = vmatpush2.bf16.msra.mxu0 0
  %3599 = vmatprep.subr.bf16.mxu0 0
  %3600 = vmatpush2.bf16.msra.mxu0 0
  %3601 = vmatprep.subr.bf16.mxu0 0
  %3602 = vmatpush2.bf16.msra.mxu0 0
  %3603 = vmatprep.mubr.bf16.mxu0 0
  %3604 = vmatmul.mubr.bf16.gmra.mxu0 %v3474
  %v3605 = vpop.f32.mrf.mxu0
  %v3606 = vadd.f32 0.0, %v3605
  %v3607 = vpop.f32.mrf.mxu0
  %v3608 = vpop.f32.mrf.mxu0
  %v3609 = vadd.f32 0.0, %v3608
  %v3610 = vpop.f32.mrf.mxu0
  %3611 = vmatprep.mubr.bf16.mxu0 0
  %3612 = vmatmul.mubr.bf16.gmra.mxu0 %v3475
  %v3613 = vpop.f32.mrf.mxu0
  %v3614 = vadd.f32 0.0, %v3613
  %v3615 = vpop.f32.mrf.mxu0
  %v3616 = vpop.f32.mrf.mxu0
  %v3617 = vadd.f32 0.0, %v3616
  %v3618 = vpop.f32.mrf.mxu0
  %3619 = vmatprep.mubr.bf16.mxu0 0
  %3620 = vmatmul.mubr.bf16.gmra.mxu0 %v3476
  %v3621 = vpop.f32.mrf.mxu0
  %v3622 = vadd.f32 0.0, %v3621
  %v3623 = vpop.f32.mrf.mxu0
  %v3624 = vpop.f32.mrf.mxu0
  %v3625 = vadd.f32 0.0, %v3624
  %v3626 = vpop.f32.mrf.mxu0
  %3627 = vmatprep.mubr.bf16.mxu0 0
  %3628 = vmatmul.mubr.bf16.gmra.mxu0 %v3477
  %v3629 = vpop.f32.mrf.mxu0
  %v3630 = vadd.f32 0.0, %v3629
  %v3631 = vpop.f32.mrf.mxu0
  %v3632 = vpop.f32.mrf.mxu0
  %v3633 = vadd.f32 0.0, %v3632
  %v3634 = vpop.f32.mrf.mxu0
  %3635 = vmatprep.mubr.bf16.mxu0 0
  %3636 = vmatmul.mubr.bf16.gmra.mxu0 %v3478
  %v3637 = vpop.f32.mrf.mxu0
  %v3638 = vadd.f32 0.0, %v3637
  %v3639 = vpop.f32.mrf.mxu0
  %v3640 = vpop.f32.mrf.mxu0
  %v3641 = vadd.f32 0.0, %v3640
  %v3642 = vpop.f32.mrf.mxu0
  %3643 = vmatprep.mubr.bf16.mxu0 0
  %3644 = vmatmul.mubr.bf16.gmra.mxu0 %v3479
  %v3645 = vpop.f32.mrf.mxu0
  %v3646 = vadd.f32 0.0, %v3645
  %v3647 = vpop.f32.mrf.mxu0
  %v3648 = vpop.f32.mrf.mxu0
  %v3649 = vadd.f32 0.0, %v3648
  %v3650 = vpop.f32.mrf.mxu0
  %3651 = vmatprep.mubr.bf16.mxu0 0
  %3652 = vmatmul.mubr.bf16.gmra.mxu0 %v3480
  %v3653 = vpop.f32.mrf.mxu0
  %v3654 = vadd.f32 0.0, %v3653
  %v3655 = vpop.f32.mrf.mxu0
  %v3656 = vpop.f32.mrf.mxu0
  %v3657 = vadd.f32 0.0, %v3656
  %v3658 = vpop.f32.mrf.mxu0
  %3659 = vmatprep.mubr.bf16.mxu0 0
  %3660 = vmatmul.mubr.bf16.gmra.mxu0 %v3481
  %v3661 = vpop.f32.mrf.mxu0
  %v3662 = vadd.f32 0.0, %v3661
  %v3663 = vpop.f32.mrf.mxu0
  %v3664 = vpop.f32.mrf.mxu0
  %v3665 = vadd.f32 0.0, %v3664
  %v3666 = vpop.f32.mrf.mxu0
  %3667 = vmatprep.mubr.bf16.mxu0 0
  %3668 = vmatmul.mubr.bf16.gmra.mxu0 %v3482
  %v3669 = vpop.f32.mrf.mxu0
  %v3670 = vadd.f32 0.0, %v3669
  %v3671 = vpop.f32.mrf.mxu0
  %v3672 = vpop.f32.mrf.mxu0
  %v3673 = vadd.f32 0.0, %v3672
  %v3674 = vpop.f32.mrf.mxu0
  %3675 = vmatprep.mubr.bf16.mxu0 0
  %3676 = vmatmul.mubr.bf16.gmra.mxu0 %v3483
  %v3677 = vpop.f32.mrf.mxu0
  %v3678 = vadd.f32 0.0, %v3677
  %v3679 = vpop.f32.mrf.mxu0
  %v3680 = vpop.f32.mrf.mxu0
  %v3681 = vadd.f32 0.0, %v3680
  %v3682 = vpop.f32.mrf.mxu0
  %3683 = vmatprep.mubr.bf16.mxu0 0
  %3684 = vmatmul.mubr.bf16.gmra.mxu0 %v3484
  %v3685 = vpop.f32.mrf.mxu0
  %v3686 = vadd.f32 0.0, %v3685
  %v3687 = vpop.f32.mrf.mxu0
  %v3688 = vpop.f32.mrf.mxu0
  %v3689 = vadd.f32 0.0, %v3688
  %v3690 = vpop.f32.mrf.mxu0
  %3691 = vmatprep.mubr.bf16.mxu0 0
  %3692 = vmatmul.mubr.bf16.gmra.mxu0 %v3485
  %v3693 = vpop.f32.mrf.mxu0
  %v3694 = vadd.f32 0.0, %v3693
  %v3695 = vpop.f32.mrf.mxu0
  %v3696 = vpop.f32.mrf.mxu0
  %v3697 = vadd.f32 0.0, %v3696
  %v3698 = vpop.f32.mrf.mxu0
  %3699 = vmatprep.mubr.bf16.mxu0 0
  %3700 = vmatmul.mubr.bf16.gmra.mxu0 %v3486
  %v3701 = vpop.f32.mrf.mxu0
  %v3702 = vadd.f32 0.0, %v3701
  %v3703 = vpop.f32.mrf.mxu0
  %v3704 = vpop.f32.mrf.mxu0
  %v3705 = vadd.f32 0.0, %v3704
  %v3706 = vpop.f32.mrf.mxu0
  %3707 = vmatprep.mubr.bf16.mxu0 0
  %3708 = vmatmul.mubr.bf16.gmra.mxu0 %v3487
  %v3709 = vpop.f32.mrf.mxu0
  %v3710 = vadd.f32 0.0, %v3709
  %v3711 = vpop.f32.mrf.mxu0
  %v3712 = vpop.f32.mrf.mxu0
  %v3713 = vadd.f32 0.0, %v3712
  %v3714 = vpop.f32.mrf.mxu0
  %3715 = vmatprep.mubr.bf16.mxu0 0
  %3716 = vmatmul.mubr.bf16.gmra.mxu0 %v3488
  %v3717 = vpop.f32.mrf.mxu0
  %v3718 = vadd.f32 0.0, %v3717
  %v3719 = vpop.f32.mrf.mxu0
  %v3720 = vpop.f32.mrf.mxu0
  %v3721 = vadd.f32 0.0, %v3720
  %v3722 = vpop.f32.mrf.mxu0
  %3723 = vmatprep.mubr.bf16.mxu0 0
  %3724 = vmatmul.mubr.bf16.gmra.mxu0 %v3489
  %v3725 = vpop.f32.mrf.mxu0
  %v3726 = vadd.f32 0.0, %v3725
  %v3727 = vpop.f32.mrf.mxu0
  %v3728 = vpop.f32.mrf.mxu0
  %v3729 = vadd.f32 0.0, %v3728
  %v3730 = vpop.f32.mrf.mxu0
  %3731 = vmatprep.mubr.bf16.mxu0 0
  %3732 = vmatmul.mubr.bf16.gmra.mxu0 %v3490
  %v3733 = vpop.f32.mrf.mxu0
  %v3734 = vadd.f32 0.0, %v3733
  %v3735 = vpop.f32.mrf.mxu0
  %v3736 = vpop.f32.mrf.mxu0
  %v3737 = vadd.f32 0.0, %v3736
  %v3738 = vpop.f32.mrf.mxu0
  %3739 = vmatprep.mubr.bf16.mxu0 0
  %3740 = vmatmul.mubr.bf16.gmra.mxu0 %v3491
  %v3741 = vpop.f32.mrf.mxu0
  %v3742 = vadd.f32 0.0, %v3741
  %v3743 = vpop.f32.mrf.mxu0
  %v3744 = vpop.f32.mrf.mxu0
  %v3745 = vadd.f32 0.0, %v3744
  %v3746 = vpop.f32.mrf.mxu0
  %3747 = vmatprep.mubr.bf16.mxu0 0
  %3748 = vmatmul.mubr.bf16.gmra.mxu0 %v3492
  %v3749 = vpop.f32.mrf.mxu0
  %v3750 = vadd.f32 0.0, %v3749
  %v3751 = vpop.f32.mrf.mxu0
  %v3752 = vpop.f32.mrf.mxu0
  %v3753 = vadd.f32 0.0, %v3752
  %v3754 = vpop.f32.mrf.mxu0
  %3755 = vmatprep.mubr.bf16.mxu0 0
  %3756 = vmatmul.mubr.bf16.gmra.mxu0 %v3493
  %v3757 = vpop.f32.mrf.mxu0
  %v3758 = vadd.f32 0.0, %v3757
  %v3759 = vpop.f32.mrf.mxu0
  %v3760 = vpop.f32.mrf.mxu0
  %v3761 = vadd.f32 0.0, %v3760
  %v3762 = vpop.f32.mrf.mxu0
  %3763 = vmatprep.mubr.bf16.mxu0 0
  %3764 = vmatmul.mubr.bf16.gmra.mxu0 %v3494
  %v3765 = vpop.f32.mrf.mxu0
  %v3766 = vadd.f32 0.0, %v3765
  %v3767 = vpop.f32.mrf.mxu0
  %v3768 = vpop.f32.mrf.mxu0
  %v3769 = vadd.f32 0.0, %v3768
  %v3770 = vpop.f32.mrf.mxu0
  %3771 = vmatprep.mubr.bf16.mxu0 0
  %3772 = vmatmul.mubr.bf16.gmra.mxu0 %v3495
  %v3773 = vpop.f32.mrf.mxu0
  %v3774 = vadd.f32 0.0, %v3773
  %v3775 = vpop.f32.mrf.mxu0
  %v3776 = vpop.f32.mrf.mxu0
  %v3777 = vadd.f32 0.0, %v3776
  %v3778 = vpop.f32.mrf.mxu0
  %3779 = vmatprep.mubr.bf16.mxu0 0
  %3780 = vmatmul.mubr.bf16.gmra.mxu0 %v3496
  %v3781 = vpop.f32.mrf.mxu0
  %v3782 = vadd.f32 0.0, %v3781
  %v3783 = vpop.f32.mrf.mxu0
  %v3784 = vpop.f32.mrf.mxu0
  %v3785 = vadd.f32 0.0, %v3784
  %v3786 = vpop.f32.mrf.mxu0
  %3787 = vmatprep.mubr.bf16.mxu0 0
  %3788 = vmatmul.mubr.bf16.gmra.mxu0 %v3497
  %v3789 = vpop.f32.mrf.mxu0
  %v3790 = vadd.f32 0.0, %v3789
  %v3791 = vpop.f32.mrf.mxu0
  %v3792 = vpop.f32.mrf.mxu0
  %v3793 = vadd.f32 0.0, %v3792
  %v3794 = vpop.f32.mrf.mxu0
  %3795 = vmatprep.mubr.bf16.mxu0 0
  %3796 = vmatmul.mubr.bf16.gmra.mxu0 %v3498
  %v3797 = vpop.f32.mrf.mxu0
  %v3798 = vadd.f32 0.0, %v3797
  %v3799 = vpop.f32.mrf.mxu0
  %v3800 = vpop.f32.mrf.mxu0
  %v3801 = vadd.f32 0.0, %v3800
  %v3802 = vpop.f32.mrf.mxu0
  %3803 = vmatprep.mubr.bf16.mxu0 0
  %3804 = vmatmul.mubr.bf16.gmra.mxu0 %v3499
  %v3805 = vpop.f32.mrf.mxu0
  %v3806 = vadd.f32 0.0, %v3805
  %v3807 = vpop.f32.mrf.mxu0
  %v3808 = vpop.f32.mrf.mxu0
  %v3809 = vadd.f32 0.0, %v3808
  %v3810 = vpop.f32.mrf.mxu0
  %3811 = vmatprep.mubr.bf16.mxu0 0
  %3812 = vmatmul.mubr.bf16.gmra.mxu0 %v3500
  %v3813 = vpop.f32.mrf.mxu0
  %v3814 = vadd.f32 0.0, %v3813
  %v3815 = vpop.f32.mrf.mxu0
  %v3816 = vpop.f32.mrf.mxu0
  %v3817 = vadd.f32 0.0, %v3816
  %v3818 = vpop.f32.mrf.mxu0
  %3819 = vmatprep.mubr.bf16.mxu0 0
  %3820 = vmatmul.mubr.bf16.gmra.mxu0 %v3501
  %v3821 = vpop.f32.mrf.mxu0
  %v3822 = vadd.f32 0.0, %v3821
  %v3823 = vpop.f32.mrf.mxu0
  %v3824 = vpop.f32.mrf.mxu0
  %v3825 = vadd.f32 0.0, %v3824
  %v3826 = vpop.f32.mrf.mxu0
  %3827 = vmatprep.mubr.bf16.mxu0 0
  %3828 = vmatmul.mubr.bf16.gmra.mxu0 %v3502
  %v3829 = vpop.f32.mrf.mxu0
  %v3830 = vadd.f32 0.0, %v3829
  %v3831 = vpop.f32.mrf.mxu0
  %v3832 = vpop.f32.mrf.mxu0
  %v3833 = vadd.f32 0.0, %v3832
  %v3834 = vpop.f32.mrf.mxu0
  %3835 = vmatprep.mubr.bf16.mxu0 0
  %3836 = vmatmul.mubr.bf16.gmra.mxu0 %v3503
  %v3837 = vpop.f32.mrf.mxu0
  %v3838 = vadd.f32 0.0, %v3837
  %v3839 = vpop.f32.mrf.mxu0
  %v3840 = vpop.f32.mrf.mxu0
  %v3841 = vadd.f32 0.0, %v3840
  %v3842 = vpop.f32.mrf.mxu0
  %3843 = vmatprep.mubr.bf16.mxu0 0
  %3844 = vmatmul.mubr.bf16.gmra.mxu0 %v3504
  %v3845 = vpop.f32.mrf.mxu0
  %v3846 = vadd.f32 0.0, %v3845
  %v3847 = vpop.f32.mrf.mxu0
  %v3848 = vpop.f32.mrf.mxu0
  %v3849 = vadd.f32 0.0, %v3848
  %v3850 = vpop.f32.mrf.mxu0
  %3851 = vmatprep.mubr.bf16.mxu0 0
  %3852 = vmatmul.mubr.bf16.gmra.mxu0 %v3505
  %v3853 = vpop.f32.mrf.mxu0
  %v3854 = vadd.f32 0.0, %v3853
  %v3855 = vpop.f32.mrf.mxu0
  %v3856 = vpop.f32.mrf.mxu0
  %v3857 = vadd.f32 0.0, %v3856
  %v3858 = vpop.f32.mrf.mxu0
  %3859 = vdwg.mxu0
  %v3860 = vadd.f32 %v3027, %v3606
  %v3861 = vadd.f32 %v3030, %v3609
  %v3862 = vadd.f32 %v3035, %v3614
  %v3863 = vadd.f32 %v3038, %v3617
  %v3864 = vadd.f32 %v3043, %v3622
  %v3865 = vadd.f32 %v3046, %v3625
  %v3866 = vadd.f32 %v3051, %v3630
  %v3867 = vadd.f32 %v3054, %v3633
  %v3868 = vadd.f32 %v3059, %v3638
  %v3869 = vadd.f32 %v3062, %v3641
  %v3870 = vadd.f32 %v3067, %v3646
  %v3871 = vadd.f32 %v3070, %v3649
  %v3872 = vadd.f32 %v3075, %v3654
  %v3873 = vadd.f32 %v3078, %v3657
  %v3874 = vadd.f32 %v3083, %v3662
  %v3875 = vadd.f32 %v3086, %v3665
  %v3876 = vadd.f32 %v3091, %v3670
  %v3877 = vadd.f32 %v3094, %v3673
  %v3878 = vadd.f32 %v3099, %v3678
  %v3879 = vadd.f32 %v3102, %v3681
  %v3880 = vadd.f32 %v3107, %v3686
  %v3881 = vadd.f32 %v3110, %v3689
  %v3882 = vadd.f32 %v3115, %v3694
  %v3883 = vadd.f32 %v3118, %v3697
  %v3884 = vadd.f32 %v3123, %v3702
  %v3885 = vadd.f32 %v3126, %v3705
  %v3886 = vadd.f32 %v3131, %v3710
  %v3887 = vadd.f32 %v3134, %v3713
  %v3888 = vadd.f32 %v3139, %v3718
  %v3889 = vadd.f32 %v3142, %v3721
  %v3890 = vadd.f32 %v3147, %v3726
  %v3891 = vadd.f32 %v3150, %v3729
  %v3892 = vadd.f32 %v3155, %v3734
  %v3893 = vadd.f32 %v3158, %v3737
  %v3894 = vadd.f32 %v3163, %v3742
  %v3895 = vadd.f32 %v3166, %v3745
  %v3896 = vadd.f32 %v3171, %v3750
  %v3897 = vadd.f32 %v3174, %v3753
  %v3898 = vadd.f32 %v3179, %v3758
  %v3899 = vadd.f32 %v3182, %v3761
  %v3900 = vadd.f32 %v3187, %v3766
  %v3901 = vadd.f32 %v3190, %v3769
  %v3902 = vadd.f32 %v3195, %v3774
  %v3903 = vadd.f32 %v3198, %v3777
  %v3904 = vadd.f32 %v3203, %v3782
  %v3905 = vadd.f32 %v3206, %v3785
  %v3906 = vadd.f32 %v3211, %v3790
  %v3907 = vadd.f32 %v3214, %v3793
  %v3908 = vadd.f32 %v3219, %v3798
  %v3909 = vadd.f32 %v3222, %v3801
  %v3910 = vadd.f32 %v3227, %v3806
  %v3911 = vadd.f32 %v3230, %v3809
  %v3912 = vadd.f32 %v3235, %v3814
  %v3913 = vadd.f32 %v3238, %v3817
  %v3914 = vadd.f32 %v3243, %v3822
  %v3915 = vadd.f32 %v3246, %v3825
  %v3916 = vadd.f32 %v3251, %v3830
  %v3917 = vadd.f32 %v3254, %v3833
  %v3918 = vadd.f32 %v3259, %v3838
  %v3919 = vadd.f32 %v3262, %v3841
  %v3920 = vadd.f32 %v3267, %v3846
  %v3921 = vadd.f32 %v3270, %v3849
  %v3922 = vadd.f32 %v3275, %v3854
  %v3923 = vadd.f32 %v3278, %v3857
  %v3924 = vld [vmem:[%s971] sm:$0xff]
  %v3925 = vld [vmem:[%s971 + $0x8] sm:$0xff]
  %v3926 = vld [vmem:[%s971 + $0x10] sm:$0xff]
  %v3927 = vld [vmem:[%s971 + $0x18] sm:$0xff]
  %v3928 = vld [vmem:[%s971 + $0x20] sm:$0xff]
  %v3929 = vld [vmem:[%s971 + $0x28] sm:$0xff]
  %v3930 = vld [vmem:[%s971 + $0x30] sm:$0xff]
  %v3931 = vld [vmem:[%s971 + $0x38] sm:$0xff]
  %v3932 = vld [vmem:[%s971 + $0x40] sm:$0xff]
  %v3933 = vld [vmem:[%s971 + $0x48] sm:$0xff]
  %v3934 = vld [vmem:[%s971 + $0x50] sm:$0xff]
  %v3935 = vld [vmem:[%s971 + $0x58] sm:$0xff]
  %v3936 = vld [vmem:[%s971 + $0x60] sm:$0xff]
  %v3937 = vld [vmem:[%s971 + $0x68] sm:$0xff]
  %v3938 = vld [vmem:[%s971 + $0x70] sm:$0xff]
  %v3939 = vld [vmem:[%s971 + $0x78] sm:$0xff]
  %v3940 = vld [vmem:[%s971 + $0x80] sm:$0xff]
  %v3941 = vld [vmem:[%s971 + $0x88] sm:$0xff]
  %v3942 = vld [vmem:[%s971 + $0x90] sm:$0xff]
  %v3943 = vld [vmem:[%s971 + $0x98] sm:$0xff]
  %v3944 = vld [vmem:[%s971 + $0xa0] sm:$0xff]
  %v3945 = vld [vmem:[%s971 + $0xa8] sm:$0xff]
  %v3946 = vld [vmem:[%s971 + $0xb0] sm:$0xff]
  %v3947 = vld [vmem:[%s971 + $0xb8] sm:$0xff]
  %v3948 = vld [vmem:[%s971 + $0xc0] sm:$0xff]
  %v3949 = vld [vmem:[%s971 + $0xc8] sm:$0xff]
  %v3950 = vld [vmem:[%s971 + $0xd0] sm:$0xff]
  %v3951 = vld [vmem:[%s971 + $0xd8] sm:$0xff]
  %v3952 = vld [vmem:[%s971 + $0xe0] sm:$0xff]
  %v3953 = vld [vmem:[%s971 + $0xe8] sm:$0xff]
  %v3954 = vld [vmem:[%s971 + $0xf0] sm:$0xff]
  %v3955 = vld [vmem:[%s971 + $0xf8] sm:$0xff]
  %v3956 = vld [vmem:[%s971 + $0x120] sm:$0xff]
  %v3957 = vld [vmem:[%s971 + $0x128] sm:$0xff]
  %v3958 = vld [vmem:[%s971 + $0x130] sm:$0xff]
  %v3959 = vld [vmem:[%s971 + $0x138] sm:$0xff]
  %v3960 = vld [vmem:[%s971 + $0x140] sm:$0xff]
  %v3961 = vld [vmem:[%s971 + $0x148] sm:$0xff]
  %v3962 = vld [vmem:[%s971 + $0x150] sm:$0xff]
  %v3963 = vld [vmem:[%s971 + $0x158] sm:$0xff]
  %v3964 = vld [vmem:[%s971 + $0x160] sm:$0xff]
  %v3965 = vld [vmem:[%s971 + $0x168] sm:$0xff]
  %v3966 = vld [vmem:[%s971 + $0x170] sm:$0xff]
  %v3967 = vld [vmem:[%s971 + $0x178] sm:$0xff]
  %v3968 = vld [vmem:[%s971 + $0x180] sm:$0xff]
  %v3969 = vld [vmem:[%s971 + $0x188] sm:$0xff]
  %v3970 = vld [vmem:[%s971 + $0x190] sm:$0xff]
  %v3971 = vld [vmem:[%s971 + $0x198] sm:$0xff]
  %v3972 = vld [vmem:[%s971 + $0x1a0] sm:$0xff]
  %v3973 = vld [vmem:[%s971 + $0x1a8] sm:$0xff]
  %v3974 = vld [vmem:[%s971 + $0x1b0] sm:$0xff]
  %v3975 = vld [vmem:[%s971 + $0x1b8] sm:$0xff]
  %v3976 = vld [vmem:[%s971 + $0x1c0] sm:$0xff]
  %v3977 = vld [vmem:[%s971 + $0x1c8] sm:$0xff]
  %v3978 = vld [vmem:[%s971 + $0x1d0] sm:$0xff]
  %v3979 = vld [vmem:[%s971 + $0x1d8] sm:$0xff]
  %v3980 = vld [vmem:[%s971 + $0x1e0] sm:$0xff]
  %v3981 = vld [vmem:[%s971 + $0x1e8] sm:$0xff]
  %v3982 = vld [vmem:[%s971 + $0x1f0] sm:$0xff]
  %v3983 = vld [vmem:[%s971 + $0x1f8] sm:$0xff]
  %v3984 = vld [vmem:[%s971 + $0x200] sm:$0xff]
  %v3985 = vld [vmem:[%s971 + $0x208] sm:$0xff]
  %v3986 = vld [vmem:[%s971 + $0x210] sm:$0xff]
  %v3987 = vld [vmem:[%s971 + $0x218] sm:$0xff]
  %v3988 = vrot.slane %v3924, 7
  %v3989 = vrot.slane %v3925, 7
  %v3990 = vrot.slane %v3926, 7
  %v3991 = vrot.slane %v3927, 7
  %v3992 = vrot.slane %v3928, 7
  %v3993 = vrot.slane %v3929, 7
  %v3994 = vrot.slane %v3930, 7
  %v3995 = vrot.slane %v3931, 7
  %v3996 = vrot.slane %v3932, 7
  %v3997 = vrot.slane %v3933, 7
  %v3998 = vrot.slane %v3934, 7
  %v3999 = vrot.slane %v3935, 7
  %v4000 = vrot.slane %v3936, 7
  %v4001 = vrot.slane %v3937, 7
  %v4002 = vrot.slane %v3938, 7
  %v4003 = vrot.slane %v3939, 7
  %v4004 = vrot.slane %v3940, 7
  %v4005 = vrot.slane %v3941, 7
  %v4006 = vrot.slane %v3942, 7
  %v4007 = vrot.slane %v3943, 7
  %v4008 = vrot.slane %v3944, 7
  %v4009 = vrot.slane %v3945, 7
  %v4010 = vrot.slane %v3946, 7
  %v4011 = vrot.slane %v3947, 7
  %v4012 = vrot.slane %v3948, 7
  %v4013 = vrot.slane %v3949, 7
  %v4014 = vrot.slane %v3950, 7
  %v4015 = vrot.slane %v3951, 7
  %v4016 = vrot.slane %v3952, 7
  %v4017 = vrot.slane %v3953, 7
  %v4018 = vrot.slane %v3954, 7
  %v4019 = vrot.slane %v3955, 7
  %v4020 = vrot.slane %v3956, 7
  %v4021 = vrot.slane %v3957, 7
  %v4022 = vrot.slane %v3958, 7
  %v4023 = vrot.slane %v3959, 7
  %v4024 = vrot.slane %v3960, 7
  %v4025 = vrot.slane %v3961, 7
  %v4026 = vrot.slane %v3962, 7
  %v4027 = vrot.slane %v3963, 7
  %v4028 = vrot.slane %v3964, 7
  %v4029 = vrot.slane %v3965, 7
  %v4030 = vrot.slane %v3966, 7
  %v4031 = vrot.slane %v3967, 7
  %v4032 = vrot.slane %v3968, 7
  %v4033 = vrot.slane %v3969, 7
  %v4034 = vrot.slane %v3970, 7
  %v4035 = vrot.slane %v3971, 7
  %v4036 = vrot.slane %v3972, 7
  %v4037 = vrot.slane %v3973, 7
  %v4038 = vrot.slane %v3974, 7
  %v4039 = vrot.slane %v3975, 7
  %v4040 = vrot.slane %v3976, 7
  %v4041 = vrot.slane %v3977, 7
  %v4042 = vrot.slane %v3978, 7
  %v4043 = vrot.slane %v3979, 7
  %v4044 = vrot.slane %v3980, 7
  %v4045 = vrot.slane %v3981, 7
  %v4046 = vrot.slane %v3982, 7
  %v4047 = vrot.slane %v3983, 7
  %v4048 = vrot.slane %v3984, 7
  %v4049 = vrot.slane %v3985, 7
  %v4050 = vrot.slane %v3986, 7
  %v4051 = vrot.slane %v3987, 7
  %v4052 = vsel %vm2381, %v4050, %v4051
  %v4053 = vsel %vm2381, %v4049, %v4050
  %v4054 = vsel %vm2381, %v4048, %v4049
  %v4055 = vsel %vm2381, %v4047, %v4048
  %v4056 = vsel %vm2381, %v4046, %v4047
  %v4057 = vsel %vm2381, %v4045, %v4046
  %v4058 = vsel %vm2381, %v4044, %v4045
  %v4059 = vsel %vm2381, %v4043, %v4044
  %v4060 = vsel %vm2381, %v4042, %v4043
  %v4061 = vsel %vm2381, %v4041, %v4042
  %v4062 = vsel %vm2381, %v4040, %v4041
  %v4063 = vsel %vm2381, %v4039, %v4040
  %v4064 = vsel %vm2381, %v4038, %v4039
  %v4065 = vsel %vm2381, %v4037, %v4038
  %v4066 = vsel %vm2381, %v4036, %v4037
  %v4067 = vsel %vm2381, %v4035, %v4036
  %v4068 = vsel %vm2381, %v4034, %v4035
  %v4069 = vsel %vm2381, %v4033, %v4034
  %v4070 = vsel %vm2381, %v4032, %v4033
  %v4071 = vsel %vm2381, %v4031, %v4032
  %v4072 = vsel %vm2381, %v4030, %v4031
  %v4073 = vsel %vm2381, %v4029, %v4030
  %v4074 = vsel %vm2381, %v4028, %v4029
  %v4075 = vsel %vm2381, %v4027, %v4028
  %v4076 = vsel %vm2381, %v4026, %v4027
  %v4077 = vsel %vm2381, %v4025, %v4026
  %v4078 = vsel %vm2381, %v4024, %v4025
  %v4079 = vsel %vm2381, %v4023, %v4024
  %v4080 = vsel %vm2381, %v4022, %v4023
  %v4081 = vsel %vm2381, %v4021, %v4022
  %v4082 = vsel %vm2381, %v4020, %v4021
  %v4083 = vsel %vm2381, %v4019, %v4020
  %v4084 = vsel %vm2381, %v4018, %v4019
  %v4085 = vsel %vm2381, %v4017, %v4018
  %v4086 = vsel %vm2381, %v4016, %v4017
  %v4087 = vsel %vm2381, %v4015, %v4016
  %v4088 = vsel %vm2381, %v4014, %v4015
  %v4089 = vsel %vm2381, %v4013, %v4014
  %v4090 = vsel %vm2381, %v4012, %v4013
  %v4091 = vsel %vm2381, %v4011, %v4012
  %v4092 = vsel %vm2381, %v4010, %v4011
  %v4093 = vsel %vm2381, %v4009, %v4010
  %v4094 = vsel %vm2381, %v4008, %v4009
  %v4095 = vsel %vm2381, %v4007, %v4008
  %v4096 = vsel %vm2381, %v4006, %v4007
  %v4097 = vsel %vm2381, %v4005, %v4006
  %v4098 = vsel %vm2381, %v4004, %v4005
  %v4099 = vsel %vm2381, %v4003, %v4004
  %v4100 = vsel %vm2381, %v4002, %v4003
  %v4101 = vsel %vm2381, %v4001, %v4002
  %v4102 = vsel %vm2381, %v4000, %v4001
  %v4103 = vsel %vm2381, %v3999, %v4000
  %v4104 = vsel %vm2381, %v3998, %v3999
  %v4105 = vsel %vm2381, %v3997, %v3998
  %v4106 = vsel %vm2381, %v3996, %v3997
  %v4107 = vsel %vm2381, %v3995, %v3996
  %v4108 = vsel %vm2381, %v3994, %v3995
  %v4109 = vsel %vm2381, %v3993, %v3994
  %v4110 = vsel %vm2381, %v3992, %v3993
  %v4111 = vsel %vm2381, %v3991, %v3992
  %v4112 = vsel %vm2381, %v3990, %v3991
  %v4113 = vsel %vm2381, %v3989, %v3990
  %v4114 = vsel %vm2381, %v3988, %v3989
  %v4115 = vsel %vm2381, %v4051, %v3988
  %v4116 = vmul.f32 %v4115, %v1997
  %v4117 = vmul.f32 %v4114, %v1998
  %v4118 = vmul.f32 %v4113, %v1999
  %v4119 = vmul.f32 %v4112, %v2000
  %v4120 = vmul.f32 %v4111, %v2001
  %v4121 = vmul.f32 %v4110, %v2002
  %v4122 = vmul.f32 %v4109, %v2003
  %v4123 = vmul.f32 %v4108, %v2004
  %v4124 = vmul.f32 %v4107, %v2005
  %v4125 = vmul.f32 %v4106, %v2006
  %v4126 = vmul.f32 %v4105, %v2007
  %v4127 = vmul.f32 %v4104, %v2008
  %v4128 = vmul.f32 %v4103, %v2009
  %v4129 = vmul.f32 %v4102, %v2010
  %v4130 = vmul.f32 %v4101, %v2011
  %v4131 = vmul.f32 %v4100, %v2012
  %v4132 = vmul.f32 %v4099, %v2013
  %v4133 = vmul.f32 %v4098, %v2014
  %v4134 = vmul.f32 %v4097, %v2015
  %v4135 = vmul.f32 %v4096, %v2016
  %v4136 = vmul.f32 %v4095, %v2017
  %v4137 = vmul.f32 %v4094, %v2018
  %v4138 = vmul.f32 %v4093, %v2019
  %v4139 = vmul.f32 %v4092, %v2020
  %v4140 = vmul.f32 %v4091, %v2021
  %v4141 = vmul.f32 %v4090, %v2022
  %v4142 = vmul.f32 %v4089, %v2023
  %v4143 = vmul.f32 %v4088, %v2024
  %v4144 = vmul.f32 %v4087, %v2025
  %v4145 = vmul.f32 %v4086, %v2026
  %v4146 = vmul.f32 %v4085, %v2027
  %v4147 = vmul.f32 %v4084, %v2028
  %v4148 = vmul.f32 %v4083, %v2029
  %v4149 = vmul.f32 %v4082, %v2030
  %v4150 = vmul.f32 %v4081, %v2031
  %v4151 = vmul.f32 %v4080, %v2032
  %v4152 = vmul.f32 %v4079, %v2033
  %v4153 = vmul.f32 %v4078, %v2034
  %v4154 = vmul.f32 %v4077, %v2035
  %v4155 = vmul.f32 %v4076, %v2036
  %v4156 = vmul.f32 %v4075, %v2037
  %v4157 = vmul.f32 %v4074, %v2038
  %v4158 = vmul.f32 %v4073, %v2039
  %v4159 = vmul.f32 %v4072, %v2040
  %v4160 = vmul.f32 %v4071, %v2041
  %v4161 = vmul.f32 %v4070, %v2042
  %v4162 = vmul.f32 %v4069, %v2043
  %v4163 = vmul.f32 %v4068, %v2044
  %v4164 = vmul.f32 %v4067, %v2045
  %v4165 = vmul.f32 %v4066, %v2046
  %v4166 = vmul.f32 %v4065, %v2047
  %v4167 = vmul.f32 %v4064, %v2048
  %v4168 = vmul.f32 %v4063, %v2049
  %v4169 = vmul.f32 %v4062, %v2050
  %v4170 = vmul.f32 %v4061, %v2051
  %v4171 = vmul.f32 %v4060, %v2052
  %v4172 = vmul.f32 %v4059, %v2053
  %v4173 = vmul.f32 %v4058, %v2054
  %v4174 = vmul.f32 %v4057, %v2055
  %v4175 = vmul.f32 %v4056, %v2056
  %v4176 = vmul.f32 %v4055, %v2057
  %v4177 = vmul.f32 %v4054, %v2058
  %v4178 = vmul.f32 %v4053, %v2059
  %v4179 = vmul.f32 %v4052, %v2060
  %v4180 = vpack.c.bf16 %v4117, %v4116
  %v4181 = vpack.c.bf16 %v4119, %v4118
  %v4182 = vpack.c.bf16 %v4121, %v4120
  %v4183 = vpack.c.bf16 %v4123, %v4122
  %v4184 = vpack.c.bf16 %v4125, %v4124
  %v4185 = vpack.c.bf16 %v4127, %v4126
  %v4186 = vpack.c.bf16 %v4129, %v4128
  %v4187 = vpack.c.bf16 %v4131, %v4130
  %v4188 = vpack.c.bf16 %v4133, %v4132
  %v4189 = vpack.c.bf16 %v4135, %v4134
  %v4190 = vpack.c.bf16 %v4137, %v4136
  %v4191 = vpack.c.bf16 %v4139, %v4138
  %v4192 = vpack.c.bf16 %v4141, %v4140
  %v4193 = vpack.c.bf16 %v4143, %v4142
  %v4194 = vpack.c.bf16 %v4145, %v4144
  %v4195 = vpack.c.bf16 %v4147, %v4146
  %v4196 = vpack.c.bf16 %v4149, %v4148
  %v4197 = vpack.c.bf16 %v4151, %v4150
  %v4198 = vpack.c.bf16 %v4153, %v4152
  %v4199 = vpack.c.bf16 %v4155, %v4154
  %v4200 = vpack.c.bf16 %v4157, %v4156
  %v4201 = vpack.c.bf16 %v4159, %v4158
  %v4202 = vpack.c.bf16 %v4161, %v4160
  %v4203 = vpack.c.bf16 %v4163, %v4162
  %v4204 = vpack.c.bf16 %v4165, %v4164
  %v4205 = vpack.c.bf16 %v4167, %v4166
  %v4206 = vpack.c.bf16 %v4169, %v4168
  %v4207 = vpack.c.bf16 %v4171, %v4170
  %v4208 = vpack.c.bf16 %v4173, %v4172
  %v4209 = vpack.c.bf16 %v4175, %v4174
  %v4210 = vpack.c.bf16 %v4177, %v4176
  %v4211 = vpack.c.bf16 %v4179, %v4178
  %s4212 = scalar_lea.vmem %s4, 192
  %v4213 = vld [vmem:[%s4212] sm:$0xf]
  %v4214 = vld [vmem:[%s4212 + $0x4] sm:$0xf]
  %v4215 = vld [vmem:[%s4212 + $0x8] sm:$0xf]
  %v4216 = vld [vmem:[%s4212 + $0xc] sm:$0xf]
  %v4217 = vld [vmem:[%s4212 + $0x10] sm:$0xf]
  %v4218 = vld [vmem:[%s4212 + $0x14] sm:$0xf]
  %v4219 = vld [vmem:[%s4212 + $0x18] sm:$0xf]
  %v4220 = vld [vmem:[%s4212 + $0x1c] sm:$0xf]
  %v4221 = vld [vmem:[%s4212 + $0x20] sm:$0xf]
  %v4222 = vld [vmem:[%s4212 + $0x24] sm:$0xf]
  %v4223 = vld [vmem:[%s4212 + $0x28] sm:$0xf]
  %v4224 = vld [vmem:[%s4212 + $0x2c] sm:$0xf]
  %v4225 = vld [vmem:[%s4212 + $0x30] sm:$0xf]
  %v4226 = vld [vmem:[%s4212 + $0x34] sm:$0xf]
  %v4227 = vld [vmem:[%s4212 + $0x38] sm:$0xf]
  %v4228 = vld [vmem:[%s4212 + $0x3c] sm:$0xf]
  %v4245 = vunpack.c.l.b16 %v4213
  %v4246 = vunpack.c.l.b16 %v4214
  %v4247 = vunpack.c.l.b16 %v4215
  %v4248 = vunpack.c.l.b16 %v4216
  %v4249 = vunpack.c.l.b16 %v4217
  %v4250 = vunpack.c.l.b16 %v4218
  %v4251 = vunpack.c.l.b16 %v4219
  %v4252 = vunpack.c.l.b16 %v4220
  %v4253 = vunpack.c.l.b16 %v4221
  %v4254 = vunpack.c.l.b16 %v4222
  %v4255 = vunpack.c.l.b16 %v4223
  %v4256 = vunpack.c.l.b16 %v4224
  %v4257 = vunpack.c.l.b16 %v4225
  %v4258 = vunpack.c.l.b16 %v4226
  %v4259 = vunpack.c.l.b16 %v4227
  %v4260 = vunpack.c.l.b16 %v4228
  %v4261 = vpack.c.b16 %v4246, %v4245
  %v4262 = vpack.c.b16 %v4248, %v4247
  %v4263 = vpack.c.b16 %v4250, %v4249
  %v4264 = vpack.c.b16 %v4252, %v4251
  %v4265 = vpack.c.b16 %v4254, %v4253
  %v4266 = vpack.c.b16 %v4256, %v4255
  %v4267 = vpack.c.b16 %v4258, %v4257
  %v4268 = vpack.c.b16 %v4260, %v4259
  %4277 = vmatprep.subr.bf16.mxu0 0
  %4278 = vmatpush1.bf16.msra.mxu0 %v4268
  %4279 = vmatprep.subr.bf16.mxu0 0
  %4280 = vmatpush1.bf16.msra.mxu0 %v4267
  %4281 = vmatprep.subr.bf16.mxu0 0
  %4282 = vmatpush1.bf16.msra.mxu0 %v4266
  %4283 = vmatprep.subr.bf16.mxu0 0
  %4284 = vmatpush1.bf16.msra.mxu0 %v4265
  %4285 = vmatprep.subr.bf16.mxu0 0
  %4286 = vmatpush1.bf16.msra.mxu0 %v4264
  %4287 = vmatprep.subr.bf16.mxu0 0
  %4288 = vmatpush1.bf16.msra.mxu0 %v4263
  %4289 = vmatprep.subr.bf16.mxu0 0
  %4290 = vmatpush1.bf16.msra.mxu0 %v4262
  %4291 = vmatprep.subr.bf16.mxu0 0
  %4292 = vmatpush1.bf16.msra.mxu0 %v4261
  %4293 = vmatprep.subr.bf16.mxu0 0
  %4294 = vmatpush2.bf16.msra.mxu0 0
  %4295 = vmatprep.subr.bf16.mxu0 0
  %4296 = vmatpush2.bf16.msra.mxu0 0
  %4297 = vmatprep.subr.bf16.mxu0 0
  %4298 = vmatpush2.bf16.msra.mxu0 0
  %4299 = vmatprep.subr.bf16.mxu0 0
  %4300 = vmatpush2.bf16.msra.mxu0 0
  %4301 = vmatprep.subr.bf16.mxu0 0
  %4302 = vmatpush2.bf16.msra.mxu0 0
  %4303 = vmatprep.subr.bf16.mxu0 0
  %4304 = vmatpush2.bf16.msra.mxu0 0
  %4305 = vmatprep.subr.bf16.mxu0 0
  %4306 = vmatpush2.bf16.msra.mxu0 0
  %4307 = vmatprep.subr.bf16.mxu0 0
  %4308 = vmatpush2.bf16.msra.mxu0 0
  %4309 = vmatprep.mubr.bf16.mxu0 0
  %4310 = vmatmul.mubr.bf16.gmra.mxu0 %v4180
  %v4311 = vpop.f32.mrf.mxu0
  %v4312 = vadd.f32 0.0, %v4311
  %v4313 = vpop.f32.mrf.mxu0
  %v4314 = vpop.f32.mrf.mxu0
  %v4315 = vadd.f32 0.0, %v4314
  %v4316 = vpop.f32.mrf.mxu0
  %4317 = vmatprep.mubr.bf16.mxu0 0
  %4318 = vmatmul.mubr.bf16.gmra.mxu0 %v4181
  %v4319 = vpop.f32.mrf.mxu0
  %v4320 = vadd.f32 0.0, %v4319
  %v4321 = vpop.f32.mrf.mxu0
  %v4322 = vpop.f32.mrf.mxu0
  %v4323 = vadd.f32 0.0, %v4322
  %v4324 = vpop.f32.mrf.mxu0
  %4325 = vmatprep.mubr.bf16.mxu0 0
  %4326 = vmatmul.mubr.bf16.gmra.mxu0 %v4182
  %v4327 = vpop.f32.mrf.mxu0
  %v4328 = vadd.f32 0.0, %v4327
  %v4329 = vpop.f32.mrf.mxu0
  %v4330 = vpop.f32.mrf.mxu0
  %v4331 = vadd.f32 0.0, %v4330
  %v4332 = vpop.f32.mrf.mxu0
  %4333 = vmatprep.mubr.bf16.mxu0 0
  %4334 = vmatmul.mubr.bf16.gmra.mxu0 %v4183
  %v4335 = vpop.f32.mrf.mxu0
  %v4336 = vadd.f32 0.0, %v4335
  %v4337 = vpop.f32.mrf.mxu0
  %v4338 = vpop.f32.mrf.mxu0
  %v4339 = vadd.f32 0.0, %v4338
  %v4340 = vpop.f32.mrf.mxu0
  %4341 = vmatprep.mubr.bf16.mxu0 0
  %4342 = vmatmul.mubr.bf16.gmra.mxu0 %v4184
  %v4343 = vpop.f32.mrf.mxu0
  %v4344 = vadd.f32 0.0, %v4343
  %v4345 = vpop.f32.mrf.mxu0
  %v4346 = vpop.f32.mrf.mxu0
  %v4347 = vadd.f32 0.0, %v4346
  %v4348 = vpop.f32.mrf.mxu0
  %4349 = vmatprep.mubr.bf16.mxu0 0
  %4350 = vmatmul.mubr.bf16.gmra.mxu0 %v4185
  %v4351 = vpop.f32.mrf.mxu0
  %v4352 = vadd.f32 0.0, %v4351
  %v4353 = vpop.f32.mrf.mxu0
  %v4354 = vpop.f32.mrf.mxu0
  %v4355 = vadd.f32 0.0, %v4354
  %v4356 = vpop.f32.mrf.mxu0
  %4357 = vmatprep.mubr.bf16.mxu0 0
  %4358 = vmatmul.mubr.bf16.gmra.mxu0 %v4186
  %v4359 = vpop.f32.mrf.mxu0
  %v4360 = vadd.f32 0.0, %v4359
  %v4361 = vpop.f32.mrf.mxu0
  %v4362 = vpop.f32.mrf.mxu0
  %v4363 = vadd.f32 0.0, %v4362
  %v4364 = vpop.f32.mrf.mxu0
  %4365 = vmatprep.mubr.bf16.mxu0 0
  %4366 = vmatmul.mubr.bf16.gmra.mxu0 %v4187
  %v4367 = vpop.f32.mrf.mxu0
  %v4368 = vadd.f32 0.0, %v4367
  %v4369 = vpop.f32.mrf.mxu0
  %v4370 = vpop.f32.mrf.mxu0
  %v4371 = vadd.f32 0.0, %v4370
  %v4372 = vpop.f32.mrf.mxu0
  %4373 = vmatprep.mubr.bf16.mxu0 0
  %4374 = vmatmul.mubr.bf16.gmra.mxu0 %v4188
  %v4375 = vpop.f32.mrf.mxu0
  %v4376 = vadd.f32 0.0, %v4375
  %v4377 = vpop.f32.mrf.mxu0
  %v4378 = vpop.f32.mrf.mxu0
  %v4379 = vadd.f32 0.0, %v4378
  %v4380 = vpop.f32.mrf.mxu0
  %4381 = vmatprep.mubr.bf16.mxu0 0
  %4382 = vmatmul.mubr.bf16.gmra.mxu0 %v4189
  %v4383 = vpop.f32.mrf.mxu0
  %v4384 = vadd.f32 0.0, %v4383
  %v4385 = vpop.f32.mrf.mxu0
  %v4386 = vpop.f32.mrf.mxu0
  %v4387 = vadd.f32 0.0, %v4386
  %v4388 = vpop.f32.mrf.mxu0
  %4389 = vmatprep.mubr.bf16.mxu0 0
  %4390 = vmatmul.mubr.bf16.gmra.mxu0 %v4190
  %v4391 = vpop.f32.mrf.mxu0
  %v4392 = vadd.f32 0.0, %v4391
  %v4393 = vpop.f32.mrf.mxu0
  %v4394 = vpop.f32.mrf.mxu0
  %v4395 = vadd.f32 0.0, %v4394
  %v4396 = vpop.f32.mrf.mxu0
  %4397 = vmatprep.mubr.bf16.mxu0 0
  %4398 = vmatmul.mubr.bf16.gmra.mxu0 %v4191
  %v4399 = vpop.f32.mrf.mxu0
  %v4400 = vadd.f32 0.0, %v4399
  %v4401 = vpop.f32.mrf.mxu0
  %v4402 = vpop.f32.mrf.mxu0
  %v4403 = vadd.f32 0.0, %v4402
  %v4404 = vpop.f32.mrf.mxu0
  %4405 = vmatprep.mubr.bf16.mxu0 0
  %4406 = vmatmul.mubr.bf16.gmra.mxu0 %v4192
  %v4407 = vpop.f32.mrf.mxu0
  %v4408 = vadd.f32 0.0, %v4407
  %v4409 = vpop.f32.mrf.mxu0
  %v4410 = vpop.f32.mrf.mxu0
  %v4411 = vadd.f32 0.0, %v4410
  %v4412 = vpop.f32.mrf.mxu0
  %4413 = vmatprep.mubr.bf16.mxu0 0
  %4414 = vmatmul.mubr.bf16.gmra.mxu0 %v4193
  %v4415 = vpop.f32.mrf.mxu0
  %v4416 = vadd.f32 0.0, %v4415
  %v4417 = vpop.f32.mrf.mxu0
  %v4418 = vpop.f32.mrf.mxu0
  %v4419 = vadd.f32 0.0, %v4418
  %v4420 = vpop.f32.mrf.mxu0
  %4421 = vmatprep.mubr.bf16.mxu0 0
  %4422 = vmatmul.mubr.bf16.gmra.mxu0 %v4194
  %v4423 = vpop.f32.mrf.mxu0
  %v4424 = vadd.f32 0.0, %v4423
  %v4425 = vpop.f32.mrf.mxu0
  %v4426 = vpop.f32.mrf.mxu0
  %v4427 = vadd.f32 0.0, %v4426
  %v4428 = vpop.f32.mrf.mxu0
  %4429 = vmatprep.mubr.bf16.mxu0 0
  %4430 = vmatmul.mubr.bf16.gmra.mxu0 %v4195
  %v4431 = vpop.f32.mrf.mxu0
  %v4432 = vadd.f32 0.0, %v4431
  %v4433 = vpop.f32.mrf.mxu0
  %v4434 = vpop.f32.mrf.mxu0
  %v4435 = vadd.f32 0.0, %v4434
  %v4436 = vpop.f32.mrf.mxu0
  %4437 = vmatprep.mubr.bf16.mxu0 0
  %4438 = vmatmul.mubr.bf16.gmra.mxu0 %v4196
  %v4439 = vpop.f32.mrf.mxu0
  %v4440 = vadd.f32 0.0, %v4439
  %v4441 = vpop.f32.mrf.mxu0
  %v4442 = vpop.f32.mrf.mxu0
  %v4443 = vadd.f32 0.0, %v4442
  %v4444 = vpop.f32.mrf.mxu0
  %4445 = vmatprep.mubr.bf16.mxu0 0
  %4446 = vmatmul.mubr.bf16.gmra.mxu0 %v4197
  %v4447 = vpop.f32.mrf.mxu0
  %v4448 = vadd.f32 0.0, %v4447
  %v4449 = vpop.f32.mrf.mxu0
  %v4450 = vpop.f32.mrf.mxu0
  %v4451 = vadd.f32 0.0, %v4450
  %v4452 = vpop.f32.mrf.mxu0
  %4453 = vmatprep.mubr.bf16.mxu0 0
  %4454 = vmatmul.mubr.bf16.gmra.mxu0 %v4198
  %v4455 = vpop.f32.mrf.mxu0
  %v4456 = vadd.f32 0.0, %v4455
  %v4457 = vpop.f32.mrf.mxu0
  %v4458 = vpop.f32.mrf.mxu0
  %v4459 = vadd.f32 0.0, %v4458
  %v4460 = vpop.f32.mrf.mxu0
  %4461 = vmatprep.mubr.bf16.mxu0 0
  %4462 = vmatmul.mubr.bf16.gmra.mxu0 %v4199
  %v4463 = vpop.f32.mrf.mxu0
  %v4464 = vadd.f32 0.0, %v4463
  %v4465 = vpop.f32.mrf.mxu0
  %v4466 = vpop.f32.mrf.mxu0
  %v4467 = vadd.f32 0.0, %v4466
  %v4468 = vpop.f32.mrf.mxu0
  %4469 = vmatprep.mubr.bf16.mxu0 0
  %4470 = vmatmul.mubr.bf16.gmra.mxu0 %v4200
  %v4471 = vpop.f32.mrf.mxu0
  %v4472 = vadd.f32 0.0, %v4471
  %v4473 = vpop.f32.mrf.mxu0
  %v4474 = vpop.f32.mrf.mxu0
  %v4475 = vadd.f32 0.0, %v4474
  %v4476 = vpop.f32.mrf.mxu0
  %4477 = vmatprep.mubr.bf16.mxu0 0
  %4478 = vmatmul.mubr.bf16.gmra.mxu0 %v4201
  %v4479 = vpop.f32.mrf.mxu0
  %v4480 = vadd.f32 0.0, %v4479
  %v4481 = vpop.f32.mrf.mxu0
  %v4482 = vpop.f32.mrf.mxu0
  %v4483 = vadd.f32 0.0, %v4482
  %v4484 = vpop.f32.mrf.mxu0
  %4485 = vmatprep.mubr.bf16.mxu0 0
  %4486 = vmatmul.mubr.bf16.gmra.mxu0 %v4202
  %v4487 = vpop.f32.mrf.mxu0
  %v4488 = vadd.f32 0.0, %v4487
  %v4489 = vpop.f32.mrf.mxu0
  %v4490 = vpop.f32.mrf.mxu0
  %v4491 = vadd.f32 0.0, %v4490
  %v4492 = vpop.f32.mrf.mxu0
  %4493 = vmatprep.mubr.bf16.mxu0 0
  %4494 = vmatmul.mubr.bf16.gmra.mxu0 %v4203
  %v4495 = vpop.f32.mrf.mxu0
  %v4496 = vadd.f32 0.0, %v4495
  %v4497 = vpop.f32.mrf.mxu0
  %v4498 = vpop.f32.mrf.mxu0
  %v4499 = vadd.f32 0.0, %v4498
  %v4500 = vpop.f32.mrf.mxu0
  %4501 = vmatprep.mubr.bf16.mxu0 0
  %4502 = vmatmul.mubr.bf16.gmra.mxu0 %v4204
  %v4503 = vpop.f32.mrf.mxu0
  %v4504 = vadd.f32 0.0, %v4503
  %v4505 = vpop.f32.mrf.mxu0
  %v4506 = vpop.f32.mrf.mxu0
  %v4507 = vadd.f32 0.0, %v4506
  %v4508 = vpop.f32.mrf.mxu0
  %4509 = vmatprep.mubr.bf16.mxu0 0
  %4510 = vmatmul.mubr.bf16.gmra.mxu0 %v4205
  %v4511 = vpop.f32.mrf.mxu0
  %v4512 = vadd.f32 0.0, %v4511
  %v4513 = vpop.f32.mrf.mxu0
  %v4514 = vpop.f32.mrf.mxu0
  %v4515 = vadd.f32 0.0, %v4514
  %v4516 = vpop.f32.mrf.mxu0
  %4517 = vmatprep.mubr.bf16.mxu0 0
  %4518 = vmatmul.mubr.bf16.gmra.mxu0 %v4206
  %v4519 = vpop.f32.mrf.mxu0
  %v4520 = vadd.f32 0.0, %v4519
  %v4521 = vpop.f32.mrf.mxu0
  %v4522 = vpop.f32.mrf.mxu0
  %v4523 = vadd.f32 0.0, %v4522
  %v4524 = vpop.f32.mrf.mxu0
  %4525 = vmatprep.mubr.bf16.mxu0 0
  %4526 = vmatmul.mubr.bf16.gmra.mxu0 %v4207
  %v4527 = vpop.f32.mrf.mxu0
  %v4528 = vadd.f32 0.0, %v4527
  %v4529 = vpop.f32.mrf.mxu0
  %v4530 = vpop.f32.mrf.mxu0
  %v4531 = vadd.f32 0.0, %v4530
  %v4532 = vpop.f32.mrf.mxu0
  %4533 = vmatprep.mubr.bf16.mxu0 0
  %4534 = vmatmul.mubr.bf16.gmra.mxu0 %v4208
  %v4535 = vpop.f32.mrf.mxu0
  %v4536 = vadd.f32 0.0, %v4535
  %v4537 = vpop.f32.mrf.mxu0
  %v4538 = vpop.f32.mrf.mxu0
  %v4539 = vadd.f32 0.0, %v4538
  %v4540 = vpop.f32.mrf.mxu0
  %4541 = vmatprep.mubr.bf16.mxu0 0
  %4542 = vmatmul.mubr.bf16.gmra.mxu0 %v4209
  %v4543 = vpop.f32.mrf.mxu0
  %v4544 = vadd.f32 0.0, %v4543
  %v4545 = vpop.f32.mrf.mxu0
  %v4546 = vpop.f32.mrf.mxu0
  %v4547 = vadd.f32 0.0, %v4546
  %v4548 = vpop.f32.mrf.mxu0
  %4549 = vmatprep.mubr.bf16.mxu0 0
  %4550 = vmatmul.mubr.bf16.gmra.mxu0 %v4210
  %v4551 = vpop.f32.mrf.mxu0
  %v4552 = vadd.f32 0.0, %v4551
  %v4553 = vpop.f32.mrf.mxu0
  %v4554 = vpop.f32.mrf.mxu0
  %v4555 = vadd.f32 0.0, %v4554
  %v4556 = vpop.f32.mrf.mxu0
  %4557 = vmatprep.mubr.bf16.mxu0 0
  %4558 = vmatmul.mubr.bf16.gmra.mxu0 %v4211
  %v4559 = vpop.f32.mrf.mxu0
  %v4560 = vadd.f32 0.0, %v4559
  %v4561 = vpop.f32.mrf.mxu0
  %v4562 = vpop.f32.mrf.mxu0
  %v4563 = vadd.f32 0.0, %v4562
  %v4564 = vpop.f32.mrf.mxu0
  %4565 = vdwg.mxu0
  %v4566 = vadd.f32 %v3860, %v4312
  %v4567 = vadd.f32 %v3861, %v4315
  %v4568 = vadd.f32 %v3862, %v4320
  %v4569 = vadd.f32 %v3863, %v4323
  %v4570 = vadd.f32 %v3864, %v4328
  %v4571 = vadd.f32 %v3865, %v4331
  %v4572 = vadd.f32 %v3866, %v4336
  %v4573 = vadd.f32 %v3867, %v4339
  %v4574 = vadd.f32 %v3868, %v4344
  %v4575 = vadd.f32 %v3869, %v4347
  %v4576 = vadd.f32 %v3870, %v4352
  %v4577 = vadd.f32 %v3871, %v4355
  %v4578 = vadd.f32 %v3872, %v4360
  %v4579 = vadd.f32 %v3873, %v4363
  %v4580 = vadd.f32 %v3874, %v4368
  %v4581 = vadd.f32 %v3875, %v4371
  %v4582 = vadd.f32 %v3876, %v4376
  %v4583 = vadd.f32 %v3877, %v4379
  %v4584 = vadd.f32 %v3878, %v4384
  %v4585 = vadd.f32 %v3879, %v4387
  %v4586 = vadd.f32 %v3880, %v4392
  %v4587 = vadd.f32 %v3881, %v4395
  %v4588 = vadd.f32 %v3882, %v4400
  %v4589 = vadd.f32 %v3883, %v4403
  %v4590 = vadd.f32 %v3884, %v4408
  %v4591 = vadd.f32 %v3885, %v4411
  %v4592 = vadd.f32 %v3886, %v4416
  %v4593 = vadd.f32 %v3887, %v4419
  %v4594 = vadd.f32 %v3888, %v4424
  %v4595 = vadd.f32 %v3889, %v4427
  %v4596 = vadd.f32 %v3890, %v4432
  %v4597 = vadd.f32 %v3891, %v4435
  %v4598 = vadd.f32 %v3892, %v4440
  %v4599 = vadd.f32 %v3893, %v4443
  %v4600 = vadd.f32 %v3894, %v4448
  %v4601 = vadd.f32 %v3895, %v4451
  %v4602 = vadd.f32 %v3896, %v4456
  %v4603 = vadd.f32 %v3897, %v4459
  %v4604 = vadd.f32 %v3898, %v4464
  %v4605 = vadd.f32 %v3899, %v4467
  %v4606 = vadd.f32 %v3900, %v4472
  %v4607 = vadd.f32 %v3901, %v4475
  %v4608 = vadd.f32 %v3902, %v4480
  %v4609 = vadd.f32 %v3903, %v4483
  %v4610 = vadd.f32 %v3904, %v4488
  %v4611 = vadd.f32 %v3905, %v4491
  %v4612 = vadd.f32 %v3906, %v4496
  %v4613 = vadd.f32 %v3907, %v4499
  %v4614 = vadd.f32 %v3908, %v4504
  %v4615 = vadd.f32 %v3909, %v4507
  %v4616 = vadd.f32 %v3910, %v4512
  %v4617 = vadd.f32 %v3911, %v4515
  %v4618 = vadd.f32 %v3912, %v4520
  %v4619 = vadd.f32 %v3913, %v4523
  %v4620 = vadd.f32 %v3914, %v4528
  %v4621 = vadd.f32 %v3915, %v4531
  %v4622 = vadd.f32 %v3916, %v4536
  %v4623 = vadd.f32 %v3917, %v4539
  %v4624 = vadd.f32 %v3918, %v4544
  %v4625 = vadd.f32 %v3919, %v4547
  %v4626 = vadd.f32 %v3920, %v4552
  %v4627 = vadd.f32 %v3921, %v4555
  %v4628 = vadd.f32 %v3922, %v4560
  %v4629 = vadd.f32 %v3923, %v4563
  %v4630 = vpack.c.bf16 %v3925, %v3924
  %v4631 = vpack.c.bf16 %v3927, %v3926
  %v4632 = vpack.c.bf16 %v3929, %v3928
  %v4633 = vpack.c.bf16 %v3931, %v3930
  %v4634 = vpack.c.bf16 %v3933, %v3932
  %v4635 = vpack.c.bf16 %v3935, %v3934
  %v4636 = vpack.c.bf16 %v3937, %v3936
  %v4637 = vpack.c.bf16 %v3939, %v3938
  %v4638 = vpack.c.bf16 %v3941, %v3940
  %v4639 = vpack.c.bf16 %v3943, %v3942
  %v4640 = vpack.c.bf16 %v3945, %v3944
  %v4641 = vpack.c.bf16 %v3947, %v3946
  %v4642 = vpack.c.bf16 %v3949, %v3948
  %v4643 = vpack.c.bf16 %v3951, %v3950
  %v4644 = vpack.c.bf16 %v3953, %v3952
  %v4645 = vpack.c.bf16 %v3955, %v3954
  %v4646 = vpack.c.bf16 %v3957, %v3956
  %v4647 = vpack.c.bf16 %v3959, %v3958
  %v4648 = vpack.c.bf16 %v3961, %v3960
  %v4649 = vpack.c.bf16 %v3963, %v3962
  %v4650 = vpack.c.bf16 %v3965, %v3964
  %v4651 = vpack.c.bf16 %v3967, %v3966
  %v4652 = vpack.c.bf16 %v3969, %v3968
  %v4653 = vpack.c.bf16 %v3971, %v3970
  %v4654 = vpack.c.bf16 %v3973, %v3972
  %v4655 = vpack.c.bf16 %v3975, %v3974
  %v4656 = vpack.c.bf16 %v3977, %v3976
  %v4657 = vpack.c.bf16 %v3979, %v3978
  %v4658 = vpack.c.bf16 %v3981, %v3980
  %v4659 = vpack.c.bf16 %v3983, %v3982
  %v4660 = vpack.c.bf16 %v3985, %v3984
  %v4661 = vpack.c.bf16 %v3987, %v3986
  %s4662 = scalar_lea.vmem %s4, 256
  %v4663 = vld [vmem:[%s4662] sm:$0xf]
  %v4664 = vld [vmem:[%s4662 + $0x4] sm:$0xf]
  %v4665 = vld [vmem:[%s4662 + $0x8] sm:$0xf]
  %v4666 = vld [vmem:[%s4662 + $0xc] sm:$0xf]
  %v4667 = vld [vmem:[%s4662 + $0x10] sm:$0xf]
  %v4668 = vld [vmem:[%s4662 + $0x14] sm:$0xf]
  %v4669 = vld [vmem:[%s4662 + $0x18] sm:$0xf]
  %v4670 = vld [vmem:[%s4662 + $0x1c] sm:$0xf]
  %v4671 = vld [vmem:[%s4662 + $0x20] sm:$0xf]
  %v4672 = vld [vmem:[%s4662 + $0x24] sm:$0xf]
  %v4673 = vld [vmem:[%s4662 + $0x28] sm:$0xf]
  %v4674 = vld [vmem:[%s4662 + $0x2c] sm:$0xf]
  %v4675 = vld [vmem:[%s4662 + $0x30] sm:$0xf]
  %v4676 = vld [vmem:[%s4662 + $0x34] sm:$0xf]
  %v4677 = vld [vmem:[%s4662 + $0x38] sm:$0xf]
  %v4678 = vld [vmem:[%s4662 + $0x3c] sm:$0xf]
  %v4695 = vunpack.c.l.b16 %v4663
  %v4696 = vunpack.c.l.b16 %v4664
  %v4697 = vunpack.c.l.b16 %v4665
  %v4698 = vunpack.c.l.b16 %v4666
  %v4699 = vunpack.c.l.b16 %v4667
  %v4700 = vunpack.c.l.b16 %v4668
  %v4701 = vunpack.c.l.b16 %v4669
  %v4702 = vunpack.c.l.b16 %v4670
  %v4703 = vunpack.c.l.b16 %v4671
  %v4704 = vunpack.c.l.b16 %v4672
  %v4705 = vunpack.c.l.b16 %v4673
  %v4706 = vunpack.c.l.b16 %v4674
  %v4707 = vunpack.c.l.b16 %v4675
  %v4708 = vunpack.c.l.b16 %v4676
  %v4709 = vunpack.c.l.b16 %v4677
  %v4710 = vunpack.c.l.b16 %v4678
  %v4711 = vpack.c.b16 %v4696, %v4695
  %v4712 = vpack.c.b16 %v4698, %v4697
  %v4713 = vpack.c.b16 %v4700, %v4699
  %v4714 = vpack.c.b16 %v4702, %v4701
  %v4715 = vpack.c.b16 %v4704, %v4703
  %v4716 = vpack.c.b16 %v4706, %v4705
  %v4717 = vpack.c.b16 %v4708, %v4707
  %v4718 = vpack.c.b16 %v4710, %v4709
  %4727 = vmatprep.subr.bf16.mxu0 0
  %4728 = vmatpush1.bf16.msra.mxu0 %v4718
  %4729 = vmatprep.subr.bf16.mxu0 0
  %4730 = vmatpush1.bf16.msra.mxu0 %v4717
  %4731 = vmatprep.subr.bf16.mxu0 0
  %4732 = vmatpush1.bf16.msra.mxu0 %v4716
  %4733 = vmatprep.subr.bf16.mxu0 0
  %4734 = vmatpush1.bf16.msra.mxu0 %v4715
  %4735 = vmatprep.subr.bf16.mxu0 0
  %4736 = vmatpush1.bf16.msra.mxu0 %v4714
  %4737 = vmatprep.subr.bf16.mxu0 0
  %4738 = vmatpush1.bf16.msra.mxu0 %v4713
  %4739 = vmatprep.subr.bf16.mxu0 0
  %4740 = vmatpush1.bf16.msra.mxu0 %v4712
  %4741 = vmatprep.subr.bf16.mxu0 0
  %4742 = vmatpush1.bf16.msra.mxu0 %v4711
  %4743 = vmatprep.subr.bf16.mxu0 0
  %4744 = vmatpush2.bf16.msra.mxu0 0
  %4745 = vmatprep.subr.bf16.mxu0 0
  %4746 = vmatpush2.bf16.msra.mxu0 0
  %4747 = vmatprep.subr.bf16.mxu0 0
  %4748 = vmatpush2.bf16.msra.mxu0 0
  %4749 = vmatprep.subr.bf16.mxu0 0
  %4750 = vmatpush2.bf16.msra.mxu0 0
  %4751 = vmatprep.subr.bf16.mxu0 0
  %4752 = vmatpush2.bf16.msra.mxu0 0
  %4753 = vmatprep.subr.bf16.mxu0 0
  %4754 = vmatpush2.bf16.msra.mxu0 0
  %4755 = vmatprep.subr.bf16.mxu0 0
  %4756 = vmatpush2.bf16.msra.mxu0 0
  %4757 = vmatprep.subr.bf16.mxu0 0
  %4758 = vmatpush2.bf16.msra.mxu0 0
  %4759 = vmatprep.mubr.bf16.mxu0 0
  %4760 = vmatmul.mubr.bf16.gmra.mxu0 %v4630
  %v4761 = vpop.f32.mrf.mxu0
  %v4762 = vadd.f32 0.0, %v4761
  %v4763 = vpop.f32.mrf.mxu0
  %v4764 = vpop.f32.mrf.mxu0
  %v4765 = vadd.f32 0.0, %v4764
  %v4766 = vpop.f32.mrf.mxu0
  %4767 = vmatprep.mubr.bf16.mxu0 0
  %4768 = vmatmul.mubr.bf16.gmra.mxu0 %v4631
  %v4769 = vpop.f32.mrf.mxu0
  %v4770 = vadd.f32 0.0, %v4769
  %v4771 = vpop.f32.mrf.mxu0
  %v4772 = vpop.f32.mrf.mxu0
  %v4773 = vadd.f32 0.0, %v4772
  %v4774 = vpop.f32.mrf.mxu0
  %4775 = vmatprep.mubr.bf16.mxu0 0
  %4776 = vmatmul.mubr.bf16.gmra.mxu0 %v4632
  %v4777 = vpop.f32.mrf.mxu0
  %v4778 = vadd.f32 0.0, %v4777
  %v4779 = vpop.f32.mrf.mxu0
  %v4780 = vpop.f32.mrf.mxu0
  %v4781 = vadd.f32 0.0, %v4780
  %v4782 = vpop.f32.mrf.mxu0
  %4783 = vmatprep.mubr.bf16.mxu0 0
  %4784 = vmatmul.mubr.bf16.gmra.mxu0 %v4633
  %v4785 = vpop.f32.mrf.mxu0
  %v4786 = vadd.f32 0.0, %v4785
  %v4787 = vpop.f32.mrf.mxu0
  %v4788 = vpop.f32.mrf.mxu0
  %v4789 = vadd.f32 0.0, %v4788
  %v4790 = vpop.f32.mrf.mxu0
  %4791 = vmatprep.mubr.bf16.mxu0 0
  %4792 = vmatmul.mubr.bf16.gmra.mxu0 %v4634
  %v4793 = vpop.f32.mrf.mxu0
  %v4794 = vadd.f32 0.0, %v4793
  %v4795 = vpop.f32.mrf.mxu0
  %v4796 = vpop.f32.mrf.mxu0
  %v4797 = vadd.f32 0.0, %v4796
  %v4798 = vpop.f32.mrf.mxu0
  %4799 = vmatprep.mubr.bf16.mxu0 0
  %4800 = vmatmul.mubr.bf16.gmra.mxu0 %v4635
  %v4801 = vpop.f32.mrf.mxu0
  %v4802 = vadd.f32 0.0, %v4801
  %v4803 = vpop.f32.mrf.mxu0
  %v4804 = vpop.f32.mrf.mxu0
  %v4805 = vadd.f32 0.0, %v4804
  %v4806 = vpop.f32.mrf.mxu0
  %4807 = vmatprep.mubr.bf16.mxu0 0
  %4808 = vmatmul.mubr.bf16.gmra.mxu0 %v4636
  %v4809 = vpop.f32.mrf.mxu0
  %v4810 = vadd.f32 0.0, %v4809
  %v4811 = vpop.f32.mrf.mxu0
  %v4812 = vpop.f32.mrf.mxu0
  %v4813 = vadd.f32 0.0, %v4812
  %v4814 = vpop.f32.mrf.mxu0
  %4815 = vmatprep.mubr.bf16.mxu0 0
  %4816 = vmatmul.mubr.bf16.gmra.mxu0 %v4637
  %v4817 = vpop.f32.mrf.mxu0
  %v4818 = vadd.f32 0.0, %v4817
  %v4819 = vpop.f32.mrf.mxu0
  %v4820 = vpop.f32.mrf.mxu0
  %v4821 = vadd.f32 0.0, %v4820
  %v4822 = vpop.f32.mrf.mxu0
  %4823 = vmatprep.mubr.bf16.mxu0 0
  %4824 = vmatmul.mubr.bf16.gmra.mxu0 %v4638
  %v4825 = vpop.f32.mrf.mxu0
  %v4826 = vadd.f32 0.0, %v4825
  %v4827 = vpop.f32.mrf.mxu0
  %v4828 = vpop.f32.mrf.mxu0
  %v4829 = vadd.f32 0.0, %v4828
  %v4830 = vpop.f32.mrf.mxu0
  %4831 = vmatprep.mubr.bf16.mxu0 0
  %4832 = vmatmul.mubr.bf16.gmra.mxu0 %v4639
  %v4833 = vpop.f32.mrf.mxu0
  %v4834 = vadd.f32 0.0, %v4833
  %v4835 = vpop.f32.mrf.mxu0
  %v4836 = vpop.f32.mrf.mxu0
  %v4837 = vadd.f32 0.0, %v4836
  %v4838 = vpop.f32.mrf.mxu0
  %4839 = vmatprep.mubr.bf16.mxu0 0
  %4840 = vmatmul.mubr.bf16.gmra.mxu0 %v4640
  %v4841 = vpop.f32.mrf.mxu0
  %v4842 = vadd.f32 0.0, %v4841
  %v4843 = vpop.f32.mrf.mxu0
  %v4844 = vpop.f32.mrf.mxu0
  %v4845 = vadd.f32 0.0, %v4844
  %v4846 = vpop.f32.mrf.mxu0
  %4847 = vmatprep.mubr.bf16.mxu0 0
  %4848 = vmatmul.mubr.bf16.gmra.mxu0 %v4641
  %v4849 = vpop.f32.mrf.mxu0
  %v4850 = vadd.f32 0.0, %v4849
  %v4851 = vpop.f32.mrf.mxu0
  %v4852 = vpop.f32.mrf.mxu0
  %v4853 = vadd.f32 0.0, %v4852
  %v4854 = vpop.f32.mrf.mxu0
  %4855 = vmatprep.mubr.bf16.mxu0 0
  %4856 = vmatmul.mubr.bf16.gmra.mxu0 %v4642
  %v4857 = vpop.f32.mrf.mxu0
  %v4858 = vadd.f32 0.0, %v4857
  %v4859 = vpop.f32.mrf.mxu0
  %v4860 = vpop.f32.mrf.mxu0
  %v4861 = vadd.f32 0.0, %v4860
  %v4862 = vpop.f32.mrf.mxu0
  %4863 = vmatprep.mubr.bf16.mxu0 0
  %4864 = vmatmul.mubr.bf16.gmra.mxu0 %v4643
  %v4865 = vpop.f32.mrf.mxu0
  %v4866 = vadd.f32 0.0, %v4865
  %v4867 = vpop.f32.mrf.mxu0
  %v4868 = vpop.f32.mrf.mxu0
  %v4869 = vadd.f32 0.0, %v4868
  %v4870 = vpop.f32.mrf.mxu0
  %4871 = vmatprep.mubr.bf16.mxu0 0
  %4872 = vmatmul.mubr.bf16.gmra.mxu0 %v4644
  %v4873 = vpop.f32.mrf.mxu0
  %v4874 = vadd.f32 0.0, %v4873
  %v4875 = vpop.f32.mrf.mxu0
  %v4876 = vpop.f32.mrf.mxu0
  %v4877 = vadd.f32 0.0, %v4876
  %v4878 = vpop.f32.mrf.mxu0
  %4879 = vmatprep.mubr.bf16.mxu0 0
  %4880 = vmatmul.mubr.bf16.gmra.mxu0 %v4645
  %v4881 = vpop.f32.mrf.mxu0
  %v4882 = vadd.f32 0.0, %v4881
  %v4883 = vpop.f32.mrf.mxu0
  %v4884 = vpop.f32.mrf.mxu0
  %v4885 = vadd.f32 0.0, %v4884
  %v4886 = vpop.f32.mrf.mxu0
  %4887 = vmatprep.mubr.bf16.mxu0 0
  %4888 = vmatmul.mubr.bf16.gmra.mxu0 %v4646
  %v4889 = vpop.f32.mrf.mxu0
  %v4890 = vadd.f32 0.0, %v4889
  %v4891 = vpop.f32.mrf.mxu0
  %v4892 = vpop.f32.mrf.mxu0
  %v4893 = vadd.f32 0.0, %v4892
  %v4894 = vpop.f32.mrf.mxu0
  %4895 = vmatprep.mubr.bf16.mxu0 0
  %4896 = vmatmul.mubr.bf16.gmra.mxu0 %v4647
  %v4897 = vpop.f32.mrf.mxu0
  %v4898 = vadd.f32 0.0, %v4897
  %v4899 = vpop.f32.mrf.mxu0
  %v4900 = vpop.f32.mrf.mxu0
  %v4901 = vadd.f32 0.0, %v4900
  %v4902 = vpop.f32.mrf.mxu0
  %4903 = vmatprep.mubr.bf16.mxu0 0
  %4904 = vmatmul.mubr.bf16.gmra.mxu0 %v4648
  %v4905 = vpop.f32.mrf.mxu0
  %v4906 = vadd.f32 0.0, %v4905
  %v4907 = vpop.f32.mrf.mxu0
  %v4908 = vpop.f32.mrf.mxu0
  %v4909 = vadd.f32 0.0, %v4908
  %v4910 = vpop.f32.mrf.mxu0
  %4911 = vmatprep.mubr.bf16.mxu0 0
  %4912 = vmatmul.mubr.bf16.gmra.mxu0 %v4649
  %v4913 = vpop.f32.mrf.mxu0
  %v4914 = vadd.f32 0.0, %v4913
  %v4915 = vpop.f32.mrf.mxu0
  %v4916 = vpop.f32.mrf.mxu0
  %v4917 = vadd.f32 0.0, %v4916
  %v4918 = vpop.f32.mrf.mxu0
  %4919 = vmatprep.mubr.bf16.mxu0 0
  %4920 = vmatmul.mubr.bf16.gmra.mxu0 %v4650
  %v4921 = vpop.f32.mrf.mxu0
  %v4922 = vadd.f32 0.0, %v4921
  %v4923 = vpop.f32.mrf.mxu0
  %v4924 = vpop.f32.mrf.mxu0
  %v4925 = vadd.f32 0.0, %v4924
  %v4926 = vpop.f32.mrf.mxu0
  %4927 = vmatprep.mubr.bf16.mxu0 0
  %4928 = vmatmul.mubr.bf16.gmra.mxu0 %v4651
  %v4929 = vpop.f32.mrf.mxu0
  %v4930 = vadd.f32 0.0, %v4929
  %v4931 = vpop.f32.mrf.mxu0
  %v4932 = vpop.f32.mrf.mxu0
  %v4933 = vadd.f32 0.0, %v4932
  %v4934 = vpop.f32.mrf.mxu0
  %4935 = vmatprep.mubr.bf16.mxu0 0
  %4936 = vmatmul.mubr.bf16.gmra.mxu0 %v4652
  %v4937 = vpop.f32.mrf.mxu0
  %v4938 = vadd.f32 0.0, %v4937
  %v4939 = vpop.f32.mrf.mxu0
  %v4940 = vpop.f32.mrf.mxu0
  %v4941 = vadd.f32 0.0, %v4940
  %v4942 = vpop.f32.mrf.mxu0
  %4943 = vmatprep.mubr.bf16.mxu0 0
  %4944 = vmatmul.mubr.bf16.gmra.mxu0 %v4653
  %v4945 = vpop.f32.mrf.mxu0
  %v4946 = vadd.f32 0.0, %v4945
  %v4947 = vpop.f32.mrf.mxu0
  %v4948 = vpop.f32.mrf.mxu0
  %v4949 = vadd.f32 0.0, %v4948
  %v4950 = vpop.f32.mrf.mxu0
  %4951 = vmatprep.mubr.bf16.mxu0 0
  %4952 = vmatmul.mubr.bf16.gmra.mxu0 %v4654
  %v4953 = vpop.f32.mrf.mxu0
  %v4954 = vadd.f32 0.0, %v4953
  %v4955 = vpop.f32.mrf.mxu0
  %v4956 = vpop.f32.mrf.mxu0
  %v4957 = vadd.f32 0.0, %v4956
  %v4958 = vpop.f32.mrf.mxu0
  %4959 = vmatprep.mubr.bf16.mxu0 0
  %4960 = vmatmul.mubr.bf16.gmra.mxu0 %v4655
  %v4961 = vpop.f32.mrf.mxu0
  %v4962 = vadd.f32 0.0, %v4961
  %v4963 = vpop.f32.mrf.mxu0
  %v4964 = vpop.f32.mrf.mxu0
  %v4965 = vadd.f32 0.0, %v4964
  %v4966 = vpop.f32.mrf.mxu0
  %4967 = vmatprep.mubr.bf16.mxu0 0
  %4968 = vmatmul.mubr.bf16.gmra.mxu0 %v4656
  %v4969 = vpop.f32.mrf.mxu0
  %v4970 = vadd.f32 0.0, %v4969
  %v4971 = vpop.f32.mrf.mxu0
  %v4972 = vpop.f32.mrf.mxu0
  %v4973 = vadd.f32 0.0, %v4972
  %v4974 = vpop.f32.mrf.mxu0
  %4975 = vmatprep.mubr.bf16.mxu0 0
  %4976 = vmatmul.mubr.bf16.gmra.mxu0 %v4657
  %v4977 = vpop.f32.mrf.mxu0
  %v4978 = vadd.f32 0.0, %v4977
  %v4979 = vpop.f32.mrf.mxu0
  %v4980 = vpop.f32.mrf.mxu0
  %v4981 = vadd.f32 0.0, %v4980
  %v4982 = vpop.f32.mrf.mxu0
  %4983 = vmatprep.mubr.bf16.mxu0 0
  %4984 = vmatmul.mubr.bf16.gmra.mxu0 %v4658
  %v4985 = vpop.f32.mrf.mxu0
  %v4986 = vadd.f32 0.0, %v4985
  %v4987 = vpop.f32.mrf.mxu0
  %v4988 = vpop.f32.mrf.mxu0
  %v4989 = vadd.f32 0.0, %v4988
  %v4990 = vpop.f32.mrf.mxu0
  %4991 = vmatprep.mubr.bf16.mxu0 0
  %4992 = vmatmul.mubr.bf16.gmra.mxu0 %v4659
  %v4993 = vpop.f32.mrf.mxu0
  %v4994 = vadd.f32 0.0, %v4993
  %v4995 = vpop.f32.mrf.mxu0
  %v4996 = vpop.f32.mrf.mxu0
  %v4997 = vadd.f32 0.0, %v4996
  %v4998 = vpop.f32.mrf.mxu0
  %4999 = vmatprep.mubr.bf16.mxu0 0
  %5000 = vmatmul.mubr.bf16.gmra.mxu0 %v4660
  %v5001 = vpop.f32.mrf.mxu0
  %v5002 = vadd.f32 0.0, %v5001
  %v5003 = vpop.f32.mrf.mxu0
  %v5004 = vpop.f32.mrf.mxu0
  %v5005 = vadd.f32 0.0, %v5004
  %v5006 = vpop.f32.mrf.mxu0
  %5007 = vmatprep.mubr.bf16.mxu0 0
  %5008 = vmatmul.mubr.bf16.gmra.mxu0 %v4661
  %v5009 = vpop.f32.mrf.mxu0
  %v5010 = vadd.f32 0.0, %v5009
  %v5011 = vpop.f32.mrf.mxu0
  %v5012 = vpop.f32.mrf.mxu0
  %v5013 = vadd.f32 0.0, %v5012
  %v5014 = vpop.f32.mrf.mxu0
  %5015 = vdwg.mxu0
  %v5016 = vadd.f32 %v4566, %v4762
  %v5017 = vadd.f32 %v4567, %v4765
  %v5018 = vadd.f32 %v4568, %v4770
  %v5019 = vadd.f32 %v4569, %v4773
  %v5020 = vadd.f32 %v4570, %v4778
  %v5021 = vadd.f32 %v4571, %v4781
  %v5022 = vadd.f32 %v4572, %v4786
  %v5023 = vadd.f32 %v4573, %v4789
  %v5024 = vadd.f32 %v4574, %v4794
  %v5025 = vadd.f32 %v4575, %v4797
  %v5026 = vadd.f32 %v4576, %v4802
  %v5027 = vadd.f32 %v4577, %v4805
  %v5028 = vadd.f32 %v4578, %v4810
  %v5029 = vadd.f32 %v4579, %v4813
  %v5030 = vadd.f32 %v4580, %v4818
  %v5031 = vadd.f32 %v4581, %v4821
  %v5032 = vadd.f32 %v4582, %v4826
  %v5033 = vadd.f32 %v4583, %v4829
  %v5034 = vadd.f32 %v4584, %v4834
  %v5035 = vadd.f32 %v4585, %v4837
  %v5036 = vadd.f32 %v4586, %v4842
  %v5037 = vadd.f32 %v4587, %v4845
  %v5038 = vadd.f32 %v4588, %v4850
  %v5039 = vadd.f32 %v4589, %v4853
  %v5040 = vadd.f32 %v4590, %v4858
  %v5041 = vadd.f32 %v4591, %v4861
  %v5042 = vadd.f32 %v4592, %v4866
  %v5043 = vadd.f32 %v4593, %v4869
  %v5044 = vadd.f32 %v4594, %v4874
  %v5045 = vadd.f32 %v4595, %v4877
  %v5046 = vadd.f32 %v4596, %v4882
  %v5047 = vadd.f32 %v4597, %v4885
  %v5048 = vadd.f32 %v4598, %v4890
  %v5049 = vadd.f32 %v4599, %v4893
  %v5050 = vadd.f32 %v4600, %v4898
  %v5051 = vadd.f32 %v4601, %v4901
  %v5052 = vadd.f32 %v4602, %v4906
  %v5053 = vadd.f32 %v4603, %v4909
  %v5054 = vadd.f32 %v4604, %v4914
  %v5055 = vadd.f32 %v4605, %v4917
  %v5056 = vadd.f32 %v4606, %v4922
  %v5057 = vadd.f32 %v4607, %v4925
  %v5058 = vadd.f32 %v4608, %v4930
  %v5059 = vadd.f32 %v4609, %v4933
  %v5060 = vadd.f32 %v4610, %v4938
  %v5061 = vadd.f32 %v4611, %v4941
  %v5062 = vadd.f32 %v4612, %v4946
  %v5063 = vadd.f32 %v4613, %v4949
  %v5064 = vadd.f32 %v4614, %v4954
  %v5065 = vadd.f32 %v4615, %v4957
  %v5066 = vadd.f32 %v4616, %v4962
  %v5067 = vadd.f32 %v4617, %v4965
  %v5068 = vadd.f32 %v4618, %v4970
  %v5069 = vadd.f32 %v4619, %v4973
  %v5070 = vadd.f32 %v4620, %v4978
  %v5071 = vadd.f32 %v4621, %v4981
  %v5072 = vadd.f32 %v4622, %v4986
  %v5073 = vadd.f32 %v4623, %v4989
  %v5074 = vadd.f32 %v4624, %v4994
  %v5075 = vadd.f32 %v4625, %v4997
  %v5076 = vadd.f32 %v4626, %v5002
  %v5077 = vadd.f32 %v4627, %v5005
  %v5078 = vadd.f32 %v4628, %v5010
  %v5079 = vadd.f32 %v4629, %v5013
  %v5080 = vrot.slane %v3924, 1
  %v5081 = vrot.slane %v3925, 1
  %v5082 = vrot.slane %v3926, 1
  %v5083 = vrot.slane %v3927, 1
  %v5084 = vrot.slane %v3928, 1
  %v5085 = vrot.slane %v3929, 1
  %v5086 = vrot.slane %v3930, 1
  %v5087 = vrot.slane %v3931, 1
  %v5088 = vrot.slane %v3932, 1
  %v5089 = vrot.slane %v3933, 1
  %v5090 = vrot.slane %v3934, 1
  %v5091 = vrot.slane %v3935, 1
  %v5092 = vrot.slane %v3936, 1
  %v5093 = vrot.slane %v3937, 1
  %v5094 = vrot.slane %v3938, 1
  %v5095 = vrot.slane %v3939, 1
  %v5096 = vrot.slane %v3940, 1
  %v5097 = vrot.slane %v3941, 1
  %v5098 = vrot.slane %v3942, 1
  %v5099 = vrot.slane %v3943, 1
  %v5100 = vrot.slane %v3944, 1
  %v5101 = vrot.slane %v3945, 1
  %v5102 = vrot.slane %v3946, 1
  %v5103 = vrot.slane %v3947, 1
  %v5104 = vrot.slane %v3948, 1
  %v5105 = vrot.slane %v3949, 1
  %v5106 = vrot.slane %v3950, 1
  %v5107 = vrot.slane %v3951, 1
  %v5108 = vrot.slane %v3952, 1
  %v5109 = vrot.slane %v3953, 1
  %v5110 = vrot.slane %v3954, 1
  %v5111 = vrot.slane %v3955, 1
  %v5112 = vrot.slane %v3956, 1
  %v5113 = vrot.slane %v3957, 1
  %v5114 = vrot.slane %v3958, 1
  %v5115 = vrot.slane %v3959, 1
  %v5116 = vrot.slane %v3960, 1
  %v5117 = vrot.slane %v3961, 1
  %v5118 = vrot.slane %v3962, 1
  %v5119 = vrot.slane %v3963, 1
  %v5120 = vrot.slane %v3964, 1
  %v5121 = vrot.slane %v3965, 1
  %v5122 = vrot.slane %v3966, 1
  %v5123 = vrot.slane %v3967, 1
  %v5124 = vrot.slane %v3968, 1
  %v5125 = vrot.slane %v3969, 1
  %v5126 = vrot.slane %v3970, 1
  %v5127 = vrot.slane %v3971, 1
  %v5128 = vrot.slane %v3972, 1
  %v5129 = vrot.slane %v3973, 1
  %v5130 = vrot.slane %v3974, 1
  %v5131 = vrot.slane %v3975, 1
  %v5132 = vrot.slane %v3976, 1
  %v5133 = vrot.slane %v3977, 1
  %v5134 = vrot.slane %v3978, 1
  %v5135 = vrot.slane %v3979, 1
  %v5136 = vrot.slane %v3980, 1
  %v5137 = vrot.slane %v3981, 1
  %v5138 = vrot.slane %v3982, 1
  %v5139 = vrot.slane %v3983, 1
  %v5140 = vrot.slane %v3984, 1
  %v5141 = vrot.slane %v3985, 1
  %v5142 = vrot.slane %v3986, 1
  %v5143 = vrot.slane %v3987, 1
  %v5144 = vsel %vm3345, %v5142, %v5143
  %v5145 = vsel %vm3345, %v5141, %v5142
  %v5146 = vsel %vm3345, %v5140, %v5141
  %v5147 = vsel %vm3345, %v5139, %v5140
  %v5148 = vsel %vm3345, %v5138, %v5139
  %v5149 = vsel %vm3345, %v5137, %v5138
  %v5150 = vsel %vm3345, %v5136, %v5137
  %v5151 = vsel %vm3345, %v5135, %v5136
  %v5152 = vsel %vm3345, %v5134, %v5135
  %v5153 = vsel %vm3345, %v5133, %v5134
  %v5154 = vsel %vm3345, %v5132, %v5133
  %v5155 = vsel %vm3345, %v5131, %v5132
  %v5156 = vsel %vm3345, %v5130, %v5131
  %v5157 = vsel %vm3345, %v5129, %v5130
  %v5158 = vsel %vm3345, %v5128, %v5129
  %v5159 = vsel %vm3345, %v5127, %v5128
  %v5160 = vsel %vm3345, %v5126, %v5127
  %v5161 = vsel %vm3345, %v5125, %v5126
  %v5162 = vsel %vm3345, %v5124, %v5125
  %v5163 = vsel %vm3345, %v5123, %v5124
  %v5164 = vsel %vm3345, %v5122, %v5123
  %v5165 = vsel %vm3345, %v5121, %v5122
  %v5166 = vsel %vm3345, %v5120, %v5121
  %v5167 = vsel %vm3345, %v5119, %v5120
  %v5168 = vsel %vm3345, %v5118, %v5119
  %v5169 = vsel %vm3345, %v5117, %v5118
  %v5170 = vsel %vm3345, %v5116, %v5117
  %v5171 = vsel %vm3345, %v5115, %v5116
  %v5172 = vsel %vm3345, %v5114, %v5115
  %v5173 = vsel %vm3345, %v5113, %v5114
  %v5174 = vsel %vm3345, %v5112, %v5113
  %v5175 = vsel %vm3345, %v5111, %v5112
  %v5176 = vsel %vm3345, %v5110, %v5111
  %v5177 = vsel %vm3345, %v5109, %v5110
  %v5178 = vsel %vm3345, %v5108, %v5109
  %v5179 = vsel %vm3345, %v5107, %v5108
  %v5180 = vsel %vm3345, %v5106, %v5107
  %v5181 = vsel %vm3345, %v5105, %v5106
  %v5182 = vsel %vm3345, %v5104, %v5105
  %v5183 = vsel %vm3345, %v5103, %v5104
  %v5184 = vsel %vm3345, %v5102, %v5103
  %v5185 = vsel %vm3345, %v5101, %v5102
  %v5186 = vsel %vm3345, %v5100, %v5101
  %v5187 = vsel %vm3345, %v5099, %v5100
  %v5188 = vsel %vm3345, %v5098, %v5099
  %v5189 = vsel %vm3345, %v5097, %v5098
  %v5190 = vsel %vm3345, %v5096, %v5097
  %v5191 = vsel %vm3345, %v5095, %v5096
  %v5192 = vsel %vm3345, %v5094, %v5095
  %v5193 = vsel %vm3345, %v5093, %v5094
  %v5194 = vsel %vm3345, %v5092, %v5093
  %v5195 = vsel %vm3345, %v5091, %v5092
  %v5196 = vsel %vm3345, %v5090, %v5091
  %v5197 = vsel %vm3345, %v5089, %v5090
  %v5198 = vsel %vm3345, %v5088, %v5089
  %v5199 = vsel %vm3345, %v5087, %v5088
  %v5200 = vsel %vm3345, %v5086, %v5087
  %v5201 = vsel %vm3345, %v5085, %v5086
  %v5202 = vsel %vm3345, %v5084, %v5085
  %v5203 = vsel %vm3345, %v5083, %v5084
  %v5204 = vsel %vm3345, %v5082, %v5083
  %v5205 = vsel %vm3345, %v5081, %v5082
  %v5206 = vsel %vm3345, %v5080, %v5081
  %v5207 = vsel %vm3345, %v5143, %v5080
  %v5208 = vmul.f32 %v5206, %v2189
  %v5209 = vmul.f32 %v5205, %v2190
  %v5210 = vmul.f32 %v5204, %v2191
  %v5211 = vmul.f32 %v5203, %v2192
  %v5212 = vmul.f32 %v5202, %v2193
  %v5213 = vmul.f32 %v5201, %v2194
  %v5214 = vmul.f32 %v5200, %v2195
  %v5215 = vmul.f32 %v5199, %v2196
  %v5216 = vmul.f32 %v5198, %v2197
  %v5217 = vmul.f32 %v5197, %v2198
  %v5218 = vmul.f32 %v5196, %v2199
  %v5219 = vmul.f32 %v5195, %v2200
  %v5220 = vmul.f32 %v5194, %v2201
  %v5221 = vmul.f32 %v5193, %v2202
  %v5222 = vmul.f32 %v5192, %v2203
  %v5223 = vmul.f32 %v5191, %v2204
  %v5224 = vmul.f32 %v5190, %v2205
  %v5225 = vmul.f32 %v5189, %v2206
  %v5226 = vmul.f32 %v5188, %v2207
  %v5227 = vmul.f32 %v5187, %v2208
  %v5228 = vmul.f32 %v5186, %v2209
  %v5229 = vmul.f32 %v5185, %v2210
  %v5230 = vmul.f32 %v5184, %v2211
  %v5231 = vmul.f32 %v5183, %v2212
  %v5232 = vmul.f32 %v5182, %v2213
  %v5233 = vmul.f32 %v5181, %v2214
  %v5234 = vmul.f32 %v5180, %v2215
  %v5235 = vmul.f32 %v5179, %v2216
  %v5236 = vmul.f32 %v5178, %v2217
  %v5237 = vmul.f32 %v5177, %v2218
  %v5238 = vmul.f32 %v5176, %v2219
  %v5239 = vmul.f32 %v5175, %v2220
  %v5240 = vmul.f32 %v5174, %v2221
  %v5241 = vmul.f32 %v5173, %v2222
  %v5242 = vmul.f32 %v5172, %v2223
  %v5243 = vmul.f32 %v5171, %v2224
  %v5244 = vmul.f32 %v5170, %v2225
  %v5245 = vmul.f32 %v5169, %v2226
  %v5246 = vmul.f32 %v5168, %v2227
  %v5247 = vmul.f32 %v5167, %v2228
  %v5248 = vmul.f32 %v5166, %v2229
  %v5249 = vmul.f32 %v5165, %v2230
  %v5250 = vmul.f32 %v5164, %v2231
  %v5251 = vmul.f32 %v5163, %v2232
  %v5252 = vmul.f32 %v5162, %v2233
  %v5253 = vmul.f32 %v5161, %v2234
  %v5254 = vmul.f32 %v5160, %v2235
  %v5255 = vmul.f32 %v5159, %v2236
  %v5256 = vmul.f32 %v5158, %v2237
  %v5257 = vmul.f32 %v5157, %v2238
  %v5258 = vmul.f32 %v5156, %v2239
  %v5259 = vmul.f32 %v5155, %v2240
  %v5260 = vmul.f32 %v5154, %v2241
  %v5261 = vmul.f32 %v5153, %v2242
  %v5262 = vmul.f32 %v5152, %v2243
  %v5263 = vmul.f32 %v5151, %v2244
  %v5264 = vmul.f32 %v5150, %v2245
  %v5265 = vmul.f32 %v5149, %v2246
  %v5266 = vmul.f32 %v5148, %v2247
  %v5267 = vmul.f32 %v5147, %v2248
  %v5268 = vmul.f32 %v5146, %v2249
  %v5269 = vmul.f32 %v5145, %v2250
  %v5270 = vmul.f32 %v5144, %v2251
  %v5271 = vmul.f32 %v5207, %v2252
  %v5272 = vpack.c.bf16 %v5209, %v5208
  %v5273 = vpack.c.bf16 %v5211, %v5210
  %v5274 = vpack.c.bf16 %v5213, %v5212
  %v5275 = vpack.c.bf16 %v5215, %v5214
  %v5276 = vpack.c.bf16 %v5217, %v5216
  %v5277 = vpack.c.bf16 %v5219, %v5218
  %v5278 = vpack.c.bf16 %v5221, %v5220
  %v5279 = vpack.c.bf16 %v5223, %v5222
  %v5280 = vpack.c.bf16 %v5225, %v5224
  %v5281 = vpack.c.bf16 %v5227, %v5226
  %v5282 = vpack.c.bf16 %v5229, %v5228
  %v5283 = vpack.c.bf16 %v5231, %v5230
  %v5284 = vpack.c.bf16 %v5233, %v5232
  %v5285 = vpack.c.bf16 %v5235, %v5234
  %v5286 = vpack.c.bf16 %v5237, %v5236
  %v5287 = vpack.c.bf16 %v5239, %v5238
  %v5288 = vpack.c.bf16 %v5241, %v5240
  %v5289 = vpack.c.bf16 %v5243, %v5242
  %v5290 = vpack.c.bf16 %v5245, %v5244
  %v5291 = vpack.c.bf16 %v5247, %v5246
  %v5292 = vpack.c.bf16 %v5249, %v5248
  %v5293 = vpack.c.bf16 %v5251, %v5250
  %v5294 = vpack.c.bf16 %v5253, %v5252
  %v5295 = vpack.c.bf16 %v5255, %v5254
  %v5296 = vpack.c.bf16 %v5257, %v5256
  %v5297 = vpack.c.bf16 %v5259, %v5258
  %v5298 = vpack.c.bf16 %v5261, %v5260
  %v5299 = vpack.c.bf16 %v5263, %v5262
  %v5300 = vpack.c.bf16 %v5265, %v5264
  %v5301 = vpack.c.bf16 %v5267, %v5266
  %v5302 = vpack.c.bf16 %v5269, %v5268
  %v5303 = vpack.c.bf16 %v5271, %v5270
  %s5304 = scalar_lea.vmem %s4, 320
  %v5305 = vld [vmem:[%s5304] sm:$0xf]
  %v5306 = vld [vmem:[%s5304 + $0x4] sm:$0xf]
  %v5307 = vld [vmem:[%s5304 + $0x8] sm:$0xf]
  %v5308 = vld [vmem:[%s5304 + $0xc] sm:$0xf]
  %v5309 = vld [vmem:[%s5304 + $0x10] sm:$0xf]
  %v5310 = vld [vmem:[%s5304 + $0x14] sm:$0xf]
  %v5311 = vld [vmem:[%s5304 + $0x18] sm:$0xf]
  %v5312 = vld [vmem:[%s5304 + $0x1c] sm:$0xf]
  %v5313 = vld [vmem:[%s5304 + $0x20] sm:$0xf]
  %v5314 = vld [vmem:[%s5304 + $0x24] sm:$0xf]
  %v5315 = vld [vmem:[%s5304 + $0x28] sm:$0xf]
  %v5316 = vld [vmem:[%s5304 + $0x2c] sm:$0xf]
  %v5317 = vld [vmem:[%s5304 + $0x30] sm:$0xf]
  %v5318 = vld [vmem:[%s5304 + $0x34] sm:$0xf]
  %v5319 = vld [vmem:[%s5304 + $0x38] sm:$0xf]
  %v5320 = vld [vmem:[%s5304 + $0x3c] sm:$0xf]
  %v5337 = vunpack.c.l.b16 %v5305
  %v5338 = vunpack.c.l.b16 %v5306
  %v5339 = vunpack.c.l.b16 %v5307
  %v5340 = vunpack.c.l.b16 %v5308
  %v5341 = vunpack.c.l.b16 %v5309
  %v5342 = vunpack.c.l.b16 %v5310
  %v5343 = vunpack.c.l.b16 %v5311
  %v5344 = vunpack.c.l.b16 %v5312
  %v5345 = vunpack.c.l.b16 %v5313
  %v5346 = vunpack.c.l.b16 %v5314
  %v5347 = vunpack.c.l.b16 %v5315
  %v5348 = vunpack.c.l.b16 %v5316
  %v5349 = vunpack.c.l.b16 %v5317
  %v5350 = vunpack.c.l.b16 %v5318
  %v5351 = vunpack.c.l.b16 %v5319
  %v5352 = vunpack.c.l.b16 %v5320
  %v5353 = vpack.c.b16 %v5338, %v5337
  %v5354 = vpack.c.b16 %v5340, %v5339
  %v5355 = vpack.c.b16 %v5342, %v5341
  %v5356 = vpack.c.b16 %v5344, %v5343
  %v5357 = vpack.c.b16 %v5346, %v5345
  %v5358 = vpack.c.b16 %v5348, %v5347
  %v5359 = vpack.c.b16 %v5350, %v5349
  %v5360 = vpack.c.b16 %v5352, %v5351
  %5369 = vmatprep.subr.bf16.mxu0 0
  %5370 = vmatpush1.bf16.msra.mxu0 %v5360
  %5371 = vmatprep.subr.bf16.mxu0 0
  %5372 = vmatpush1.bf16.msra.mxu0 %v5359
  %5373 = vmatprep.subr.bf16.mxu0 0
  %5374 = vmatpush1.bf16.msra.mxu0 %v5358
  %5375 = vmatprep.subr.bf16.mxu0 0
  %5376 = vmatpush1.bf16.msra.mxu0 %v5357
  %5377 = vmatprep.subr.bf16.mxu0 0
  %5378 = vmatpush1.bf16.msra.mxu0 %v5356
  %5379 = vmatprep.subr.bf16.mxu0 0
  %5380 = vmatpush1.bf16.msra.mxu0 %v5355
  %5381 = vmatprep.subr.bf16.mxu0 0
  %5382 = vmatpush1.bf16.msra.mxu0 %v5354
  %5383 = vmatprep.subr.bf16.mxu0 0
  %5384 = vmatpush1.bf16.msra.mxu0 %v5353
  %5385 = vmatprep.subr.bf16.mxu0 0
  %5386 = vmatpush2.bf16.msra.mxu0 0
  %5387 = vmatprep.subr.bf16.mxu0 0
  %5388 = vmatpush2.bf16.msra.mxu0 0
  %5389 = vmatprep.subr.bf16.mxu0 0
  %5390 = vmatpush2.bf16.msra.mxu0 0
  %5391 = vmatprep.subr.bf16.mxu0 0
  %5392 = vmatpush2.bf16.msra.mxu0 0
  %5393 = vmatprep.subr.bf16.mxu0 0
  %5394 = vmatpush2.bf16.msra.mxu0 0
  %5395 = vmatprep.subr.bf16.mxu0 0
  %5396 = vmatpush2.bf16.msra.mxu0 0
  %5397 = vmatprep.subr.bf16.mxu0 0
  %5398 = vmatpush2.bf16.msra.mxu0 0
  %5399 = vmatprep.subr.bf16.mxu0 0
  %5400 = vmatpush2.bf16.msra.mxu0 0
  %5401 = vmatprep.mubr.bf16.mxu0 0
  %5402 = vmatmul.mubr.bf16.gmra.mxu0 %v5272
  %v5403 = vpop.f32.mrf.mxu0
  %v5404 = vadd.f32 0.0, %v5403
  %v5405 = vpop.f32.mrf.mxu0
  %v5406 = vpop.f32.mrf.mxu0
  %v5407 = vadd.f32 0.0, %v5406
  %v5408 = vpop.f32.mrf.mxu0
  %5409 = vmatprep.mubr.bf16.mxu0 0
  %5410 = vmatmul.mubr.bf16.gmra.mxu0 %v5273
  %v5411 = vpop.f32.mrf.mxu0
  %v5412 = vadd.f32 0.0, %v5411
  %v5413 = vpop.f32.mrf.mxu0
  %v5414 = vpop.f32.mrf.mxu0
  %v5415 = vadd.f32 0.0, %v5414
  %v5416 = vpop.f32.mrf.mxu0
  %5417 = vmatprep.mubr.bf16.mxu0 0
  %5418 = vmatmul.mubr.bf16.gmra.mxu0 %v5274
  %v5419 = vpop.f32.mrf.mxu0
  %v5420 = vadd.f32 0.0, %v5419
  %v5421 = vpop.f32.mrf.mxu0
  %v5422 = vpop.f32.mrf.mxu0
  %v5423 = vadd.f32 0.0, %v5422
  %v5424 = vpop.f32.mrf.mxu0
  %5425 = vmatprep.mubr.bf16.mxu0 0
  %5426 = vmatmul.mubr.bf16.gmra.mxu0 %v5275
  %v5427 = vpop.f32.mrf.mxu0
  %v5428 = vadd.f32 0.0, %v5427
  %v5429 = vpop.f32.mrf.mxu0
  %v5430 = vpop.f32.mrf.mxu0
  %v5431 = vadd.f32 0.0, %v5430
  %v5432 = vpop.f32.mrf.mxu0
  %5433 = vmatprep.mubr.bf16.mxu0 0
  %5434 = vmatmul.mubr.bf16.gmra.mxu0 %v5276
  %v5435 = vpop.f32.mrf.mxu0
  %v5436 = vadd.f32 0.0, %v5435
  %v5437 = vpop.f32.mrf.mxu0
  %v5438 = vpop.f32.mrf.mxu0
  %v5439 = vadd.f32 0.0, %v5438
  %v5440 = vpop.f32.mrf.mxu0
  %5441 = vmatprep.mubr.bf16.mxu0 0
  %5442 = vmatmul.mubr.bf16.gmra.mxu0 %v5277
  %v5443 = vpop.f32.mrf.mxu0
  %v5444 = vadd.f32 0.0, %v5443
  %v5445 = vpop.f32.mrf.mxu0
  %v5446 = vpop.f32.mrf.mxu0
  %v5447 = vadd.f32 0.0, %v5446
  %v5448 = vpop.f32.mrf.mxu0
  %5449 = vmatprep.mubr.bf16.mxu0 0
  %5450 = vmatmul.mubr.bf16.gmra.mxu0 %v5278
  %v5451 = vpop.f32.mrf.mxu0
  %v5452 = vadd.f32 0.0, %v5451
  %v5453 = vpop.f32.mrf.mxu0
  %v5454 = vpop.f32.mrf.mxu0
  %v5455 = vadd.f32 0.0, %v5454
  %v5456 = vpop.f32.mrf.mxu0
  %5457 = vmatprep.mubr.bf16.mxu0 0
  %5458 = vmatmul.mubr.bf16.gmra.mxu0 %v5279
  %v5459 = vpop.f32.mrf.mxu0
  %v5460 = vadd.f32 0.0, %v5459
  %v5461 = vpop.f32.mrf.mxu0
  %v5462 = vpop.f32.mrf.mxu0
  %v5463 = vadd.f32 0.0, %v5462
  %v5464 = vpop.f32.mrf.mxu0
  %5465 = vmatprep.mubr.bf16.mxu0 0
  %5466 = vmatmul.mubr.bf16.gmra.mxu0 %v5280
  %v5467 = vpop.f32.mrf.mxu0
  %v5468 = vadd.f32 0.0, %v5467
  %v5469 = vpop.f32.mrf.mxu0
  %v5470 = vpop.f32.mrf.mxu0
  %v5471 = vadd.f32 0.0, %v5470
  %v5472 = vpop.f32.mrf.mxu0
  %5473 = vmatprep.mubr.bf16.mxu0 0
  %5474 = vmatmul.mubr.bf16.gmra.mxu0 %v5281
  %v5475 = vpop.f32.mrf.mxu0
  %v5476 = vadd.f32 0.0, %v5475
  %v5477 = vpop.f32.mrf.mxu0
  %v5478 = vpop.f32.mrf.mxu0
  %v5479 = vadd.f32 0.0, %v5478
  %v5480 = vpop.f32.mrf.mxu0
  %5481 = vmatprep.mubr.bf16.mxu0 0
  %5482 = vmatmul.mubr.bf16.gmra.mxu0 %v5282
  %v5483 = vpop.f32.mrf.mxu0
  %v5484 = vadd.f32 0.0, %v5483
  %v5485 = vpop.f32.mrf.mxu0
  %v5486 = vpop.f32.mrf.mxu0
  %v5487 = vadd.f32 0.0, %v5486
  %v5488 = vpop.f32.mrf.mxu0
  %5489 = vmatprep.mubr.bf16.mxu0 0
  %5490 = vmatmul.mubr.bf16.gmra.mxu0 %v5283
  %v5491 = vpop.f32.mrf.mxu0
  %v5492 = vadd.f32 0.0, %v5491
  %v5493 = vpop.f32.mrf.mxu0
  %v5494 = vpop.f32.mrf.mxu0
  %v5495 = vadd.f32 0.0, %v5494
  %v5496 = vpop.f32.mrf.mxu0
  %5497 = vmatprep.mubr.bf16.mxu0 0
  %5498 = vmatmul.mubr.bf16.gmra.mxu0 %v5284
  %v5499 = vpop.f32.mrf.mxu0
  %v5500 = vadd.f32 0.0, %v5499
  %v5501 = vpop.f32.mrf.mxu0
  %v5502 = vpop.f32.mrf.mxu0
  %v5503 = vadd.f32 0.0, %v5502
  %v5504 = vpop.f32.mrf.mxu0
  %5505 = vmatprep.mubr.bf16.mxu0 0
  %5506 = vmatmul.mubr.bf16.gmra.mxu0 %v5285
  %v5507 = vpop.f32.mrf.mxu0
  %v5508 = vadd.f32 0.0, %v5507
  %v5509 = vpop.f32.mrf.mxu0
  %v5510 = vpop.f32.mrf.mxu0
  %v5511 = vadd.f32 0.0, %v5510
  %v5512 = vpop.f32.mrf.mxu0
  %5513 = vmatprep.mubr.bf16.mxu0 0
  %5514 = vmatmul.mubr.bf16.gmra.mxu0 %v5286
  %v5515 = vpop.f32.mrf.mxu0
  %v5516 = vadd.f32 0.0, %v5515
  %v5517 = vpop.f32.mrf.mxu0
  %v5518 = vpop.f32.mrf.mxu0
  %v5519 = vadd.f32 0.0, %v5518
  %v5520 = vpop.f32.mrf.mxu0
  %5521 = vmatprep.mubr.bf16.mxu0 0
  %5522 = vmatmul.mubr.bf16.gmra.mxu0 %v5287
  %v5523 = vpop.f32.mrf.mxu0
  %v5524 = vadd.f32 0.0, %v5523
  %v5525 = vpop.f32.mrf.mxu0
  %v5526 = vpop.f32.mrf.mxu0
  %v5527 = vadd.f32 0.0, %v5526
  %v5528 = vpop.f32.mrf.mxu0
  %5529 = vmatprep.mubr.bf16.mxu0 0
  %5530 = vmatmul.mubr.bf16.gmra.mxu0 %v5288
  %v5531 = vpop.f32.mrf.mxu0
  %v5532 = vadd.f32 0.0, %v5531
  %v5533 = vpop.f32.mrf.mxu0
  %v5534 = vpop.f32.mrf.mxu0
  %v5535 = vadd.f32 0.0, %v5534
  %v5536 = vpop.f32.mrf.mxu0
  %5537 = vmatprep.mubr.bf16.mxu0 0
  %5538 = vmatmul.mubr.bf16.gmra.mxu0 %v5289
  %v5539 = vpop.f32.mrf.mxu0
  %v5540 = vadd.f32 0.0, %v5539
  %v5541 = vpop.f32.mrf.mxu0
  %v5542 = vpop.f32.mrf.mxu0
  %v5543 = vadd.f32 0.0, %v5542
  %v5544 = vpop.f32.mrf.mxu0
  %5545 = vmatprep.mubr.bf16.mxu0 0
  %5546 = vmatmul.mubr.bf16.gmra.mxu0 %v5290
  %v5547 = vpop.f32.mrf.mxu0
  %v5548 = vadd.f32 0.0, %v5547
  %v5549 = vpop.f32.mrf.mxu0
  %v5550 = vpop.f32.mrf.mxu0
  %v5551 = vadd.f32 0.0, %v5550
  %v5552 = vpop.f32.mrf.mxu0
  %5553 = vmatprep.mubr.bf16.mxu0 0
  %5554 = vmatmul.mubr.bf16.gmra.mxu0 %v5291
  %v5555 = vpop.f32.mrf.mxu0
  %v5556 = vadd.f32 0.0, %v5555
  %v5557 = vpop.f32.mrf.mxu0
  %v5558 = vpop.f32.mrf.mxu0
  %v5559 = vadd.f32 0.0, %v5558
  %v5560 = vpop.f32.mrf.mxu0
  %5561 = vmatprep.mubr.bf16.mxu0 0
  %5562 = vmatmul.mubr.bf16.gmra.mxu0 %v5292
  %v5563 = vpop.f32.mrf.mxu0
  %v5564 = vadd.f32 0.0, %v5563
  %v5565 = vpop.f32.mrf.mxu0
  %v5566 = vpop.f32.mrf.mxu0
  %v5567 = vadd.f32 0.0, %v5566
  %v5568 = vpop.f32.mrf.mxu0
  %5569 = vmatprep.mubr.bf16.mxu0 0
  %5570 = vmatmul.mubr.bf16.gmra.mxu0 %v5293
  %v5571 = vpop.f32.mrf.mxu0
  %v5572 = vadd.f32 0.0, %v5571
  %v5573 = vpop.f32.mrf.mxu0
  %v5574 = vpop.f32.mrf.mxu0
  %v5575 = vadd.f32 0.0, %v5574
  %v5576 = vpop.f32.mrf.mxu0
  %5577 = vmatprep.mubr.bf16.mxu0 0
  %5578 = vmatmul.mubr.bf16.gmra.mxu0 %v5294
  %v5579 = vpop.f32.mrf.mxu0
  %v5580 = vadd.f32 0.0, %v5579
  %v5581 = vpop.f32.mrf.mxu0
  %v5582 = vpop.f32.mrf.mxu0
  %v5583 = vadd.f32 0.0, %v5582
  %v5584 = vpop.f32.mrf.mxu0
  %5585 = vmatprep.mubr.bf16.mxu0 0
  %5586 = vmatmul.mubr.bf16.gmra.mxu0 %v5295
  %v5587 = vpop.f32.mrf.mxu0
  %v5588 = vadd.f32 0.0, %v5587
  %v5589 = vpop.f32.mrf.mxu0
  %v5590 = vpop.f32.mrf.mxu0
  %v5591 = vadd.f32 0.0, %v5590
  %v5592 = vpop.f32.mrf.mxu0
  %5593 = vmatprep.mubr.bf16.mxu0 0
  %5594 = vmatmul.mubr.bf16.gmra.mxu0 %v5296
  %v5595 = vpop.f32.mrf.mxu0
  %v5596 = vadd.f32 0.0, %v5595
  %v5597 = vpop.f32.mrf.mxu0
  %v5598 = vpop.f32.mrf.mxu0
  %v5599 = vadd.f32 0.0, %v5598
  %v5600 = vpop.f32.mrf.mxu0
  %5601 = vmatprep.mubr.bf16.mxu0 0
  %5602 = vmatmul.mubr.bf16.gmra.mxu0 %v5297
  %v5603 = vpop.f32.mrf.mxu0
  %v5604 = vadd.f32 0.0, %v5603
  %v5605 = vpop.f32.mrf.mxu0
  %v5606 = vpop.f32.mrf.mxu0
  %v5607 = vadd.f32 0.0, %v5606
  %v5608 = vpop.f32.mrf.mxu0
  %5609 = vmatprep.mubr.bf16.mxu0 0
  %5610 = vmatmul.mubr.bf16.gmra.mxu0 %v5298
  %v5611 = vpop.f32.mrf.mxu0
  %v5612 = vadd.f32 0.0, %v5611
  %v5613 = vpop.f32.mrf.mxu0
  %v5614 = vpop.f32.mrf.mxu0
  %v5615 = vadd.f32 0.0, %v5614
  %v5616 = vpop.f32.mrf.mxu0
  %5617 = vmatprep.mubr.bf16.mxu0 0
  %5618 = vmatmul.mubr.bf16.gmra.mxu0 %v5299
  %v5619 = vpop.f32.mrf.mxu0
  %v5620 = vadd.f32 0.0, %v5619
  %v5621 = vpop.f32.mrf.mxu0
  %v5622 = vpop.f32.mrf.mxu0
  %v5623 = vadd.f32 0.0, %v5622
  %v5624 = vpop.f32.mrf.mxu0
  %5625 = vmatprep.mubr.bf16.mxu0 0
  %5626 = vmatmul.mubr.bf16.gmra.mxu0 %v5300
  %v5627 = vpop.f32.mrf.mxu0
  %v5628 = vadd.f32 0.0, %v5627
  %v5629 = vpop.f32.mrf.mxu0
  %v5630 = vpop.f32.mrf.mxu0
  %v5631 = vadd.f32 0.0, %v5630
  %v5632 = vpop.f32.mrf.mxu0
  %5633 = vmatprep.mubr.bf16.mxu0 0
  %5634 = vmatmul.mubr.bf16.gmra.mxu0 %v5301
  %v5635 = vpop.f32.mrf.mxu0
  %v5636 = vadd.f32 0.0, %v5635
  %v5637 = vpop.f32.mrf.mxu0
  %v5638 = vpop.f32.mrf.mxu0
  %v5639 = vadd.f32 0.0, %v5638
  %v5640 = vpop.f32.mrf.mxu0
  %5641 = vmatprep.mubr.bf16.mxu0 0
  %5642 = vmatmul.mubr.bf16.gmra.mxu0 %v5302
  %v5643 = vpop.f32.mrf.mxu0
  %v5644 = vadd.f32 0.0, %v5643
  %v5645 = vpop.f32.mrf.mxu0
  %v5646 = vpop.f32.mrf.mxu0
  %v5647 = vadd.f32 0.0, %v5646
  %v5648 = vpop.f32.mrf.mxu0
  %5649 = vmatprep.mubr.bf16.mxu0 0
  %5650 = vmatmul.mubr.bf16.gmra.mxu0 %v5303
  %v5651 = vpop.f32.mrf.mxu0
  %v5652 = vadd.f32 0.0, %v5651
  %v5653 = vpop.f32.mrf.mxu0
  %v5654 = vpop.f32.mrf.mxu0
  %v5655 = vadd.f32 0.0, %v5654
  %v5656 = vpop.f32.mrf.mxu0
  %5657 = vdwg.mxu0
  %v5658 = vadd.f32 %v5016, %v5404
  %v5659 = vadd.f32 %v5017, %v5407
  %v5660 = vadd.f32 %v5018, %v5412
  %v5661 = vadd.f32 %v5019, %v5415
  %v5662 = vadd.f32 %v5020, %v5420
  %v5663 = vadd.f32 %v5021, %v5423
  %v5664 = vadd.f32 %v5022, %v5428
  %v5665 = vadd.f32 %v5023, %v5431
  %v5666 = vadd.f32 %v5024, %v5436
  %v5667 = vadd.f32 %v5025, %v5439
  %v5668 = vadd.f32 %v5026, %v5444
  %v5669 = vadd.f32 %v5027, %v5447
  %v5670 = vadd.f32 %v5028, %v5452
  %v5671 = vadd.f32 %v5029, %v5455
  %v5672 = vadd.f32 %v5030, %v5460
  %v5673 = vadd.f32 %v5031, %v5463
  %v5674 = vadd.f32 %v5032, %v5468
  %v5675 = vadd.f32 %v5033, %v5471
  %v5676 = vadd.f32 %v5034, %v5476
  %v5677 = vadd.f32 %v5035, %v5479
  %v5678 = vadd.f32 %v5036, %v5484
  %v5679 = vadd.f32 %v5037, %v5487
  %v5680 = vadd.f32 %v5038, %v5492
  %v5681 = vadd.f32 %v5039, %v5495
  %v5682 = vadd.f32 %v5040, %v5500
  %v5683 = vadd.f32 %v5041, %v5503
  %v5684 = vadd.f32 %v5042, %v5508
  %v5685 = vadd.f32 %v5043, %v5511
  %v5686 = vadd.f32 %v5044, %v5516
  %v5687 = vadd.f32 %v5045, %v5519
  %v5688 = vadd.f32 %v5046, %v5524
  %v5689 = vadd.f32 %v5047, %v5527
  %v5690 = vadd.f32 %v5048, %v5532
  %v5691 = vadd.f32 %v5049, %v5535
  %v5692 = vadd.f32 %v5050, %v5540
  %v5693 = vadd.f32 %v5051, %v5543
  %v5694 = vadd.f32 %v5052, %v5548
  %v5695 = vadd.f32 %v5053, %v5551
  %v5696 = vadd.f32 %v5054, %v5556
  %v5697 = vadd.f32 %v5055, %v5559
  %v5698 = vadd.f32 %v5056, %v5564
  %v5699 = vadd.f32 %v5057, %v5567
  %v5700 = vadd.f32 %v5058, %v5572
  %v5701 = vadd.f32 %v5059, %v5575
  %v5702 = vadd.f32 %v5060, %v5580
  %v5703 = vadd.f32 %v5061, %v5583
  %v5704 = vadd.f32 %v5062, %v5588
  %v5705 = vadd.f32 %v5063, %v5591
  %v5706 = vadd.f32 %v5064, %v5596
  %v5707 = vadd.f32 %v5065, %v5599
  %v5708 = vadd.f32 %v5066, %v5604
  %v5709 = vadd.f32 %v5067, %v5607
  %v5710 = vadd.f32 %v5068, %v5612
  %v5711 = vadd.f32 %v5069, %v5615
  %v5712 = vadd.f32 %v5070, %v5620
  %v5713 = vadd.f32 %v5071, %v5623
  %v5714 = vadd.f32 %v5072, %v5628
  %v5715 = vadd.f32 %v5073, %v5631
  %v5716 = vadd.f32 %v5074, %v5636
  %v5717 = vadd.f32 %v5075, %v5639
  %v5718 = vadd.f32 %v5076, %v5644
  %v5719 = vadd.f32 %v5077, %v5647
  %v5720 = vadd.f32 %v5078, %v5652
  %v5721 = vadd.f32 %v5079, %v5655
  %s5722 = scalar_lea.vmem [#allocation2], 32
  %v5723 = vld [vmem:[%s5722] sm:$0xff]
  %v5724 = vld [vmem:[%s5722 + $0x8] sm:$0xff]
  %v5725 = vld [vmem:[%s5722 + $0x10] sm:$0xff]
  %v5726 = vld [vmem:[%s5722 + $0x18] sm:$0xff]
  %v5727 = vld [vmem:[%s5722 + $0x20] sm:$0xff]
  %v5728 = vld [vmem:[%s5722 + $0x28] sm:$0xff]
  %v5729 = vld [vmem:[%s5722 + $0x30] sm:$0xff]
  %v5730 = vld [vmem:[%s5722 + $0x38] sm:$0xff]
  %v5731 = vld [vmem:[%s5722 + $0x40] sm:$0xff]
  %v5732 = vld [vmem:[%s5722 + $0x48] sm:$0xff]
  %v5733 = vld [vmem:[%s5722 + $0x50] sm:$0xff]
  %v5734 = vld [vmem:[%s5722 + $0x58] sm:$0xff]
  %v5735 = vld [vmem:[%s5722 + $0x60] sm:$0xff]
  %v5736 = vld [vmem:[%s5722 + $0x68] sm:$0xff]
  %v5737 = vld [vmem:[%s5722 + $0x70] sm:$0xff]
  %v5738 = vld [vmem:[%s5722 + $0x78] sm:$0xff]
  %v5739 = vld [vmem:[%s5722 + $0x80] sm:$0xff]
  %v5740 = vld [vmem:[%s5722 + $0x88] sm:$0xff]
  %v5741 = vld [vmem:[%s5722 + $0x90] sm:$0xff]
  %v5742 = vld [vmem:[%s5722 + $0x98] sm:$0xff]
  %v5743 = vld [vmem:[%s5722 + $0xa0] sm:$0xff]
  %v5744 = vld [vmem:[%s5722 + $0xa8] sm:$0xff]
  %v5745 = vld [vmem:[%s5722 + $0xb0] sm:$0xff]
  %v5746 = vld [vmem:[%s5722 + $0xb8] sm:$0xff]
  %v5747 = vld [vmem:[%s5722 + $0xc0] sm:$0xff]
  %v5748 = vld [vmem:[%s5722 + $0xc8] sm:$0xff]
  %v5749 = vld [vmem:[%s5722 + $0xd0] sm:$0xff]
  %v5750 = vld [vmem:[%s5722 + $0xd8] sm:$0xff]
  %v5751 = vld [vmem:[%s5722 + $0xe0] sm:$0xff]
  %v5752 = vld [vmem:[%s5722 + $0xe8] sm:$0xff]
  %v5753 = vld [vmem:[%s5722 + $0xf0] sm:$0xff]
  %v5754 = vld [vmem:[%s5722 + $0xf8] sm:$0xff]
  %v5755 = vld [vmem:[%s5722 + $0x120] sm:$0xff]
  %v5756 = vld [vmem:[%s5722 + $0x128] sm:$0xff]
  %v5757 = vld [vmem:[%s5722 + $0x130] sm:$0xff]
  %v5758 = vld [vmem:[%s5722 + $0x138] sm:$0xff]
  %v5759 = vld [vmem:[%s5722 + $0x140] sm:$0xff]
  %v5760 = vld [vmem:[%s5722 + $0x148] sm:$0xff]
  %v5761 = vld [vmem:[%s5722 + $0x150] sm:$0xff]
  %v5762 = vld [vmem:[%s5722 + $0x158] sm:$0xff]
  %v5763 = vld [vmem:[%s5722 + $0x160] sm:$0xff]
  %v5764 = vld [vmem:[%s5722 + $0x168] sm:$0xff]
  %v5765 = vld [vmem:[%s5722 + $0x170] sm:$0xff]
  %v5766 = vld [vmem:[%s5722 + $0x178] sm:$0xff]
  %v5767 = vld [vmem:[%s5722 + $0x180] sm:$0xff]
  %v5768 = vld [vmem:[%s5722 + $0x188] sm:$0xff]
  %v5769 = vld [vmem:[%s5722 + $0x190] sm:$0xff]
  %v5770 = vld [vmem:[%s5722 + $0x198] sm:$0xff]
  %v5771 = vld [vmem:[%s5722 + $0x1a0] sm:$0xff]
  %v5772 = vld [vmem:[%s5722 + $0x1a8] sm:$0xff]
  %v5773 = vld [vmem:[%s5722 + $0x1b0] sm:$0xff]
  %v5774 = vld [vmem:[%s5722 + $0x1b8] sm:$0xff]
  %v5775 = vld [vmem:[%s5722 + $0x1c0] sm:$0xff]
  %v5776 = vld [vmem:[%s5722 + $0x1c8] sm:$0xff]
  %v5777 = vld [vmem:[%s5722 + $0x1d0] sm:$0xff]
  %v5778 = vld [vmem:[%s5722 + $0x1d8] sm:$0xff]
  %v5779 = vld [vmem:[%s5722 + $0x1e0] sm:$0xff]
  %v5780 = vld [vmem:[%s5722 + $0x1e8] sm:$0xff]
  %v5781 = vld [vmem:[%s5722 + $0x1f0] sm:$0xff]
  %v5782 = vld [vmem:[%s5722 + $0x1f8] sm:$0xff]
  %v5783 = vld [vmem:[%s5722 + $0x200] sm:$0xff]
  %v5784 = vld [vmem:[%s5722 + $0x208] sm:$0xff]
  %v5785 = vld [vmem:[%s5722 + $0x210] sm:$0xff]
  %v5786 = vld [vmem:[%s5722 + $0x218] sm:$0xff]
  %v5787 = vrot.slane %v5723, 7
  %v5788 = vrot.slane %v5724, 7
  %v5789 = vrot.slane %v5725, 7
  %v5790 = vrot.slane %v5726, 7
  %v5791 = vrot.slane %v5727, 7
  %v5792 = vrot.slane %v5728, 7
  %v5793 = vrot.slane %v5729, 7
  %v5794 = vrot.slane %v5730, 7
  %v5795 = vrot.slane %v5731, 7
  %v5796 = vrot.slane %v5732, 7
  %v5797 = vrot.slane %v5733, 7
  %v5798 = vrot.slane %v5734, 7
  %v5799 = vrot.slane %v5735, 7
  %v5800 = vrot.slane %v5736, 7
  %v5801 = vrot.slane %v5737, 7
  %v5802 = vrot.slane %v5738, 7
  %v5803 = vrot.slane %v5739, 7
  %v5804 = vrot.slane %v5740, 7
  %v5805 = vrot.slane %v5741, 7
  %v5806 = vrot.slane %v5742, 7
  %v5807 = vrot.slane %v5743, 7
  %v5808 = vrot.slane %v5744, 7
  %v5809 = vrot.slane %v5745, 7
  %v5810 = vrot.slane %v5746, 7
  %v5811 = vrot.slane %v5747, 7
  %v5812 = vrot.slane %v5748, 7
  %v5813 = vrot.slane %v5749, 7
  %v5814 = vrot.slane %v5750, 7
  %v5815 = vrot.slane %v5751, 7
  %v5816 = vrot.slane %v5752, 7
  %v5817 = vrot.slane %v5753, 7
  %v5818 = vrot.slane %v5754, 7
  %v5819 = vrot.slane %v5755, 7
  %v5820 = vrot.slane %v5756, 7
  %v5821 = vrot.slane %v5757, 7
  %v5822 = vrot.slane %v5758, 7
  %v5823 = vrot.slane %v5759, 7
  %v5824 = vrot.slane %v5760, 7
  %v5825 = vrot.slane %v5761, 7
  %v5826 = vrot.slane %v5762, 7
  %v5827 = vrot.slane %v5763, 7
  %v5828 = vrot.slane %v5764, 7
  %v5829 = vrot.slane %v5765, 7
  %v5830 = vrot.slane %v5766, 7
  %v5831 = vrot.slane %v5767, 7
  %v5832 = vrot.slane %v5768, 7
  %v5833 = vrot.slane %v5769, 7
  %v5834 = vrot.slane %v5770, 7
  %v5835 = vrot.slane %v5771, 7
  %v5836 = vrot.slane %v5772, 7
  %v5837 = vrot.slane %v5773, 7
  %v5838 = vrot.slane %v5774, 7
  %v5839 = vrot.slane %v5775, 7
  %v5840 = vrot.slane %v5776, 7
  %v5841 = vrot.slane %v5777, 7
  %v5842 = vrot.slane %v5778, 7
  %v5843 = vrot.slane %v5779, 7
  %v5844 = vrot.slane %v5780, 7
  %v5845 = vrot.slane %v5781, 7
  %v5846 = vrot.slane %v5782, 7
  %v5847 = vrot.slane %v5783, 7
  %v5848 = vrot.slane %v5784, 7
  %v5849 = vrot.slane %v5785, 7
  %v5850 = vrot.slane %v5786, 7
  %v5851 = vsel %vm2381, %v5849, %v5850
  %v5852 = vsel %vm2381, %v5848, %v5849
  %v5853 = vsel %vm2381, %v5847, %v5848
  %v5854 = vsel %vm2381, %v5846, %v5847
  %v5855 = vsel %vm2381, %v5845, %v5846
  %v5856 = vsel %vm2381, %v5844, %v5845
  %v5857 = vsel %vm2381, %v5843, %v5844
  %v5858 = vsel %vm2381, %v5842, %v5843
  %v5859 = vsel %vm2381, %v5841, %v5842
  %v5860 = vsel %vm2381, %v5840, %v5841
  %v5861 = vsel %vm2381, %v5839, %v5840
  %v5862 = vsel %vm2381, %v5838, %v5839
  %v5863 = vsel %vm2381, %v5837, %v5838
  %v5864 = vsel %vm2381, %v5836, %v5837
  %v5865 = vsel %vm2381, %v5835, %v5836
  %v5866 = vsel %vm2381, %v5834, %v5835
  %v5867 = vsel %vm2381, %v5833, %v5834
  %v5868 = vsel %vm2381, %v5832, %v5833
  %v5869 = vsel %vm2381, %v5831, %v5832
  %v5870 = vsel %vm2381, %v5830, %v5831
  %v5871 = vsel %vm2381, %v5829, %v5830
  %v5872 = vsel %vm2381, %v5828, %v5829
  %v5873 = vsel %vm2381, %v5827, %v5828
  %v5874 = vsel %vm2381, %v5826, %v5827
  %v5875 = vsel %vm2381, %v5825, %v5826
  %v5876 = vsel %vm2381, %v5824, %v5825
  %v5877 = vsel %vm2381, %v5823, %v5824
  %v5878 = vsel %vm2381, %v5822, %v5823
  %v5879 = vsel %vm2381, %v5821, %v5822
  %v5880 = vsel %vm2381, %v5820, %v5821
  %v5881 = vsel %vm2381, %v5819, %v5820
  %v5882 = vsel %vm2381, %v5818, %v5819
  %v5883 = vsel %vm2381, %v5817, %v5818
  %v5884 = vsel %vm2381, %v5816, %v5817
  %v5885 = vsel %vm2381, %v5815, %v5816
  %v5886 = vsel %vm2381, %v5814, %v5815
  %v5887 = vsel %vm2381, %v5813, %v5814
  %v5888 = vsel %vm2381, %v5812, %v5813
  %v5889 = vsel %vm2381, %v5811, %v5812
  %v5890 = vsel %vm2381, %v5810, %v5811
  %v5891 = vsel %vm2381, %v5809, %v5810
  %v5892 = vsel %vm2381, %v5808, %v5809
  %v5893 = vsel %vm2381, %v5807, %v5808
  %v5894 = vsel %vm2381, %v5806, %v5807
  %v5895 = vsel %vm2381, %v5805, %v5806
  %v5896 = vsel %vm2381, %v5804, %v5805
  %v5897 = vsel %vm2381, %v5803, %v5804
  %v5898 = vsel %vm2381, %v5802, %v5803
  %v5899 = vsel %vm2381, %v5801, %v5802
  %v5900 = vsel %vm2381, %v5800, %v5801
  %v5901 = vsel %vm2381, %v5799, %v5800
  %v5902 = vsel %vm2381, %v5798, %v5799
  %v5903 = vsel %vm2381, %v5797, %v5798
  %v5904 = vsel %vm2381, %v5796, %v5797
  %v5905 = vsel %vm2381, %v5795, %v5796
  %v5906 = vsel %vm2381, %v5794, %v5795
  %v5907 = vsel %vm2381, %v5793, %v5794
  %v5908 = vsel %vm2381, %v5792, %v5793
  %v5909 = vsel %vm2381, %v5791, %v5792
  %v5910 = vsel %vm2381, %v5790, %v5791
  %v5911 = vsel %vm2381, %v5789, %v5790
  %v5912 = vsel %vm2381, %v5788, %v5789
  %v5913 = vsel %vm2381, %v5787, %v5788
  %v5914 = vsel %vm2381, %v5850, %v5787
  %v5915 = vmul.f32 %v5914, %v1997
  %v5916 = vmul.f32 %v5913, %v1998
  %v5917 = vmul.f32 %v5912, %v1999
  %v5918 = vmul.f32 %v5911, %v2000
  %v5919 = vmul.f32 %v5910, %v2001
  %v5920 = vmul.f32 %v5909, %v2002
  %v5921 = vmul.f32 %v5908, %v2003
  %v5922 = vmul.f32 %v5907, %v2004
  %v5923 = vmul.f32 %v5906, %v2005
  %v5924 = vmul.f32 %v5905, %v2006
  %v5925 = vmul.f32 %v5904, %v2007
  %v5926 = vmul.f32 %v5903, %v2008
  %v5927 = vmul.f32 %v5902, %v2009
  %v5928 = vmul.f32 %v5901, %v2010
  %v5929 = vmul.f32 %v5900, %v2011
  %v5930 = vmul.f32 %v5899, %v2012
  %v5931 = vmul.f32 %v5898, %v2013
  %v5932 = vmul.f32 %v5897, %v2014
  %v5933 = vmul.f32 %v5896, %v2015
  %v5934 = vmul.f32 %v5895, %v2016
  %v5935 = vmul.f32 %v5894, %v2017
  %v5936 = vmul.f32 %v5893, %v2018
  %v5937 = vmul.f32 %v5892, %v2019
  %v5938 = vmul.f32 %v5891, %v2020
  %v5939 = vmul.f32 %v5890, %v2021
  %v5940 = vmul.f32 %v5889, %v2022
  %v5941 = vmul.f32 %v5888, %v2023
  %v5942 = vmul.f32 %v5887, %v2024
  %v5943 = vmul.f32 %v5886, %v2025
  %v5944 = vmul.f32 %v5885, %v2026
  %v5945 = vmul.f32 %v5884, %v2027
  %v5946 = vmul.f32 %v5883, %v2028
  %v5947 = vmul.f32 %v5882, %v2029
  %v5948 = vmul.f32 %v5881, %v2030
  %v5949 = vmul.f32 %v5880, %v2031
  %v5950 = vmul.f32 %v5879, %v2032
  %v5951 = vmul.f32 %v5878, %v2033
  %v5952 = vmul.f32 %v5877, %v2034
  %v5953 = vmul.f32 %v5876, %v2035
  %v5954 = vmul.f32 %v5875, %v2036
  %v5955 = vmul.f32 %v5874, %v2037
  %v5956 = vmul.f32 %v5873, %v2038
  %v5957 = vmul.f32 %v5872, %v2039
  %v5958 = vmul.f32 %v5871, %v2040
  %v5959 = vmul.f32 %v5870, %v2041
  %v5960 = vmul.f32 %v5869, %v2042
  %v5961 = vmul.f32 %v5868, %v2043
  %v5962 = vmul.f32 %v5867, %v2044
  %v5963 = vmul.f32 %v5866, %v2045
  %v5964 = vmul.f32 %v5865, %v2046
  %v5965 = vmul.f32 %v5864, %v2047
  %v5966 = vmul.f32 %v5863, %v2048
  %v5967 = vmul.f32 %v5862, %v2049
  %v5968 = vmul.f32 %v5861, %v2050
  %v5969 = vmul.f32 %v5860, %v2051
  %v5970 = vmul.f32 %v5859, %v2052
  %v5971 = vmul.f32 %v5858, %v2053
  %v5972 = vmul.f32 %v5857, %v2054
  %v5973 = vmul.f32 %v5856, %v2055
  %v5974 = vmul.f32 %v5855, %v2056
  %v5975 = vmul.f32 %v5854, %v2057
  %v5976 = vmul.f32 %v5853, %v2058
  %v5977 = vmul.f32 %v5852, %v2059
  %v5978 = vmul.f32 %v5851, %v2060
  %v5979 = vpack.c.bf16 %v5916, %v5915
  %v5980 = vpack.c.bf16 %v5918, %v5917
  %v5981 = vpack.c.bf16 %v5920, %v5919
  %v5982 = vpack.c.bf16 %v5922, %v5921
  %v5983 = vpack.c.bf16 %v5924, %v5923
  %v5984 = vpack.c.bf16 %v5926, %v5925
  %v5985 = vpack.c.bf16 %v5928, %v5927
  %v5986 = vpack.c.bf16 %v5930, %v5929
  %v5987 = vpack.c.bf16 %v5932, %v5931
  %v5988 = vpack.c.bf16 %v5934, %v5933
  %v5989 = vpack.c.bf16 %v5936, %v5935
  %v5990 = vpack.c.bf16 %v5938, %v5937
  %v5991 = vpack.c.bf16 %v5940, %v5939
  %v5992 = vpack.c.bf16 %v5942, %v5941
  %v5993 = vpack.c.bf16 %v5944, %v5943
  %v5994 = vpack.c.bf16 %v5946, %v5945
  %v5995 = vpack.c.bf16 %v5948, %v5947
  %v5996 = vpack.c.bf16 %v5950, %v5949
  %v5997 = vpack.c.bf16 %v5952, %v5951
  %v5998 = vpack.c.bf16 %v5954, %v5953
  %v5999 = vpack.c.bf16 %v5956, %v5955
  %v6000 = vpack.c.bf16 %v5958, %v5957
  %v6001 = vpack.c.bf16 %v5960, %v5959
  %v6002 = vpack.c.bf16 %v5962, %v5961
  %v6003 = vpack.c.bf16 %v5964, %v5963
  %v6004 = vpack.c.bf16 %v5966, %v5965
  %v6005 = vpack.c.bf16 %v5968, %v5967
  %v6006 = vpack.c.bf16 %v5970, %v5969
  %v6007 = vpack.c.bf16 %v5972, %v5971
  %v6008 = vpack.c.bf16 %v5974, %v5973
  %v6009 = vpack.c.bf16 %v5976, %v5975
  %v6010 = vpack.c.bf16 %v5978, %v5977
  %s6011 = scalar_lea.vmem %s4, 384
  %v6012 = vld [vmem:[%s6011] sm:$0xf]
  %v6013 = vld [vmem:[%s6011 + $0x4] sm:$0xf]
  %v6014 = vld [vmem:[%s6011 + $0x8] sm:$0xf]
  %v6015 = vld [vmem:[%s6011 + $0xc] sm:$0xf]
  %v6016 = vld [vmem:[%s6011 + $0x10] sm:$0xf]
  %v6017 = vld [vmem:[%s6011 + $0x14] sm:$0xf]
  %v6018 = vld [vmem:[%s6011 + $0x18] sm:$0xf]
  %v6019 = vld [vmem:[%s6011 + $0x1c] sm:$0xf]
  %v6020 = vld [vmem:[%s6011 + $0x20] sm:$0xf]
  %v6021 = vld [vmem:[%s6011 + $0x24] sm:$0xf]
  %v6022 = vld [vmem:[%s6011 + $0x28] sm:$0xf]
  %v6023 = vld [vmem:[%s6011 + $0x2c] sm:$0xf]
  %v6024 = vld [vmem:[%s6011 + $0x30] sm:$0xf]
  %v6025 = vld [vmem:[%s6011 + $0x34] sm:$0xf]
  %v6026 = vld [vmem:[%s6011 + $0x38] sm:$0xf]
  %v6027 = vld [vmem:[%s6011 + $0x3c] sm:$0xf]
  %v6044 = vunpack.c.l.b16 %v6012
  %v6045 = vunpack.c.l.b16 %v6013
  %v6046 = vunpack.c.l.b16 %v6014
  %v6047 = vunpack.c.l.b16 %v6015
  %v6048 = vunpack.c.l.b16 %v6016
  %v6049 = vunpack.c.l.b16 %v6017
  %v6050 = vunpack.c.l.b16 %v6018
  %v6051 = vunpack.c.l.b16 %v6019
  %v6052 = vunpack.c.l.b16 %v6020
  %v6053 = vunpack.c.l.b16 %v6021
  %v6054 = vunpack.c.l.b16 %v6022
  %v6055 = vunpack.c.l.b16 %v6023
  %v6056 = vunpack.c.l.b16 %v6024
  %v6057 = vunpack.c.l.b16 %v6025
  %v6058 = vunpack.c.l.b16 %v6026
  %v6059 = vunpack.c.l.b16 %v6027
  %v6060 = vpack.c.b16 %v6045, %v6044
  %v6061 = vpack.c.b16 %v6047, %v6046
  %v6062 = vpack.c.b16 %v6049, %v6048
  %v6063 = vpack.c.b16 %v6051, %v6050
  %v6064 = vpack.c.b16 %v6053, %v6052
  %v6065 = vpack.c.b16 %v6055, %v6054
  %v6066 = vpack.c.b16 %v6057, %v6056
  %v6067 = vpack.c.b16 %v6059, %v6058
  %6076 = vmatprep.subr.bf16.mxu0 0
  %6077 = vmatpush1.bf16.msra.mxu0 %v6067
  %6078 = vmatprep.subr.bf16.mxu0 0
  %6079 = vmatpush1.bf16.msra.mxu0 %v6066
  %6080 = vmatprep.subr.bf16.mxu0 0
  %6081 = vmatpush1.bf16.msra.mxu0 %v6065
  %6082 = vmatprep.subr.bf16.mxu0 0
  %6083 = vmatpush1.bf16.msra.mxu0 %v6064
  %6084 = vmatprep.subr.bf16.mxu0 0
  %6085 = vmatpush1.bf16.msra.mxu0 %v6063
  %6086 = vmatprep.subr.bf16.mxu0 0
  %6087 = vmatpush1.bf16.msra.mxu0 %v6062
  %6088 = vmatprep.subr.bf16.mxu0 0
  %6089 = vmatpush1.bf16.msra.mxu0 %v6061
  %6090 = vmatprep.subr.bf16.mxu0 0
  %6091 = vmatpush1.bf16.msra.mxu0 %v6060
  %6092 = vmatprep.subr.bf16.mxu0 0
  %6093 = vmatpush2.bf16.msra.mxu0 0
  %6094 = vmatprep.subr.bf16.mxu0 0
  %6095 = vmatpush2.bf16.msra.mxu0 0
  %6096 = vmatprep.subr.bf16.mxu0 0
  %6097 = vmatpush2.bf16.msra.mxu0 0
  %6098 = vmatprep.subr.bf16.mxu0 0
  %6099 = vmatpush2.bf16.msra.mxu0 0
  %6100 = vmatprep.subr.bf16.mxu0 0
  %6101 = vmatpush2.bf16.msra.mxu0 0
  %6102 = vmatprep.subr.bf16.mxu0 0
  %6103 = vmatpush2.bf16.msra.mxu0 0
  %6104 = vmatprep.subr.bf16.mxu0 0
  %6105 = vmatpush2.bf16.msra.mxu0 0
  %6106 = vmatprep.subr.bf16.mxu0 0
  %6107 = vmatpush2.bf16.msra.mxu0 0
  %6108 = vmatprep.mubr.bf16.mxu0 0
  %6109 = vmatmul.mubr.bf16.gmra.mxu0 %v5979
  %v6110 = vpop.f32.mrf.mxu0
  %v6111 = vadd.f32 0.0, %v6110
  %v6112 = vpop.f32.mrf.mxu0
  %v6113 = vpop.f32.mrf.mxu0
  %v6114 = vadd.f32 0.0, %v6113
  %v6115 = vpop.f32.mrf.mxu0
  %6116 = vmatprep.mubr.bf16.mxu0 0
  %6117 = vmatmul.mubr.bf16.gmra.mxu0 %v5980
  %v6118 = vpop.f32.mrf.mxu0
  %v6119 = vadd.f32 0.0, %v6118
  %v6120 = vpop.f32.mrf.mxu0
  %v6121 = vpop.f32.mrf.mxu0
  %v6122 = vadd.f32 0.0, %v6121
  %v6123 = vpop.f32.mrf.mxu0
  %6124 = vmatprep.mubr.bf16.mxu0 0
  %6125 = vmatmul.mubr.bf16.gmra.mxu0 %v5981
  %v6126 = vpop.f32.mrf.mxu0
  %v6127 = vadd.f32 0.0, %v6126
  %v6128 = vpop.f32.mrf.mxu0
  %v6129 = vpop.f32.mrf.mxu0
  %v6130 = vadd.f32 0.0, %v6129
  %v6131 = vpop.f32.mrf.mxu0
  %6132 = vmatprep.mubr.bf16.mxu0 0
  %6133 = vmatmul.mubr.bf16.gmra.mxu0 %v5982
  %v6134 = vpop.f32.mrf.mxu0
  %v6135 = vadd.f32 0.0, %v6134
  %v6136 = vpop.f32.mrf.mxu0
  %v6137 = vpop.f32.mrf.mxu0
  %v6138 = vadd.f32 0.0, %v6137
  %v6139 = vpop.f32.mrf.mxu0
  %6140 = vmatprep.mubr.bf16.mxu0 0
  %6141 = vmatmul.mubr.bf16.gmra.mxu0 %v5983
  %v6142 = vpop.f32.mrf.mxu0
  %v6143 = vadd.f32 0.0, %v6142
  %v6144 = vpop.f32.mrf.mxu0
  %v6145 = vpop.f32.mrf.mxu0
  %v6146 = vadd.f32 0.0, %v6145
  %v6147 = vpop.f32.mrf.mxu0
  %6148 = vmatprep.mubr.bf16.mxu0 0
  %6149 = vmatmul.mubr.bf16.gmra.mxu0 %v5984
  %v6150 = vpop.f32.mrf.mxu0
  %v6151 = vadd.f32 0.0, %v6150
  %v6152 = vpop.f32.mrf.mxu0
  %v6153 = vpop.f32.mrf.mxu0
  %v6154 = vadd.f32 0.0, %v6153
  %v6155 = vpop.f32.mrf.mxu0
  %6156 = vmatprep.mubr.bf16.mxu0 0
  %6157 = vmatmul.mubr.bf16.gmra.mxu0 %v5985
  %v6158 = vpop.f32.mrf.mxu0
  %v6159 = vadd.f32 0.0, %v6158
  %v6160 = vpop.f32.mrf.mxu0
  %v6161 = vpop.f32.mrf.mxu0
  %v6162 = vadd.f32 0.0, %v6161
  %v6163 = vpop.f32.mrf.mxu0
  %6164 = vmatprep.mubr.bf16.mxu0 0
  %6165 = vmatmul.mubr.bf16.gmra.mxu0 %v5986
  %v6166 = vpop.f32.mrf.mxu0
  %v6167 = vadd.f32 0.0, %v6166
  %v6168 = vpop.f32.mrf.mxu0
  %v6169 = vpop.f32.mrf.mxu0
  %v6170 = vadd.f32 0.0, %v6169
  %v6171 = vpop.f32.mrf.mxu0
  %6172 = vmatprep.mubr.bf16.mxu0 0
  %6173 = vmatmul.mubr.bf16.gmra.mxu0 %v5987
  %v6174 = vpop.f32.mrf.mxu0
  %v6175 = vadd.f32 0.0, %v6174
  %v6176 = vpop.f32.mrf.mxu0
  %v6177 = vpop.f32.mrf.mxu0
  %v6178 = vadd.f32 0.0, %v6177
  %v6179 = vpop.f32.mrf.mxu0
  %6180 = vmatprep.mubr.bf16.mxu0 0
  %6181 = vmatmul.mubr.bf16.gmra.mxu0 %v5988
  %v6182 = vpop.f32.mrf.mxu0
  %v6183 = vadd.f32 0.0, %v6182
  %v6184 = vpop.f32.mrf.mxu0
  %v6185 = vpop.f32.mrf.mxu0
  %v6186 = vadd.f32 0.0, %v6185
  %v6187 = vpop.f32.mrf.mxu0
  %6188 = vmatprep.mubr.bf16.mxu0 0
  %6189 = vmatmul.mubr.bf16.gmra.mxu0 %v5989
  %v6190 = vpop.f32.mrf.mxu0
  %v6191 = vadd.f32 0.0, %v6190
  %v6192 = vpop.f32.mrf.mxu0
  %v6193 = vpop.f32.mrf.mxu0
  %v6194 = vadd.f32 0.0, %v6193
  %v6195 = vpop.f32.mrf.mxu0
  %6196 = vmatprep.mubr.bf16.mxu0 0
  %6197 = vmatmul.mubr.bf16.gmra.mxu0 %v5990
  %v6198 = vpop.f32.mrf.mxu0
  %v6199 = vadd.f32 0.0, %v6198
  %v6200 = vpop.f32.mrf.mxu0
  %v6201 = vpop.f32.mrf.mxu0
  %v6202 = vadd.f32 0.0, %v6201
  %v6203 = vpop.f32.mrf.mxu0
  %6204 = vmatprep.mubr.bf16.mxu0 0
  %6205 = vmatmul.mubr.bf16.gmra.mxu0 %v5991
  %v6206 = vpop.f32.mrf.mxu0
  %v6207 = vadd.f32 0.0, %v6206
  %v6208 = vpop.f32.mrf.mxu0
  %v6209 = vpop.f32.mrf.mxu0
  %v6210 = vadd.f32 0.0, %v6209
  %v6211 = vpop.f32.mrf.mxu0
  %6212 = vmatprep.mubr.bf16.mxu0 0
  %6213 = vmatmul.mubr.bf16.gmra.mxu0 %v5992
  %v6214 = vpop.f32.mrf.mxu0
  %v6215 = vadd.f32 0.0, %v6214
  %v6216 = vpop.f32.mrf.mxu0
  %v6217 = vpop.f32.mrf.mxu0
  %v6218 = vadd.f32 0.0, %v6217
  %v6219 = vpop.f32.mrf.mxu0
  %6220 = vmatprep.mubr.bf16.mxu0 0
  %6221 = vmatmul.mubr.bf16.gmra.mxu0 %v5993
  %v6222 = vpop.f32.mrf.mxu0
  %v6223 = vadd.f32 0.0, %v6222
  %v6224 = vpop.f32.mrf.mxu0
  %v6225 = vpop.f32.mrf.mxu0
  %v6226 = vadd.f32 0.0, %v6225
  %v6227 = vpop.f32.mrf.mxu0
  %6228 = vmatprep.mubr.bf16.mxu0 0
  %6229 = vmatmul.mubr.bf16.gmra.mxu0 %v5994
  %v6230 = vpop.f32.mrf.mxu0
  %v6231 = vadd.f32 0.0, %v6230
  %v6232 = vpop.f32.mrf.mxu0
  %v6233 = vpop.f32.mrf.mxu0
  %v6234 = vadd.f32 0.0, %v6233
  %v6235 = vpop.f32.mrf.mxu0
  %6236 = vmatprep.mubr.bf16.mxu0 0
  %6237 = vmatmul.mubr.bf16.gmra.mxu0 %v5995
  %v6238 = vpop.f32.mrf.mxu0
  %v6239 = vadd.f32 0.0, %v6238
  %v6240 = vpop.f32.mrf.mxu0
  %v6241 = vpop.f32.mrf.mxu0
  %v6242 = vadd.f32 0.0, %v6241
  %v6243 = vpop.f32.mrf.mxu0
  %6244 = vmatprep.mubr.bf16.mxu0 0
  %6245 = vmatmul.mubr.bf16.gmra.mxu0 %v5996
  %v6246 = vpop.f32.mrf.mxu0
  %v6247 = vadd.f32 0.0, %v6246
  %v6248 = vpop.f32.mrf.mxu0
  %v6249 = vpop.f32.mrf.mxu0
  %v6250 = vadd.f32 0.0, %v6249
  %v6251 = vpop.f32.mrf.mxu0
  %6252 = vmatprep.mubr.bf16.mxu0 0
  %6253 = vmatmul.mubr.bf16.gmra.mxu0 %v5997
  %v6254 = vpop.f32.mrf.mxu0
  %v6255 = vadd.f32 0.0, %v6254
  %v6256 = vpop.f32.mrf.mxu0
  %v6257 = vpop.f32.mrf.mxu0
  %v6258 = vadd.f32 0.0, %v6257
  %v6259 = vpop.f32.mrf.mxu0
  %6260 = vmatprep.mubr.bf16.mxu0 0
  %6261 = vmatmul.mubr.bf16.gmra.mxu0 %v5998
  %v6262 = vpop.f32.mrf.mxu0
  %v6263 = vadd.f32 0.0, %v6262
  %v6264 = vpop.f32.mrf.mxu0
  %v6265 = vpop.f32.mrf.mxu0
  %v6266 = vadd.f32 0.0, %v6265
  %v6267 = vpop.f32.mrf.mxu0
  %6268 = vmatprep.mubr.bf16.mxu0 0
  %6269 = vmatmul.mubr.bf16.gmra.mxu0 %v5999
  %v6270 = vpop.f32.mrf.mxu0
  %v6271 = vadd.f32 0.0, %v6270
  %v6272 = vpop.f32.mrf.mxu0
  %v6273 = vpop.f32.mrf.mxu0
  %v6274 = vadd.f32 0.0, %v6273
  %v6275 = vpop.f32.mrf.mxu0
  %6276 = vmatprep.mubr.bf16.mxu0 0
  %6277 = vmatmul.mubr.bf16.gmra.mxu0 %v6000
  %v6278 = vpop.f32.mrf.mxu0
  %v6279 = vadd.f32 0.0, %v6278
  %v6280 = vpop.f32.mrf.mxu0
  %v6281 = vpop.f32.mrf.mxu0
  %v6282 = vadd.f32 0.0, %v6281
  %v6283 = vpop.f32.mrf.mxu0
  %6284 = vmatprep.mubr.bf16.mxu0 0
  %6285 = vmatmul.mubr.bf16.gmra.mxu0 %v6001
  %v6286 = vpop.f32.mrf.mxu0
  %v6287 = vadd.f32 0.0, %v6286
  %v6288 = vpop.f32.mrf.mxu0
  %v6289 = vpop.f32.mrf.mxu0
  %v6290 = vadd.f32 0.0, %v6289
  %v6291 = vpop.f32.mrf.mxu0
  %6292 = vmatprep.mubr.bf16.mxu0 0
  %6293 = vmatmul.mubr.bf16.gmra.mxu0 %v6002
  %v6294 = vpop.f32.mrf.mxu0
  %v6295 = vadd.f32 0.0, %v6294
  %v6296 = vpop.f32.mrf.mxu0
  %v6297 = vpop.f32.mrf.mxu0
  %v6298 = vadd.f32 0.0, %v6297
  %v6299 = vpop.f32.mrf.mxu0
  %6300 = vmatprep.mubr.bf16.mxu0 0
  %6301 = vmatmul.mubr.bf16.gmra.mxu0 %v6003
  %v6302 = vpop.f32.mrf.mxu0
  %v6303 = vadd.f32 0.0, %v6302
  %v6304 = vpop.f32.mrf.mxu0
  %v6305 = vpop.f32.mrf.mxu0
  %v6306 = vadd.f32 0.0, %v6305
  %v6307 = vpop.f32.mrf.mxu0
  %6308 = vmatprep.mubr.bf16.mxu0 0
  %6309 = vmatmul.mubr.bf16.gmra.mxu0 %v6004
  %v6310 = vpop.f32.mrf.mxu0
  %v6311 = vadd.f32 0.0, %v6310
  %v6312 = vpop.f32.mrf.mxu0
  %v6313 = vpop.f32.mrf.mxu0
  %v6314 = vadd.f32 0.0, %v6313
  %v6315 = vpop.f32.mrf.mxu0
  %6316 = vmatprep.mubr.bf16.mxu0 0
  %6317 = vmatmul.mubr.bf16.gmra.mxu0 %v6005
  %v6318 = vpop.f32.mrf.mxu0
  %v6319 = vadd.f32 0.0, %v6318
  %v6320 = vpop.f32.mrf.mxu0
  %v6321 = vpop.f32.mrf.mxu0
  %v6322 = vadd.f32 0.0, %v6321
  %v6323 = vpop.f32.mrf.mxu0
  %6324 = vmatprep.mubr.bf16.mxu0 0
  %6325 = vmatmul.mubr.bf16.gmra.mxu0 %v6006
  %v6326 = vpop.f32.mrf.mxu0
  %v6327 = vadd.f32 0.0, %v6326
  %v6328 = vpop.f32.mrf.mxu0
  %v6329 = vpop.f32.mrf.mxu0
  %v6330 = vadd.f32 0.0, %v6329
  %v6331 = vpop.f32.mrf.mxu0
  %6332 = vmatprep.mubr.bf16.mxu0 0
  %6333 = vmatmul.mubr.bf16.gmra.mxu0 %v6007
  %v6334 = vpop.f32.mrf.mxu0
  %v6335 = vadd.f32 0.0, %v6334
  %v6336 = vpop.f32.mrf.mxu0
  %v6337 = vpop.f32.mrf.mxu0
  %v6338 = vadd.f32 0.0, %v6337
  %v6339 = vpop.f32.mrf.mxu0
  %6340 = vmatprep.mubr.bf16.mxu0 0
  %6341 = vmatmul.mubr.bf16.gmra.mxu0 %v6008
  %v6342 = vpop.f32.mrf.mxu0
  %v6343 = vadd.f32 0.0, %v6342
  %v6344 = vpop.f32.mrf.mxu0
  %v6345 = vpop.f32.mrf.mxu0
  %v6346 = vadd.f32 0.0, %v6345
  %v6347 = vpop.f32.mrf.mxu0
  %6348 = vmatprep.mubr.bf16.mxu0 0
  %6349 = vmatmul.mubr.bf16.gmra.mxu0 %v6009
  %v6350 = vpop.f32.mrf.mxu0
  %v6351 = vadd.f32 0.0, %v6350
  %v6352 = vpop.f32.mrf.mxu0
  %v6353 = vpop.f32.mrf.mxu0
  %v6354 = vadd.f32 0.0, %v6353
  %v6355 = vpop.f32.mrf.mxu0
  %6356 = vmatprep.mubr.bf16.mxu0 0
  %6357 = vmatmul.mubr.bf16.gmra.mxu0 %v6010
  %v6358 = vpop.f32.mrf.mxu0
  %v6359 = vadd.f32 0.0, %v6358
  %v6360 = vpop.f32.mrf.mxu0
  %v6361 = vpop.f32.mrf.mxu0
  %v6362 = vadd.f32 0.0, %v6361
  %v6363 = vpop.f32.mrf.mxu0
  %6364 = vdwg.mxu0
  %v6365 = vadd.f32 %v5658, %v6111
  %v6366 = vadd.f32 %v5659, %v6114
  %v6367 = vadd.f32 %v5660, %v6119
  %v6368 = vadd.f32 %v5661, %v6122
  %v6369 = vadd.f32 %v5662, %v6127
  %v6370 = vadd.f32 %v5663, %v6130
  %v6371 = vadd.f32 %v5664, %v6135
  %v6372 = vadd.f32 %v5665, %v6138
  %v6373 = vadd.f32 %v5666, %v6143
  %v6374 = vadd.f32 %v5667, %v6146
  %v6375 = vadd.f32 %v5668, %v6151
  %v6376 = vadd.f32 %v5669, %v6154
  %v6377 = vadd.f32 %v5670, %v6159
  %v6378 = vadd.f32 %v5671, %v6162
  %v6379 = vadd.f32 %v5672, %v6167
  %v6380 = vadd.f32 %v5673, %v6170
  %v6381 = vadd.f32 %v5674, %v6175
  %v6382 = vadd.f32 %v5675, %v6178
  %v6383 = vadd.f32 %v5676, %v6183
  %v6384 = vadd.f32 %v5677, %v6186
  %v6385 = vadd.f32 %v5678, %v6191
  %v6386 = vadd.f32 %v5679, %v6194
  %v6387 = vadd.f32 %v5680, %v6199
  %v6388 = vadd.f32 %v5681, %v6202
  %v6389 = vadd.f32 %v5682, %v6207
  %v6390 = vadd.f32 %v5683, %v6210
  %v6391 = vadd.f32 %v5684, %v6215
  %v6392 = vadd.f32 %v5685, %v6218
  %v6393 = vadd.f32 %v5686, %v6223
  %v6394 = vadd.f32 %v5687, %v6226
  %v6395 = vadd.f32 %v5688, %v6231
  %v6396 = vadd.f32 %v5689, %v6234
  %v6397 = vadd.f32 %v5690, %v6239
  %v6398 = vadd.f32 %v5691, %v6242
  %v6399 = vadd.f32 %v5692, %v6247
  %v6400 = vadd.f32 %v5693, %v6250
  %v6401 = vadd.f32 %v5694, %v6255
  %v6402 = vadd.f32 %v5695, %v6258
  %v6403 = vadd.f32 %v5696, %v6263
  %v6404 = vadd.f32 %v5697, %v6266
  %v6405 = vadd.f32 %v5698, %v6271
  %v6406 = vadd.f32 %v5699, %v6274
  %v6407 = vadd.f32 %v5700, %v6279
  %v6408 = vadd.f32 %v5701, %v6282
  %v6409 = vadd.f32 %v5702, %v6287
  %v6410 = vadd.f32 %v5703, %v6290
  %v6411 = vadd.f32 %v5704, %v6295
  %v6412 = vadd.f32 %v5705, %v6298
  %v6413 = vadd.f32 %v5706, %v6303
  %v6414 = vadd.f32 %v5707, %v6306
  %v6415 = vadd.f32 %v5708, %v6311
  %v6416 = vadd.f32 %v5709, %v6314
  %v6417 = vadd.f32 %v5710, %v6319
  %v6418 = vadd.f32 %v5711, %v6322
  %v6419 = vadd.f32 %v5712, %v6327
  %v6420 = vadd.f32 %v5713, %v6330
  %v6421 = vadd.f32 %v5714, %v6335
  %v6422 = vadd.f32 %v5715, %v6338
  %v6423 = vadd.f32 %v5716, %v6343
  %v6424 = vadd.f32 %v5717, %v6346
  %v6425 = vadd.f32 %v5718, %v6351
  %v6426 = vadd.f32 %v5719, %v6354
  %v6427 = vadd.f32 %v5720, %v6359
  %v6428 = vadd.f32 %v5721, %v6362
  %v6429 = vpack.c.bf16 %v5724, %v5723
  %v6430 = vpack.c.bf16 %v5726, %v5725
  %v6431 = vpack.c.bf16 %v5728, %v5727
  %v6432 = vpack.c.bf16 %v5730, %v5729
  %v6433 = vpack.c.bf16 %v5732, %v5731
  %v6434 = vpack.c.bf16 %v5734, %v5733
  %v6435 = vpack.c.bf16 %v5736, %v5735
  %v6436 = vpack.c.bf16 %v5738, %v5737
  %v6437 = vpack.c.bf16 %v5740, %v5739
  %v6438 = vpack.c.bf16 %v5742, %v5741
  %v6439 = vpack.c.bf16 %v5744, %v5743
  %v6440 = vpack.c.bf16 %v5746, %v5745
  %v6441 = vpack.c.bf16 %v5748, %v5747
  %v6442 = vpack.c.bf16 %v5750, %v5749
  %v6443 = vpack.c.bf16 %v5752, %v5751
  %v6444 = vpack.c.bf16 %v5754, %v5753
  %v6445 = vpack.c.bf16 %v5756, %v5755
  %v6446 = vpack.c.bf16 %v5758, %v5757
  %v6447 = vpack.c.bf16 %v5760, %v5759
  %v6448 = vpack.c.bf16 %v5762, %v5761
  %v6449 = vpack.c.bf16 %v5764, %v5763
  %v6450 = vpack.c.bf16 %v5766, %v5765
  %v6451 = vpack.c.bf16 %v5768, %v5767
  %v6452 = vpack.c.bf16 %v5770, %v5769
  %v6453 = vpack.c.bf16 %v5772, %v5771
  %v6454 = vpack.c.bf16 %v5774, %v5773
  %v6455 = vpack.c.bf16 %v5776, %v5775
  %v6456 = vpack.c.bf16 %v5778, %v5777
  %v6457 = vpack.c.bf16 %v5780, %v5779
  %v6458 = vpack.c.bf16 %v5782, %v5781
  %v6459 = vpack.c.bf16 %v5784, %v5783
  %v6460 = vpack.c.bf16 %v5786, %v5785
  %s6461 = scalar_lea.vmem %s4, 448
  %v6462 = vld [vmem:[%s6461] sm:$0xf]
  %v6463 = vld [vmem:[%s6461 + $0x4] sm:$0xf]
  %v6464 = vld [vmem:[%s6461 + $0x8] sm:$0xf]
  %v6465 = vld [vmem:[%s6461 + $0xc] sm:$0xf]
  %v6466 = vld [vmem:[%s6461 + $0x10] sm:$0xf]
  %v6467 = vld [vmem:[%s6461 + $0x14] sm:$0xf]
  %v6468 = vld [vmem:[%s6461 + $0x18] sm:$0xf]
  %v6469 = vld [vmem:[%s6461 + $0x1c] sm:$0xf]
  %v6470 = vld [vmem:[%s6461 + $0x20] sm:$0xf]
  %v6471 = vld [vmem:[%s6461 + $0x24] sm:$0xf]
  %v6472 = vld [vmem:[%s6461 + $0x28] sm:$0xf]
  %v6473 = vld [vmem:[%s6461 + $0x2c] sm:$0xf]
  %v6474 = vld [vmem:[%s6461 + $0x30] sm:$0xf]
  %v6475 = vld [vmem:[%s6461 + $0x34] sm:$0xf]
  %v6476 = vld [vmem:[%s6461 + $0x38] sm:$0xf]
  %v6477 = vld [vmem:[%s6461 + $0x3c] sm:$0xf]
  %v6494 = vunpack.c.l.b16 %v6462
  %v6495 = vunpack.c.l.b16 %v6463
  %v6496 = vunpack.c.l.b16 %v6464
  %v6497 = vunpack.c.l.b16 %v6465
  %v6498 = vunpack.c.l.b16 %v6466
  %v6499 = vunpack.c.l.b16 %v6467
  %v6500 = vunpack.c.l.b16 %v6468
  %v6501 = vunpack.c.l.b16 %v6469
  %v6502 = vunpack.c.l.b16 %v6470
  %v6503 = vunpack.c.l.b16 %v6471
  %v6504 = vunpack.c.l.b16 %v6472
  %v6505 = vunpack.c.l.b16 %v6473
  %v6506 = vunpack.c.l.b16 %v6474
  %v6507 = vunpack.c.l.b16 %v6475
  %v6508 = vunpack.c.l.b16 %v6476
  %v6509 = vunpack.c.l.b16 %v6477
  %v6510 = vpack.c.b16 %v6495, %v6494
  %v6511 = vpack.c.b16 %v6497, %v6496
  %v6512 = vpack.c.b16 %v6499, %v6498
  %v6513 = vpack.c.b16 %v6501, %v6500
  %v6514 = vpack.c.b16 %v6503, %v6502
  %v6515 = vpack.c.b16 %v6505, %v6504
  %v6516 = vpack.c.b16 %v6507, %v6506
  %v6517 = vpack.c.b16 %v6509, %v6508
  %6526 = vmatprep.subr.bf16.mxu0 0
  %6527 = vmatpush1.bf16.msra.mxu0 %v6517
  %6528 = vmatprep.subr.bf16.mxu0 0
  %6529 = vmatpush1.bf16.msra.mxu0 %v6516
  %6530 = vmatprep.subr.bf16.mxu0 0
  %6531 = vmatpush1.bf16.msra.mxu0 %v6515
  %6532 = vmatprep.subr.bf16.mxu0 0
  %6533 = vmatpush1.bf16.msra.mxu0 %v6514
  %6534 = vmatprep.subr.bf16.mxu0 0
  %6535 = vmatpush1.bf16.msra.mxu0 %v6513
  %6536 = vmatprep.subr.bf16.mxu0 0
  %6537 = vmatpush1.bf16.msra.mxu0 %v6512
  %6538 = vmatprep.subr.bf16.mxu0 0
  %6539 = vmatpush1.bf16.msra.mxu0 %v6511
  %6540 = vmatprep.subr.bf16.mxu0 0
  %6541 = vmatpush1.bf16.msra.mxu0 %v6510
  %6542 = vmatprep.subr.bf16.mxu0 0
  %6543 = vmatpush2.bf16.msra.mxu0 0
  %6544 = vmatprep.subr.bf16.mxu0 0
  %6545 = vmatpush2.bf16.msra.mxu0 0
  %6546 = vmatprep.subr.bf16.mxu0 0
  %6547 = vmatpush2.bf16.msra.mxu0 0
  %6548 = vmatprep.subr.bf16.mxu0 0
  %6549 = vmatpush2.bf16.msra.mxu0 0
  %6550 = vmatprep.subr.bf16.mxu0 0
  %6551 = vmatpush2.bf16.msra.mxu0 0
  %6552 = vmatprep.subr.bf16.mxu0 0
  %6553 = vmatpush2.bf16.msra.mxu0 0
  %6554 = vmatprep.subr.bf16.mxu0 0
  %6555 = vmatpush2.bf16.msra.mxu0 0
  %6556 = vmatprep.subr.bf16.mxu0 0
  %6557 = vmatpush2.bf16.msra.mxu0 0
  %6558 = vmatprep.mubr.bf16.mxu0 0
  %6559 = vmatmul.mubr.bf16.gmra.mxu0 %v6429
  %v6560 = vpop.f32.mrf.mxu0
  %v6561 = vadd.f32 0.0, %v6560
  %v6562 = vpop.f32.mrf.mxu0
  %v6563 = vpop.f32.mrf.mxu0
  %v6564 = vadd.f32 0.0, %v6563
  %v6565 = vpop.f32.mrf.mxu0
  %6566 = vmatprep.mubr.bf16.mxu0 0
  %6567 = vmatmul.mubr.bf16.gmra.mxu0 %v6430
  %v6568 = vpop.f32.mrf.mxu0
  %v6569 = vadd.f32 0.0, %v6568
  %v6570 = vpop.f32.mrf.mxu0
  %v6571 = vpop.f32.mrf.mxu0
  %v6572 = vadd.f32 0.0, %v6571
  %v6573 = vpop.f32.mrf.mxu0
  %6574 = vmatprep.mubr.bf16.mxu0 0
  %6575 = vmatmul.mubr.bf16.gmra.mxu0 %v6431
  %v6576 = vpop.f32.mrf.mxu0
  %v6577 = vadd.f32 0.0, %v6576
  %v6578 = vpop.f32.mrf.mxu0
  %v6579 = vpop.f32.mrf.mxu0
  %v6580 = vadd.f32 0.0, %v6579
  %v6581 = vpop.f32.mrf.mxu0
  %6582 = vmatprep.mubr.bf16.mxu0 0
  %6583 = vmatmul.mubr.bf16.gmra.mxu0 %v6432
  %v6584 = vpop.f32.mrf.mxu0
  %v6585 = vadd.f32 0.0, %v6584
  %v6586 = vpop.f32.mrf.mxu0
  %v6587 = vpop.f32.mrf.mxu0
  %v6588 = vadd.f32 0.0, %v6587
  %v6589 = vpop.f32.mrf.mxu0
  %6590 = vmatprep.mubr.bf16.mxu0 0
  %6591 = vmatmul.mubr.bf16.gmra.mxu0 %v6433
  %v6592 = vpop.f32.mrf.mxu0
  %v6593 = vadd.f32 0.0, %v6592
  %v6594 = vpop.f32.mrf.mxu0
  %v6595 = vpop.f32.mrf.mxu0
  %v6596 = vadd.f32 0.0, %v6595
  %v6597 = vpop.f32.mrf.mxu0
  %6598 = vmatprep.mubr.bf16.mxu0 0
  %6599 = vmatmul.mubr.bf16.gmra.mxu0 %v6434
  %v6600 = vpop.f32.mrf.mxu0
  %v6601 = vadd.f32 0.0, %v6600
  %v6602 = vpop.f32.mrf.mxu0
  %v6603 = vpop.f32.mrf.mxu0
  %v6604 = vadd.f32 0.0, %v6603
  %v6605 = vpop.f32.mrf.mxu0
  %6606 = vmatprep.mubr.bf16.mxu0 0
  %6607 = vmatmul.mubr.bf16.gmra.mxu0 %v6435
  %v6608 = vpop.f32.mrf.mxu0
  %v6609 = vadd.f32 0.0, %v6608
  %v6610 = vpop.f32.mrf.mxu0
  %v6611 = vpop.f32.mrf.mxu0
  %v6612 = vadd.f32 0.0, %v6611
  %v6613 = vpop.f32.mrf.mxu0
  %6614 = vmatprep.mubr.bf16.mxu0 0
  %6615 = vmatmul.mubr.bf16.gmra.mxu0 %v6436
  %v6616 = vpop.f32.mrf.mxu0
  %v6617 = vadd.f32 0.0, %v6616
  %v6618 = vpop.f32.mrf.mxu0
  %v6619 = vpop.f32.mrf.mxu0
  %v6620 = vadd.f32 0.0, %v6619
  %v6621 = vpop.f32.mrf.mxu0
  %6622 = vmatprep.mubr.bf16.mxu0 0
  %6623 = vmatmul.mubr.bf16.gmra.mxu0 %v6437
  %v6624 = vpop.f32.mrf.mxu0
  %v6625 = vadd.f32 0.0, %v6624
  %v6626 = vpop.f32.mrf.mxu0
  %v6627 = vpop.f32.mrf.mxu0
  %v6628 = vadd.f32 0.0, %v6627
  %v6629 = vpop.f32.mrf.mxu0
  %6630 = vmatprep.mubr.bf16.mxu0 0
  %6631 = vmatmul.mubr.bf16.gmra.mxu0 %v6438
  %v6632 = vpop.f32.mrf.mxu0
  %v6633 = vadd.f32 0.0, %v6632
  %v6634 = vpop.f32.mrf.mxu0
  %v6635 = vpop.f32.mrf.mxu0
  %v6636 = vadd.f32 0.0, %v6635
  %v6637 = vpop.f32.mrf.mxu0
  %6638 = vmatprep.mubr.bf16.mxu0 0
  %6639 = vmatmul.mubr.bf16.gmra.mxu0 %v6439
  %v6640 = vpop.f32.mrf.mxu0
  %v6641 = vadd.f32 0.0, %v6640
  %v6642 = vpop.f32.mrf.mxu0
  %v6643 = vpop.f32.mrf.mxu0
  %v6644 = vadd.f32 0.0, %v6643
  %v6645 = vpop.f32.mrf.mxu0
  %6646 = vmatprep.mubr.bf16.mxu0 0
  %6647 = vmatmul.mubr.bf16.gmra.mxu0 %v6440
  %v6648 = vpop.f32.mrf.mxu0
  %v6649 = vadd.f32 0.0, %v6648
  %v6650 = vpop.f32.mrf.mxu0
  %v6651 = vpop.f32.mrf.mxu0
  %v6652 = vadd.f32 0.0, %v6651
  %v6653 = vpop.f32.mrf.mxu0
  %6654 = vmatprep.mubr.bf16.mxu0 0
  %6655 = vmatmul.mubr.bf16.gmra.mxu0 %v6441
  %v6656 = vpop.f32.mrf.mxu0
  %v6657 = vadd.f32 0.0, %v6656
  %v6658 = vpop.f32.mrf.mxu0
  %v6659 = vpop.f32.mrf.mxu0
  %v6660 = vadd.f32 0.0, %v6659
  %v6661 = vpop.f32.mrf.mxu0
  %6662 = vmatprep.mubr.bf16.mxu0 0
  %6663 = vmatmul.mubr.bf16.gmra.mxu0 %v6442
  %v6664 = vpop.f32.mrf.mxu0
  %v6665 = vadd.f32 0.0, %v6664
  %v6666 = vpop.f32.mrf.mxu0
  %v6667 = vpop.f32.mrf.mxu0
  %v6668 = vadd.f32 0.0, %v6667
  %v6669 = vpop.f32.mrf.mxu0
  %6670 = vmatprep.mubr.bf16.mxu0 0
  %6671 = vmatmul.mubr.bf16.gmra.mxu0 %v6443
  %v6672 = vpop.f32.mrf.mxu0
  %v6673 = vadd.f32 0.0, %v6672
  %v6674 = vpop.f32.mrf.mxu0
  %v6675 = vpop.f32.mrf.mxu0
  %v6676 = vadd.f32 0.0, %v6675
  %v6677 = vpop.f32.mrf.mxu0
  %6678 = vmatprep.mubr.bf16.mxu0 0
  %6679 = vmatmul.mubr.bf16.gmra.mxu0 %v6444
  %v6680 = vpop.f32.mrf.mxu0
  %v6681 = vadd.f32 0.0, %v6680
  %v6682 = vpop.f32.mrf.mxu0
  %v6683 = vpop.f32.mrf.mxu0
  %v6684 = vadd.f32 0.0, %v6683
  %v6685 = vpop.f32.mrf.mxu0
  %6686 = vmatprep.mubr.bf16.mxu0 0
  %6687 = vmatmul.mubr.bf16.gmra.mxu0 %v6445
  %v6688 = vpop.f32.mrf.mxu0
  %v6689 = vadd.f32 0.0, %v6688
  %v6690 = vpop.f32.mrf.mxu0
  %v6691 = vpop.f32.mrf.mxu0
  %v6692 = vadd.f32 0.0, %v6691
  %v6693 = vpop.f32.mrf.mxu0
  %6694 = vmatprep.mubr.bf16.mxu0 0
  %6695 = vmatmul.mubr.bf16.gmra.mxu0 %v6446
  %v6696 = vpop.f32.mrf.mxu0
  %v6697 = vadd.f32 0.0, %v6696
  %v6698 = vpop.f32.mrf.mxu0
  %v6699 = vpop.f32.mrf.mxu0
  %v6700 = vadd.f32 0.0, %v6699
  %v6701 = vpop.f32.mrf.mxu0
  %6702 = vmatprep.mubr.bf16.mxu0 0
  %6703 = vmatmul.mubr.bf16.gmra.mxu0 %v6447
  %v6704 = vpop.f32.mrf.mxu0
  %v6705 = vadd.f32 0.0, %v6704
  %v6706 = vpop.f32.mrf.mxu0
  %v6707 = vpop.f32.mrf.mxu0
  %v6708 = vadd.f32 0.0, %v6707
  %v6709 = vpop.f32.mrf.mxu0
  %6710 = vmatprep.mubr.bf16.mxu0 0
  %6711 = vmatmul.mubr.bf16.gmra.mxu0 %v6448
  %v6712 = vpop.f32.mrf.mxu0
  %v6713 = vadd.f32 0.0, %v6712
  %v6714 = vpop.f32.mrf.mxu0
  %v6715 = vpop.f32.mrf.mxu0
  %v6716 = vadd.f32 0.0, %v6715
  %v6717 = vpop.f32.mrf.mxu0
  %6718 = vmatprep.mubr.bf16.mxu0 0
  %6719 = vmatmul.mubr.bf16.gmra.mxu0 %v6449
  %v6720 = vpop.f32.mrf.mxu0
  %v6721 = vadd.f32 0.0, %v6720
  %v6722 = vpop.f32.mrf.mxu0
  %v6723 = vpop.f32.mrf.mxu0
  %v6724 = vadd.f32 0.0, %v6723
  %v6725 = vpop.f32.mrf.mxu0
  %6726 = vmatprep.mubr.bf16.mxu0 0
  %6727 = vmatmul.mubr.bf16.gmra.mxu0 %v6450
  %v6728 = vpop.f32.mrf.mxu0
  %v6729 = vadd.f32 0.0, %v6728
  %v6730 = vpop.f32.mrf.mxu0
  %v6731 = vpop.f32.mrf.mxu0
  %v6732 = vadd.f32 0.0, %v6731
  %v6733 = vpop.f32.mrf.mxu0
  %6734 = vmatprep.mubr.bf16.mxu0 0
  %6735 = vmatmul.mubr.bf16.gmra.mxu0 %v6451
  %v6736 = vpop.f32.mrf.mxu0
  %v6737 = vadd.f32 0.0, %v6736
  %v6738 = vpop.f32.mrf.mxu0
  %v6739 = vpop.f32.mrf.mxu0
  %v6740 = vadd.f32 0.0, %v6739
  %v6741 = vpop.f32.mrf.mxu0
  %6742 = vmatprep.mubr.bf16.mxu0 0
  %6743 = vmatmul.mubr.bf16.gmra.mxu0 %v6452
  %v6744 = vpop.f32.mrf.mxu0
  %v6745 = vadd.f32 0.0, %v6744
  %v6746 = vpop.f32.mrf.mxu0
  %v6747 = vpop.f32.mrf.mxu0
  %v6748 = vadd.f32 0.0, %v6747
  %v6749 = vpop.f32.mrf.mxu0
  %6750 = vmatprep.mubr.bf16.mxu0 0
  %6751 = vmatmul.mubr.bf16.gmra.mxu0 %v6453
  %v6752 = vpop.f32.mrf.mxu0
  %v6753 = vadd.f32 0.0, %v6752
  %v6754 = vpop.f32.mrf.mxu0
  %v6755 = vpop.f32.mrf.mxu0
  %v6756 = vadd.f32 0.0, %v6755
  %v6757 = vpop.f32.mrf.mxu0
  %6758 = vmatprep.mubr.bf16.mxu0 0
  %6759 = vmatmul.mubr.bf16.gmra.mxu0 %v6454
  %v6760 = vpop.f32.mrf.mxu0
  %v6761 = vadd.f32 0.0, %v6760
  %v6762 = vpop.f32.mrf.mxu0
  %v6763 = vpop.f32.mrf.mxu0
  %v6764 = vadd.f32 0.0, %v6763
  %v6765 = vpop.f32.mrf.mxu0
  %6766 = vmatprep.mubr.bf16.mxu0 0
  %6767 = vmatmul.mubr.bf16.gmra.mxu0 %v6455
  %v6768 = vpop.f32.mrf.mxu0
  %v6769 = vadd.f32 0.0, %v6768
  %v6770 = vpop.f32.mrf.mxu0
  %v6771 = vpop.f32.mrf.mxu0
  %v6772 = vadd.f32 0.0, %v6771
  %v6773 = vpop.f32.mrf.mxu0
  %6774 = vmatprep.mubr.bf16.mxu0 0
  %6775 = vmatmul.mubr.bf16.gmra.mxu0 %v6456
  %v6776 = vpop.f32.mrf.mxu0
  %v6777 = vadd.f32 0.0, %v6776
  %v6778 = vpop.f32.mrf.mxu0
  %v6779 = vpop.f32.mrf.mxu0
  %v6780 = vadd.f32 0.0, %v6779
  %v6781 = vpop.f32.mrf.mxu0
  %6782 = vmatprep.mubr.bf16.mxu0 0
  %6783 = vmatmul.mubr.bf16.gmra.mxu0 %v6457
  %v6784 = vpop.f32.mrf.mxu0
  %v6785 = vadd.f32 0.0, %v6784
  %v6786 = vpop.f32.mrf.mxu0
  %v6787 = vpop.f32.mrf.mxu0
  %v6788 = vadd.f32 0.0, %v6787
  %v6789 = vpop.f32.mrf.mxu0
  %6790 = vmatprep.mubr.bf16.mxu0 0
  %6791 = vmatmul.mubr.bf16.gmra.mxu0 %v6458
  %v6792 = vpop.f32.mrf.mxu0
  %v6793 = vadd.f32 0.0, %v6792
  %v6794 = vpop.f32.mrf.mxu0
  %v6795 = vpop.f32.mrf.mxu0
  %v6796 = vadd.f32 0.0, %v6795
  %v6797 = vpop.f32.mrf.mxu0
  %6798 = vmatprep.mubr.bf16.mxu0 0
  %6799 = vmatmul.mubr.bf16.gmra.mxu0 %v6459
  %v6800 = vpop.f32.mrf.mxu0
  %v6801 = vadd.f32 0.0, %v6800
  %v6802 = vpop.f32.mrf.mxu0
  %v6803 = vpop.f32.mrf.mxu0
  %v6804 = vadd.f32 0.0, %v6803
  %v6805 = vpop.f32.mrf.mxu0
  %6806 = vmatprep.mubr.bf16.mxu0 0
  %6807 = vmatmul.mubr.bf16.gmra.mxu0 %v6460
  %v6808 = vpop.f32.mrf.mxu0
  %v6809 = vadd.f32 0.0, %v6808
  %v6810 = vpop.f32.mrf.mxu0
  %v6811 = vpop.f32.mrf.mxu0
  %v6812 = vadd.f32 0.0, %v6811
  %v6813 = vpop.f32.mrf.mxu0
  %6814 = vdwg.mxu0
  %v6815 = vadd.f32 %v6365, %v6561
  %v6816 = vadd.f32 %v6366, %v6564
  %v6817 = vadd.f32 %v6367, %v6569
  %v6818 = vadd.f32 %v6368, %v6572
  %v6819 = vadd.f32 %v6369, %v6577
  %v6820 = vadd.f32 %v6370, %v6580
  %v6821 = vadd.f32 %v6371, %v6585
  %v6822 = vadd.f32 %v6372, %v6588
  %v6823 = vadd.f32 %v6373, %v6593
  %v6824 = vadd.f32 %v6374, %v6596
  %v6825 = vadd.f32 %v6375, %v6601
  %v6826 = vadd.f32 %v6376, %v6604
  %v6827 = vadd.f32 %v6377, %v6609
  %v6828 = vadd.f32 %v6378, %v6612
  %v6829 = vadd.f32 %v6379, %v6617
  %v6830 = vadd.f32 %v6380, %v6620
  %v6831 = vadd.f32 %v6381, %v6625
  %v6832 = vadd.f32 %v6382, %v6628
  %v6833 = vadd.f32 %v6383, %v6633
  %v6834 = vadd.f32 %v6384, %v6636
  %v6835 = vadd.f32 %v6385, %v6641
  %v6836 = vadd.f32 %v6386, %v6644
  %v6837 = vadd.f32 %v6387, %v6649
  %v6838 = vadd.f32 %v6388, %v6652
  %v6839 = vadd.f32 %v6389, %v6657
  %v6840 = vadd.f32 %v6390, %v6660
  %v6841 = vadd.f32 %v6391, %v6665
  %v6842 = vadd.f32 %v6392, %v6668
  %v6843 = vadd.f32 %v6393, %v6673
  %v6844 = vadd.f32 %v6394, %v6676
  %v6845 = vadd.f32 %v6395, %v6681
  %v6846 = vadd.f32 %v6396, %v6684
  %v6847 = vadd.f32 %v6397, %v6689
  %v6848 = vadd.f32 %v6398, %v6692
  %v6849 = vadd.f32 %v6399, %v6697
  %v6850 = vadd.f32 %v6400, %v6700
  %v6851 = vadd.f32 %v6401, %v6705
  %v6852 = vadd.f32 %v6402, %v6708
  %v6853 = vadd.f32 %v6403, %v6713
  %v6854 = vadd.f32 %v6404, %v6716
  %v6855 = vadd.f32 %v6405, %v6721
  %v6856 = vadd.f32 %v6406, %v6724
  %v6857 = vadd.f32 %v6407, %v6729
  %v6858 = vadd.f32 %v6408, %v6732
  %v6859 = vadd.f32 %v6409, %v6737
  %v6860 = vadd.f32 %v6410, %v6740
  %v6861 = vadd.f32 %v6411, %v6745
  %v6862 = vadd.f32 %v6412, %v6748
  %v6863 = vadd.f32 %v6413, %v6753
  %v6864 = vadd.f32 %v6414, %v6756
  %v6865 = vadd.f32 %v6415, %v6761
  %v6866 = vadd.f32 %v6416, %v6764
  %v6867 = vadd.f32 %v6417, %v6769
  %v6868 = vadd.f32 %v6418, %v6772
  %v6869 = vadd.f32 %v6419, %v6777
  %v6870 = vadd.f32 %v6420, %v6780
  %v6871 = vadd.f32 %v6421, %v6785
  %v6872 = vadd.f32 %v6422, %v6788
  %v6873 = vadd.f32 %v6423, %v6793
  %v6874 = vadd.f32 %v6424, %v6796
  %v6875 = vadd.f32 %v6425, %v6801
  %v6876 = vadd.f32 %v6426, %v6804
  %v6877 = vadd.f32 %v6427, %v6809
  %v6878 = vadd.f32 %v6428, %v6812
  %v6879 = vrot.slane %v5723, 1
  %v6880 = vrot.slane %v5724, 1
  %v6881 = vrot.slane %v5725, 1
  %v6882 = vrot.slane %v5726, 1
  %v6883 = vrot.slane %v5727, 1
  %v6884 = vrot.slane %v5728, 1
  %v6885 = vrot.slane %v5729, 1
  %v6886 = vrot.slane %v5730, 1
  %v6887 = vrot.slane %v5731, 1
  %v6888 = vrot.slane %v5732, 1
  %v6889 = vrot.slane %v5733, 1
  %v6890 = vrot.slane %v5734, 1
  %v6891 = vrot.slane %v5735, 1
  %v6892 = vrot.slane %v5736, 1
  %v6893 = vrot.slane %v5737, 1
  %v6894 = vrot.slane %v5738, 1
  %v6895 = vrot.slane %v5739, 1
  %v6896 = vrot.slane %v5740, 1
  %v6897 = vrot.slane %v5741, 1
  %v6898 = vrot.slane %v5742, 1
  %v6899 = vrot.slane %v5743, 1
  %v6900 = vrot.slane %v5744, 1
  %v6901 = vrot.slane %v5745, 1
  %v6902 = vrot.slane %v5746, 1
  %v6903 = vrot.slane %v5747, 1
  %v6904 = vrot.slane %v5748, 1
  %v6905 = vrot.slane %v5749, 1
  %v6906 = vrot.slane %v5750, 1
  %v6907 = vrot.slane %v5751, 1
  %v6908 = vrot.slane %v5752, 1
  %v6909 = vrot.slane %v5753, 1
  %v6910 = vrot.slane %v5754, 1
  %v6911 = vrot.slane %v5755, 1
  %v6912 = vrot.slane %v5756, 1
  %v6913 = vrot.slane %v5757, 1
  %v6914 = vrot.slane %v5758, 1
  %v6915 = vrot.slane %v5759, 1
  %v6916 = vrot.slane %v5760, 1
  %v6917 = vrot.slane %v5761, 1
  %v6918 = vrot.slane %v5762, 1
  %v6919 = vrot.slane %v5763, 1
  %v6920 = vrot.slane %v5764, 1
  %v6921 = vrot.slane %v5765, 1
  %v6922 = vrot.slane %v5766, 1
  %v6923 = vrot.slane %v5767, 1
  %v6924 = vrot.slane %v5768, 1
  %v6925 = vrot.slane %v5769, 1
  %v6926 = vrot.slane %v5770, 1
  %v6927 = vrot.slane %v5771, 1
  %v6928 = vrot.slane %v5772, 1
  %v6929 = vrot.slane %v5773, 1
  %v6930 = vrot.slane %v5774, 1
  %v6931 = vrot.slane %v5775, 1
  %v6932 = vrot.slane %v5776, 1
  %v6933 = vrot.slane %v5777, 1
  %v6934 = vrot.slane %v5778, 1
  %v6935 = vrot.slane %v5779, 1
  %v6936 = vrot.slane %v5780, 1
  %v6937 = vrot.slane %v5781, 1
  %v6938 = vrot.slane %v5782, 1
  %v6939 = vrot.slane %v5783, 1
  %v6940 = vrot.slane %v5784, 1
  %v6941 = vrot.slane %v5785, 1
  %v6942 = vrot.slane %v5786, 1
  %v6943 = vsel %vm3345, %v6941, %v6942
  %v6944 = vsel %vm3345, %v6940, %v6941
  %v6945 = vsel %vm3345, %v6939, %v6940
  %v6946 = vsel %vm3345, %v6938, %v6939
  %v6947 = vsel %vm3345, %v6937, %v6938
  %v6948 = vsel %vm3345, %v6936, %v6937
  %v6949 = vsel %vm3345, %v6935, %v6936
  %v6950 = vsel %vm3345, %v6934, %v6935
  %v6951 = vsel %vm3345, %v6933, %v6934
  %v6952 = vsel %vm3345, %v6932, %v6933
  %v6953 = vsel %vm3345, %v6931, %v6932
  %v6954 = vsel %vm3345, %v6930, %v6931
  %v6955 = vsel %vm3345, %v6929, %v6930
  %v6956 = vsel %vm3345, %v6928, %v6929
  %v6957 = vsel %vm3345, %v6927, %v6928
  %v6958 = vsel %vm3345, %v6926, %v6927
  %v6959 = vsel %vm3345, %v6925, %v6926
  %v6960 = vsel %vm3345, %v6924, %v6925
  %v6961 = vsel %vm3345, %v6923, %v6924
  %v6962 = vsel %vm3345, %v6922, %v6923
  %v6963 = vsel %vm3345, %v6921, %v6922
  %v6964 = vsel %vm3345, %v6920, %v6921
  %v6965 = vsel %vm3345, %v6919, %v6920
  %v6966 = vsel %vm3345, %v6918, %v6919
  %v6967 = vsel %vm3345, %v6917, %v6918
  %v6968 = vsel %vm3345, %v6916, %v6917
  %v6969 = vsel %vm3345, %v6915, %v6916
  %v6970 = vsel %vm3345, %v6914, %v6915
  %v6971 = vsel %vm3345, %v6913, %v6914
  %v6972 = vsel %vm3345, %v6912, %v6913
  %v6973 = vsel %vm3345, %v6911, %v6912
  %v6974 = vsel %vm3345, %v6910, %v6911
  %v6975 = vsel %vm3345, %v6909, %v6910
  %v6976 = vsel %vm3345, %v6908, %v6909
  %v6977 = vsel %vm3345, %v6907, %v6908
  %v6978 = vsel %vm3345, %v6906, %v6907
  %v6979 = vsel %vm3345, %v6905, %v6906
  %v6980 = vsel %vm3345, %v6904, %v6905
  %v6981 = vsel %vm3345, %v6903, %v6904
  %v6982 = vsel %vm3345, %v6902, %v6903
  %v6983 = vsel %vm3345, %v6901, %v6902
  %v6984 = vsel %vm3345, %v6900, %v6901
  %v6985 = vsel %vm3345, %v6899, %v6900
  %v6986 = vsel %vm3345, %v6898, %v6899
  %v6987 = vsel %vm3345, %v6897, %v6898
  %v6988 = vsel %vm3345, %v6896, %v6897
  %v6989 = vsel %vm3345, %v6895, %v6896
  %v6990 = vsel %vm3345, %v6894, %v6895
  %v6991 = vsel %vm3345, %v6893, %v6894
  %v6992 = vsel %vm3345, %v6892, %v6893
  %v6993 = vsel %vm3345, %v6891, %v6892
  %v6994 = vsel %vm3345, %v6890, %v6891
  %v6995 = vsel %vm3345, %v6889, %v6890
  %v6996 = vsel %vm3345, %v6888, %v6889
  %v6997 = vsel %vm3345, %v6887, %v6888
  %v6998 = vsel %vm3345, %v6886, %v6887
  %v6999 = vsel %vm3345, %v6885, %v6886
  %v7000 = vsel %vm3345, %v6884, %v6885
  %v7001 = vsel %vm3345, %v6883, %v6884
  %v7002 = vsel %vm3345, %v6882, %v6883
  %v7003 = vsel %vm3345, %v6881, %v6882
  %v7004 = vsel %vm3345, %v6880, %v6881
  %v7005 = vsel %vm3345, %v6879, %v6880
  %v7006 = vsel %vm3345, %v6942, %v6879
  %v7007 = vmul.f32 %v7005, %v2189
  %v7008 = vmul.f32 %v7004, %v2190
  %v7009 = vmul.f32 %v7003, %v2191
  %v7010 = vmul.f32 %v7002, %v2192
  %v7011 = vmul.f32 %v7001, %v2193
  %v7012 = vmul.f32 %v7000, %v2194
  %v7013 = vmul.f32 %v6999, %v2195
  %v7014 = vmul.f32 %v6998, %v2196
  %v7015 = vmul.f32 %v6997, %v2197
  %v7016 = vmul.f32 %v6996, %v2198
  %v7017 = vmul.f32 %v6995, %v2199
  %v7018 = vmul.f32 %v6994, %v2200
  %v7019 = vmul.f32 %v6993, %v2201
  %v7020 = vmul.f32 %v6992, %v2202
  %v7021 = vmul.f32 %v6991, %v2203
  %v7022 = vmul.f32 %v6990, %v2204
  %v7023 = vmul.f32 %v6989, %v2205
  %v7024 = vmul.f32 %v6988, %v2206
  %v7025 = vmul.f32 %v6987, %v2207
  %v7026 = vmul.f32 %v6986, %v2208
  %v7027 = vmul.f32 %v6985, %v2209
  %v7028 = vmul.f32 %v6984, %v2210
  %v7029 = vmul.f32 %v6983, %v2211
  %v7030 = vmul.f32 %v6982, %v2212
  %v7031 = vmul.f32 %v6981, %v2213
  %v7032 = vmul.f32 %v6980, %v2214
  %v7033 = vmul.f32 %v6979, %v2215
  %v7034 = vmul.f32 %v6978, %v2216
  %v7035 = vmul.f32 %v6977, %v2217
  %v7036 = vmul.f32 %v6976, %v2218
  %v7037 = vmul.f32 %v6975, %v2219
  %v7038 = vmul.f32 %v6974, %v2220
  %v7039 = vmul.f32 %v6973, %v2221
  %v7040 = vmul.f32 %v6972, %v2222
  %v7041 = vmul.f32 %v6971, %v2223
  %v7042 = vmul.f32 %v6970, %v2224
  %v7043 = vmul.f32 %v6969, %v2225
  %v7044 = vmul.f32 %v6968, %v2226
  %v7045 = vmul.f32 %v6967, %v2227
  %v7046 = vmul.f32 %v6966, %v2228
  %v7047 = vmul.f32 %v6965, %v2229
  %v7048 = vmul.f32 %v6964, %v2230
  %v7049 = vmul.f32 %v6963, %v2231
  %v7050 = vmul.f32 %v6962, %v2232
  %v7051 = vmul.f32 %v6961, %v2233
  %v7052 = vmul.f32 %v6960, %v2234
  %v7053 = vmul.f32 %v6959, %v2235
  %v7054 = vmul.f32 %v6958, %v2236
  %v7055 = vmul.f32 %v6957, %v2237
  %v7056 = vmul.f32 %v6956, %v2238
  %v7057 = vmul.f32 %v6955, %v2239
  %v7058 = vmul.f32 %v6954, %v2240
  %v7059 = vmul.f32 %v6953, %v2241
  %v7060 = vmul.f32 %v6952, %v2242
  %v7061 = vmul.f32 %v6951, %v2243
  %v7062 = vmul.f32 %v6950, %v2244
  %v7063 = vmul.f32 %v6949, %v2245
  %v7064 = vmul.f32 %v6948, %v2246
  %v7065 = vmul.f32 %v6947, %v2247
  %v7066 = vmul.f32 %v6946, %v2248
  %v7067 = vmul.f32 %v6945, %v2249
  %v7068 = vmul.f32 %v6944, %v2250
  %v7069 = vmul.f32 %v6943, %v2251
  %v7070 = vmul.f32 %v7006, %v2252
  %v7071 = vpack.c.bf16 %v7008, %v7007
  %v7072 = vpack.c.bf16 %v7010, %v7009
  %v7073 = vpack.c.bf16 %v7012, %v7011
  %v7074 = vpack.c.bf16 %v7014, %v7013
  %v7075 = vpack.c.bf16 %v7016, %v7015
  %v7076 = vpack.c.bf16 %v7018, %v7017
  %v7077 = vpack.c.bf16 %v7020, %v7019
  %v7078 = vpack.c.bf16 %v7022, %v7021
  %v7079 = vpack.c.bf16 %v7024, %v7023
  %v7080 = vpack.c.bf16 %v7026, %v7025
  %v7081 = vpack.c.bf16 %v7028, %v7027
  %v7082 = vpack.c.bf16 %v7030, %v7029
  %v7083 = vpack.c.bf16 %v7032, %v7031
  %v7084 = vpack.c.bf16 %v7034, %v7033
  %v7085 = vpack.c.bf16 %v7036, %v7035
  %v7086 = vpack.c.bf16 %v7038, %v7037
  %v7087 = vpack.c.bf16 %v7040, %v7039
  %v7088 = vpack.c.bf16 %v7042, %v7041
  %v7089 = vpack.c.bf16 %v7044, %v7043
  %v7090 = vpack.c.bf16 %v7046, %v7045
  %v7091 = vpack.c.bf16 %v7048, %v7047
  %v7092 = vpack.c.bf16 %v7050, %v7049
  %v7093 = vpack.c.bf16 %v7052, %v7051
  %v7094 = vpack.c.bf16 %v7054, %v7053
  %v7095 = vpack.c.bf16 %v7056, %v7055
  %v7096 = vpack.c.bf16 %v7058, %v7057
  %v7097 = vpack.c.bf16 %v7060, %v7059
  %v7098 = vpack.c.bf16 %v7062, %v7061
  %v7099 = vpack.c.bf16 %v7064, %v7063
  %v7100 = vpack.c.bf16 %v7066, %v7065
  %v7101 = vpack.c.bf16 %v7068, %v7067
  %v7102 = vpack.c.bf16 %v7070, %v7069
  %s7103 = scalar_lea.vmem %s4, 512
  %v7104 = vld [vmem:[%s7103] sm:$0xf]
  %v7105 = vld [vmem:[%s7103 + $0x4] sm:$0xf]
  %v7106 = vld [vmem:[%s7103 + $0x8] sm:$0xf]
  %v7107 = vld [vmem:[%s7103 + $0xc] sm:$0xf]
  %v7108 = vld [vmem:[%s7103 + $0x10] sm:$0xf]
  %v7109 = vld [vmem:[%s7103 + $0x14] sm:$0xf]
  %v7110 = vld [vmem:[%s7103 + $0x18] sm:$0xf]
  %v7111 = vld [vmem:[%s7103 + $0x1c] sm:$0xf]
  %v7112 = vld [vmem:[%s7103 + $0x20] sm:$0xf]
  %v7113 = vld [vmem:[%s7103 + $0x24] sm:$0xf]
  %v7114 = vld [vmem:[%s7103 + $0x28] sm:$0xf]
  %v7115 = vld [vmem:[%s7103 + $0x2c] sm:$0xf]
  %v7116 = vld [vmem:[%s7103 + $0x30] sm:$0xf]
  %v7117 = vld [vmem:[%s7103 + $0x34] sm:$0xf]
  %v7118 = vld [vmem:[%s7103 + $0x38] sm:$0xf]
  %v7119 = vld [vmem:[%s7103 + $0x3c] sm:$0xf]
  %v7136 = vunpack.c.l.b16 %v7104
  %v7137 = vunpack.c.l.b16 %v7105
  %v7138 = vunpack.c.l.b16 %v7106
  %v7139 = vunpack.c.l.b16 %v7107
  %v7140 = vunpack.c.l.b16 %v7108
  %v7141 = vunpack.c.l.b16 %v7109
  %v7142 = vunpack.c.l.b16 %v7110
  %v7143 = vunpack.c.l.b16 %v7111
  %v7144 = vunpack.c.l.b16 %v7112
  %v7145 = vunpack.c.l.b16 %v7113
  %v7146 = vunpack.c.l.b16 %v7114
  %v7147 = vunpack.c.l.b16 %v7115
  %v7148 = vunpack.c.l.b16 %v7116
  %v7149 = vunpack.c.l.b16 %v7117
  %v7150 = vunpack.c.l.b16 %v7118
  %v7151 = vunpack.c.l.b16 %v7119
  %v7152 = vpack.c.b16 %v7137, %v7136
  %v7153 = vpack.c.b16 %v7139, %v7138
  %v7154 = vpack.c.b16 %v7141, %v7140
  %v7155 = vpack.c.b16 %v7143, %v7142
  %v7156 = vpack.c.b16 %v7145, %v7144
  %v7157 = vpack.c.b16 %v7147, %v7146
  %v7158 = vpack.c.b16 %v7149, %v7148
  %v7159 = vpack.c.b16 %v7151, %v7150
  %7168 = vmatprep.subr.bf16.mxu0 0
  %7169 = vmatpush1.bf16.msra.mxu0 %v7159
  %7170 = vmatprep.subr.bf16.mxu0 0
  %7171 = vmatpush1.bf16.msra.mxu0 %v7158
  %7172 = vmatprep.subr.bf16.mxu0 0
  %7173 = vmatpush1.bf16.msra.mxu0 %v7157
  %7174 = vmatprep.subr.bf16.mxu0 0
  %7175 = vmatpush1.bf16.msra.mxu0 %v7156
  %7176 = vmatprep.subr.bf16.mxu0 0
  %7177 = vmatpush1.bf16.msra.mxu0 %v7155
  %7178 = vmatprep.subr.bf16.mxu0 0
  %7179 = vmatpush1.bf16.msra.mxu0 %v7154
  %7180 = vmatprep.subr.bf16.mxu0 0
  %7181 = vmatpush1.bf16.msra.mxu0 %v7153
  %7182 = vmatprep.subr.bf16.mxu0 0
  %7183 = vmatpush1.bf16.msra.mxu0 %v7152
  %7184 = vmatprep.subr.bf16.mxu0 0
  %7185 = vmatpush2.bf16.msra.mxu0 0
  %7186 = vmatprep.subr.bf16.mxu0 0
  %7187 = vmatpush2.bf16.msra.mxu0 0
  %7188 = vmatprep.subr.bf16.mxu0 0
  %7189 = vmatpush2.bf16.msra.mxu0 0
  %7190 = vmatprep.subr.bf16.mxu0 0
  %7191 = vmatpush2.bf16.msra.mxu0 0
  %7192 = vmatprep.subr.bf16.mxu0 0
  %7193 = vmatpush2.bf16.msra.mxu0 0
  %7194 = vmatprep.subr.bf16.mxu0 0
  %7195 = vmatpush2.bf16.msra.mxu0 0
  %7196 = vmatprep.subr.bf16.mxu0 0
  %7197 = vmatpush2.bf16.msra.mxu0 0
  %7198 = vmatprep.subr.bf16.mxu0 0
  %7199 = vmatpush2.bf16.msra.mxu0 0
  %7200 = vmatprep.mubr.bf16.mxu0 0
  %7201 = vmatmul.mubr.bf16.gmra.mxu0 %v7071
  %v7202 = vpop.f32.mrf.mxu0
  %v7203 = vadd.f32 0.0, %v7202
  %v7204 = vpop.f32.mrf.mxu0
  %v7205 = vpop.f32.mrf.mxu0
  %v7206 = vadd.f32 0.0, %v7205
  %v7207 = vpop.f32.mrf.mxu0
  %7208 = vmatprep.mubr.bf16.mxu0 0
  %7209 = vmatmul.mubr.bf16.gmra.mxu0 %v7072
  %v7210 = vpop.f32.mrf.mxu0
  %v7211 = vadd.f32 0.0, %v7210
  %v7212 = vpop.f32.mrf.mxu0
  %v7213 = vpop.f32.mrf.mxu0
  %v7214 = vadd.f32 0.0, %v7213
  %v7215 = vpop.f32.mrf.mxu0
  %7216 = vmatprep.mubr.bf16.mxu0 0
  %7217 = vmatmul.mubr.bf16.gmra.mxu0 %v7073
  %v7218 = vpop.f32.mrf.mxu0
  %v7219 = vadd.f32 0.0, %v7218
  %v7220 = vpop.f32.mrf.mxu0
  %v7221 = vpop.f32.mrf.mxu0
  %v7222 = vadd.f32 0.0, %v7221
  %v7223 = vpop.f32.mrf.mxu0
  %7224 = vmatprep.mubr.bf16.mxu0 0
  %7225 = vmatmul.mubr.bf16.gmra.mxu0 %v7074
  %v7226 = vpop.f32.mrf.mxu0
  %v7227 = vadd.f32 0.0, %v7226
  %v7228 = vpop.f32.mrf.mxu0
  %v7229 = vpop.f32.mrf.mxu0
  %v7230 = vadd.f32 0.0, %v7229
  %v7231 = vpop.f32.mrf.mxu0
  %7232 = vmatprep.mubr.bf16.mxu0 0
  %7233 = vmatmul.mubr.bf16.gmra.mxu0 %v7075
  %v7234 = vpop.f32.mrf.mxu0
  %v7235 = vadd.f32 0.0, %v7234
  %v7236 = vpop.f32.mrf.mxu0
  %v7237 = vpop.f32.mrf.mxu0
  %v7238 = vadd.f32 0.0, %v7237
  %v7239 = vpop.f32.mrf.mxu0
  %7240 = vmatprep.mubr.bf16.mxu0 0
  %7241 = vmatmul.mubr.bf16.gmra.mxu0 %v7076
  %v7242 = vpop.f32.mrf.mxu0
  %v7243 = vadd.f32 0.0, %v7242
  %v7244 = vpop.f32.mrf.mxu0
  %v7245 = vpop.f32.mrf.mxu0
  %v7246 = vadd.f32 0.0, %v7245
  %v7247 = vpop.f32.mrf.mxu0
  %7248 = vmatprep.mubr.bf16.mxu0 0
  %7249 = vmatmul.mubr.bf16.gmra.mxu0 %v7077
  %v7250 = vpop.f32.mrf.mxu0
  %v7251 = vadd.f32 0.0, %v7250
  %v7252 = vpop.f32.mrf.mxu0
  %v7253 = vpop.f32.mrf.mxu0
  %v7254 = vadd.f32 0.0, %v7253
  %v7255 = vpop.f32.mrf.mxu0
  %7256 = vmatprep.mubr.bf16.mxu0 0
  %7257 = vmatmul.mubr.bf16.gmra.mxu0 %v7078
  %v7258 = vpop.f32.mrf.mxu0
  %v7259 = vadd.f32 0.0, %v7258
  %v7260 = vpop.f32.mrf.mxu0
  %v7261 = vpop.f32.mrf.mxu0
  %v7262 = vadd.f32 0.0, %v7261
  %v7263 = vpop.f32.mrf.mxu0
  %7264 = vmatprep.mubr.bf16.mxu0 0
  %7265 = vmatmul.mubr.bf16.gmra.mxu0 %v7079
  %v7266 = vpop.f32.mrf.mxu0
  %v7267 = vadd.f32 0.0, %v7266
  %v7268 = vpop.f32.mrf.mxu0
  %v7269 = vpop.f32.mrf.mxu0
  %v7270 = vadd.f32 0.0, %v7269
  %v7271 = vpop.f32.mrf.mxu0
  %7272 = vmatprep.mubr.bf16.mxu0 0
  %7273 = vmatmul.mubr.bf16.gmra.mxu0 %v7080
  %v7274 = vpop.f32.mrf.mxu0
  %v7275 = vadd.f32 0.0, %v7274
  %v7276 = vpop.f32.mrf.mxu0
  %v7277 = vpop.f32.mrf.mxu0
  %v7278 = vadd.f32 0.0, %v7277
  %v7279 = vpop.f32.mrf.mxu0
  %7280 = vmatprep.mubr.bf16.mxu0 0
  %7281 = vmatmul.mubr.bf16.gmra.mxu0 %v7081
  %v7282 = vpop.f32.mrf.mxu0
  %v7283 = vadd.f32 0.0, %v7282
  %v7284 = vpop.f32.mrf.mxu0
  %v7285 = vpop.f32.mrf.mxu0
  %v7286 = vadd.f32 0.0, %v7285
  %v7287 = vpop.f32.mrf.mxu0
  %7288 = vmatprep.mubr.bf16.mxu0 0
  %7289 = vmatmul.mubr.bf16.gmra.mxu0 %v7082
  %v7290 = vpop.f32.mrf.mxu0
  %v7291 = vadd.f32 0.0, %v7290
  %v7292 = vpop.f32.mrf.mxu0
  %v7293 = vpop.f32.mrf.mxu0
  %v7294 = vadd.f32 0.0, %v7293
  %v7295 = vpop.f32.mrf.mxu0
  %7296 = vmatprep.mubr.bf16.mxu0 0
  %7297 = vmatmul.mubr.bf16.gmra.mxu0 %v7083
  %v7298 = vpop.f32.mrf.mxu0
  %v7299 = vadd.f32 0.0, %v7298
  %v7300 = vpop.f32.mrf.mxu0
  %v7301 = vpop.f32.mrf.mxu0
  %v7302 = vadd.f32 0.0, %v7301
  %v7303 = vpop.f32.mrf.mxu0
  %7304 = vmatprep.mubr.bf16.mxu0 0
  %7305 = vmatmul.mubr.bf16.gmra.mxu0 %v7084
  %v7306 = vpop.f32.mrf.mxu0
  %v7307 = vadd.f32 0.0, %v7306
  %v7308 = vpop.f32.mrf.mxu0
  %v7309 = vpop.f32.mrf.mxu0
  %v7310 = vadd.f32 0.0, %v7309
  %v7311 = vpop.f32.mrf.mxu0
  %7312 = vmatprep.mubr.bf16.mxu0 0
  %7313 = vmatmul.mubr.bf16.gmra.mxu0 %v7085
  %v7314 = vpop.f32.mrf.mxu0
  %v7315 = vadd.f32 0.0, %v7314
  %v7316 = vpop.f32.mrf.mxu0
  %v7317 = vpop.f32.mrf.mxu0
  %v7318 = vadd.f32 0.0, %v7317
  %v7319 = vpop.f32.mrf.mxu0
  %7320 = vmatprep.mubr.bf16.mxu0 0
  %7321 = vmatmul.mubr.bf16.gmra.mxu0 %v7086
  %v7322 = vpop.f32.mrf.mxu0
  %v7323 = vadd.f32 0.0, %v7322
  %v7324 = vpop.f32.mrf.mxu0
  %v7325 = vpop.f32.mrf.mxu0
  %v7326 = vadd.f32 0.0, %v7325
  %v7327 = vpop.f32.mrf.mxu0
  %7328 = vmatprep.mubr.bf16.mxu0 0
  %7329 = vmatmul.mubr.bf16.gmra.mxu0 %v7087
  %v7330 = vpop.f32.mrf.mxu0
  %v7331 = vadd.f32 0.0, %v7330
  %v7332 = vpop.f32.mrf.mxu0
  %v7333 = vpop.f32.mrf.mxu0
  %v7334 = vadd.f32 0.0, %v7333
  %v7335 = vpop.f32.mrf.mxu0
  %7336 = vmatprep.mubr.bf16.mxu0 0
  %7337 = vmatmul.mubr.bf16.gmra.mxu0 %v7088
  %v7338 = vpop.f32.mrf.mxu0
  %v7339 = vadd.f32 0.0, %v7338
  %v7340 = vpop.f32.mrf.mxu0
  %v7341 = vpop.f32.mrf.mxu0
  %v7342 = vadd.f32 0.0, %v7341
  %v7343 = vpop.f32.mrf.mxu0
  %7344 = vmatprep.mubr.bf16.mxu0 0
  %7345 = vmatmul.mubr.bf16.gmra.mxu0 %v7089
  %v7346 = vpop.f32.mrf.mxu0
  %v7347 = vadd.f32 0.0, %v7346
  %v7348 = vpop.f32.mrf.mxu0
  %v7349 = vpop.f32.mrf.mxu0
  %v7350 = vadd.f32 0.0, %v7349
  %v7351 = vpop.f32.mrf.mxu0
  %7352 = vmatprep.mubr.bf16.mxu0 0
  %7353 = vmatmul.mubr.bf16.gmra.mxu0 %v7090
  %v7354 = vpop.f32.mrf.mxu0
  %v7355 = vadd.f32 0.0, %v7354
  %v7356 = vpop.f32.mrf.mxu0
  %v7357 = vpop.f32.mrf.mxu0
  %v7358 = vadd.f32 0.0, %v7357
  %v7359 = vpop.f32.mrf.mxu0
  %7360 = vmatprep.mubr.bf16.mxu0 0
  %7361 = vmatmul.mubr.bf16.gmra.mxu0 %v7091
  %v7362 = vpop.f32.mrf.mxu0
  %v7363 = vadd.f32 0.0, %v7362
  %v7364 = vpop.f32.mrf.mxu0
  %v7365 = vpop.f32.mrf.mxu0
  %v7366 = vadd.f32 0.0, %v7365
  %v7367 = vpop.f32.mrf.mxu0
  %7368 = vmatprep.mubr.bf16.mxu0 0
  %7369 = vmatmul.mubr.bf16.gmra.mxu0 %v7092
  %v7370 = vpop.f32.mrf.mxu0
  %v7371 = vadd.f32 0.0, %v7370
  %v7372 = vpop.f32.mrf.mxu0
  %v7373 = vpop.f32.mrf.mxu0
  %v7374 = vadd.f32 0.0, %v7373
  %v7375 = vpop.f32.mrf.mxu0
  %7376 = vmatprep.mubr.bf16.mxu0 0
  %7377 = vmatmul.mubr.bf16.gmra.mxu0 %v7093
  %v7378 = vpop.f32.mrf.mxu0
  %v7379 = vadd.f32 0.0, %v7378
  %v7380 = vpop.f32.mrf.mxu0
  %v7381 = vpop.f32.mrf.mxu0
  %v7382 = vadd.f32 0.0, %v7381
  %v7383 = vpop.f32.mrf.mxu0
  %7384 = vmatprep.mubr.bf16.mxu0 0
  %7385 = vmatmul.mubr.bf16.gmra.mxu0 %v7094
  %v7386 = vpop.f32.mrf.mxu0
  %v7387 = vadd.f32 0.0, %v7386
  %v7388 = vpop.f32.mrf.mxu0
  %v7389 = vpop.f32.mrf.mxu0
  %v7390 = vadd.f32 0.0, %v7389
  %v7391 = vpop.f32.mrf.mxu0
  %7392 = vmatprep.mubr.bf16.mxu0 0
  %7393 = vmatmul.mubr.bf16.gmra.mxu0 %v7095
  %v7394 = vpop.f32.mrf.mxu0
  %v7395 = vadd.f32 0.0, %v7394
  %v7396 = vpop.f32.mrf.mxu0
  %v7397 = vpop.f32.mrf.mxu0
  %v7398 = vadd.f32 0.0, %v7397
  %v7399 = vpop.f32.mrf.mxu0
  %7400 = vmatprep.mubr.bf16.mxu0 0
  %7401 = vmatmul.mubr.bf16.gmra.mxu0 %v7096
  %v7402 = vpop.f32.mrf.mxu0
  %v7403 = vadd.f32 0.0, %v7402
  %v7404 = vpop.f32.mrf.mxu0
  %v7405 = vpop.f32.mrf.mxu0
  %v7406 = vadd.f32 0.0, %v7405
  %v7407 = vpop.f32.mrf.mxu0
  %7408 = vmatprep.mubr.bf16.mxu0 0
  %7409 = vmatmul.mubr.bf16.gmra.mxu0 %v7097
  %v7410 = vpop.f32.mrf.mxu0
  %v7411 = vadd.f32 0.0, %v7410
  %v7412 = vpop.f32.mrf.mxu0
  %v7413 = vpop.f32.mrf.mxu0
  %v7414 = vadd.f32 0.0, %v7413
  %v7415 = vpop.f32.mrf.mxu0
  %7416 = vmatprep.mubr.bf16.mxu0 0
  %7417 = vmatmul.mubr.bf16.gmra.mxu0 %v7098
  %v7418 = vpop.f32.mrf.mxu0
  %v7419 = vadd.f32 0.0, %v7418
  %v7420 = vpop.f32.mrf.mxu0
  %v7421 = vpop.f32.mrf.mxu0
  %v7422 = vadd.f32 0.0, %v7421
  %v7423 = vpop.f32.mrf.mxu0
  %7424 = vmatprep.mubr.bf16.mxu0 0
  %7425 = vmatmul.mubr.bf16.gmra.mxu0 %v7099
  %v7426 = vpop.f32.mrf.mxu0
  %v7427 = vadd.f32 0.0, %v7426
  %v7428 = vpop.f32.mrf.mxu0
  %v7429 = vpop.f32.mrf.mxu0
  %v7430 = vadd.f32 0.0, %v7429
  %v7431 = vpop.f32.mrf.mxu0
  %7432 = vmatprep.mubr.bf16.mxu0 0
  %7433 = vmatmul.mubr.bf16.gmra.mxu0 %v7100
  %v7434 = vpop.f32.mrf.mxu0
  %v7435 = vadd.f32 0.0, %v7434
  %v7436 = vpop.f32.mrf.mxu0
  %v7437 = vpop.f32.mrf.mxu0
  %v7438 = vadd.f32 0.0, %v7437
  %v7439 = vpop.f32.mrf.mxu0
  %7440 = vmatprep.mubr.bf16.mxu0 0
  %7441 = vmatmul.mubr.bf16.gmra.mxu0 %v7101
  %v7442 = vpop.f32.mrf.mxu0
  %v7443 = vadd.f32 0.0, %v7442
  %v7444 = vpop.f32.mrf.mxu0
  %v7445 = vpop.f32.mrf.mxu0
  %v7446 = vadd.f32 0.0, %v7445
  %v7447 = vpop.f32.mrf.mxu0
  %7448 = vmatprep.mubr.bf16.mxu0 0
  %7449 = vmatmul.mubr.bf16.gmra.mxu0 %v7102
  %v7450 = vpop.f32.mrf.mxu0
  %v7451 = vadd.f32 0.0, %v7450
  %v7452 = vpop.f32.mrf.mxu0
  %v7453 = vpop.f32.mrf.mxu0
  %v7454 = vadd.f32 0.0, %v7453
  %v7455 = vpop.f32.mrf.mxu0
  %7456 = vdwg.mxu0
  %v7457 = vadd.f32 %v6815, %v7203
  %v7458 = vadd.f32 %v6816, %v7206
  %v7459 = vadd.f32 %v6817, %v7211
  %v7460 = vadd.f32 %v6818, %v7214
  %v7461 = vadd.f32 %v6819, %v7219
  %v7462 = vadd.f32 %v6820, %v7222
  %v7463 = vadd.f32 %v6821, %v7227
  %v7464 = vadd.f32 %v6822, %v7230
  %v7465 = vadd.f32 %v6823, %v7235
  %v7466 = vadd.f32 %v6824, %v7238
  %v7467 = vadd.f32 %v6825, %v7243
  %v7468 = vadd.f32 %v6826, %v7246
  %v7469 = vadd.f32 %v6827, %v7251
  %v7470 = vadd.f32 %v6828, %v7254
  %v7471 = vadd.f32 %v6829, %v7259
  %v7472 = vadd.f32 %v6830, %v7262
  %v7473 = vadd.f32 %v6831, %v7267
  %v7474 = vadd.f32 %v6832, %v7270
  %v7475 = vadd.f32 %v6833, %v7275
  %v7476 = vadd.f32 %v6834, %v7278
  %v7477 = vadd.f32 %v6835, %v7283
  %v7478 = vadd.f32 %v6836, %v7286
  %v7479 = vadd.f32 %v6837, %v7291
  %v7480 = vadd.f32 %v6838, %v7294
  %v7481 = vadd.f32 %v6839, %v7299
  %v7482 = vadd.f32 %v6840, %v7302
  %v7483 = vadd.f32 %v6841, %v7307
  %v7484 = vadd.f32 %v6842, %v7310
  %v7485 = vadd.f32 %v6843, %v7315
  %v7486 = vadd.f32 %v6844, %v7318
  %v7487 = vadd.f32 %v6845, %v7323
  %v7488 = vadd.f32 %v6846, %v7326
  %v7489 = vadd.f32 %v6847, %v7331
  %v7490 = vadd.f32 %v6848, %v7334
  %v7491 = vadd.f32 %v6849, %v7339
  %v7492 = vadd.f32 %v6850, %v7342
  %v7493 = vadd.f32 %v6851, %v7347
  %v7494 = vadd.f32 %v6852, %v7350
  %v7495 = vadd.f32 %v6853, %v7355
  %v7496 = vadd.f32 %v6854, %v7358
  %v7497 = vadd.f32 %v6855, %v7363
  %v7498 = vadd.f32 %v6856, %v7366
  %v7499 = vadd.f32 %v6857, %v7371
  %v7500 = vadd.f32 %v6858, %v7374
  %v7501 = vadd.f32 %v6859, %v7379
  %v7502 = vadd.f32 %v6860, %v7382
  %v7503 = vadd.f32 %v6861, %v7387
  %v7504 = vadd.f32 %v6862, %v7390
  %v7505 = vadd.f32 %v6863, %v7395
  %v7506 = vadd.f32 %v6864, %v7398
  %v7507 = vadd.f32 %v6865, %v7403
  %v7508 = vadd.f32 %v6866, %v7406
  %v7509 = vadd.f32 %v6867, %v7411
  %v7510 = vadd.f32 %v6868, %v7414
  %v7511 = vadd.f32 %v6869, %v7419
  %v7512 = vadd.f32 %v6870, %v7422
  %v7513 = vadd.f32 %v6871, %v7427
  %v7514 = vadd.f32 %v6872, %v7430
  %v7515 = vadd.f32 %v6873, %v7435
  %v7516 = vadd.f32 %v6874, %v7438
  %v7517 = vadd.f32 %v6875, %v7443
  %v7518 = vadd.f32 %v6876, %v7446
  %v7519 = vadd.f32 %v6877, %v7451
  %v7520 = vadd.f32 %v6878, %v7454
  %v7521 = vld [vmem:[%s5] sm:$0x1]
  %v7522 = vld [vmem:[%s6] sm:$0x1]
  %v7523 = vadd.f32 %v7457, %v7458
  %v7524 = vadd.f32 %v7523, %v7459
  %v7525 = vadd.f32 %v7524, %v7460
  %v7526 = vadd.f32 %v7525, %v7461
  %v7527 = vadd.f32 %v7526, %v7462
  %v7528 = vadd.f32 %v7527, %v7463
  %v7529 = vadd.f32 %v7528, %v7464
  %v7530 = vadd.f32 %v7529, %v7465
  %v7531 = vadd.f32 %v7530, %v7466
  %v7532 = vadd.f32 %v7531, %v7467
  %v7533 = vadd.f32 %v7532, %v7468
  %v7534 = vadd.f32 %v7533, %v7469
  %v7535 = vadd.f32 %v7534, %v7470
  %v7536 = vadd.f32 %v7535, %v7471
  %v7537 = vadd.f32 %v7536, %v7472
  %v7538 = vadd.f32 %v7537, %v7473
  %v7539 = vadd.f32 %v7538, %v7474
  %v7540 = vadd.f32 %v7539, %v7475
  %v7541 = vadd.f32 %v7540, %v7476
  %v7542 = vadd.f32 %v7541, %v7477
  %v7543 = vadd.f32 %v7542, %v7478
  %v7544 = vadd.f32 %v7543, %v7479
  %v7545 = vadd.f32 %v7544, %v7480
  %v7546 = vadd.f32 %v7545, %v7481
  %v7547 = vadd.f32 %v7546, %v7482
  %v7548 = vadd.f32 %v7547, %v7483
  %v7549 = vadd.f32 %v7548, %v7484
  %v7550 = vadd.f32 %v7549, %v7485
  %v7551 = vadd.f32 %v7550, %v7486
  %v7552 = vadd.f32 %v7551, %v7487
  %v7553 = vadd.f32 %v7552, %v7488
  %v7554 = vadd.f32 %v7553, %v7489
  %v7555 = vadd.f32 %v7554, %v7490
  %v7556 = vadd.f32 %v7555, %v7491
  %v7557 = vadd.f32 %v7556, %v7492
  %v7558 = vadd.f32 %v7557, %v7493
  %v7559 = vadd.f32 %v7558, %v7494
  %v7560 = vadd.f32 %v7559, %v7495
  %v7561 = vadd.f32 %v7560, %v7496
  %v7562 = vadd.f32 %v7561, %v7497
  %v7563 = vadd.f32 %v7562, %v7498
  %v7564 = vadd.f32 %v7563, %v7499
  %v7565 = vadd.f32 %v7564, %v7500
  %v7566 = vadd.f32 %v7565, %v7501
  %v7567 = vadd.f32 %v7566, %v7502
  %v7568 = vadd.f32 %v7567, %v7503
  %v7569 = vadd.f32 %v7568, %v7504
  %v7570 = vadd.f32 %v7569, %v7505
  %v7571 = vadd.f32 %v7570, %v7506
  %v7572 = vadd.f32 %v7571, %v7507
  %v7573 = vadd.f32 %v7572, %v7508
  %v7574 = vadd.f32 %v7573, %v7509
  %v7575 = vadd.f32 %v7574, %v7510
  %v7576 = vadd.f32 %v7575, %v7511
  %v7577 = vadd.f32 %v7576, %v7512
  %v7578 = vadd.f32 %v7577, %v7513
  %v7579 = vadd.f32 %v7578, %v7514
  %v7580 = vadd.f32 %v7579, %v7515
  %v7581 = vadd.f32 %v7580, %v7516
  %v7582 = vadd.f32 %v7581, %v7517
  %v7583 = vadd.f32 %v7582, %v7518
  %v7584 = vadd.f32 %v7583, %v7519
  %v7585 = vadd.f32 %v7584, %v7520
  %v7586 = vrot.slane %v7585, 4
  %v7587 = vadd.f32 %v7585, %v7586
  %v7588 = vrot.slane %v7587, 2
  %v7589 = vadd.f32 %v7587, %v7588
  %v7590 = vrot.slane %v7589, 1
  %v7591 = vadd.f32 %v7589, %v7590
  %v7592 = vmul.f32 %v7591, 0.001953125
  %v7593 = vsub.f32 %v7457, %v7592
  %v7594 = vsub.f32 %v7458, %v7592
  %v7595 = vsub.f32 %v7459, %v7592
  %v7596 = vsub.f32 %v7460, %v7592
  %v7597 = vsub.f32 %v7461, %v7592
  %v7598 = vsub.f32 %v7462, %v7592
  %v7599 = vsub.f32 %v7463, %v7592
  %v7600 = vsub.f32 %v7464, %v7592
  %v7601 = vsub.f32 %v7465, %v7592
  %v7602 = vsub.f32 %v7466, %v7592
  %v7603 = vsub.f32 %v7467, %v7592
  %v7604 = vsub.f32 %v7468, %v7592
  %v7605 = vsub.f32 %v7469, %v7592
  %v7606 = vsub.f32 %v7470, %v7592
  %v7607 = vsub.f32 %v7471, %v7592
  %v7608 = vsub.f32 %v7472, %v7592
  %v7609 = vsub.f32 %v7473, %v7592
  %v7610 = vsub.f32 %v7474, %v7592
  %v7611 = vsub.f32 %v7475, %v7592
  %v7612 = vsub.f32 %v7476, %v7592
  %v7613 = vsub.f32 %v7477, %v7592
  %v7614 = vsub.f32 %v7478, %v7592
  %v7615 = vsub.f32 %v7479, %v7592
  %v7616 = vsub.f32 %v7480, %v7592
  %v7617 = vsub.f32 %v7481, %v7592
  %v7618 = vsub.f32 %v7482, %v7592
  %v7619 = vsub.f32 %v7483, %v7592
  %v7620 = vsub.f32 %v7484, %v7592
  %v7621 = vsub.f32 %v7485, %v7592
  %v7622 = vsub.f32 %v7486, %v7592
  %v7623 = vsub.f32 %v7487, %v7592
  %v7624 = vsub.f32 %v7488, %v7592
  %v7625 = vsub.f32 %v7489, %v7592
  %v7626 = vsub.f32 %v7490, %v7592
  %v7627 = vsub.f32 %v7491, %v7592
  %v7628 = vsub.f32 %v7492, %v7592
  %v7629 = vsub.f32 %v7493, %v7592
  %v7630 = vsub.f32 %v7494, %v7592
  %v7631 = vsub.f32 %v7495, %v7592
  %v7632 = vsub.f32 %v7496, %v7592
  %v7633 = vsub.f32 %v7497, %v7592
  %v7634 = vsub.f32 %v7498, %v7592
  %v7635 = vsub.f32 %v7499, %v7592
  %v7636 = vsub.f32 %v7500, %v7592
  %v7637 = vsub.f32 %v7501, %v7592
  %v7638 = vsub.f32 %v7502, %v7592
  %v7639 = vsub.f32 %v7503, %v7592
  %v7640 = vsub.f32 %v7504, %v7592
  %v7641 = vsub.f32 %v7505, %v7592
  %v7642 = vsub.f32 %v7506, %v7592
  %v7643 = vsub.f32 %v7507, %v7592
  %v7644 = vsub.f32 %v7508, %v7592
  %v7645 = vsub.f32 %v7509, %v7592
  %v7646 = vsub.f32 %v7510, %v7592
  %v7647 = vsub.f32 %v7511, %v7592
  %v7648 = vsub.f32 %v7512, %v7592
  %v7649 = vsub.f32 %v7513, %v7592
  %v7650 = vsub.f32 %v7514, %v7592
  %v7651 = vsub.f32 %v7515, %v7592
  %v7652 = vsub.f32 %v7516, %v7592
  %v7653 = vsub.f32 %v7517, %v7592
  %v7654 = vsub.f32 %v7518, %v7592
  %v7655 = vsub.f32 %v7519, %v7592
  %v7656 = vsub.f32 %v7520, %v7592
  %v7657 = vmul.f32 %v7593, %v7593
  %v7658 = vmul.f32 %v7594, %v7594
  %v7659 = vmul.f32 %v7595, %v7595
  %v7660 = vmul.f32 %v7596, %v7596
  %v7661 = vmul.f32 %v7597, %v7597
  %v7662 = vmul.f32 %v7598, %v7598
  %v7663 = vmul.f32 %v7599, %v7599
  %v7664 = vmul.f32 %v7600, %v7600
  %v7665 = vmul.f32 %v7601, %v7601
  %v7666 = vmul.f32 %v7602, %v7602
  %v7667 = vmul.f32 %v7603, %v7603
  %v7668 = vmul.f32 %v7604, %v7604
  %v7669 = vmul.f32 %v7605, %v7605
  %v7670 = vmul.f32 %v7606, %v7606
  %v7671 = vmul.f32 %v7607, %v7607
  %v7672 = vmul.f32 %v7608, %v7608
  %v7673 = vmul.f32 %v7609, %v7609
  %v7674 = vmul.f32 %v7610, %v7610
  %v7675 = vmul.f32 %v7611, %v7611
  %v7676 = vmul.f32 %v7612, %v7612
  %v7677 = vmul.f32 %v7613, %v7613
  %v7678 = vmul.f32 %v7614, %v7614
  %v7679 = vmul.f32 %v7615, %v7615
  %v7680 = vmul.f32 %v7616, %v7616
  %v7681 = vmul.f32 %v7617, %v7617
  %v7682 = vmul.f32 %v7618, %v7618
  %v7683 = vmul.f32 %v7619, %v7619
  %v7684 = vmul.f32 %v7620, %v7620
  %v7685 = vmul.f32 %v7621, %v7621
  %v7686 = vmul.f32 %v7622, %v7622
  %v7687 = vmul.f32 %v7623, %v7623
  %v7688 = vmul.f32 %v7624, %v7624
  %v7689 = vmul.f32 %v7625, %v7625
  %v7690 = vmul.f32 %v7626, %v7626
  %v7691 = vmul.f32 %v7627, %v7627
  %v7692 = vmul.f32 %v7628, %v7628
  %v7693 = vmul.f32 %v7629, %v7629
  %v7694 = vmul.f32 %v7630, %v7630
  %v7695 = vmul.f32 %v7631, %v7631
  %v7696 = vmul.f32 %v7632, %v7632
  %v7697 = vmul.f32 %v7633, %v7633
  %v7698 = vmul.f32 %v7634, %v7634
  %v7699 = vmul.f32 %v7635, %v7635
  %v7700 = vmul.f32 %v7636, %v7636
  %v7701 = vmul.f32 %v7637, %v7637
  %v7702 = vmul.f32 %v7638, %v7638
  %v7703 = vmul.f32 %v7639, %v7639
  %v7704 = vmul.f32 %v7640, %v7640
  %v7705 = vmul.f32 %v7641, %v7641
  %v7706 = vmul.f32 %v7642, %v7642
  %v7707 = vmul.f32 %v7643, %v7643
  %v7708 = vmul.f32 %v7644, %v7644
  %v7709 = vmul.f32 %v7645, %v7645
  %v7710 = vmul.f32 %v7646, %v7646
  %v7711 = vmul.f32 %v7647, %v7647
  %v7712 = vmul.f32 %v7648, %v7648
  %v7713 = vmul.f32 %v7649, %v7649
  %v7714 = vmul.f32 %v7650, %v7650
  %v7715 = vmul.f32 %v7651, %v7651
  %v7716 = vmul.f32 %v7652, %v7652
  %v7717 = vmul.f32 %v7653, %v7653
  %v7718 = vmul.f32 %v7654, %v7654
  %v7719 = vmul.f32 %v7655, %v7655
  %v7720 = vmul.f32 %v7656, %v7656
  %v7721 = vadd.f32 %v7657, %v7658
  %v7722 = vadd.f32 %v7721, %v7659
  %v7723 = vadd.f32 %v7722, %v7660
  %v7724 = vadd.f32 %v7723, %v7661
  %v7725 = vadd.f32 %v7724, %v7662
  %v7726 = vadd.f32 %v7725, %v7663
  %v7727 = vadd.f32 %v7726, %v7664
  %v7728 = vadd.f32 %v7727, %v7665
  %v7729 = vadd.f32 %v7728, %v7666
  %v7730 = vadd.f32 %v7729, %v7667
  %v7731 = vadd.f32 %v7730, %v7668
  %v7732 = vadd.f32 %v7731, %v7669
  %v7733 = vadd.f32 %v7732, %v7670
  %v7734 = vadd.f32 %v7733, %v7671
  %v7735 = vadd.f32 %v7734, %v7672
  %v7736 = vadd.f32 %v7735, %v7673
  %v7737 = vadd.f32 %v7736, %v7674
  %v7738 = vadd.f32 %v7737, %v7675
  %v7739 = vadd.f32 %v7738, %v7676
  %v7740 = vadd.f32 %v7739, %v7677
  %v7741 = vadd.f32 %v7740, %v7678
  %v7742 = vadd.f32 %v7741, %v7679
  %v7743 = vadd.f32 %v7742, %v7680
  %v7744 = vadd.f32 %v7743, %v7681
  %v7745 = vadd.f32 %v7744, %v7682
  %v7746 = vadd.f32 %v7745, %v7683
  %v7747 = vadd.f32 %v7746, %v7684
  %v7748 = vadd.f32 %v7747, %v7685
  %v7749 = vadd.f32 %v7748, %v7686
  %v7750 = vadd.f32 %v7749, %v7687
  %v7751 = vadd.f32 %v7750, %v7688
  %v7752 = vadd.f32 %v7751, %v7689
  %v7753 = vadd.f32 %v7752, %v7690
  %v7754 = vadd.f32 %v7753, %v7691
  %v7755 = vadd.f32 %v7754, %v7692
  %v7756 = vadd.f32 %v7755, %v7693
  %v7757 = vadd.f32 %v7756, %v7694
  %v7758 = vadd.f32 %v7757, %v7695
  %v7759 = vadd.f32 %v7758, %v7696
  %v7760 = vadd.f32 %v7759, %v7697
  %v7761 = vadd.f32 %v7760, %v7698
  %v7762 = vadd.f32 %v7761, %v7699
  %v7763 = vadd.f32 %v7762, %v7700
  %v7764 = vadd.f32 %v7763, %v7701
  %v7765 = vadd.f32 %v7764, %v7702
  %v7766 = vadd.f32 %v7765, %v7703
  %v7767 = vadd.f32 %v7766, %v7704
  %v7768 = vadd.f32 %v7767, %v7705
  %v7769 = vadd.f32 %v7768, %v7706
  %v7770 = vadd.f32 %v7769, %v7707
  %v7771 = vadd.f32 %v7770, %v7708
  %v7772 = vadd.f32 %v7771, %v7709
  %v7773 = vadd.f32 %v7772, %v7710
  %v7774 = vadd.f32 %v7773, %v7711
  %v7775 = vadd.f32 %v7774, %v7712
  %v7776 = vadd.f32 %v7775, %v7713
  %v7777 = vadd.f32 %v7776, %v7714
  %v7778 = vadd.f32 %v7777, %v7715
  %v7779 = vadd.f32 %v7778, %v7716
  %v7780 = vadd.f32 %v7779, %v7717
  %v7781 = vadd.f32 %v7780, %v7718
  %v7782 = vadd.f32 %v7781, %v7719
  %v7783 = vadd.f32 %v7782, %v7720
  %v7784 = vrot.slane %v7783, 4
  %v7785 = vadd.f32 %v7783, %v7784
  %v7786 = vrot.slane %v7785, 2
  %v7787 = vadd.f32 %v7785, %v7786
  %v7788 = vrot.slane %v7787, 1
  %v7789 = vadd.f32 %v7787, %v7788
  %v7790 = vmul.f32 %v7789, 0.001953125
  %v7791 = vadd.f32 %v7790, 1e-05
  %v7792 = vrsqrt.pop %v7791
  %v7793 = vmul.f32 %v7521, %v7792
  %v7795 = vlaneseq
  %v7796 = vshrl.u32 %v7795, 7
  %v7797 = vsub.s32 0, %v7796
  %v7798 = vrot.slane %v7793, %v7797
  %v7800 = vmul.f32 %v7593, %v7798
  %v7801 = vmul.f32 %v7594, %v7798
  %v7802 = vmul.f32 %v7595, %v7798
  %v7803 = vmul.f32 %v7596, %v7798
  %v7804 = vmul.f32 %v7597, %v7798
  %v7805 = vmul.f32 %v7598, %v7798
  %v7806 = vmul.f32 %v7599, %v7798
  %v7807 = vmul.f32 %v7600, %v7798
  %v7808 = vmul.f32 %v7601, %v7798
  %v7809 = vmul.f32 %v7602, %v7798
  %v7810 = vmul.f32 %v7603, %v7798
  %v7811 = vmul.f32 %v7604, %v7798
  %v7812 = vmul.f32 %v7605, %v7798
  %v7813 = vmul.f32 %v7606, %v7798
  %v7814 = vmul.f32 %v7607, %v7798
  %v7815 = vmul.f32 %v7608, %v7798
  %v7816 = vmul.f32 %v7609, %v7798
  %v7817 = vmul.f32 %v7610, %v7798
  %v7818 = vmul.f32 %v7611, %v7798
  %v7819 = vmul.f32 %v7612, %v7798
  %v7820 = vmul.f32 %v7613, %v7798
  %v7821 = vmul.f32 %v7614, %v7798
  %v7822 = vmul.f32 %v7615, %v7798
  %v7823 = vmul.f32 %v7616, %v7798
  %v7824 = vmul.f32 %v7617, %v7798
  %v7825 = vmul.f32 %v7618, %v7798
  %v7826 = vmul.f32 %v7619, %v7798
  %v7827 = vmul.f32 %v7620, %v7798
  %v7828 = vmul.f32 %v7621, %v7798
  %v7829 = vmul.f32 %v7622, %v7798
  %v7830 = vmul.f32 %v7623, %v7798
  %v7831 = vmul.f32 %v7624, %v7798
  %v7832 = vmul.f32 %v7625, %v7798
  %v7833 = vmul.f32 %v7626, %v7798
  %v7834 = vmul.f32 %v7627, %v7798
  %v7835 = vmul.f32 %v7628, %v7798
  %v7836 = vmul.f32 %v7629, %v7798
  %v7837 = vmul.f32 %v7630, %v7798
  %v7838 = vmul.f32 %v7631, %v7798
  %v7839 = vmul.f32 %v7632, %v7798
  %v7840 = vmul.f32 %v7633, %v7798
  %v7841 = vmul.f32 %v7634, %v7798
  %v7842 = vmul.f32 %v7635, %v7798
  %v7843 = vmul.f32 %v7636, %v7798
  %v7844 = vmul.f32 %v7637, %v7798
  %v7845 = vmul.f32 %v7638, %v7798
  %v7846 = vmul.f32 %v7639, %v7798
  %v7847 = vmul.f32 %v7640, %v7798
  %v7848 = vmul.f32 %v7641, %v7798
  %v7849 = vmul.f32 %v7642, %v7798
  %v7850 = vmul.f32 %v7643, %v7798
  %v7851 = vmul.f32 %v7644, %v7798
  %v7852 = vmul.f32 %v7645, %v7798
  %v7853 = vmul.f32 %v7646, %v7798
  %v7854 = vmul.f32 %v7647, %v7798
  %v7855 = vmul.f32 %v7648, %v7798
  %v7856 = vmul.f32 %v7649, %v7798
  %v7857 = vmul.f32 %v7650, %v7798
  %v7858 = vmul.f32 %v7651, %v7798
  %v7859 = vmul.f32 %v7652, %v7798
  %v7860 = vmul.f32 %v7653, %v7798
  %v7861 = vmul.f32 %v7654, %v7798
  %v7862 = vmul.f32 %v7655, %v7798
  %v7863 = vmul.f32 %v7656, %v7798
  %v7865 = vlaneseq
  %v7866 = vshrl.u32 %v7865, 7
  %v7867 = vsub.s32 0, %v7866
  %v7868 = vrot.slane %v7522, %v7867
  %v7870 = vadd.f32 %v7800, %v7868
  %v7871 = vadd.f32 %v7801, %v7868
  %v7872 = vadd.f32 %v7802, %v7868
  %v7873 = vadd.f32 %v7803, %v7868
  %v7874 = vadd.f32 %v7804, %v7868
  %v7875 = vadd.f32 %v7805, %v7868
  %v7876 = vadd.f32 %v7806, %v7868
  %v7877 = vadd.f32 %v7807, %v7868
  %v7878 = vadd.f32 %v7808, %v7868
  %v7879 = vadd.f32 %v7809, %v7868
  %v7880 = vadd.f32 %v7810, %v7868
  %v7881 = vadd.f32 %v7811, %v7868
  %v7882 = vadd.f32 %v7812, %v7868
  %v7883 = vadd.f32 %v7813, %v7868
  %v7884 = vadd.f32 %v7814, %v7868
  %v7885 = vadd.f32 %v7815, %v7868
  %v7886 = vadd.f32 %v7816, %v7868
  %v7887 = vadd.f32 %v7817, %v7868
  %v7888 = vadd.f32 %v7818, %v7868
  %v7889 = vadd.f32 %v7819, %v7868
  %v7890 = vadd.f32 %v7820, %v7868
  %v7891 = vadd.f32 %v7821, %v7868
  %v7892 = vadd.f32 %v7822, %v7868
  %v7893 = vadd.f32 %v7823, %v7868
  %v7894 = vadd.f32 %v7824, %v7868
  %v7895 = vadd.f32 %v7825, %v7868
  %v7896 = vadd.f32 %v7826, %v7868
  %v7897 = vadd.f32 %v7827, %v7868
  %v7898 = vadd.f32 %v7828, %v7868
  %v7899 = vadd.f32 %v7829, %v7868
  %v7900 = vadd.f32 %v7830, %v7868
  %v7901 = vadd.f32 %v7831, %v7868
  %v7902 = vadd.f32 %v7832, %v7868
  %v7903 = vadd.f32 %v7833, %v7868
  %v7904 = vadd.f32 %v7834, %v7868
  %v7905 = vadd.f32 %v7835, %v7868
  %v7906 = vadd.f32 %v7836, %v7868
  %v7907 = vadd.f32 %v7837, %v7868
  %v7908 = vadd.f32 %v7838, %v7868
  %v7909 = vadd.f32 %v7839, %v7868
  %v7910 = vadd.f32 %v7840, %v7868
  %v7911 = vadd.f32 %v7841, %v7868
  %v7912 = vadd.f32 %v7842, %v7868
  %v7913 = vadd.f32 %v7843, %v7868
  %v7914 = vadd.f32 %v7844, %v7868
  %v7915 = vadd.f32 %v7845, %v7868
  %v7916 = vadd.f32 %v7846, %v7868
  %v7917 = vadd.f32 %v7847, %v7868
  %v7918 = vadd.f32 %v7848, %v7868
  %v7919 = vadd.f32 %v7849, %v7868
  %v7920 = vadd.f32 %v7850, %v7868
  %v7921 = vadd.f32 %v7851, %v7868
  %v7922 = vadd.f32 %v7852, %v7868
  %v7923 = vadd.f32 %v7853, %v7868
  %v7924 = vadd.f32 %v7854, %v7868
  %v7925 = vadd.f32 %v7855, %v7868
  %v7926 = vadd.f32 %v7856, %v7868
  %v7927 = vadd.f32 %v7857, %v7868
  %v7928 = vadd.f32 %v7858, %v7868
  %v7929 = vadd.f32 %v7859, %v7868
  %v7930 = vadd.f32 %v7860, %v7868
  %v7931 = vadd.f32 %v7861, %v7868
  %v7932 = vadd.f32 %v7862, %v7868
  %v7933 = vadd.f32 %v7863, %v7868
  %v7934 = vmax.f32 %v7870, 0.0
  %v7935 = vmax.f32 %v7871, 0.0
  %v7936 = vmax.f32 %v7872, 0.0
  %v7937 = vmax.f32 %v7873, 0.0
  %v7938 = vmax.f32 %v7874, 0.0
  %v7939 = vmax.f32 %v7875, 0.0
  %v7940 = vmax.f32 %v7876, 0.0
  %v7941 = vmax.f32 %v7877, 0.0
  %v7942 = vmax.f32 %v7878, 0.0
  %v7943 = vmax.f32 %v7879, 0.0
  %v7944 = vmax.f32 %v7880, 0.0
  %v7945 = vmax.f32 %v7881, 0.0
  %v7946 = vmax.f32 %v7882, 0.0
  %v7947 = vmax.f32 %v7883, 0.0
  %v7948 = vmax.f32 %v7884, 0.0
  %v7949 = vmax.f32 %v7885, 0.0
  %v7950 = vmax.f32 %v7886, 0.0
  %v7951 = vmax.f32 %v7887, 0.0
  %v7952 = vmax.f32 %v7888, 0.0
  %v7953 = vmax.f32 %v7889, 0.0
  %v7954 = vmax.f32 %v7890, 0.0
  %v7955 = vmax.f32 %v7891, 0.0
  %v7956 = vmax.f32 %v7892, 0.0
  %v7957 = vmax.f32 %v7893, 0.0
  %v7958 = vmax.f32 %v7894, 0.0
  %v7959 = vmax.f32 %v7895, 0.0
  %v7960 = vmax.f32 %v7896, 0.0
  %v7961 = vmax.f32 %v7897, 0.0
  %v7962 = vmax.f32 %v7898, 0.0
  %v7963 = vmax.f32 %v7899, 0.0
  %v7964 = vmax.f32 %v7900, 0.0
  %v7965 = vmax.f32 %v7901, 0.0
  %v7966 = vmax.f32 %v7902, 0.0
  %v7967 = vmax.f32 %v7903, 0.0
  %v7968 = vmax.f32 %v7904, 0.0
  %v7969 = vmax.f32 %v7905, 0.0
  %v7970 = vmax.f32 %v7906, 0.0
  %v7971 = vmax.f32 %v7907, 0.0
  %v7972 = vmax.f32 %v7908, 0.0
  %v7973 = vmax.f32 %v7909, 0.0
  %v7974 = vmax.f32 %v7910, 0.0
  %v7975 = vmax.f32 %v7911, 0.0
  %v7976 = vmax.f32 %v7912, 0.0
  %v7977 = vmax.f32 %v7913, 0.0
  %v7978 = vmax.f32 %v7914, 0.0
  %v7979 = vmax.f32 %v7915, 0.0
  %v7980 = vmax.f32 %v7916, 0.0
  %v7981 = vmax.f32 %v7917, 0.0
  %v7982 = vmax.f32 %v7918, 0.0
  %v7983 = vmax.f32 %v7919, 0.0
  %v7984 = vmax.f32 %v7920, 0.0
  %v7985 = vmax.f32 %v7921, 0.0
  %v7986 = vmax.f32 %v7922, 0.0
  %v7987 = vmax.f32 %v7923, 0.0
  %v7988 = vmax.f32 %v7924, 0.0
  %v7989 = vmax.f32 %v7925, 0.0
  %v7990 = vmax.f32 %v7926, 0.0
  %v7991 = vmax.f32 %v7927, 0.0
  %v7992 = vmax.f32 %v7928, 0.0
  %v7993 = vmax.f32 %v7929, 0.0
  %v7994 = vmax.f32 %v7930, 0.0
  %v7995 = vmax.f32 %v7931, 0.0
  %v7996 = vmax.f32 %v7932, 0.0
  %v7997 = vmax.f32 %v7933, 0.0
  %v7998 = vpack.c.bf16 %v7935, %v7934
  %v7999 = vpack.c.bf16 %v7937, %v7936
  %v8000 = vpack.c.bf16 %v7939, %v7938
  %v8001 = vpack.c.bf16 %v7941, %v7940
  %v8002 = vpack.c.bf16 %v7943, %v7942
  %v8003 = vpack.c.bf16 %v7945, %v7944
  %v8004 = vpack.c.bf16 %v7947, %v7946
  %v8005 = vpack.c.bf16 %v7949, %v7948
  %v8006 = vpack.c.bf16 %v7951, %v7950
  %v8007 = vpack.c.bf16 %v7953, %v7952
  %v8008 = vpack.c.bf16 %v7955, %v7954
  %v8009 = vpack.c.bf16 %v7957, %v7956
  %v8010 = vpack.c.bf16 %v7959, %v7958
  %v8011 = vpack.c.bf16 %v7961, %v7960
  %v8012 = vpack.c.bf16 %v7963, %v7962
  %v8013 = vpack.c.bf16 %v7965, %v7964
  %v8014 = vpack.c.bf16 %v7967, %v7966
  %v8015 = vpack.c.bf16 %v7969, %v7968
  %v8016 = vpack.c.bf16 %v7971, %v7970
  %v8017 = vpack.c.bf16 %v7973, %v7972
  %v8018 = vpack.c.bf16 %v7975, %v7974
  %v8019 = vpack.c.bf16 %v7977, %v7976
  %v8020 = vpack.c.bf16 %v7979, %v7978
  %v8021 = vpack.c.bf16 %v7981, %v7980
  %v8022 = vpack.c.bf16 %v7983, %v7982
  %v8023 = vpack.c.bf16 %v7985, %v7984
  %v8024 = vpack.c.bf16 %v7987, %v7986
  %v8025 = vpack.c.bf16 %v7989, %v7988
  %v8026 = vpack.c.bf16 %v7991, %v7990
  %v8027 = vpack.c.bf16 %v7993, %v7992
  %v8028 = vpack.c.bf16 %v7995, %v7994
  %v8029 = vpack.c.bf16 %v7997, %v7996
  %v8030 = vld [vmem:[%s7] sm:$0xf]
  %v8031 = vld [vmem:[%s7 + $0x4] sm:$0xf]
  %v8032 = vld [vmem:[%s7 + $0x8] sm:$0xf]
  %v8033 = vld [vmem:[%s7 + $0xc] sm:$0xf]
  %v8034 = vld [vmem:[%s7 + $0x10] sm:$0xf]
  %v8035 = vld [vmem:[%s7 + $0x14] sm:$0xf]
  %v8036 = vld [vmem:[%s7 + $0x18] sm:$0xf]
  %v8037 = vld [vmem:[%s7 + $0x1c] sm:$0xf]
  %v8038 = vld [vmem:[%s7 + $0x20] sm:$0xf]
  %v8039 = vld [vmem:[%s7 + $0x24] sm:$0xf]
  %v8040 = vld [vmem:[%s7 + $0x28] sm:$0xf]
  %v8041 = vld [vmem:[%s7 + $0x2c] sm:$0xf]
  %v8042 = vld [vmem:[%s7 + $0x30] sm:$0xf]
  %v8043 = vld [vmem:[%s7 + $0x34] sm:$0xf]
  %v8044 = vld [vmem:[%s7 + $0x38] sm:$0xf]
  %v8045 = vld [vmem:[%s7 + $0x3c] sm:$0xf]
  %v8062 = vunpack.c.l.b16 %v8030
  %v8063 = vunpack.c.l.b16 %v8031
  %v8064 = vunpack.c.l.b16 %v8032
  %v8065 = vunpack.c.l.b16 %v8033
  %v8066 = vunpack.c.l.b16 %v8034
  %v8067 = vunpack.c.l.b16 %v8035
  %v8068 = vunpack.c.l.b16 %v8036
  %v8069 = vunpack.c.l.b16 %v8037
  %v8070 = vunpack.c.l.b16 %v8038
  %v8071 = vunpack.c.l.b16 %v8039
  %v8072 = vunpack.c.l.b16 %v8040
  %v8073 = vunpack.c.l.b16 %v8041
  %v8074 = vunpack.c.l.b16 %v8042
  %v8075 = vunpack.c.l.b16 %v8043
  %v8076 = vunpack.c.l.b16 %v8044
  %v8077 = vunpack.c.l.b16 %v8045
  %v8078 = vpack.c.b16 %v8063, %v8062
  %v8079 = vpack.c.b16 %v8065, %v8064
  %v8080 = vpack.c.b16 %v8067, %v8066
  %v8081 = vpack.c.b16 %v8069, %v8068
  %v8082 = vpack.c.b16 %v8071, %v8070
  %v8083 = vpack.c.b16 %v8073, %v8072
  %v8084 = vpack.c.b16 %v8075, %v8074
  %v8085 = vpack.c.b16 %v8077, %v8076
  %8094 = vmatprep.subr.bf16.mxu0 0
  %8095 = vmatpush1.bf16.msra.mxu0 %v8085
  %8096 = vmatprep.subr.bf16.mxu0 0
  %8097 = vmatpush1.bf16.msra.mxu0 %v8084
  %8098 = vmatprep.subr.bf16.mxu0 0
  %8099 = vmatpush1.bf16.msra.mxu0 %v8083
  %8100 = vmatprep.subr.bf16.mxu0 0
  %8101 = vmatpush1.bf16.msra.mxu0 %v8082
  %8102 = vmatprep.subr.bf16.mxu0 0
  %8103 = vmatpush1.bf16.msra.mxu0 %v8081
  %8104 = vmatprep.subr.bf16.mxu0 0
  %8105 = vmatpush1.bf16.msra.mxu0 %v8080
  %8106 = vmatprep.subr.bf16.mxu0 0
  %8107 = vmatpush1.bf16.msra.mxu0 %v8079
  %8108 = vmatprep.subr.bf16.mxu0 0
  %8109 = vmatpush1.bf16.msra.mxu0 %v8078
  %8110 = vmatprep.subr.bf16.mxu0 0
  %8111 = vmatpush2.bf16.msra.mxu0 0
  %8112 = vmatprep.subr.bf16.mxu0 0
  %8113 = vmatpush2.bf16.msra.mxu0 0
  %8114 = vmatprep.subr.bf16.mxu0 0
  %8115 = vmatpush2.bf16.msra.mxu0 0
  %8116 = vmatprep.subr.bf16.mxu0 0
  %8117 = vmatpush2.bf16.msra.mxu0 0
  %8118 = vmatprep.subr.bf16.mxu0 0
  %8119 = vmatpush2.bf16.msra.mxu0 0
  %8120 = vmatprep.subr.bf16.mxu0 0
  %8121 = vmatpush2.bf16.msra.mxu0 0
  %8122 = vmatprep.subr.bf16.mxu0 0
  %8123 = vmatpush2.bf16.msra.mxu0 0
  %8124 = vmatprep.subr.bf16.mxu0 0
  %8125 = vmatpush2.bf16.msra.mxu0 0
  %8126 = vmatprep.mubr.bf16.mxu0 0
  %8127 = vmatmul.mubr.bf16.gmra.mxu0 %v7998
  %v8128 = vpop.f32.mrf.mxu0
  %v8129 = vadd.f32 0.0, %v8128
  %v8130 = vpop.f32.mrf.mxu0
  %v8131 = vpop.f32.mrf.mxu0
  %v8132 = vadd.f32 0.0, %v8131
  %v8133 = vpop.f32.mrf.mxu0
  %8134 = vmatprep.mubr.bf16.mxu0 0
  %8135 = vmatmul.mubr.bf16.gmra.mxu0 %v7999
  %v8136 = vpop.f32.mrf.mxu0
  %v8137 = vadd.f32 0.0, %v8136
  %v8138 = vpop.f32.mrf.mxu0
  %v8139 = vpop.f32.mrf.mxu0
  %v8140 = vadd.f32 0.0, %v8139
  %v8141 = vpop.f32.mrf.mxu0
  %8142 = vmatprep.mubr.bf16.mxu0 0
  %8143 = vmatmul.mubr.bf16.gmra.mxu0 %v8000
  %v8144 = vpop.f32.mrf.mxu0
  %v8145 = vadd.f32 0.0, %v8144
  %v8146 = vpop.f32.mrf.mxu0
  %v8147 = vpop.f32.mrf.mxu0
  %v8148 = vadd.f32 0.0, %v8147
  %v8149 = vpop.f32.mrf.mxu0
  %8150 = vmatprep.mubr.bf16.mxu0 0
  %8151 = vmatmul.mubr.bf16.gmra.mxu0 %v8001
  %v8152 = vpop.f32.mrf.mxu0
  %v8153 = vadd.f32 0.0, %v8152
  %v8154 = vpop.f32.mrf.mxu0
  %v8155 = vpop.f32.mrf.mxu0
  %v8156 = vadd.f32 0.0, %v8155
  %v8157 = vpop.f32.mrf.mxu0
  %8158 = vmatprep.mubr.bf16.mxu0 0
  %8159 = vmatmul.mubr.bf16.gmra.mxu0 %v8002
  %v8160 = vpop.f32.mrf.mxu0
  %v8161 = vadd.f32 0.0, %v8160
  %v8162 = vpop.f32.mrf.mxu0
  %v8163 = vpop.f32.mrf.mxu0
  %v8164 = vadd.f32 0.0, %v8163
  %v8165 = vpop.f32.mrf.mxu0
  %8166 = vmatprep.mubr.bf16.mxu0 0
  %8167 = vmatmul.mubr.bf16.gmra.mxu0 %v8003
  %v8168 = vpop.f32.mrf.mxu0
  %v8169 = vadd.f32 0.0, %v8168
  %v8170 = vpop.f32.mrf.mxu0
  %v8171 = vpop.f32.mrf.mxu0
  %v8172 = vadd.f32 0.0, %v8171
  %v8173 = vpop.f32.mrf.mxu0
  %8174 = vmatprep.mubr.bf16.mxu0 0
  %8175 = vmatmul.mubr.bf16.gmra.mxu0 %v8004
  %v8176 = vpop.f32.mrf.mxu0
  %v8177 = vadd.f32 0.0, %v8176
  %v8178 = vpop.f32.mrf.mxu0
  %v8179 = vpop.f32.mrf.mxu0
  %v8180 = vadd.f32 0.0, %v8179
  %v8181 = vpop.f32.mrf.mxu0
  %8182 = vmatprep.mubr.bf16.mxu0 0
  %8183 = vmatmul.mubr.bf16.gmra.mxu0 %v8005
  %v8184 = vpop.f32.mrf.mxu0
  %v8185 = vadd.f32 0.0, %v8184
  %v8186 = vpop.f32.mrf.mxu0
  %v8187 = vpop.f32.mrf.mxu0
  %v8188 = vadd.f32 0.0, %v8187
  %v8189 = vpop.f32.mrf.mxu0
  %8190 = vmatprep.mubr.bf16.mxu0 0
  %8191 = vmatmul.mubr.bf16.gmra.mxu0 %v8006
  %v8192 = vpop.f32.mrf.mxu0
  %v8193 = vadd.f32 0.0, %v8192
  %v8194 = vpop.f32.mrf.mxu0
  %v8195 = vpop.f32.mrf.mxu0
  %v8196 = vadd.f32 0.0, %v8195
  %v8197 = vpop.f32.mrf.mxu0
  %8198 = vmatprep.mubr.bf16.mxu0 0
  %8199 = vmatmul.mubr.bf16.gmra.mxu0 %v8007
  %v8200 = vpop.f32.mrf.mxu0
  %v8201 = vadd.f32 0.0, %v8200
  %v8202 = vpop.f32.mrf.mxu0
  %v8203 = vpop.f32.mrf.mxu0
  %v8204 = vadd.f32 0.0, %v8203
  %v8205 = vpop.f32.mrf.mxu0
  %8206 = vmatprep.mubr.bf16.mxu0 0
  %8207 = vmatmul.mubr.bf16.gmra.mxu0 %v8008
  %v8208 = vpop.f32.mrf.mxu0
  %v8209 = vadd.f32 0.0, %v8208
  %v8210 = vpop.f32.mrf.mxu0
  %v8211 = vpop.f32.mrf.mxu0
  %v8212 = vadd.f32 0.0, %v8211
  %v8213 = vpop.f32.mrf.mxu0
  %8214 = vmatprep.mubr.bf16.mxu0 0
  %8215 = vmatmul.mubr.bf16.gmra.mxu0 %v8009
  %v8216 = vpop.f32.mrf.mxu0
  %v8217 = vadd.f32 0.0, %v8216
  %v8218 = vpop.f32.mrf.mxu0
  %v8219 = vpop.f32.mrf.mxu0
  %v8220 = vadd.f32 0.0, %v8219
  %v8221 = vpop.f32.mrf.mxu0
  %8222 = vmatprep.mubr.bf16.mxu0 0
  %8223 = vmatmul.mubr.bf16.gmra.mxu0 %v8010
  %v8224 = vpop.f32.mrf.mxu0
  %v8225 = vadd.f32 0.0, %v8224
  %v8226 = vpop.f32.mrf.mxu0
  %v8227 = vpop.f32.mrf.mxu0
  %v8228 = vadd.f32 0.0, %v8227
  %v8229 = vpop.f32.mrf.mxu0
  %8230 = vmatprep.mubr.bf16.mxu0 0
  %8231 = vmatmul.mubr.bf16.gmra.mxu0 %v8011
  %v8232 = vpop.f32.mrf.mxu0
  %v8233 = vadd.f32 0.0, %v8232
  %v8234 = vpop.f32.mrf.mxu0
  %v8235 = vpop.f32.mrf.mxu0
  %v8236 = vadd.f32 0.0, %v8235
  %v8237 = vpop.f32.mrf.mxu0
  %8238 = vmatprep.mubr.bf16.mxu0 0
  %8239 = vmatmul.mubr.bf16.gmra.mxu0 %v8012
  %v8240 = vpop.f32.mrf.mxu0
  %v8241 = vadd.f32 0.0, %v8240
  %v8242 = vpop.f32.mrf.mxu0
  %v8243 = vpop.f32.mrf.mxu0
  %v8244 = vadd.f32 0.0, %v8243
  %v8245 = vpop.f32.mrf.mxu0
  %8246 = vmatprep.mubr.bf16.mxu0 0
  %8247 = vmatmul.mubr.bf16.gmra.mxu0 %v8013
  %v8248 = vpop.f32.mrf.mxu0
  %v8249 = vadd.f32 0.0, %v8248
  %v8250 = vpop.f32.mrf.mxu0
  %v8251 = vpop.f32.mrf.mxu0
  %v8252 = vadd.f32 0.0, %v8251
  %v8253 = vpop.f32.mrf.mxu0
  %8254 = vmatprep.mubr.bf16.mxu0 0
  %8255 = vmatmul.mubr.bf16.gmra.mxu0 %v8014
  %v8256 = vpop.f32.mrf.mxu0
  %v8257 = vadd.f32 0.0, %v8256
  %v8258 = vpop.f32.mrf.mxu0
  %v8259 = vpop.f32.mrf.mxu0
  %v8260 = vadd.f32 0.0, %v8259
  %v8261 = vpop.f32.mrf.mxu0
  %8262 = vmatprep.mubr.bf16.mxu0 0
  %8263 = vmatmul.mubr.bf16.gmra.mxu0 %v8015
  %v8264 = vpop.f32.mrf.mxu0
  %v8265 = vadd.f32 0.0, %v8264
  %v8266 = vpop.f32.mrf.mxu0
  %v8267 = vpop.f32.mrf.mxu0
  %v8268 = vadd.f32 0.0, %v8267
  %v8269 = vpop.f32.mrf.mxu0
  %8270 = vmatprep.mubr.bf16.mxu0 0
  %8271 = vmatmul.mubr.bf16.gmra.mxu0 %v8016
  %v8272 = vpop.f32.mrf.mxu0
  %v8273 = vadd.f32 0.0, %v8272
  %v8274 = vpop.f32.mrf.mxu0
  %v8275 = vpop.f32.mrf.mxu0
  %v8276 = vadd.f32 0.0, %v8275
  %v8277 = vpop.f32.mrf.mxu0
  %8278 = vmatprep.mubr.bf16.mxu0 0
  %8279 = vmatmul.mubr.bf16.gmra.mxu0 %v8017
  %v8280 = vpop.f32.mrf.mxu0
  %v8281 = vadd.f32 0.0, %v8280
  %v8282 = vpop.f32.mrf.mxu0
  %v8283 = vpop.f32.mrf.mxu0
  %v8284 = vadd.f32 0.0, %v8283
  %v8285 = vpop.f32.mrf.mxu0
  %8286 = vmatprep.mubr.bf16.mxu0 0
  %8287 = vmatmul.mubr.bf16.gmra.mxu0 %v8018
  %v8288 = vpop.f32.mrf.mxu0
  %v8289 = vadd.f32 0.0, %v8288
  %v8290 = vpop.f32.mrf.mxu0
  %v8291 = vpop.f32.mrf.mxu0
  %v8292 = vadd.f32 0.0, %v8291
  %v8293 = vpop.f32.mrf.mxu0
  %8294 = vmatprep.mubr.bf16.mxu0 0
  %8295 = vmatmul.mubr.bf16.gmra.mxu0 %v8019
  %v8296 = vpop.f32.mrf.mxu0
  %v8297 = vadd.f32 0.0, %v8296
  %v8298 = vpop.f32.mrf.mxu0
  %v8299 = vpop.f32.mrf.mxu0
  %v8300 = vadd.f32 0.0, %v8299
  %v8301 = vpop.f32.mrf.mxu0
  %8302 = vmatprep.mubr.bf16.mxu0 0
  %8303 = vmatmul.mubr.bf16.gmra.mxu0 %v8020
  %v8304 = vpop.f32.mrf.mxu0
  %v8305 = vadd.f32 0.0, %v8304
  %v8306 = vpop.f32.mrf.mxu0
  %v8307 = vpop.f32.mrf.mxu0
  %v8308 = vadd.f32 0.0, %v8307
  %v8309 = vpop.f32.mrf.mxu0
  %8310 = vmatprep.mubr.bf16.mxu0 0
  %8311 = vmatmul.mubr.bf16.gmra.mxu0 %v8021
  %v8312 = vpop.f32.mrf.mxu0
  %v8313 = vadd.f32 0.0, %v8312
  %v8314 = vpop.f32.mrf.mxu0
  %v8315 = vpop.f32.mrf.mxu0
  %v8316 = vadd.f32 0.0, %v8315
  %v8317 = vpop.f32.mrf.mxu0
  %8318 = vmatprep.mubr.bf16.mxu0 0
  %8319 = vmatmul.mubr.bf16.gmra.mxu0 %v8022
  %v8320 = vpop.f32.mrf.mxu0
  %v8321 = vadd.f32 0.0, %v8320
  %v8322 = vpop.f32.mrf.mxu0
  %v8323 = vpop.f32.mrf.mxu0
  %v8324 = vadd.f32 0.0, %v8323
  %v8325 = vpop.f32.mrf.mxu0
  %8326 = vmatprep.mubr.bf16.mxu0 0
  %8327 = vmatmul.mubr.bf16.gmra.mxu0 %v8023
  %v8328 = vpop.f32.mrf.mxu0
  %v8329 = vadd.f32 0.0, %v8328
  %v8330 = vpop.f32.mrf.mxu0
  %v8331 = vpop.f32.mrf.mxu0
  %v8332 = vadd.f32 0.0, %v8331
  %v8333 = vpop.f32.mrf.mxu0
  %8334 = vmatprep.mubr.bf16.mxu0 0
  %8335 = vmatmul.mubr.bf16.gmra.mxu0 %v8024
  %v8336 = vpop.f32.mrf.mxu0
  %v8337 = vadd.f32 0.0, %v8336
  %v8338 = vpop.f32.mrf.mxu0
  %v8339 = vpop.f32.mrf.mxu0
  %v8340 = vadd.f32 0.0, %v8339
  %v8341 = vpop.f32.mrf.mxu0
  %8342 = vmatprep.mubr.bf16.mxu0 0
  %8343 = vmatmul.mubr.bf16.gmra.mxu0 %v8025
  %v8344 = vpop.f32.mrf.mxu0
  %v8345 = vadd.f32 0.0, %v8344
  %v8346 = vpop.f32.mrf.mxu0
  %v8347 = vpop.f32.mrf.mxu0
  %v8348 = vadd.f32 0.0, %v8347
  %v8349 = vpop.f32.mrf.mxu0
  %8350 = vmatprep.mubr.bf16.mxu0 0
  %8351 = vmatmul.mubr.bf16.gmra.mxu0 %v8026
  %v8352 = vpop.f32.mrf.mxu0
  %v8353 = vadd.f32 0.0, %v8352
  %v8354 = vpop.f32.mrf.mxu0
  %v8355 = vpop.f32.mrf.mxu0
  %v8356 = vadd.f32 0.0, %v8355
  %v8357 = vpop.f32.mrf.mxu0
  %8358 = vmatprep.mubr.bf16.mxu0 0
  %8359 = vmatmul.mubr.bf16.gmra.mxu0 %v8027
  %v8360 = vpop.f32.mrf.mxu0
  %v8361 = vadd.f32 0.0, %v8360
  %v8362 = vpop.f32.mrf.mxu0
  %v8363 = vpop.f32.mrf.mxu0
  %v8364 = vadd.f32 0.0, %v8363
  %v8365 = vpop.f32.mrf.mxu0
  %8366 = vmatprep.mubr.bf16.mxu0 0
  %8367 = vmatmul.mubr.bf16.gmra.mxu0 %v8028
  %v8368 = vpop.f32.mrf.mxu0
  %v8369 = vadd.f32 0.0, %v8368
  %v8370 = vpop.f32.mrf.mxu0
  %v8371 = vpop.f32.mrf.mxu0
  %v8372 = vadd.f32 0.0, %v8371
  %v8373 = vpop.f32.mrf.mxu0
  %8374 = vmatprep.mubr.bf16.mxu0 0
  %8375 = vmatmul.mubr.bf16.gmra.mxu0 %v8029
  %v8376 = vpop.f32.mrf.mxu0
  %v8377 = vadd.f32 0.0, %v8376
  %v8378 = vpop.f32.mrf.mxu0
  %v8379 = vpop.f32.mrf.mxu0
  %v8380 = vadd.f32 0.0, %v8379
  %v8381 = vpop.f32.mrf.mxu0
  %8382 = vdwg.mxu0
  %v8383 = vld [vmem:[%s8] sm:$0x1]
  %v8384 = vld [vmem:[%s9] sm:$0x1]
  %v8385 = vadd.f32 %v8129, %v8132
  %v8386 = vadd.f32 %v8385, %v8137
  %v8387 = vadd.f32 %v8386, %v8140
  %v8388 = vadd.f32 %v8387, %v8145
  %v8389 = vadd.f32 %v8388, %v8148
  %v8390 = vadd.f32 %v8389, %v8153
  %v8391 = vadd.f32 %v8390, %v8156
  %v8392 = vadd.f32 %v8391, %v8161
  %v8393 = vadd.f32 %v8392, %v8164
  %v8394 = vadd.f32 %v8393, %v8169
  %v8395 = vadd.f32 %v8394, %v8172
  %v8396 = vadd.f32 %v8395, %v8177
  %v8397 = vadd.f32 %v8396, %v8180
  %v8398 = vadd.f32 %v8397, %v8185
  %v8399 = vadd.f32 %v8398, %v8188
  %v8400 = vadd.f32 %v8399, %v8193
  %v8401 = vadd.f32 %v8400, %v8196
  %v8402 = vadd.f32 %v8401, %v8201
  %v8403 = vadd.f32 %v8402, %v8204
  %v8404 = vadd.f32 %v8403, %v8209
  %v8405 = vadd.f32 %v8404, %v8212
  %v8406 = vadd.f32 %v8405, %v8217
  %v8407 = vadd.f32 %v8406, %v8220
  %v8408 = vadd.f32 %v8407, %v8225
  %v8409 = vadd.f32 %v8408, %v8228
  %v8410 = vadd.f32 %v8409, %v8233
  %v8411 = vadd.f32 %v8410, %v8236
  %v8412 = vadd.f32 %v8411, %v8241
  %v8413 = vadd.f32 %v8412, %v8244
  %v8414 = vadd.f32 %v8413, %v8249
  %v8415 = vadd.f32 %v8414, %v8252
  %v8416 = vadd.f32 %v8415, %v8257
  %v8417 = vadd.f32 %v8416, %v8260
  %v8418 = vadd.f32 %v8417, %v8265
  %v8419 = vadd.f32 %v8418, %v8268
  %v8420 = vadd.f32 %v8419, %v8273
  %v8421 = vadd.f32 %v8420, %v8276
  %v8422 = vadd.f32 %v8421, %v8281
  %v8423 = vadd.f32 %v8422, %v8284
  %v8424 = vadd.f32 %v8423, %v8289
  %v8425 = vadd.f32 %v8424, %v8292
  %v8426 = vadd.f32 %v8425, %v8297
  %v8427 = vadd.f32 %v8426, %v8300
  %v8428 = vadd.f32 %v8427, %v8305
  %v8429 = vadd.f32 %v8428, %v8308
  %v8430 = vadd.f32 %v8429, %v8313
  %v8431 = vadd.f32 %v8430, %v8316
  %v8432 = vadd.f32 %v8431, %v8321
  %v8433 = vadd.f32 %v8432, %v8324
  %v8434 = vadd.f32 %v8433, %v8329
  %v8435 = vadd.f32 %v8434, %v8332
  %v8436 = vadd.f32 %v8435, %v8337
  %v8437 = vadd.f32 %v8436, %v8340
  %v8438 = vadd.f32 %v8437, %v8345
  %v8439 = vadd.f32 %v8438, %v8348
  %v8440 = vadd.f32 %v8439, %v8353
  %v8441 = vadd.f32 %v8440, %v8356
  %v8442 = vadd.f32 %v8441, %v8361
  %v8443 = vadd.f32 %v8442, %v8364
  %v8444 = vadd.f32 %v8443, %v8369
  %v8445 = vadd.f32 %v8444, %v8372
  %v8446 = vadd.f32 %v8445, %v8377
  %v8447 = vadd.f32 %v8446, %v8380
  %v8448 = vrot.slane %v8447, 4
  %v8449 = vadd.f32 %v8447, %v8448
  %v8450 = vrot.slane %v8449, 2
  %v8451 = vadd.f32 %v8449, %v8450
  %v8452 = vrot.slane %v8451, 1
  %v8453 = vadd.f32 %v8451, %v8452
  %v8454 = vmul.f32 %v8453, 0.001953125
  %v8455 = vsub.f32 %v8129, %v8454
  %v8456 = vsub.f32 %v8132, %v8454
  %v8457 = vsub.f32 %v8137, %v8454
  %v8458 = vsub.f32 %v8140, %v8454
  %v8459 = vsub.f32 %v8145, %v8454
  %v8460 = vsub.f32 %v8148, %v8454
  %v8461 = vsub.f32 %v8153, %v8454
  %v8462 = vsub.f32 %v8156, %v8454
  %v8463 = vsub.f32 %v8161, %v8454
  %v8464 = vsub.f32 %v8164, %v8454
  %v8465 = vsub.f32 %v8169, %v8454
  %v8466 = vsub.f32 %v8172, %v8454
  %v8467 = vsub.f32 %v8177, %v8454
  %v8468 = vsub.f32 %v8180, %v8454
  %v8469 = vsub.f32 %v8185, %v8454
  %v8470 = vsub.f32 %v8188, %v8454
  %v8471 = vsub.f32 %v8193, %v8454
  %v8472 = vsub.f32 %v8196, %v8454
  %v8473 = vsub.f32 %v8201, %v8454
  %v8474 = vsub.f32 %v8204, %v8454
  %v8475 = vsub.f32 %v8209, %v8454
  %v8476 = vsub.f32 %v8212, %v8454
  %v8477 = vsub.f32 %v8217, %v8454
  %v8478 = vsub.f32 %v8220, %v8454
  %v8479 = vsub.f32 %v8225, %v8454
  %v8480 = vsub.f32 %v8228, %v8454
  %v8481 = vsub.f32 %v8233, %v8454
  %v8482 = vsub.f32 %v8236, %v8454
  %v8483 = vsub.f32 %v8241, %v8454
  %v8484 = vsub.f32 %v8244, %v8454
  %v8485 = vsub.f32 %v8249, %v8454
  %v8486 = vsub.f32 %v8252, %v8454
  %v8487 = vsub.f32 %v8257, %v8454
  %v8488 = vsub.f32 %v8260, %v8454
  %v8489 = vsub.f32 %v8265, %v8454
  %v8490 = vsub.f32 %v8268, %v8454
  %v8491 = vsub.f32 %v8273, %v8454
  %v8492 = vsub.f32 %v8276, %v8454
  %v8493 = vsub.f32 %v8281, %v8454
  %v8494 = vsub.f32 %v8284, %v8454
  %v8495 = vsub.f32 %v8289, %v8454
  %v8496 = vsub.f32 %v8292, %v8454
  %v8497 = vsub.f32 %v8297, %v8454
  %v8498 = vsub.f32 %v8300, %v8454
  %v8499 = vsub.f32 %v8305, %v8454
  %v8500 = vsub.f32 %v8308, %v8454
  %v8501 = vsub.f32 %v8313, %v8454
  %v8502 = vsub.f32 %v8316, %v8454
  %v8503 = vsub.f32 %v8321, %v8454
  %v8504 = vsub.f32 %v8324, %v8454
  %v8505 = vsub.f32 %v8329, %v8454
  %v8506 = vsub.f32 %v8332, %v8454
  %v8507 = vsub.f32 %v8337, %v8454
  %v8508 = vsub.f32 %v8340, %v8454
  %v8509 = vsub.f32 %v8345, %v8454
  %v8510 = vsub.f32 %v8348, %v8454
  %v8511 = vsub.f32 %v8353, %v8454
  %v8512 = vsub.f32 %v8356, %v8454
  %v8513 = vsub.f32 %v8361, %v8454
  %v8514 = vsub.f32 %v8364, %v8454
  %v8515 = vsub.f32 %v8369, %v8454
  %v8516 = vsub.f32 %v8372, %v8454
  %v8517 = vsub.f32 %v8377, %v8454
  %v8518 = vsub.f32 %v8380, %v8454
  %v8519 = vmul.f32 %v8455, %v8455
  %v8520 = vmul.f32 %v8456, %v8456
  %v8521 = vmul.f32 %v8457, %v8457
  %v8522 = vmul.f32 %v8458, %v8458
  %v8523 = vmul.f32 %v8459, %v8459
  %v8524 = vmul.f32 %v8460, %v8460
  %v8525 = vmul.f32 %v8461, %v8461
  %v8526 = vmul.f32 %v8462, %v8462
  %v8527 = vmul.f32 %v8463, %v8463
  %v8528 = vmul.f32 %v8464, %v8464
  %v8529 = vmul.f32 %v8465, %v8465
  %v8530 = vmul.f32 %v8466, %v8466
  %v8531 = vmul.f32 %v8467, %v8467
  %v8532 = vmul.f32 %v8468, %v8468
  %v8533 = vmul.f32 %v8469, %v8469
  %v8534 = vmul.f32 %v8470, %v8470
  %v8535 = vmul.f32 %v8471, %v8471
  %v8536 = vmul.f32 %v8472, %v8472
  %v8537 = vmul.f32 %v8473, %v8473
  %v8538 = vmul.f32 %v8474, %v8474
  %v8539 = vmul.f32 %v8475, %v8475
  %v8540 = vmul.f32 %v8476, %v8476
  %v8541 = vmul.f32 %v8477, %v8477
  %v8542 = vmul.f32 %v8478, %v8478
  %v8543 = vmul.f32 %v8479, %v8479
  %v8544 = vmul.f32 %v8480, %v8480
  %v8545 = vmul.f32 %v8481, %v8481
  %v8546 = vmul.f32 %v8482, %v8482
  %v8547 = vmul.f32 %v8483, %v8483
  %v8548 = vmul.f32 %v8484, %v8484
  %v8549 = vmul.f32 %v8485, %v8485
  %v8550 = vmul.f32 %v8486, %v8486
  %v8551 = vmul.f32 %v8487, %v8487
  %v8552 = vmul.f32 %v8488, %v8488
  %v8553 = vmul.f32 %v8489, %v8489
  %v8554 = vmul.f32 %v8490, %v8490
  %v8555 = vmul.f32 %v8491, %v8491
  %v8556 = vmul.f32 %v8492, %v8492
  %v8557 = vmul.f32 %v8493, %v8493
  %v8558 = vmul.f32 %v8494, %v8494
  %v8559 = vmul.f32 %v8495, %v8495
  %v8560 = vmul.f32 %v8496, %v8496
  %v8561 = vmul.f32 %v8497, %v8497
  %v8562 = vmul.f32 %v8498, %v8498
  %v8563 = vmul.f32 %v8499, %v8499
  %v8564 = vmul.f32 %v8500, %v8500
  %v8565 = vmul.f32 %v8501, %v8501
  %v8566 = vmul.f32 %v8502, %v8502
  %v8567 = vmul.f32 %v8503, %v8503
  %v8568 = vmul.f32 %v8504, %v8504
  %v8569 = vmul.f32 %v8505, %v8505
  %v8570 = vmul.f32 %v8506, %v8506
  %v8571 = vmul.f32 %v8507, %v8507
  %v8572 = vmul.f32 %v8508, %v8508
  %v8573 = vmul.f32 %v8509, %v8509
  %v8574 = vmul.f32 %v8510, %v8510
  %v8575 = vmul.f32 %v8511, %v8511
  %v8576 = vmul.f32 %v8512, %v8512
  %v8577 = vmul.f32 %v8513, %v8513
  %v8578 = vmul.f32 %v8514, %v8514
  %v8579 = vmul.f32 %v8515, %v8515
  %v8580 = vmul.f32 %v8516, %v8516
  %v8581 = vmul.f32 %v8517, %v8517
  %v8582 = vmul.f32 %v8518, %v8518
  %v8583 = vadd.f32 %v8519, %v8520
  %v8584 = vadd.f32 %v8583, %v8521
  %v8585 = vadd.f32 %v8584, %v8522
  %v8586 = vadd.f32 %v8585, %v8523
  %v8587 = vadd.f32 %v8586, %v8524
  %v8588 = vadd.f32 %v8587, %v8525
  %v8589 = vadd.f32 %v8588, %v8526
  %v8590 = vadd.f32 %v8589, %v8527
  %v8591 = vadd.f32 %v8590, %v8528
  %v8592 = vadd.f32 %v8591, %v8529
  %v8593 = vadd.f32 %v8592, %v8530
  %v8594 = vadd.f32 %v8593, %v8531
  %v8595 = vadd.f32 %v8594, %v8532
  %v8596 = vadd.f32 %v8595, %v8533
  %v8597 = vadd.f32 %v8596, %v8534
  %v8598 = vadd.f32 %v8597, %v8535
  %v8599 = vadd.f32 %v8598, %v8536
  %v8600 = vadd.f32 %v8599, %v8537
  %v8601 = vadd.f32 %v8600, %v8538
  %v8602 = vadd.f32 %v8601, %v8539
  %v8603 = vadd.f32 %v8602, %v8540
  %v8604 = vadd.f32 %v8603, %v8541
  %v8605 = vadd.f32 %v8604, %v8542
  %v8606 = vadd.f32 %v8605, %v8543
  %v8607 = vadd.f32 %v8606, %v8544
  %v8608 = vadd.f32 %v8607, %v8545
  %v8609 = vadd.f32 %v8608, %v8546
  %v8610 = vadd.f32 %v8609, %v8547
  %v8611 = vadd.f32 %v8610, %v8548
  %v8612 = vadd.f32 %v8611, %v8549
  %v8613 = vadd.f32 %v8612, %v8550
  %v8614 = vadd.f32 %v8613, %v8551
  %v8615 = vadd.f32 %v8614, %v8552
  %v8616 = vadd.f32 %v8615, %v8553
  %v8617 = vadd.f32 %v8616, %v8554
  %v8618 = vadd.f32 %v8617, %v8555
  %v8619 = vadd.f32 %v8618, %v8556
  %v8620 = vadd.f32 %v8619, %v8557
  %v8621 = vadd.f32 %v8620, %v8558
  %v8622 = vadd.f32 %v8621, %v8559
  %v8623 = vadd.f32 %v8622, %v8560
  %v8624 = vadd.f32 %v8623, %v8561
  %v8625 = vadd.f32 %v8624, %v8562
  %v8626 = vadd.f32 %v8625, %v8563
  %v8627 = vadd.f32 %v8626, %v8564
  %v8628 = vadd.f32 %v8627, %v8565
  %v8629 = vadd.f32 %v8628, %v8566
  %v8630 = vadd.f32 %v8629, %v8567
  %v8631 = vadd.f32 %v8630, %v8568
  %v8632 = vadd.f32 %v8631, %v8569
  %v8633 = vadd.f32 %v8632, %v8570
  %v8634 = vadd.f32 %v8633, %v8571
  %v8635 = vadd.f32 %v8634, %v8572
  %v8636 = vadd.f32 %v8635, %v8573
  %v8637 = vadd.f32 %v8636, %v8574
  %v8638 = vadd.f32 %v8637, %v8575
  %v8639 = vadd.f32 %v8638, %v8576
  %v8640 = vadd.f32 %v8639, %v8577
  %v8641 = vadd.f32 %v8640, %v8578
  %v8642 = vadd.f32 %v8641, %v8579
  %v8643 = vadd.f32 %v8642, %v8580
  %v8644 = vadd.f32 %v8643, %v8581
  %v8645 = vadd.f32 %v8644, %v8582
  %v8646 = vrot.slane %v8645, 4
  %v8647 = vadd.f32 %v8645, %v8646
  %v8648 = vrot.slane %v8647, 2
  %v8649 = vadd.f32 %v8647, %v8648
  %v8650 = vrot.slane %v8649, 1
  %v8651 = vadd.f32 %v8649, %v8650
  %v8652 = vmul.f32 %v8651, 0.001953125
  %v8653 = vadd.f32 %v8652, 1e-05
  %v8654 = vrsqrt.pop %v8653
  %v8655 = vmul.f32 %v8383, %v8654
  %v8657 = vlaneseq
  %v8658 = vshrl.u32 %v8657, 7
  %v8659 = vsub.s32 0, %v8658
  %v8660 = vrot.slane %v8655, %v8659
  %v8662 = vmul.f32 %v8455, %v8660
  %v8663 = vmul.f32 %v8456, %v8660
  %v8664 = vmul.f32 %v8457, %v8660
  %v8665 = vmul.f32 %v8458, %v8660
  %v8666 = vmul.f32 %v8459, %v8660
  %v8667 = vmul.f32 %v8460, %v8660
  %v8668 = vmul.f32 %v8461, %v8660
  %v8669 = vmul.f32 %v8462, %v8660
  %v8670 = vmul.f32 %v8463, %v8660
  %v8671 = vmul.f32 %v8464, %v8660
  %v8672 = vmul.f32 %v8465, %v8660
  %v8673 = vmul.f32 %v8466, %v8660
  %v8674 = vmul.f32 %v8467, %v8660
  %v8675 = vmul.f32 %v8468, %v8660
  %v8676 = vmul.f32 %v8469, %v8660
  %v8677 = vmul.f32 %v8470, %v8660
  %v8678 = vmul.f32 %v8471, %v8660
  %v8679 = vmul.f32 %v8472, %v8660
  %v8680 = vmul.f32 %v8473, %v8660
  %v8681 = vmul.f32 %v8474, %v8660
  %v8682 = vmul.f32 %v8475, %v8660
  %v8683 = vmul.f32 %v8476, %v8660
  %v8684 = vmul.f32 %v8477, %v8660
  %v8685 = vmul.f32 %v8478, %v8660
  %v8686 = vmul.f32 %v8479, %v8660
  %v8687 = vmul.f32 %v8480, %v8660
  %v8688 = vmul.f32 %v8481, %v8660
  %v8689 = vmul.f32 %v8482, %v8660
  %v8690 = vmul.f32 %v8483, %v8660
  %v8691 = vmul.f32 %v8484, %v8660
  %v8692 = vmul.f32 %v8485, %v8660
  %v8693 = vmul.f32 %v8486, %v8660
  %v8694 = vmul.f32 %v8487, %v8660
  %v8695 = vmul.f32 %v8488, %v8660
  %v8696 = vmul.f32 %v8489, %v8660
  %v8697 = vmul.f32 %v8490, %v8660
  %v8698 = vmul.f32 %v8491, %v8660
  %v8699 = vmul.f32 %v8492, %v8660
  %v8700 = vmul.f32 %v8493, %v8660
  %v8701 = vmul.f32 %v8494, %v8660
  %v8702 = vmul.f32 %v8495, %v8660
  %v8703 = vmul.f32 %v8496, %v8660
  %v8704 = vmul.f32 %v8497, %v8660
  %v8705 = vmul.f32 %v8498, %v8660
  %v8706 = vmul.f32 %v8499, %v8660
  %v8707 = vmul.f32 %v8500, %v8660
  %v8708 = vmul.f32 %v8501, %v8660
  %v8709 = vmul.f32 %v8502, %v8660
  %v8710 = vmul.f32 %v8503, %v8660
  %v8711 = vmul.f32 %v8504, %v8660
  %v8712 = vmul.f32 %v8505, %v8660
  %v8713 = vmul.f32 %v8506, %v8660
  %v8714 = vmul.f32 %v8507, %v8660
  %v8715 = vmul.f32 %v8508, %v8660
  %v8716 = vmul.f32 %v8509, %v8660
  %v8717 = vmul.f32 %v8510, %v8660
  %v8718 = vmul.f32 %v8511, %v8660
  %v8719 = vmul.f32 %v8512, %v8660
  %v8720 = vmul.f32 %v8513, %v8660
  %v8721 = vmul.f32 %v8514, %v8660
  %v8722 = vmul.f32 %v8515, %v8660
  %v8723 = vmul.f32 %v8516, %v8660
  %v8724 = vmul.f32 %v8517, %v8660
  %v8725 = vmul.f32 %v8518, %v8660
  %v8727 = vlaneseq
  %v8728 = vshrl.u32 %v8727, 7
  %v8729 = vsub.s32 0, %v8728
  %v8730 = vrot.slane %v8384, %v8729
  %v8732 = vadd.f32 %v8662, %v8730
  %v8733 = vadd.f32 %v8663, %v8730
  %v8734 = vadd.f32 %v8664, %v8730
  %v8735 = vadd.f32 %v8665, %v8730
  %v8736 = vadd.f32 %v8666, %v8730
  %v8737 = vadd.f32 %v8667, %v8730
  %v8738 = vadd.f32 %v8668, %v8730
  %v8739 = vadd.f32 %v8669, %v8730
  %v8740 = vadd.f32 %v8670, %v8730
  %v8741 = vadd.f32 %v8671, %v8730
  %v8742 = vadd.f32 %v8672, %v8730
  %v8743 = vadd.f32 %v8673, %v8730
  %v8744 = vadd.f32 %v8674, %v8730
  %v8745 = vadd.f32 %v8675, %v8730
  %v8746 = vadd.f32 %v8676, %v8730
  %v8747 = vadd.f32 %v8677, %v8730
  %v8748 = vadd.f32 %v8678, %v8730
  %v8749 = vadd.f32 %v8679, %v8730
  %v8750 = vadd.f32 %v8680, %v8730
  %v8751 = vadd.f32 %v8681, %v8730
  %v8752 = vadd.f32 %v8682, %v8730
  %v8753 = vadd.f32 %v8683, %v8730
  %v8754 = vadd.f32 %v8684, %v8730
  %v8755 = vadd.f32 %v8685, %v8730
  %v8756 = vadd.f32 %v8686, %v8730
  %v8757 = vadd.f32 %v8687, %v8730
  %v8758 = vadd.f32 %v8688, %v8730
  %v8759 = vadd.f32 %v8689, %v8730
  %v8760 = vadd.f32 %v8690, %v8730
  %v8761 = vadd.f32 %v8691, %v8730
  %v8762 = vadd.f32 %v8692, %v8730
  %v8763 = vadd.f32 %v8693, %v8730
  %v8764 = vadd.f32 %v8694, %v8730
  %v8765 = vadd.f32 %v8695, %v8730
  %v8766 = vadd.f32 %v8696, %v8730
  %v8767 = vadd.f32 %v8697, %v8730
  %v8768 = vadd.f32 %v8698, %v8730
  %v8769 = vadd.f32 %v8699, %v8730
  %v8770 = vadd.f32 %v8700, %v8730
  %v8771 = vadd.f32 %v8701, %v8730
  %v8772 = vadd.f32 %v8702, %v8730
  %v8773 = vadd.f32 %v8703, %v8730
  %v8774 = vadd.f32 %v8704, %v8730
  %v8775 = vadd.f32 %v8705, %v8730
  %v8776 = vadd.f32 %v8706, %v8730
  %v8777 = vadd.f32 %v8707, %v8730
  %v8778 = vadd.f32 %v8708, %v8730
  %v8779 = vadd.f32 %v8709, %v8730
  %v8780 = vadd.f32 %v8710, %v8730
  %v8781 = vadd.f32 %v8711, %v8730
  %v8782 = vadd.f32 %v8712, %v8730
  %v8783 = vadd.f32 %v8713, %v8730
  %v8784 = vadd.f32 %v8714, %v8730
  %v8785 = vadd.f32 %v8715, %v8730
  %v8786 = vadd.f32 %v8716, %v8730
  %v8787 = vadd.f32 %v8717, %v8730
  %v8788 = vadd.f32 %v8718, %v8730
  %v8789 = vadd.f32 %v8719, %v8730
  %v8790 = vadd.f32 %v8720, %v8730
  %v8791 = vadd.f32 %v8721, %v8730
  %v8792 = vadd.f32 %v8722, %v8730
  %v8793 = vadd.f32 %v8723, %v8730
  %v8794 = vadd.f32 %v8724, %v8730
  %v8795 = vadd.f32 %v8725, %v8730
  %v8796 = vld [vmem:[%s0] sm:$0xff]
  %v8797 = vld [vmem:[%s0 + $0x8] sm:$0xff]
  %v8798 = vld [vmem:[%s0 + $0x10] sm:$0xff]
  %v8799 = vld [vmem:[%s0 + $0x18] sm:$0xff]
  %v8800 = vld [vmem:[%s0 + $0x20] sm:$0xff]
  %v8801 = vld [vmem:[%s0 + $0x28] sm:$0xff]
  %v8802 = vld [vmem:[%s0 + $0x30] sm:$0xff]
  %v8803 = vld [vmem:[%s0 + $0x38] sm:$0xff]
  %v8804 = vld [vmem:[%s0 + $0x40] sm:$0xff]
  %v8805 = vld [vmem:[%s0 + $0x48] sm:$0xff]
  %v8806 = vld [vmem:[%s0 + $0x50] sm:$0xff]
  %v8807 = vld [vmem:[%s0 + $0x58] sm:$0xff]
  %v8808 = vld [vmem:[%s0 + $0x60] sm:$0xff]
  %v8809 = vld [vmem:[%s0 + $0x68] sm:$0xff]
  %v8810 = vld [vmem:[%s0 + $0x70] sm:$0xff]
  %v8811 = vld [vmem:[%s0 + $0x78] sm:$0xff]
  %v8812 = vld [vmem:[%s0 + $0x80] sm:$0xff]
  %v8813 = vld [vmem:[%s0 + $0x88] sm:$0xff]
  %v8814 = vld [vmem:[%s0 + $0x90] sm:$0xff]
  %v8815 = vld [vmem:[%s0 + $0x98] sm:$0xff]
  %v8816 = vld [vmem:[%s0 + $0xa0] sm:$0xff]
  %v8817 = vld [vmem:[%s0 + $0xa8] sm:$0xff]
  %v8818 = vld [vmem:[%s0 + $0xb0] sm:$0xff]
  %v8819 = vld [vmem:[%s0 + $0xb8] sm:$0xff]
  %v8820 = vld [vmem:[%s0 + $0xc0] sm:$0xff]
  %v8821 = vld [vmem:[%s0 + $0xc8] sm:$0xff]
  %v8822 = vld [vmem:[%s0 + $0xd0] sm:$0xff]
  %v8823 = vld [vmem:[%s0 + $0xd8] sm:$0xff]
  %v8824 = vld [vmem:[%s0 + $0xe0] sm:$0xff]
  %v8825 = vld [vmem:[%s0 + $0xe8] sm:$0xff]
  %v8826 = vld [vmem:[%s0 + $0xf0] sm:$0xff]
  %v8827 = vld [vmem:[%s0 + $0xf8] sm:$0xff]
  %v8828 = vld [vmem:[%s0 + $0x100] sm:$0xff]
  %v8829 = vld [vmem:[%s0 + $0x108] sm:$0xff]
  %v8830 = vld [vmem:[%s0 + $0x110] sm:$0xff]
  %v8831 = vld [vmem:[%s0 + $0x118] sm:$0xff]
  %v8832 = vld [vmem:[%s0 + $0x120] sm:$0xff]
  %v8833 = vld [vmem:[%s0 + $0x128] sm:$0xff]
  %v8834 = vld [vmem:[%s0 + $0x130] sm:$0xff]
  %v8835 = vld [vmem:[%s0 + $0x138] sm:$0xff]
  %v8836 = vld [vmem:[%s0 + $0x140] sm:$0xff]
  %v8837 = vld [vmem:[%s0 + $0x148] sm:$0xff]
  %v8838 = vld [vmem:[%s0 + $0x150] sm:$0xff]
  %v8839 = vld [vmem:[%s0 + $0x158] sm:$0xff]
  %v8840 = vld [vmem:[%s0 + $0x160] sm:$0xff]
  %v8841 = vld [vmem:[%s0 + $0x168] sm:$0xff]
  %v8842 = vld [vmem:[%s0 + $0x170] sm:$0xff]
  %v8843 = vld [vmem:[%s0 + $0x178] sm:$0xff]
  %v8844 = vld [vmem:[%s0 + $0x180] sm:$0xff]
  %v8845 = vld [vmem:[%s0 + $0x188] sm:$0xff]
  %v8846 = vld [vmem:[%s0 + $0x190] sm:$0xff]
  %v8847 = vld [vmem:[%s0 + $0x198] sm:$0xff]
  %v8848 = vld [vmem:[%s0 + $0x1a0] sm:$0xff]
  %v8849 = vld [vmem:[%s0 + $0x1a8] sm:$0xff]
  %v8850 = vld [vmem:[%s0 + $0x1b0] sm:$0xff]
  %v8851 = vld [vmem:[%s0 + $0x1b8] sm:$0xff]
  %v8852 = vld [vmem:[%s0 + $0x1c0] sm:$0xff]
  %v8853 = vld [vmem:[%s0 + $0x1c8] sm:$0xff]
  %v8854 = vld [vmem:[%s0 + $0x1d0] sm:$0xff]
  %v8855 = vld [vmem:[%s0 + $0x1d8] sm:$0xff]
  %v8856 = vld [vmem:[%s0 + $0x1e0] sm:$0xff]
  %v8857 = vld [vmem:[%s0 + $0x1e8] sm:$0xff]
  %v8858 = vld [vmem:[%s0 + $0x1f0] sm:$0xff]
  %v8859 = vld [vmem:[%s0 + $0x1f8] sm:$0xff]
  %v8860 = vadd.f32 %v8732, %v8796
  %v8861 = vadd.f32 %v8733, %v8797
  %v8862 = vadd.f32 %v8734, %v8798
  %v8863 = vadd.f32 %v8735, %v8799
  %v8864 = vadd.f32 %v8736, %v8800
  %v8865 = vadd.f32 %v8737, %v8801
  %v8866 = vadd.f32 %v8738, %v8802
  %v8867 = vadd.f32 %v8739, %v8803
  %v8868 = vadd.f32 %v8740, %v8804
  %v8869 = vadd.f32 %v8741, %v8805
  %v8870 = vadd.f32 %v8742, %v8806
  %v8871 = vadd.f32 %v8743, %v8807
  %v8872 = vadd.f32 %v8744, %v8808
  %v8873 = vadd.f32 %v8745, %v8809
  %v8874 = vadd.f32 %v8746, %v8810
  %v8875 = vadd.f32 %v8747, %v8811
  %v8876 = vadd.f32 %v8748, %v8812
  %v8877 = vadd.f32 %v8749, %v8813
  %v8878 = vadd.f32 %v8750, %v8814
  %v8879 = vadd.f32 %v8751, %v8815
  %v8880 = vadd.f32 %v8752, %v8816
  %v8881 = vadd.f32 %v8753, %v8817
  %v8882 = vadd.f32 %v8754, %v8818
  %v8883 = vadd.f32 %v8755, %v8819
  %v8884 = vadd.f32 %v8756, %v8820
  %v8885 = vadd.f32 %v8757, %v8821
  %v8886 = vadd.f32 %v8758, %v8822
  %v8887 = vadd.f32 %v8759, %v8823
  %v8888 = vadd.f32 %v8760, %v8824
  %v8889 = vadd.f32 %v8761, %v8825
  %v8890 = vadd.f32 %v8762, %v8826
  %v8891 = vadd.f32 %v8763, %v8827
  %v8892 = vadd.f32 %v8764, %v8828
  %v8893 = vadd.f32 %v8765, %v8829
  %v8894 = vadd.f32 %v8766, %v8830
  %v8895 = vadd.f32 %v8767, %v8831
  %v8896 = vadd.f32 %v8768, %v8832
  %v8897 = vadd.f32 %v8769, %v8833
  %v8898 = vadd.f32 %v8770, %v8834
  %v8899 = vadd.f32 %v8771, %v8835
  %v8900 = vadd.f32 %v8772, %v8836
  %v8901 = vadd.f32 %v8773, %v8837
  %v8902 = vadd.f32 %v8774, %v8838
  %v8903 = vadd.f32 %v8775, %v8839
  %v8904 = vadd.f32 %v8776, %v8840
  %v8905 = vadd.f32 %v8777, %v8841
  %v8906 = vadd.f32 %v8778, %v8842
  %v8907 = vadd.f32 %v8779, %v8843
  %v8908 = vadd.f32 %v8780, %v8844
  %v8909 = vadd.f32 %v8781, %v8845
  %v8910 = vadd.f32 %v8782, %v8846
  %v8911 = vadd.f32 %v8783, %v8847
  %v8912 = vadd.f32 %v8784, %v8848
  %v8913 = vadd.f32 %v8785, %v8849
  %v8914 = vadd.f32 %v8786, %v8850
  %v8915 = vadd.f32 %v8787, %v8851
  %v8916 = vadd.f32 %v8788, %v8852
  %v8917 = vadd.f32 %v8789, %v8853
  %v8918 = vadd.f32 %v8790, %v8854
  %v8919 = vadd.f32 %v8791, %v8855
  %v8920 = vadd.f32 %v8792, %v8856
  %v8921 = vadd.f32 %v8793, %v8857
  %v8922 = vadd.f32 %v8794, %v8858
  %v8923 = vadd.f32 %v8795, %v8859
  %v8924 = vmax.f32 %v8860, 0.0
  %v8925 = vmax.f32 %v8861, 0.0
  %v8926 = vmax.f32 %v8862, 0.0
  %v8927 = vmax.f32 %v8863, 0.0
  %v8928 = vmax.f32 %v8864, 0.0
  %v8929 = vmax.f32 %v8865, 0.0
  %v8930 = vmax.f32 %v8866, 0.0
  %v8931 = vmax.f32 %v8867, 0.0
  %v8932 = vmax.f32 %v8868, 0.0
  %v8933 = vmax.f32 %v8869, 0.0
  %v8934 = vmax.f32 %v8870, 0.0
  %v8935 = vmax.f32 %v8871, 0.0
  %v8936 = vmax.f32 %v8872, 0.0
  %v8937 = vmax.f32 %v8873, 0.0
  %v8938 = vmax.f32 %v8874, 0.0
  %v8939 = vmax.f32 %v8875, 0.0
  %v8940 = vmax.f32 %v8876, 0.0
  %v8941 = vmax.f32 %v8877, 0.0
  %v8942 = vmax.f32 %v8878, 0.0
  %v8943 = vmax.f32 %v8879, 0.0
  %v8944 = vmax.f32 %v8880, 0.0
  %v8945 = vmax.f32 %v8881, 0.0
  %v8946 = vmax.f32 %v8882, 0.0
  %v8947 = vmax.f32 %v8883, 0.0
  %v8948 = vmax.f32 %v8884, 0.0
  %v8949 = vmax.f32 %v8885, 0.0
  %v8950 = vmax.f32 %v8886, 0.0
  %v8951 = vmax.f32 %v8887, 0.0
  %v8952 = vmax.f32 %v8888, 0.0
  %v8953 = vmax.f32 %v8889, 0.0
  %v8954 = vmax.f32 %v8890, 0.0
  %v8955 = vmax.f32 %v8891, 0.0
  %v8956 = vmax.f32 %v8892, 0.0
  %v8957 = vmax.f32 %v8893, 0.0
  %v8958 = vmax.f32 %v8894, 0.0
  %v8959 = vmax.f32 %v8895, 0.0
  %v8960 = vmax.f32 %v8896, 0.0
  %v8961 = vmax.f32 %v8897, 0.0
  %v8962 = vmax.f32 %v8898, 0.0
  %v8963 = vmax.f32 %v8899, 0.0
  %v8964 = vmax.f32 %v8900, 0.0
  %v8965 = vmax.f32 %v8901, 0.0
  %v8966 = vmax.f32 %v8902, 0.0
  %v8967 = vmax.f32 %v8903, 0.0
  %v8968 = vmax.f32 %v8904, 0.0
  %v8969 = vmax.f32 %v8905, 0.0
  %v8970 = vmax.f32 %v8906, 0.0
  %v8971 = vmax.f32 %v8907, 0.0
  %v8972 = vmax.f32 %v8908, 0.0
  %v8973 = vmax.f32 %v8909, 0.0
  %v8974 = vmax.f32 %v8910, 0.0
  %v8975 = vmax.f32 %v8911, 0.0
  %v8976 = vmax.f32 %v8912, 0.0
  %v8977 = vmax.f32 %v8913, 0.0
  %v8978 = vmax.f32 %v8914, 0.0
  %v8979 = vmax.f32 %v8915, 0.0
  %v8980 = vmax.f32 %v8916, 0.0
  %v8981 = vmax.f32 %v8917, 0.0
  %v8982 = vmax.f32 %v8918, 0.0
  %v8983 = vmax.f32 %v8919, 0.0
  %v8984 = vmax.f32 %v8920, 0.0
  %v8985 = vmax.f32 %v8921, 0.0
  %v8986 = vmax.f32 %v8922, 0.0
  %v8987 = vmax.f32 %v8923, 0.0
  %8988 = vst [vmem:[%s10] sm:$0xff] %v8924
  %8989 = vst [vmem:[%s10 + $0x8] sm:$0xff] %v8925
  %8990 = vst [vmem:[%s10 + $0x10] sm:$0xff] %v8926
  %8991 = vst [vmem:[%s10 + $0x18] sm:$0xff] %v8927
  %8992 = vst [vmem:[%s10 + $0x20] sm:$0xff] %v8928
  %8993 = vst [vmem:[%s10 + $0x28] sm:$0xff] %v8929
  %8994 = vst [vmem:[%s10 + $0x30] sm:$0xff] %v8930
  %8995 = vst [vmem:[%s10 + $0x38] sm:$0xff] %v8931
  %8996 = vst [vmem:[%s10 + $0x40] sm:$0xff] %v8932
  %8997 = vst [vmem:[%s10 + $0x48] sm:$0xff] %v8933
  %8998 = vst [vmem:[%s10 + $0x50] sm:$0xff] %v8934
  %8999 = vst [vmem:[%s10 + $0x58] sm:$0xff] %v8935
  %9000 = vst [vmem:[%s10 + $0x60] sm:$0xff] %v8936
  %9001 = vst [vmem:[%s10 + $0x68] sm:$0xff] %v8937
  %9002 = vst [vmem:[%s10 + $0x70] sm:$0xff] %v8938
  %9003 = vst [vmem:[%s10 + $0x78] sm:$0xff] %v8939
  %9004 = vst [vmem:[%s10 + $0x80] sm:$0xff] %v8940
  %9005 = vst [vmem:[%s10 + $0x88] sm:$0xff] %v8941
  %9006 = vst [vmem:[%s10 + $0x90] sm:$0xff] %v8942
  %9007 = vst [vmem:[%s10 + $0x98] sm:$0xff] %v8943
  %9008 = vst [vmem:[%s10 + $0xa0] sm:$0xff] %v8944
  %9009 = vst [vmem:[%s10 + $0xa8] sm:$0xff] %v8945
  %9010 = vst [vmem:[%s10 + $0xb0] sm:$0xff] %v8946
  %9011 = vst [vmem:[%s10 + $0xb8] sm:$0xff] %v8947
  %9012 = vst [vmem:[%s10 + $0xc0] sm:$0xff] %v8948
  %9013 = vst [vmem:[%s10 + $0xc8] sm:$0xff] %v8949
  %9014 = vst [vmem:[%s10 + $0xd0] sm:$0xff] %v8950
  %9015 = vst [vmem:[%s10 + $0xd8] sm:$0xff] %v8951
  %9016 = vst [vmem:[%s10 + $0xe0] sm:$0xff] %v8952
  %9017 = vst [vmem:[%s10 + $0xe8] sm:$0xff] %v8953
  %9018 = vst [vmem:[%s10 + $0xf0] sm:$0xff] %v8954
  %9019 = vst [vmem:[%s10 + $0xf8] sm:$0xff] %v8955
  %9020 = vst [vmem:[%s10 + $0x100] sm:$0xff] %v8956
  %9021 = vst [vmem:[%s10 + $0x108] sm:$0xff] %v8957
  %9022 = vst [vmem:[%s10 + $0x110] sm:$0xff] %v8958
  %9023 = vst [vmem:[%s10 + $0x118] sm:$0xff] %v8959
  %9024 = vst [vmem:[%s10 + $0x120] sm:$0xff] %v8960
  %9025 = vst [vmem:[%s10 + $0x128] sm:$0xff] %v8961
  %9026 = vst [vmem:[%s10 + $0x130] sm:$0xff] %v8962
  %9027 = vst [vmem:[%s10 + $0x138] sm:$0xff] %v8963
  %9028 = vst [vmem:[%s10 + $0x140] sm:$0xff] %v8964
  %9029 = vst [vmem:[%s10 + $0x148] sm:$0xff] %v8965
  %9030 = vst [vmem:[%s10 + $0x150] sm:$0xff] %v8966
  %9031 = vst [vmem:[%s10 + $0x158] sm:$0xff] %v8967
  %9032 = vst [vmem:[%s10 + $0x160] sm:$0xff] %v8968
  %9033 = vst [vmem:[%s10 + $0x168] sm:$0xff] %v8969
  %9034 = vst [vmem:[%s10 + $0x170] sm:$0xff] %v8970
  %9035 = vst [vmem:[%s10 + $0x178] sm:$0xff] %v8971
  %9036 = vst [vmem:[%s10 + $0x180] sm:$0xff] %v8972
  %9037 = vst [vmem:[%s10 + $0x188] sm:$0xff] %v8973
  %9038 = vst [vmem:[%s10 + $0x190] sm:$0xff] %v8974
  %9039 = vst [vmem:[%s10 + $0x198] sm:$0xff] %v8975
  %9040 = vst [vmem:[%s10 + $0x1a0] sm:$0xff] %v8976
  %9041 = vst [vmem:[%s10 + $0x1a8] sm:$0xff] %v8977
  %9042 = vst [vmem:[%s10 + $0x1b0] sm:$0xff] %v8978
  %9043 = vst [vmem:[%s10 + $0x1b8] sm:$0xff] %v8979
  %9044 = vst [vmem:[%s10 + $0x1c0] sm:$0xff] %v8980
  %9045 = vst [vmem:[%s10 + $0x1c8] sm:$0xff] %v8981
  %9046 = vst [vmem:[%s10 + $0x1d0] sm:$0xff] %v8982
  %9047 = vst [vmem:[%s10 + $0x1d8] sm:$0xff] %v8983
  %9048 = vst [vmem:[%s10 + $0x1e0] sm:$0xff] %v8984
  %9049 = vst [vmem:[%s10 + $0x1e8] sm:$0xff] %v8985
  %9050 = vst [vmem:[%s10 + $0x1f0] sm:$0xff] %v8986
  %9051 = vst [vmem:[%s10 + $0x1f8] sm:$0xff] %v8987
  // Predicated region
  $region42: #{bottleneck_forward.1} parent=0 // pred_check
    _
  $region43: #{bottleneck_forward.1} parent=0 // pred_check_branch
    %9053 = sbr.rel (0) target = $region45
  $region44: #{bottleneck_forward.1} parent=0 // pred_region
    _
  $region45: #{bottleneck_forward.1} parent=0 // pred_fallthru
    _
  // Predicated region
  $region46: #{bottleneck_forward.1} parent=0 // pred_check
    _
  $region47: #{bottleneck_forward.1} parent=0 // pred_check_branch
    %9055 = sbr.rel (0) target = $region49
  $region48: #{bottleneck_forward.1} parent=0 // pred_region
    _
  $region49: #{bottleneck_forward.1} parent=0 // pred_fallthru
    _

</llo_original>
